<compile_context>
chip_gen: v6e
topology: v6e:2x2x1
jax: 0.10.0
libtpu: 0.0.40
codegen_flags: <defaults>
</compile_context>

<pallas_src>
import numpy as np
import jax
import jax.numpy as jnp
from jax.experimental import pallas as pl
from jax.experimental.pallas import tpu as pltpu


# ---------------------------------------------------------------------------
# Fused kernel
# ---------------------------------------------------------------------------

def _pick_row_tile(M, cap=256):
    """Largest row sub-tile <= cap that divides M (prefers multiples of 16)."""
    if M <= cap:
        return M
    for tm in range(cap - cap % 16, 15, -16):
        if M % tm == 0:
            return tm
    for tm in range(cap - cap % 8, 7, -8):
        if M % tm == 0:
            return tm
    return M


def make_bottleneck_kernel(H, W, M, TM, front, has_downsample):
    """Fused Bottleneck forward over one image (H*W rows) per grid step.

    front: row offset (multiple of 16) at which out1 is staged inside the padded
           VMEM slab; rows [0, front) and [front + M, slab_len) stay zero and act
           as the conv2 zero padding in the row direction.
    TM:    row sub-tile for the fused conv2 -> conv3 -> residual epilogue
           (register accumulation, no intermediate VMEM round trips).
    """
    n_sub = M // TM

    def kernel(*refs):
        if has_downsample:
            (x_ref, w1_ref, s1_ref, w2_ref, s2_ref, w3_ref, s3_ref,
             nl_ref, nr_ref, wd_ref, sd_ref, o_ref, pad_ref) = refs
        else:
            (x_ref, w1_ref, s1_ref, w2_ref, s2_ref, w3_ref, s3_ref,
             nl_ref, nr_ref, o_ref, pad_ref) = refs

        slab_rows, planes = pad_ref.shape
        tail = slab_rows - front - M

        # ---- conv1 (1x1) + bn1(shift) + relu, staged once into the slab ------
        y1 = jnp.dot(x_ref[...], w1_ref[...], preferred_element_type=jnp.float32)
        y1 = jnp.maximum(y1 + s1_ref[...], 0.0)
        pad_ref[pl.ds(front, M), :] = y1.astype(pad_ref.dtype)

        # Re-zero ONLY the padding rows (middle rows are fully overwritten above).
        pad_ref[pl.ds(0, front), :] = jnp.zeros((front, planes), pad_ref.dtype)
        pad_ref[pl.ds(front + M, tail), :] = jnp.zeros((tail, planes), pad_ref.dtype)

        # ---- per-row-sub-tile: conv2 (3x3) -> bn2+relu -> conv3 -> +id -> relu
        for t in range(n_sub):
            r0 = t * TM
            nl = nl_ref[pl.ds(r0, TM), :]        # bf16 (TM,1): 0 where x-col == 0
            nr = nr_ref[pl.ds(r0, TM), :]        # bf16 (TM,1): 0 where x-col == W-1

            acc = None                           # register accumulator (f32)
            for dy in range(3):
                for dx in range(3):
                    start = front + r0 - W - 1 + dy * W + dx        # static offset
                    tap = pad_ref[pl.ds(start, TM), :].astype(jnp.bfloat16)
                    if dx == 0:
                        tap = tap * nl           # kill column wrap-around
                    elif dx == 2:
                        tap = tap * nr
                    part = jnp.dot(tap, w2_ref[dy * 3 + dx],
                                   preferred_element_type=jnp.float32)
                    acc = part if acc is None else acc + part
            y2 = jnp.maximum(acc + s2_ref[...], 0.0).astype(jnp.bfloat16)

            # conv3 (1x1) + bn3(shift) + residual + relu, stored straight to o_ref
            y3 = jnp.dot(y2, w3_ref[...], preferred_element_type=jnp.float32) + s3_ref[...]
            if has_downsample:
                idn = jnp.dot(x_ref[pl.ds(r0, TM), :], wd_ref[...],
                              preferred_element_type=jnp.float32) + sd_ref[...]
            else:
                idn = x_ref[pl.ds(r0, TM), :].astype(jnp.float32)
            o_ref[pl.ds(r0, TM), :] = jnp.maximum(y3 + idn, 0.0).astype(o_ref.dtype)

    return kernel


# ---------------------------------------------------------------------------
# Wrapper: layout transforms, BN folding, pallas_call
# ---------------------------------------------------------------------------

def _bottleneck_forward(x_nchw, params, slab_dtype):
    N, Cin, H, W = x_nchw.shape
    M = H * W
    assert M % 8 == 0, "H*W must be a multiple of 8 for the (8,128) tiling rule"

    planes = params['w1'].shape[1]
    out_c = params['w3'].shape[1]
    has_ds = 'wd' in params

    # NCHW -> (N*H*W, Cin), bf16 activations at the kernel boundary.
    x2d = jnp.transpose(x_nchw, (0, 2, 3, 1)).reshape(N * M, Cin).astype(jnp.bfloat16)

    # Fold BN scale into the conv weights (bf16); shifts stay f32.
    w1 = (params['w1'] * params['scale1']).astype(jnp.bfloat16)
    w2 = (params['w2'] * params['scale2']).astype(jnp.bfloat16)
    w3 = (params['w3'] * params['scale3']).astype(jnp.bfloat16)
    s1, s2, s3 = params['shift1'], params['shift2'], params['shift3']

    # Column-edge masks (bf16, exact 0/1) for the flattened 3x3-tap trick.
    xcol = jnp.arange(M, dtype=jnp.int32) % W
    not_left = (xcol != 0).astype(jnp.bfloat16).reshape(M, 1)
    not_right = (xcol != W - 1).astype(jnp.bfloat16).reshape(M, 1)

    # Padded slab geometry: out1 lives at rows [front, front+M); front/tail are
    # multiples of 16 so bf16 (16-row packed) stores of the staged region and the
    # padding re-zeroing are sublane-tile aligned.
    front = -(-(W + 1) // 16) * 16
    tail = -(-(W + 1) // 16) * 16
    slab_len = front + M + tail

    TM = _pick_row_tile(M)

    inputs = [x2d, w1, s1, w2, s2, w3, s3, not_left, not_right]
    in_specs = [
        pl.BlockSpec((M, Cin), lambda n: (n, 0)),
        pl.BlockSpec((Cin, planes), lambda n: (0, 0)),
        pl.BlockSpec((1, planes), lambda n: (0, 0)),
        pl.BlockSpec((9, planes, planes), lambda n: (0, 0, 0)),
        pl.BlockSpec((1, planes), lambda n: (0, 0)),
        pl.BlockSpec((planes, out_c), lambda n: (0, 0)),
        pl.BlockSpec((1, out_c), lambda n: (0, 0)),
        pl.BlockSpec((M, 1), lambda n: (0, 0)),
        pl.BlockSpec((M, 1), lambda n: (0, 0)),
    ]
    if has_ds:
        wd = (params['wd'] * params['scaled']).astype(jnp.bfloat16)
        inputs += [wd, params['shiftd']]
        in_specs += [pl.BlockSpec((Cin, out_c), lambda n: (0, 0)),
                     pl.BlockSpec((1, out_c), lambda n: (0, 0))]

    # Rough per-step VMEM budget (double-buffered I/O + weights + slab scratch).
    slab_bpe = jnp.dtype(slab_dtype).itemsize
    est = (2 * M * Cin * 2                      # x (bf16, double-buffered)
           + 2 * M * out_c * 2                  # out (bf16, double-buffered)
           + 2 * 2 * (M * 2)                    # two (M,1) bf16 edge masks
           + 2 * 2 * (Cin * planes + 9 * planes * planes + planes * out_c
                      + (Cin * out_c if has_ds else 0))      # bf16 weights
           + 2 * 4 * (2 * planes + (2 if has_ds else 1) * out_c)  # f32 shifts
           + slab_len * planes * slab_bpe)      # slab scratch
    try:
        hw_cap = int(pltpu.get_tpu_info().vmem_capacity_bytes * 3 // 4)
    except Exception:
        hw_cap = 48 * 1024 * 1024               # safe for v7x's 64 MiB per-TC VMEM
    vmem_limit = int(min(hw_cap, max(2 * est, 32 * 1024 * 1024)))

    out2d = pl.pallas_call(
        make_bottleneck_kernel(H, W, M, TM, front, has_ds),
        out_shape=jax.ShapeDtypeStruct((N * M, out_c), jnp.bfloat16),
        grid=(N,),
        in_specs=in_specs,
        out_specs=pl.BlockSpec((M, out_c), lambda n: (n, 0)),
        scratch_shapes=[pltpu.VMEM((slab_len, planes), slab_dtype)],   # padded out1
        compiler_params=pltpu.CompilerParams(
            dimension_semantics=("parallel",),
            vmem_limit_bytes=vmem_limit),
    )(*inputs)

    return jnp.transpose(out2d.reshape(N, H, W, out_c), (0, 3, 1, 2))  # NCHW, bf16


def bottleneck_forward(x_nchw, params):
    try:
        out = _bottleneck_forward(x_nchw, params, slab_dtype=jnp.bfloat16)
        return jax.block_until_ready(out)
    except Exception:
        # TODO(synk): some Mosaic builds reject bf16 VMEM slices at odd row offsets;
        # fall back to the previously validated f32 slab (2x slab VMEM, per-tap cast).
        return _bottleneck_forward(x_nchw, params, slab_dtype=jnp.float32)


# ---------------------------------------------------------------------------
# Deterministic parameter init (shapes from Bottleneck.__init__)
# ---------------------------------------------------------------------------

def init_params(key, in_channels, planes, expansion=4, eps=1e-5):
    def bn_affine(k, c):
        k1, k2, k3, k4 = jax.random.split(k, 4)
        gamma = 1.0 + 0.1 * jax.random.normal(k1, (c,), jnp.float32)
        beta = 0.1 * jax.random.normal(k2, (c,), jnp.float32)
        mean = 0.1 * jax.random.normal(k3, (c,), jnp.float32)
        var = 1.0 + 0.1 * jax.random.uniform(k4, (c,), jnp.float32)
        scale = gamma / jnp.sqrt(var + eps)
        shift = beta - mean * scale
        return scale.reshape(1, c), shift.reshape(1, c)

    keys = jax.random.split(key, 8)
    out_c = planes * expansion
    p = {}
    # 1x1 conv weights stored as (Cin, Cout); 3x3 conv as (9, Cin, Cout), k = dy*3+dx
    p['w1'] = 0.1 * jax.random.normal(keys[0], (in_channels, planes), jnp.float32)
    p['scale1'], p['shift1'] = bn_affine(keys[1], planes)
    p['w2'] = 0.1 * jax.random.normal(keys[2], (9, planes, planes), jnp.float32)
    p['scale2'], p['shift2'] = bn_affine(keys[3], planes)
    p['w3'] = 0.1 * jax.random.normal(keys[4], (planes, out_c), jnp.float32)
    p['scale3'], p['shift3'] = bn_affine(keys[5], out_c)
    if in_channels != out_c:
        p['wd'] = 0.1 * jax.random.normal(keys[6], (in_channels, out_c), jnp.float32)
        p['scaled'], p['shiftd'] = bn_affine(keys[7], out_c)
    return p


# ---------------------------------------------------------------------------
# Pure-JAX f32 reference (same math as the PyTorch module) for correctness
# ---------------------------------------------------------------------------

def bottleneck_ref(x_nchw, params):
    hp = jax.lax.Precision.HIGHEST
    N, C, H, W = x_nchw.shape
    x = jnp.transpose(x_nchw, (0, 2, 3, 1))
    x2 = x.reshape(-1, C)

    def pw(a, w, s, b):
        return jnp.dot(a, w, precision=hp) * s + b

    o1 = jnp.maximum(pw(x2, params['w1'], params['scale1'], params['shift1']), 0.0)
    planes = o1.shape[-1]
    xp = jnp.pad(o1.reshape(N, H, W, planes), ((0, 0), (1, 1), (1, 1), (0, 0)))
    acc = jnp.zeros((N * H * W, planes), jnp.float32)
    for dy in range(3):
        for dx in range(3):
            acc = acc + jnp.dot(xp[:, dy:dy + H, dx:dx + W, :].reshape(-1, planes),
                                params['w2'][dy * 3 + dx], precision=hp)
    o2 = jnp.maximum(acc * params['scale2'] + params['shift2'], 0.0)
    identity = pw(x2, params['wd'], params['scaled'], params['shiftd']) if 'wd' in params else x2
    o3 = jnp.maximum(pw(o2, params['w3'], params['scale3'], params['shift3']) + identity, 0.0)
    out_c = o3.shape[-1]
    return jnp.transpose(o3.reshape(N, H, W, out_c), (0, 3, 1, 2))


if __name__ == "__main__":
    key = jax.random.PRNGKey(0)
    k1, k2, k3, k4 = jax.random.split(key, 4)

    # Case 1: channel expansion -> downsample 1x1+bn branch is active.
    N, Cin, H, W = 2, 4, 16, 16
    planes = 4                                  # -> out channels = planes * 4 = 16
    x = jax.random.normal(k1, (N, Cin, H, W), jnp.float32)
    params = init_params(k2, Cin, planes)
    out = jax.block_until_ready(bottleneck_forward(x, params))
    assert out.shape == (N, planes * 4, H, W), out.shape
    ref = bottleneck_ref(x, params)
    np.testing.assert_allclose(np.asarray(out).astype(np.float32),
                               np.asarray(ref), rtol=5e-2, atol=5e-2)

    # Case 2: in_channels == planes * 4 -> pure identity residual path.
    Cin2 = planes * 4
    x2 = jax.random.normal(k3, (N, Cin2, H, W), jnp.float32)
    params2 = init_params(k4, Cin2, planes)
    out2 = jax.block_until_ready(bottleneck_forward(x2, params2))
    assert out2.shape == (N, planes * 4, H, W), out2.shape
    ref2 = bottleneck_ref(x2, params2)
    np.testing.assert_allclose(np.asarray(out2).astype(np.float32),
                               np.asarray(ref2), rtol=5e-2, atol=5e-2)

    print("KERNEL_OK")
</pallas_src>

<mosaic_0001>
module attributes {stable_mosaic.version = 11 : i64} {
  func.func @kernel(%arg0: i32, %arg1: memref<256x4xbf16, #tpu.memory_space<vmem>>, %arg2: memref<4x4xbf16, #tpu.memory_space<vmem>>, %arg3: memref<1x4xf32, #tpu.memory_space<vmem>>, %arg4: memref<9x4x4xbf16, #tpu.memory_space<vmem>>, %arg5: memref<1x4xf32, #tpu.memory_space<vmem>>, %arg6: memref<4x16xbf16, #tpu.memory_space<vmem>>, %arg7: memref<1x16xf32, #tpu.memory_space<vmem>>, %arg8: memref<256x1xbf16, #tpu.memory_space<vmem>>, %arg9: memref<256x1xbf16, #tpu.memory_space<vmem>>, %arg10: memref<4x16xbf16, #tpu.memory_space<vmem>>, %arg11: memref<1x16xf32, #tpu.memory_space<vmem>>, %arg12: memref<256x16xbf16, #tpu.memory_space<vmem>>, %arg13: memref<320x4xbf16, #tpu.memory_space<vmem>>) attributes {dimension_semantics = [#tpu.dimension_semantics<parallel>], iteration_bounds = array<i64: 2>, scalar_prefetch = 0 : i64, scratch_operands = 1 : i64, tpu.core_type = #tpu.core_type<tc>, window_params = [{transform_indices = @transform_0, window_bounds = array<i64: 256, 4>}, {pipeline_mode = #tpu.pipeline_mode<synchronous>, transform_indices = @transform_1, window_bounds = array<i64: 4, 4>}, {pipeline_mode = #tpu.pipeline_mode<synchronous>, transform_indices = @transform_2, window_bounds = array<i64: 1, 4>}, {pipeline_mode = #tpu.pipeline_mode<synchronous>, transform_indices = @transform_3, window_bounds = array<i64: 9, 4, 4>}, {pipeline_mode = #tpu.pipeline_mode<synchronous>, transform_indices = @transform_4, window_bounds = array<i64: 1, 4>}, {pipeline_mode = #tpu.pipeline_mode<synchronous>, transform_indices = @transform_5, window_bounds = array<i64: 4, 16>}, {pipeline_mode = #tpu.pipeline_mode<synchronous>, transform_indices = @transform_6, window_bounds = array<i64: 1, 16>}, {pipeline_mode = #tpu.pipeline_mode<synchronous>, transform_indices = @transform_7, window_bounds = array<i64: 256, 1>}, {pipeline_mode = #tpu.pipeline_mode<synchronous>, transform_indices = @transform_8, window_bounds = array<i64: 256, 1>}, {pipeline_mode = #tpu.pipeline_mode<synchronous>, transform_indices = @transform_9, window_bounds = array<i64: 4, 16>}, {pipeline_mode = #tpu.pipeline_mode<synchronous>, transform_indices = @transform_10, window_bounds = array<i64: 1, 16>}, {transform_indices = @transform_11, window_bounds = array<i64: 256, 16>}]} {
    %c0 = arith.constant 0 : index
    %c0_0 = arith.constant 0 : index
    %0 = vector.load %arg1[%c0, %c0_0] : memref<256x4xbf16, #tpu.memory_space<vmem>>, vector<256x4xbf16>
    %c0_1 = arith.constant 0 : index
    %c0_2 = arith.constant 0 : index
    %1 = vector.load %arg2[%c0_1, %c0_2] : memref<4x4xbf16, #tpu.memory_space<vmem>>, vector<4x4xbf16>
    %cst = arith.constant dense<0.000000e+00> : vector<256x4xf32>
    %2 = tpu.matmul %0, %1, %cst {dimension_numbers = #tpu.dot_dimension_numbers<[1], [0], [0], [1], [0, 0, 1, 1], [], []>} : vector<256x4xbf16>, vector<4x4xbf16>, vector<256x4xf32> -> vector<256x4xf32>
    %c0_3 = arith.constant 0 : index
    %c0_4 = arith.constant 0 : index
    %3 = vector.load %arg3[%c0_3, %c0_4] : memref<1x4xf32, #tpu.memory_space<vmem>>, vector<1x4xf32>
    %4 = vector.broadcast %3 : vector<1x4xf32> to vector<256x4xf32>
    %5 = arith.addf %2, %4 : vector<256x4xf32>
    %cst_5 = arith.constant 0.000000e+00 : f32
    %6 = vector.broadcast %cst_5 : f32 to vector<256x4xf32>
    %7 = arith.maximumf %5, %6 : vector<256x4xf32>
    %8 = arith.truncf %7 : vector<256x4xf32> to vector<256x4xbf16>
    %c32 = arith.constant 32 : index
    %c0_6 = arith.constant 0 : index
    %9 = vector.load %arg13[%c32, %c0_6] : memref<320x4xbf16, #tpu.memory_space<vmem>>, vector<256x4xbf16>
    tpu.vector_store %arg13[%c32, %c0_6], %8 {strides = array<i32>} : memref<320x4xbf16, #tpu.memory_space<vmem>>, vector<256x4xbf16>,
    %cst_7 = arith.constant 0.000000e+00 : bf16
    %10 = vector.broadcast %cst_7 : bf16 to vector<32x4xbf16>
    %c0_8 = arith.constant 0 : index
    %c0_9 = arith.constant 0 : index
    %11 = vector.load %arg13[%c0_8, %c0_9] : memref<320x4xbf16, #tpu.memory_space<vmem>>, vector<32x4xbf16>
    tpu.vector_store %arg13[%c0_8, %c0_9], %10 {strides = array<i32>} : memref<320x4xbf16, #tpu.memory_space<vmem>>, vector<32x4xbf16>,
    %cst_10 = arith.constant 0.000000e+00 : bf16
    %12 = vector.broadcast %cst_10 : bf16 to vector<32x4xbf16>
    %c288 = arith.constant 288 : index
    %c0_11 = arith.constant 0 : index
    %13 = vector.load %arg13[%c288, %c0_11] : memref<320x4xbf16, #tpu.memory_space<vmem>>, vector<32x4xbf16>
    tpu.vector_store %arg13[%c288, %c0_11], %12 {strides = array<i32>} : memref<320x4xbf16, #tpu.memory_space<vmem>>, vector<32x4xbf16>,
    %c0_12 = arith.constant 0 : index
    %c0_13 = arith.constant 0 : index
    %14 = vector.load %arg8[%c0_12, %c0_13] : memref<256x1xbf16, #tpu.memory_space<vmem>>, vector<256x1xbf16>
    %c0_14 = arith.constant 0 : index
    %c0_15 = arith.constant 0 : index
    %15 = vector.load %arg9[%c0_14, %c0_15] : memref<256x1xbf16, #tpu.memory_space<vmem>>, vector<256x1xbf16>
    %c15 = arith.constant 15 : index
    %c0_16 = arith.constant 0 : index
    %16 = vector.load %arg13[%c15, %c0_16] : memref<320x4xbf16, #tpu.memory_space<vmem>>, vector<256x4xbf16>
    %17 = vector.broadcast %14 : vector<256x1xbf16> to vector<256x4xbf16>
    %18 = arith.mulf %16, %17 : vector<256x4xbf16>
    %c0_17 = arith.constant 0 : index
    %c0_18 = arith.constant 0 : index
    %c0_19 = arith.constant 0 : index
    %19 = vector.load %arg4[%c0_17, %c0_18, %c0_19] : memref<9x4x4xbf16, #tpu.memory_space<vmem>>, vector<1x4x4xbf16>
    %20 = vector.shape_cast %19 : vector<1x4x4xbf16> to vector<4x4xbf16>
    %cst_20 = arith.constant dense<0.000000e+00> : vector<256x4xf32>
    %21 = tpu.matmul %18, %20, %cst_20 {dimension_numbers = #tpu.dot_dimension_numbers<[1], [0], [0], [1], [0, 0, 1, 1], [], []>} : vector<256x4xbf16>, vector<4x4xbf16>, vector<256x4xf32> -> vector<256x4xf32>
    %c16 = arith.constant 16 : index
    %c0_21 = arith.constant 0 : index
    %22 = vector.load %arg13[%c16, %c0_21] : memref<320x4xbf16, #tpu.memory_space<vmem>>, vector<256x4xbf16>
    %c1 = arith.constant 1 : index
    %c0_22 = arith.constant 0 : index
    %c0_23 = arith.constant 0 : index
    %23 = vector.load %arg4[%c1, %c0_22, %c0_23] : memref<9x4x4xbf16, #tpu.memory_space<vmem>>, vector<1x4x4xbf16>
    %24 = vector.shape_cast %23 : vector<1x4x4xbf16> to vector<4x4xbf16>
    %cst_24 = arith.constant dense<0.000000e+00> : vector<256x4xf32>
    %25 = tpu.matmul %22, %24, %cst_24 {dimension_numbers = #tpu.dot_dimension_numbers<[1], [0], [0], [1], [0, 0, 1, 1], [], []>} : vector<256x4xbf16>, vector<4x4xbf16>, vector<256x4xf32> -> vector<256x4xf32>
    %26 = arith.addf %21, %25 : vector<256x4xf32>
    %c17 = arith.constant 17 : index
    %c0_25 = arith.constant 0 : index
    %27 = vector.load %arg13[%c17, %c0_25] : memref<320x4xbf16, #tpu.memory_space<vmem>>, vector<256x4xbf16>
    %28 = vector.broadcast %15 : vector<256x1xbf16> to vector<256x4xbf16>
    %29 = arith.mulf %27, %28 : vector<256x4xbf16>
    %c2 = arith.constant 2 : index
    %c0_26 = arith.constant 0 : index
    %c0_27 = arith.constant 0 : index
    %30 = vector.load %arg4[%c2, %c0_26, %c0_27] : memref<9x4x4xbf16, #tpu.memory_space<vmem>>, vector<1x4x4xbf16>
    %31 = vector.shape_cast %30 : vector<1x4x4xbf16> to vector<4x4xbf16>
    %cst_28 = arith.constant dense<0.000000e+00> : vector<256x4xf32>
    %32 = tpu.matmul %29, %31, %cst_28 {dimension_numbers = #tpu.dot_dimension_numbers<[1], [0], [0], [1], [0, 0, 1, 1], [], []>} : vector<256x4xbf16>, vector<4x4xbf16>, vector<256x4xf32> -> vector<256x4xf32>
    %33 = arith.addf %26, %32 : vector<256x4xf32>
    %c31 = arith.constant 31 : index
    %c0_29 = arith.constant 0 : index
    %34 = vector.load %arg13[%c31, %c0_29] : memref<320x4xbf16, #tpu.memory_space<vmem>>, vector<256x4xbf16>
    %35 = vector.broadcast %14 : vector<256x1xbf16> to vector<256x4xbf16>
    %36 = arith.mulf %34, %35 : vector<256x4xbf16>
    %c3 = arith.constant 3 : index
    %c0_30 = arith.constant 0 : index
    %c0_31 = arith.constant 0 : index
    %37 = vector.load %arg4[%c3, %c0_30, %c0_31] : memref<9x4x4xbf16, #tpu.memory_space<vmem>>, vector<1x4x4xbf16>
    %38 = vector.shape_cast %37 : vector<1x4x4xbf16> to vector<4x4xbf16>
    %cst_32 = arith.constant dense<0.000000e+00> : vector<256x4xf32>
    %39 = tpu.matmul %36, %38, %cst_32 {dimension_numbers = #tpu.dot_dimension_numbers<[1], [0], [0], [1], [0, 0, 1, 1], [], []>} : vector<256x4xbf16>, vector<4x4xbf16>, vector<256x4xf32> -> vector<256x4xf32>
    %40 = arith.addf %33, %39 : vector<256x4xf32>
    %c32_33 = arith.constant 32 : index
    %c0_34 = arith.constant 0 : index
    %41 = vector.load %arg13[%c32_33, %c0_34] : memref<320x4xbf16, #tpu.memory_space<vmem>>, vector<256x4xbf16>
    %c4 = arith.constant 4 : index
    %c0_35 = arith.constant 0 : index
    %c0_36 = arith.constant 0 : index
    %42 = vector.load %arg4[%c4, %c0_35, %c0_36] : memref<9x4x4xbf16, #tpu.memory_space<vmem>>, vector<1x4x4xbf16>
    %43 = vector.shape_cast %42 : vector<1x4x4xbf16> to vector<4x4xbf16>
    %cst_37 = arith.constant dense<0.000000e+00> : vector<256x4xf32>
    %44 = tpu.matmul %41, %43, %cst_37 {dimension_numbers = #tpu.dot_dimension_numbers<[1], [0], [0], [1], [0, 0, 1, 1], [], []>} : vector<256x4xbf16>, vector<4x4xbf16>, vector<256x4xf32> -> vector<256x4xf32>
    %45 = arith.addf %40, %44 : vector<256x4xf32>
    %c33 = arith.constant 33 : index
    %c0_38 = arith.constant 0 : index
    %46 = vector.load %arg13[%c33, %c0_38] : memref<320x4xbf16, #tpu.memory_space<vmem>>, vector<256x4xbf16>
    %47 = vector.broadcast %15 : vector<256x1xbf16> to vector<256x4xbf16>
    %48 = arith.mulf %46, %47 : vector<256x4xbf16>
    %c5 = arith.constant 5 : index
    %c0_39 = arith.constant 0 : index
    %c0_40 = arith.constant 0 : index
    %49 = vector.load %arg4[%c5, %c0_39, %c0_40] : memref<9x4x4xbf16, #tpu.memory_space<vmem>>, vector<1x4x4xbf16>
    %50 = vector.shape_cast %49 : vector<1x4x4xbf16> to vector<4x4xbf16>
    %cst_41 = arith.constant dense<0.000000e+00> : vector<256x4xf32>
    %51 = tpu.matmul %48, %50, %cst_41 {dimension_numbers = #tpu.dot_dimension_numbers<[1], [0], [0], [1], [0, 0, 1, 1], [], []>} : vector<256x4xbf16>, vector<4x4xbf16>, vector<256x4xf32> -> vector<256x4xf32>
    %52 = arith.addf %45, %51 : vector<256x4xf32>
    %c47 = arith.constant 47 : index
    %c0_42 = arith.constant 0 : index
    %53 = vector.load %arg13[%c47, %c0_42] : memref<320x4xbf16, #tpu.memory_space<vmem>>, vector<256x4xbf16>
    %54 = vector.broadcast %14 : vector<256x1xbf16> to vector<256x4xbf16>
    %55 = arith.mulf %53, %54 : vector<256x4xbf16>
    %c6 = arith.constant 6 : index
    %c0_43 = arith.constant 0 : index
    %c0_44 = arith.constant 0 : index
    %56 = vector.load %arg4[%c6, %c0_43, %c0_44] : memref<9x4x4xbf16, #tpu.memory_space<vmem>>, vector<1x4x4xbf16>
    %57 = vector.shape_cast %56 : vector<1x4x4xbf16> to vector<4x4xbf16>
    %cst_45 = arith.constant dense<0.000000e+00> : vector<256x4xf32>
    %58 = tpu.matmul %55, %57, %cst_45 {dimension_numbers = #tpu.dot_dimension_numbers<[1], [0], [0], [1], [0, 0, 1, 1], [], []>} : vector<256x4xbf16>, vector<4x4xbf16>, vector<256x4xf32> -> vector<256x4xf32>
    %59 = arith.addf %52, %58 : vector<256x4xf32>
    %c48 = arith.constant 48 : index
    %c0_46 = arith.constant 0 : index
    %60 = vector.load %arg13[%c48, %c0_46] : memref<320x4xbf16, #tpu.memory_space<vmem>>, vector<256x4xbf16>
    %c7 = arith.constant 7 : index
    %c0_47 = arith.constant 0 : index
    %c0_48 = arith.constant 0 : index
    %61 = vector.load %arg4[%c7, %c0_47, %c0_48] : memref<9x4x4xbf16, #tpu.memory_space<vmem>>, vector<1x4x4xbf16>
    %62 = vector.shape_cast %61 : vector<1x4x4xbf16> to vector<4x4xbf16>
    %cst_49 = arith.constant dense<0.000000e+00> : vector<256x4xf32>
    %63 = tpu.matmul %60, %62, %cst_49 {dimension_numbers = #tpu.dot_dimension_numbers<[1], [0], [0], [1], [0, 0, 1, 1], [], []>} : vector<256x4xbf16>, vector<4x4xbf16>, vector<256x4xf32> -> vector<256x4xf32>
    %64 = arith.addf %59, %63 : vector<256x4xf32>
    %c49 = arith.constant 49 : index
    %c0_50 = arith.constant 0 : index
    %65 = vector.load %arg13[%c49, %c0_50] : memref<320x4xbf16, #tpu.memory_space<vmem>>, vector<256x4xbf16>
    %66 = vector.broadcast %15 : vector<256x1xbf16> to vector<256x4xbf16>
    %67 = arith.mulf %65, %66 : vector<256x4xbf16>
    %c8 = arith.constant 8 : index
    %c0_51 = arith.constant 0 : index
    %c0_52 = arith.constant 0 : index
    %68 = vector.load %arg4[%c8, %c0_51, %c0_52] : memref<9x4x4xbf16, #tpu.memory_space<vmem>>, vector<1x4x4xbf16>
    %69 = vector.shape_cast %68 : vector<1x4x4xbf16> to vector<4x4xbf16>
    %cst_53 = arith.constant dense<0.000000e+00> : vector<256x4xf32>
    %70 = tpu.matmul %67, %69, %cst_53 {dimension_numbers = #tpu.dot_dimension_numbers<[1], [0], [0], [1], [0, 0, 1, 1], [], []>} : vector<256x4xbf16>, vector<4x4xbf16>, vector<256x4xf32> -> vector<256x4xf32>
    %71 = arith.addf %64, %70 : vector<256x4xf32>
    %c0_54 = arith.constant 0 : index
    %c0_55 = arith.constant 0 : index
    %72 = vector.load %arg5[%c0_54, %c0_55] : memref<1x4xf32, #tpu.memory_space<vmem>>, vector<1x4xf32>
    %73 = vector.broadcast %72 : vector<1x4xf32> to vector<256x4xf32>
    %74 = arith.addf %71, %73 : vector<256x4xf32>
    %cst_56 = arith.constant 0.000000e+00 : f32
    %75 = vector.broadcast %cst_56 : f32 to vector<256x4xf32>
    %76 = arith.maximumf %74, %75 : vector<256x4xf32>
    %77 = arith.truncf %76 : vector<256x4xf32> to vector<256x4xbf16>
    %c0_57 = arith.constant 0 : index
    %c0_58 = arith.constant 0 : index
    %78 = vector.load %arg6[%c0_57, %c0_58] : memref<4x16xbf16, #tpu.memory_space<vmem>>, vector<4x16xbf16>
    %cst_59 = arith.constant dense<0.000000e+00> : vector<256x16xf32>
    %79 = tpu.matmul %77, %78, %cst_59 {dimension_numbers = #tpu.dot_dimension_numbers<[1], [0], [0], [1], [0, 0, 1, 1], [], []>} : vector<256x4xbf16>, vector<4x16xbf16>, vector<256x16xf32> -> vector<256x16xf32>
    %c0_60 = arith.constant 0 : index
    %c0_61 = arith.constant 0 : index
    %80 = vector.load %arg7[%c0_60, %c0_61] : memref<1x16xf32, #tpu.memory_space<vmem>>, vector<1x16xf32>
    %81 = vector.broadcast %80 : vector<1x16xf32> to vector<256x16xf32>
    %82 = arith.addf %79, %81 : vector<256x16xf32>
    %c0_62 = arith.constant 0 : index
    %c0_63 = arith.constant 0 : index
    %83 = vector.load %arg1[%c0_62, %c0_63] : memref<256x4xbf16, #tpu.memory_space<vmem>>, vector<256x4xbf16>
    %c0_64 = arith.constant 0 : index
    %c0_65 = arith.constant 0 : index
    %84 = vector.load %arg10[%c0_64, %c0_65] : memref<4x16xbf16, #tpu.memory_space<vmem>>, vector<4x16xbf16>
    %cst_66 = arith.constant dense<0.000000e+00> : vector<256x16xf32>
    %85 = tpu.matmul %83, %84, %cst_66 {dimension_numbers = #tpu.dot_dimension_numbers<[1], [0], [0], [1], [0, 0, 1, 1], [], []>} : vector<256x4xbf16>, vector<4x16xbf16>, vector<256x16xf32> -> vector<256x16xf32>
    %c0_67 = arith.constant 0 : index
    %c0_68 = arith.constant 0 : index
    %86 = vector.load %arg11[%c0_67, %c0_68] : memref<1x16xf32, #tpu.memory_space<vmem>>, vector<1x16xf32>
    %87 = vector.broadcast %86 : vector<1x16xf32> to vector<256x16xf32>
    %88 = arith.addf %85, %87 : vector<256x16xf32>
    %89 = arith.addf %82, %88 : vector<256x16xf32>
    %cst_69 = arith.constant 0.000000e+00 : f32
    %90 = vector.broadcast %cst_69 : f32 to vector<256x16xf32>
    %91 = arith.maximumf %89, %90 : vector<256x16xf32>
    %92 = arith.truncf %91 : vector<256x16xf32> to vector<256x16xbf16>
    %c0_70 = arith.constant 0 : index
    %c0_71 = arith.constant 0 : index
    %93 = vector.load %arg12[%c0_70, %c0_71] : memref<256x16xbf16, #tpu.memory_space<vmem>>, vector<256x16xbf16>
    tpu.vector_store %arg12[%c0_70, %c0_71], %92 {strides = array<i32>} : memref<256x16xbf16, #tpu.memory_space<vmem>>, vector<256x16xbf16>,
    return
  }
  func.func @transform_0(%arg0: i32) -> (i32, i32) {
    %c0_i32 = arith.constant 0 : i32
    %c0_i32_0 = arith.constant 0 : i32
    return %arg0, %c0_i32 : i32, i32
  }
  func.func @transform_1(%arg0: i32) -> (i32, i32) {
    %c0_i32 = arith.constant 0 : i32
    %c0_i32_0 = arith.constant 0 : i32
    %c0_i32_1 = arith.constant 0 : i32
    return %c0_i32, %c0_i32_0 : i32, i32
  }
  func.func @transform_2(%arg0: i32) -> (i32, i32) {
    %c0_i32 = arith.constant 0 : i32
    %c0_i32_0 = arith.constant 0 : i32
    %c0_i32_1 = arith.constant 0 : i32
    return %c0_i32, %c0_i32_0 : i32, i32
  }
  func.func @transform_3(%arg0: i32) -> (i32, i32, i32) {
    %c0_i32 = arith.constant 0 : i32
    %c0_i32_0 = arith.constant 0 : i32
    %c0_i32_1 = arith.constant 0 : i32
    %c0_i32_2 = arith.constant 0 : i32
    return %c0_i32, %c0_i32_0, %c0_i32_1 : i32, i32, i32
  }
  func.func @transform_4(%arg0: i32) -> (i32, i32) {
    %c0_i32 = arith.constant 0 : i32
    %c0_i32_0 = arith.constant 0 : i32
    %c0_i32_1 = arith.constant 0 : i32
    return %c0_i32, %c0_i32_0 : i32, i32
  }
  func.func @transform_5(%arg0: i32) -> (i32, i32) {
    %c0_i32 = arith.constant 0 : i32
    %c0_i32_0 = arith.constant 0 : i32
    %c0_i32_1 = arith.constant 0 : i32
    return %c0_i32, %c0_i32_0 : i32, i32
  }
  func.func @transform_6(%arg0: i32) -> (i32, i32) {
    %c0_i32 = arith.constant 0 : i32
    %c0_i32_0 = arith.constant 0 : i32
    %c0_i32_1 = arith.constant 0 : i32
    return %c0_i32, %c0_i32_0 : i32, i32
  }
  func.func @transform_7(%arg0: i32) -> (i32, i32) {
    %c0_i32 = arith.constant 0 : i32
    %c0_i32_0 = arith.constant 0 : i32
    %c0_i32_1 = arith.constant 0 : i32
    return %c0_i32, %c0_i32_0 : i32, i32
  }
  func.func @transform_8(%arg0: i32) -> (i32, i32) {
    %c0_i32 = arith.constant 0 : i32
    %c0_i32_0 = arith.constant 0 : i32
    %c0_i32_1 = arith.constant 0 : i32
    return %c0_i32, %c0_i32_0 : i32, i32
  }
  func.func @transform_9(%arg0: i32) -> (i32, i32) {
    %c0_i32 = arith.constant 0 : i32
    %c0_i32_0 = arith.constant 0 : i32
    %c0_i32_1 = arith.constant 0 : i32
    return %c0_i32, %c0_i32_0 : i32, i32
  }
  func.func @transform_10(%arg0: i32) -> (i32, i32) {
    %c0_i32 = arith.constant 0 : i32
    %c0_i32_0 = arith.constant 0 : i32
    %c0_i32_1 = arith.constant 0 : i32
    return %c0_i32, %c0_i32_0 : i32, i32
  }
  func.func @transform_11(%arg0: i32) -> (i32, i32) {
    %c0_i32 = arith.constant 0 : i32
    %c0_i32_0 = arith.constant 0 : i32
    return %arg0, %c0_i32 : i32, i32
  }
}

module attributes {stable_mosaic.version = 11 : i64} {
  func.func @kernel(%arg0: i32, %arg1: memref<256x4xbf16, #tpu.memory_space<vmem>>, %arg2: memref<4x4xbf16, #tpu.memory_space<vmem>>, %arg3: memref<1x4xf32, #tpu.memory_space<vmem>>, %arg4: memref<9x4x4xbf16, #tpu.memory_space<vmem>>, %arg5: memref<1x4xf32, #tpu.memory_space<vmem>>, %arg6: memref<4x16xbf16, #tpu.memory_space<vmem>>, %arg7: memref<1x16xf32, #tpu.memory_space<vmem>>, %arg8: memref<256x1xbf16, #tpu.memory_space<vmem>>, %arg9: memref<256x1xbf16, #tpu.memory_space<vmem>>, %arg10: memref<4x16xbf16, #tpu.memory_space<vmem>>, %arg11: memref<1x16xf32, #tpu.memory_space<vmem>>, %arg12: memref<256x16xbf16, #tpu.memory_space<vmem>>, %arg13: memref<320x4xf32, #tpu.memory_space<vmem>>) attributes {dimension_semantics = [#tpu.dimension_semantics<parallel>], iteration_bounds = array<i64: 2>, scalar_prefetch = 0 : i64, scratch_operands = 1 : i64, tpu.core_type = #tpu.core_type<tc>, window_params = [{transform_indices = @transform_0, window_bounds = array<i64: 256, 4>}, {pipeline_mode = #tpu.pipeline_mode<synchronous>, transform_indices = @transform_1, window_bounds = array<i64: 4, 4>}, {pipeline_mode = #tpu.pipeline_mode<synchronous>, transform_indices = @transform_2, window_bounds = array<i64: 1, 4>}, {pipeline_mode = #tpu.pipeline_mode<synchronous>, transform_indices = @transform_3, window_bounds = array<i64: 9, 4, 4>}, {pipeline_mode = #tpu.pipeline_mode<synchronous>, transform_indices = @transform_4, window_bounds = array<i64: 1, 4>}, {pipeline_mode = #tpu.pipeline_mode<synchronous>, transform_indices = @transform_5, window_bounds = array<i64: 4, 16>}, {pipeline_mode = #tpu.pipeline_mode<synchronous>, transform_indices = @transform_6, window_bounds = array<i64: 1, 16>}, {pipeline_mode = #tpu.pipeline_mode<synchronous>, transform_indices = @transform_7, window_bounds = array<i64: 256, 1>}, {pipeline_mode = #tpu.pipeline_mode<synchronous>, transform_indices = @transform_8, window_bounds = array<i64: 256, 1>}, {pipeline_mode = #tpu.pipeline_mode<synchronous>, transform_indices = @transform_9, window_bounds = array<i64: 4, 16>}, {pipeline_mode = #tpu.pipeline_mode<synchronous>, transform_indices = @transform_10, window_bounds = array<i64: 1, 16>}, {transform_indices = @transform_11, window_bounds = array<i64: 256, 16>}]} {
    %c0 = arith.constant 0 : index
    %c0_0 = arith.constant 0 : index
    %0 = vector.load %arg1[%c0, %c0_0] : memref<256x4xbf16, #tpu.memory_space<vmem>>, vector<256x4xbf16>
    %c0_1 = arith.constant 0 : index
    %c0_2 = arith.constant 0 : index
    %1 = vector.load %arg2[%c0_1, %c0_2] : memref<4x4xbf16, #tpu.memory_space<vmem>>, vector<4x4xbf16>
    %cst = arith.constant dense<0.000000e+00> : vector<256x4xf32>
    %2 = tpu.matmul %0, %1, %cst {dimension_numbers = #tpu.dot_dimension_numbers<[1], [0], [0], [1], [0, 0, 1, 1], [], []>} : vector<256x4xbf16>, vector<4x4xbf16>, vector<256x4xf32> -> vector<256x4xf32>
    %c0_3 = arith.constant 0 : index
    %c0_4 = arith.constant 0 : index
    %3 = vector.load %arg3[%c0_3, %c0_4] : memref<1x4xf32, #tpu.memory_space<vmem>>, vector<1x4xf32>
    %4 = vector.broadcast %3 : vector<1x4xf32> to vector<256x4xf32>
    %5 = arith.addf %2, %4 : vector<256x4xf32>
    %cst_5 = arith.constant 0.000000e+00 : f32
    %6 = vector.broadcast %cst_5 : f32 to vector<256x4xf32>
    %7 = arith.maximumf %5, %6 : vector<256x4xf32>
    %c32 = arith.constant 32 : index
    %c0_6 = arith.constant 0 : index
    %8 = vector.load %arg13[%c32, %c0_6] : memref<320x4xf32, #tpu.memory_space<vmem>>, vector<256x4xf32>
    tpu.vector_store %arg13[%c32, %c0_6], %7 {strides = array<i32>} : memref<320x4xf32, #tpu.memory_space<vmem>>, vector<256x4xf32>,
    %cst_7 = arith.constant 0.000000e+00 : f32
    %9 = vector.broadcast %cst_7 : f32 to vector<32x4xf32>
    %c0_8 = arith.constant 0 : index
    %c0_9 = arith.constant 0 : index
    %10 = vector.load %arg13[%c0_8, %c0_9] : memref<320x4xf32, #tpu.memory_space<vmem>>, vector<32x4xf32>
    tpu.vector_store %arg13[%c0_8, %c0_9], %9 {strides = array<i32>} : memref<320x4xf32, #tpu.memory_space<vmem>>, vector<32x4xf32>,
    %cst_10 = arith.constant 0.000000e+00 : f32
    %11 = vector.broadcast %cst_10 : f32 to vector<32x4xf32>
    %c288 = arith.constant 288 : index
    %c0_11 = arith.constant 0 : index
    %12 = vector.load %arg13[%c288, %c0_11] : memref<320x4xf32, #tpu.memory_space<vmem>>, vector<32x4xf32>
    tpu.vector_store %arg13[%c288, %c0_11], %11 {strides = array<i32>} : memref<320x4xf32, #tpu.memory_space<vmem>>, vector<32x4xf32>,
    %c0_12 = arith.constant 0 : index
    %c0_13 = arith.constant 0 : index
    %13 = vector.load %arg8[%c0_12, %c0_13] : memref<256x1xbf16, #tpu.memory_space<vmem>>, vector<256x1xbf16>
    %c0_14 = arith.constant 0 : index
    %c0_15 = arith.constant 0 : index
    %14 = vector.load %arg9[%c0_14, %c0_15] : memref<256x1xbf16, #tpu.memory_space<vmem>>, vector<256x1xbf16>
    %c15 = arith.constant 15 : index
    %c0_16 = arith.constant 0 : index
    %15 = vector.load %arg13[%c15, %c0_16] : memref<320x4xf32, #tpu.memory_space<vmem>>, vector<256x4xf32>
    %16 = arith.truncf %15 : vector<256x4xf32> to vector<256x4xbf16>
    %17 = vector.broadcast %13 : vector<256x1xbf16> to vector<256x4xbf16>
    %18 = arith.mulf %16, %17 : vector<256x4xbf16>
    %c0_17 = arith.constant 0 : index
    %c0_18 = arith.constant 0 : index
    %c0_19 = arith.constant 0 : index
    %19 = vector.load %arg4[%c0_17, %c0_18, %c0_19] : memref<9x4x4xbf16, #tpu.memory_space<vmem>>, vector<1x4x4xbf16>
    %20 = vector.shape_cast %19 : vector<1x4x4xbf16> to vector<4x4xbf16>
    %cst_20 = arith.constant dense<0.000000e+00> : vector<256x4xf32>
    %21 = tpu.matmul %18, %20, %cst_20 {dimension_numbers = #tpu.dot_dimension_numbers<[1], [0], [0], [1], [0, 0, 1, 1], [], []>} : vector<256x4xbf16>, vector<4x4xbf16>, vector<256x4xf32> -> vector<256x4xf32>
    %c16 = arith.constant 16 : index
    %c0_21 = arith.constant 0 : index
    %22 = vector.load %arg13[%c16, %c0_21] : memref<320x4xf32, #tpu.memory_space<vmem>>, vector<256x4xf32>
    %23 = arith.truncf %22 : vector<256x4xf32> to vector<256x4xbf16>
    %c1 = arith.constant 1 : index
    %c0_22 = arith.constant 0 : index
    %c0_23 = arith.constant 0 : index
    %24 = vector.load %arg4[%c1, %c0_22, %c0_23] : memref<9x4x4xbf16, #tpu.memory_space<vmem>>, vector<1x4x4xbf16>
    %25 = vector.shape_cast %24 : vector<1x4x4xbf16> to vector<4x4xbf16>
    %cst_24 = arith.constant dense<0.000000e+00> : vector<256x4xf32>
    %26 = tpu.matmul %23, %25, %cst_24 {dimension_numbers = #tpu.dot_dimension_numbers<[1], [0], [0], [1], [0, 0, 1, 1], [], []>} : vector<256x4xbf16>, vector<4x4xbf16>, vector<256x4xf32> -> vector<256x4xf32>
    %27 = arith.addf %21, %26 : vector<256x4xf32>
    %c17 = arith.constant 17 : index
    %c0_25 = arith.constant 0 : index
    %28 = vector.load %arg13[%c17, %c0_25] : memref<320x4xf32, #tpu.memory_space<vmem>>, vector<256x4xf32>
    %29 = arith.truncf %28 : vector<256x4xf32> to vector<256x4xbf16>
    %30 = vector.broadcast %14 : vector<256x1xbf16> to vector<256x4xbf16>
    %31 = arith.mulf %29, %30 : vector<256x4xbf16>
    %c2 = arith.constant 2 : index
    %c0_26 = arith.constant 0 : index
    %c0_27 = arith.constant 0 : index
    %32 = vector.load %arg4[%c2, %c0_26, %c0_27] : memref<9x4x4xbf16, #tpu.memory_space<vmem>>, vector<1x4x4xbf16>
    %33 = vector.shape_cast %32 : vector<1x4x4xbf16> to vector<4x4xbf16>
    %cst_28 = arith.constant dense<0.000000e+00> : vector<256x4xf32>
    %34 = tpu.matmul %31, %33, %cst_28 {dimension_numbers = #tpu.dot_dimension_numbers<[1], [0], [0], [1], [0, 0, 1, 1], [], []>} : vector<256x4xbf16>, vector<4x4xbf16>, vector<256x4xf32> -> vector<256x4xf32>
    %35 = arith.addf %27, %34 : vector<256x4xf32>
    %c31 = arith.constant 31 : index
    %c0_29 = arith.constant 0 : index
    %36 = vector.load %arg13[%c31, %c0_29] : memref<320x4xf32, #tpu.memory_space<vmem>>, vector<256x4xf32>
    %37 = arith.truncf %36 : vector<256x4xf32> to vector<256x4xbf16>
    %38 = vector.broadcast %13 : vector<256x1xbf16> to vector<256x4xbf16>
    %39 = arith.mulf %37, %38 : vector<256x4xbf16>
    %c3 = arith.constant 3 : index
    %c0_30 = arith.constant 0 : index
    %c0_31 = arith.constant 0 : index
    %40 = vector.load %arg4[%c3, %c0_30, %c0_31] : memref<9x4x4xbf16, #tpu.memory_space<vmem>>, vector<1x4x4xbf16>
    %41 = vector.shape_cast %40 : vector<1x4x4xbf16> to vector<4x4xbf16>
    %cst_32 = arith.constant dense<0.000000e+00> : vector<256x4xf32>
    %42 = tpu.matmul %39, %41, %cst_32 {dimension_numbers = #tpu.dot_dimension_numbers<[1], [0], [0], [1], [0, 0, 1, 1], [], []>} : vector<256x4xbf16>, vector<4x4xbf16>, vector<256x4xf32> -> vector<256x4xf32>
    %43 = arith.addf %35, %42 : vector<256x4xf32>
    %c32_33 = arith.constant 32 : index
    %c0_34 = arith.constant 0 : index
    %44 = vector.load %arg13[%c32_33, %c0_34] : memref<320x4xf32, #tpu.memory_space<vmem>>, vector<256x4xf32>
    %45 = arith.truncf %44 : vector<256x4xf32> to vector<256x4xbf16>
    %c4 = arith.constant 4 : index
    %c0_35 = arith.constant 0 : index
    %c0_36 = arith.constant 0 : index
    %46 = vector.load %arg4[%c4, %c0_35, %c0_36] : memref<9x4x4xbf16, #tpu.memory_space<vmem>>, vector<1x4x4xbf16>
    %47 = vector.shape_cast %46 : vector<1x4x4xbf16> to vector<4x4xbf16>
    %cst_37 = arith.constant dense<0.000000e+00> : vector<256x4xf32>
    %48 = tpu.matmul %45, %47, %cst_37 {dimension_numbers = #tpu.dot_dimension_numbers<[1], [0], [0], [1], [0, 0, 1, 1], [], []>} : vector<256x4xbf16>, vector<4x4xbf16>, vector<256x4xf32> -> vector<256x4xf32>
    %49 = arith.addf %43, %48 : vector<256x4xf32>
    %c33 = arith.constant 33 : index
    %c0_38 = arith.constant 0 : index
    %50 = vector.load %arg13[%c33, %c0_38] : memref<320x4xf32, #tpu.memory_space<vmem>>, vector<256x4xf32>
    %51 = arith.truncf %50 : vector<256x4xf32> to vector<256x4xbf16>
    %52 = vector.broadcast %14 : vector<256x1xbf16> to vector<256x4xbf16>
    %53 = arith.mulf %51, %52 : vector<256x4xbf16>
    %c5 = arith.constant 5 : index
    %c0_39 = arith.constant 0 : index
    %c0_40 = arith.constant 0 : index
    %54 = vector.load %arg4[%c5, %c0_39, %c0_40] : memref<9x4x4xbf16, #tpu.memory_space<vmem>>, vector<1x4x4xbf16>
    %55 = vector.shape_cast %54 : vector<1x4x4xbf16> to vector<4x4xbf16>
    %cst_41 = arith.constant dense<0.000000e+00> : vector<256x4xf32>
    %56 = tpu.matmul %53, %55, %cst_41 {dimension_numbers = #tpu.dot_dimension_numbers<[1], [0], [0], [1], [0, 0, 1, 1], [], []>} : vector<256x4xbf16>, vector<4x4xbf16>, vector<256x4xf32> -> vector<256x4xf32>
    %57 = arith.addf %49, %56 : vector<256x4xf32>
    %c47 = arith.constant 47 : index
    %c0_42 = arith.constant 0 : index
    %58 = vector.load %arg13[%c47, %c0_42] : memref<320x4xf32, #tpu.memory_space<vmem>>, vector<256x4xf32>
    %59 = arith.truncf %58 : vector<256x4xf32> to vector<256x4xbf16>
    %60 = vector.broadcast %13 : vector<256x1xbf16> to vector<256x4xbf16>
    %61 = arith.mulf %59, %60 : vector<256x4xbf16>
    %c6 = arith.constant 6 : index
    %c0_43 = arith.constant 0 : index
    %c0_44 = arith.constant 0 : index
    %62 = vector.load %arg4[%c6, %c0_43, %c0_44] : memref<9x4x4xbf16, #tpu.memory_space<vmem>>, vector<1x4x4xbf16>
    %63 = vector.shape_cast %62 : vector<1x4x4xbf16> to vector<4x4xbf16>
    %cst_45 = arith.constant dense<0.000000e+00> : vector<256x4xf32>
    %64 = tpu.matmul %61, %63, %cst_45 {dimension_numbers = #tpu.dot_dimension_numbers<[1], [0], [0], [1], [0, 0, 1, 1], [], []>} : vector<256x4xbf16>, vector<4x4xbf16>, vector<256x4xf32> -> vector<256x4xf32>
    %65 = arith.addf %57, %64 : vector<256x4xf32>
    %c48 = arith.constant 48 : index
    %c0_46 = arith.constant 0 : index
    %66 = vector.load %arg13[%c48, %c0_46] : memref<320x4xf32, #tpu.memory_space<vmem>>, vector<256x4xf32>
    %67 = arith.truncf %66 : vector<256x4xf32> to vector<256x4xbf16>
    %c7 = arith.constant 7 : index
    %c0_47 = arith.constant 0 : index
    %c0_48 = arith.constant 0 : index
    %68 = vector.load %arg4[%c7, %c0_47, %c0_48] : memref<9x4x4xbf16, #tpu.memory_space<vmem>>, vector<1x4x4xbf16>
    %69 = vector.shape_cast %68 : vector<1x4x4xbf16> to vector<4x4xbf16>
    %cst_49 = arith.constant dense<0.000000e+00> : vector<256x4xf32>
    %70 = tpu.matmul %67, %69, %cst_49 {dimension_numbers = #tpu.dot_dimension_numbers<[1], [0], [0], [1], [0, 0, 1, 1], [], []>} : vector<256x4xbf16>, vector<4x4xbf16>, vector<256x4xf32> -> vector<256x4xf32>
    %71 = arith.addf %65, %70 : vector<256x4xf32>
    %c49 = arith.constant 49 : index
    %c0_50 = arith.constant 0 : index
    %72 = vector.load %arg13[%c49, %c0_50] : memref<320x4xf32, #tpu.memory_space<vmem>>, vector<256x4xf32>
    %73 = arith.truncf %72 : vector<256x4xf32> to vector<256x4xbf16>
    %74 = vector.broadcast %14 : vector<256x1xbf16> to vector<256x4xbf16>
    %75 = arith.mulf %73, %74 : vector<256x4xbf16>
    %c8 = arith.constant 8 : index
    %c0_51 = arith.constant 0 : index
    %c0_52 = arith.constant 0 : index
    %76 = vector.load %arg4[%c8, %c0_51, %c0_52] : memref<9x4x4xbf16, #tpu.memory_space<vmem>>, vector<1x4x4xbf16>
    %77 = vector.shape_cast %76 : vector<1x4x4xbf16> to vector<4x4xbf16>
    %cst_53 = arith.constant dense<0.000000e+00> : vector<256x4xf32>
    %78 = tpu.matmul %75, %77, %cst_53 {dimension_numbers = #tpu.dot_dimension_numbers<[1], [0], [0], [1], [0, 0, 1, 1], [], []>} : vector<256x4xbf16>, vector<4x4xbf16>, vector<256x4xf32> -> vector<256x4xf32>
    %79 = arith.addf %71, %78 : vector<256x4xf32>
    %c0_54 = arith.constant 0 : index
    %c0_55 = arith.constant 0 : index
    %80 = vector.load %arg5[%c0_54, %c0_55] : memref<1x4xf32, #tpu.memory_space<vmem>>, vector<1x4xf32>
    %81 = vector.broadcast %80 : vector<1x4xf32> to vector<256x4xf32>
    %82 = arith.addf %79, %81 : vector<256x4xf32>
    %cst_56 = arith.constant 0.000000e+00 : f32
    %83 = vector.broadcast %cst_56 : f32 to vector<256x4xf32>
    %84 = arith.maximumf %82, %83 : vector<256x4xf32>
    %85 = arith.truncf %84 : vector<256x4xf32> to vector<256x4xbf16>
    %c0_57 = arith.constant 0 : index
    %c0_58 = arith.constant 0 : index
    %86 = vector.load %arg6[%c0_57, %c0_58] : memref<4x16xbf16, #tpu.memory_space<vmem>>, vector<4x16xbf16>
    %cst_59 = arith.constant dense<0.000000e+00> : vector<256x16xf32>
    %87 = tpu.matmul %85, %86, %cst_59 {dimension_numbers = #tpu.dot_dimension_numbers<[1], [0], [0], [1], [0, 0, 1, 1], [], []>} : vector<256x4xbf16>, vector<4x16xbf16>, vector<256x16xf32> -> vector<256x16xf32>
    %c0_60 = arith.constant 0 : index
    %c0_61 = arith.constant 0 : index
    %88 = vector.load %arg7[%c0_60, %c0_61] : memref<1x16xf32, #tpu.memory_space<vmem>>, vector<1x16xf32>
    %89 = vector.broadcast %88 : vector<1x16xf32> to vector<256x16xf32>
    %90 = arith.addf %87, %89 : vector<256x16xf32>
    %c0_62 = arith.constant 0 : index
    %c0_63 = arith.constant 0 : index
    %91 = vector.load %arg1[%c0_62, %c0_63] : memref<256x4xbf16, #tpu.memory_space<vmem>>, vector<256x4xbf16>
    %c0_64 = arith.constant 0 : index
    %c0_65 = arith.constant 0 : index
    %92 = vector.load %arg10[%c0_64, %c0_65] : memref<4x16xbf16, #tpu.memory_space<vmem>>, vector<4x16xbf16>
    %cst_66 = arith.constant dense<0.000000e+00> : vector<256x16xf32>
    %93 = tpu.matmul %91, %92, %cst_66 {dimension_numbers = #tpu.dot_dimension_numbers<[1], [0], [0], [1], [0, 0, 1, 1], [], []>} : vector<256x4xbf16>, vector<4x16xbf16>, vector<256x16xf32> -> vector<256x16xf32>
    %c0_67 = arith.constant 0 : index
    %c0_68 = arith.constant 0 : index
    %94 = vector.load %arg11[%c0_67, %c0_68] : memref<1x16xf32, #tpu.memory_space<vmem>>, vector<1x16xf32>
    %95 = vector.broadcast %94 : vector<1x16xf32> to vector<256x16xf32>
    %96 = arith.addf %93, %95 : vector<256x16xf32>
    %97 = arith.addf %90, %96 : vector<256x16xf32>
    %cst_69 = arith.constant 0.000000e+00 : f32
    %98 = vector.broadcast %cst_69 : f32 to vector<256x16xf32>
    %99 = arith.maximumf %97, %98 : vector<256x16xf32>
    %100 = arith.truncf %99 : vector<256x16xf32> to vector<256x16xbf16>
    %c0_70 = arith.constant 0 : index
    %c0_71 = arith.constant 0 : index
    %101 = vector.load %arg12[%c0_70, %c0_71] : memref<256x16xbf16, #tpu.memory_space<vmem>>, vector<256x16xbf16>
    tpu.vector_store %arg12[%c0_70, %c0_71], %100 {strides = array<i32>} : memref<256x16xbf16, #tpu.memory_space<vmem>>, vector<256x16xbf16>,
    return
  }
  func.func @transform_0(%arg0: i32) -> (i32, i32) {
    %c0_i32 = arith.constant 0 : i32
    %c0_i32_0 = arith.constant 0 : i32
    return %arg0, %c0_i32 : i32, i32
  }
  func.func @transform_1(%arg0: i32) -> (i32, i32) {
    %c0_i32 = arith.constant 0 : i32
    %c0_i32_0 = arith.constant 0 : i32
    %c0_i32_1 = arith.constant 0 : i32
    return %c0_i32, %c0_i32_0 : i32, i32
  }
  func.func @transform_2(%arg0: i32) -> (i32, i32) {
    %c0_i32 = arith.constant 0 : i32
    %c0_i32_0 = arith.constant 0 : i32
    %c0_i32_1 = arith.constant 0 : i32
    return %c0_i32, %c0_i32_0 : i32, i32
  }
  func.func @transform_3(%arg0: i32) -> (i32, i32, i32) {
    %c0_i32 = arith.constant 0 : i32
    %c0_i32_0 = arith.constant 0 : i32
    %c0_i32_1 = arith.constant 0 : i32
    %c0_i32_2 = arith.constant 0 : i32
    return %c0_i32, %c0_i32_0, %c0_i32_1 : i32, i32, i32
  }
  func.func @transform_4(%arg0: i32) -> (i32, i32) {
    %c0_i32 = arith.constant 0 : i32
    %c0_i32_0 = arith.constant 0 : i32
    %c0_i32_1 = arith.constant 0 : i32
    return %c0_i32, %c0_i32_0 : i32, i32
  }
  func.func @transform_5(%arg0: i32) -> (i32, i32) {
    %c0_i32 = arith.constant 0 : i32
    %c0_i32_0 = arith.constant 0 : i32
    %c0_i32_1 = arith.constant 0 : i32
    return %c0_i32, %c0_i32_0 : i32, i32
  }
  func.func @transform_6(%arg0: i32) -> (i32, i32) {
    %c0_i32 = arith.constant 0 : i32
    %c0_i32_0 = arith.constant 0 : i32
    %c0_i32_1 = arith.constant 0 : i32
    return %c0_i32, %c0_i32_0 : i32, i32
  }
  func.func @transform_7(%arg0: i32) -> (i32, i32) {
    %c0_i32 = arith.constant 0 : i32
    %c0_i32_0 = arith.constant 0 : i32
    %c0_i32_1 = arith.constant 0 : i32
    return %c0_i32, %c0_i32_0 : i32, i32
  }
  func.func @transform_8(%arg0: i32) -> (i32, i32) {
    %c0_i32 = arith.constant 0 : i32
    %c0_i32_0 = arith.constant 0 : i32
    %c0_i32_1 = arith.constant 0 : i32
    return %c0_i32, %c0_i32_0 : i32, i32
  }
  func.func @transform_9(%arg0: i32) -> (i32, i32) {
    %c0_i32 = arith.constant 0 : i32
    %c0_i32_0 = arith.constant 0 : i32
    %c0_i32_1 = arith.constant 0 : i32
    return %c0_i32, %c0_i32_0 : i32, i32
  }
  func.func @transform_10(%arg0: i32) -> (i32, i32) {
    %c0_i32 = arith.constant 0 : i32
    %c0_i32_0 = arith.constant 0 : i32
    %c0_i32_1 = arith.constant 0 : i32
    return %c0_i32, %c0_i32_0 : i32, i32
  }
  func.func @transform_11(%arg0: i32) -> (i32, i32) {
    %c0_i32 = arith.constant 0 : i32
    %c0_i32_0 = arith.constant 0 : i32
    return %arg0, %c0_i32 : i32, i32
  }
}

</mosaic_0001>

<llo_original>
// kernel: tpu_custom_call.1
$region0: #{tpu_custom_call.1}
  #allocation0 [shape = 'u32[]', space=smem, size = 0x4, offset = 0x4, fixed_abs, tag = 'smem constant byte address 0x4 - core index']
  #allocation1 [shape = 'u32[144,128]{1,0:T(1,128)}', space=vmem, size = 0x12000, scoped, tag = 'internal scratch']
  #allocation2 [shape = 'bf16[320,4]{1,0:T(8,128)(2,1)}', space=vmem, size = 0x14000, scoped, tag = 'scratch operand']
  %s0 = inlined_call_operand.vmem [shape: bf16[512,4], index: 0, kind: input, shape index: {}]
  %s1 = inlined_call_operand.vmem [shape: bf16[4,4], index: 1, kind: input, shape index: {}]
  %s2 = inlined_call_operand.vmem [shape: f32[1,4], index: 2, kind: input, shape index: {}]
  %s3 = inlined_call_operand.vmem [shape: bf16[9,4,4], index: 3, kind: input, shape index: {}]
  %s4 = inlined_call_operand.vmem [shape: f32[1,4], index: 4, kind: input, shape index: {}]
  %s5 = inlined_call_operand.vmem [shape: bf16[4,16], index: 5, kind: input, shape index: {}]
  %s6 = inlined_call_operand.vmem [shape: f32[1,16], index: 6, kind: input, shape index: {}]
  %s7 = inlined_call_operand.vmem [shape: bf16[256,1], index: 7, kind: input, shape index: {}]
  %s8 = inlined_call_operand.vmem [shape: bf16[256,1], index: 8, kind: input, shape index: {}]
  %s9 = inlined_call_operand.vmem [shape: bf16[4,16], index: 9, kind: input, shape index: {}]
  %s10 = inlined_call_operand.vmem [shape: f32[1,16], index: 10, kind: input, shape index: {}]
  %s11 = inlined_call_operand.vmem [shape: bf16[512,16], index: 11, kind: output, shape index: {}]
  %s12 = sld [smem:[#allocation0]]
  $region77: #{tpu_custom_call.1} parent=0
    _
  %s14 = ssub.s32 1, %s12
  %s15 = scalar_select 0, %s14, %s12
  loop: start=0, step=1, limit=4
  $region2: #{tpu_custom_call.1} parent=0 // loop_pre_header
    _
  $region3: #{tpu_custom_call.1} parent=0 // loop_header
    %s17 = sphi 0, %s21
    %p18 = scmp.ge.s32.totalorder %s17, 4
    %s27 = sphi 0, %s29
    %s30 = sphi 0, %s27
    %s31 = sphi 0, %s30
    %s47 = sphi 0, %s31
    %s51 = sphi 0, %s51
    %s53 = sphi 0, %s51
    %s54 = sphi 0, %s53
    %s68 = sphi 0, %s54
    %s72 = sphi 0, %s72
    %s74 = sphi 0, %s72
    %s75 = sphi 0, %s74
    %s89 = sphi 0, %s75
    %s93 = sphi 0, %s93
    %s95 = sphi 0, %s93
    %s96 = sphi 0, %s95
    %s110 = sphi 0, %s96
    %s114 = sphi 0, %s114
    %s116 = sphi 0, %s114
    %s117 = sphi 0, %s116
    %s131 = sphi 0, %s117
    %s135 = sphi 0, %s135
    %s137 = sphi 0, %s135
    %s138 = sphi 0, %s137
    %s152 = sphi 0, %s138
    %s156 = sphi 0, %s156
    %s158 = sphi 0, %s156
    %s159 = sphi 0, %s158
    %s173 = sphi 0, %s159
    %s177 = sphi 0, %s177
    %s179 = sphi 0, %s177
    %s180 = sphi 0, %s179
    %s194 = sphi 0, %s180
    %s198 = sphi 0, %s198
    %s200 = sphi 0, %s198
    %s201 = sphi 0, %s200
    %s215 = sphi 0, %s201
    %s219 = sphi 0, %s219
    %s221 = sphi 0, %s219
    %s222 = sphi 0, %s221
    %s236 = sphi 0, %s222
    %s240 = sphi 0, %s240
    %s242 = sphi 0, %s240
    %s243 = sphi 0, %s242
    %s257 = sphi 0, %s243
    %s263 = sphi 0, %s265
    %s266 = sphi 0, %s263
    %s267 = sphi 0, %s266
    %s283 = sphi 0, %s267
  $region4: #{tpu_custom_call.1} parent=0 // loop_header_branch
    %20 = sbr.rel (%p18) target = $region8
  $region5: #{tpu_custom_call.1} parent=0 // loop_body
    %s22 = ssub.s32 %s17, 1
    %s23 = ssub.s32 %s17, 2
    %s24 = sadd.s32 %s17, 1
    %s25 = ssub.s32 %s17, %s24
    %p26 = scmp.eq.s32.totalorder %s25, 0
    %s28 = sadd.s32 %s27, 1
    %s29 = scalar_select %p26, %s27, %s28
    %p32 = pneg %p26
    %p33 = scmp.eq.s32.totalorder %s17, 1
    %p34 = por %p32, %p33
    %p35 = scmp.ne.s32.totalorder %s27, %s30
    %p36 = scmp.eq.s32.totalorder %s17, 0
    %p37 = por %p35, %p36
    %p38 = scmp.ne.s32.totalorder %s27, %s30
    %p39 = scmp.eq.s32.totalorder %s22, 1
    %p40 = por %p38, %p39
    %p41 = scmp.ne.s32.totalorder %s30, %s31
    %p42 = scmp.eq.s32.totalorder %s22, 0
    %p43 = por %p41, %p42
    %p44 = scmp.ne.s32.totalorder %s30, %s31
    %p45 = scmp.eq.s32.totalorder %s23, 1
    %p46 = por %p44, %p45
    %p48 = scmp.ne.s32.totalorder %s31, %s47
    %p49 = scmp.eq.s32.totalorder %s23, 0
    %p50 = por %p48, %p49
    %s52 = sadd.s32 %s51, 1
    %p55 = scmp.eq.s32.totalorder %s17, 1
    %p56 = scmp.ne.s32.totalorder %s51, %s53
    %p57 = scmp.eq.s32.totalorder %s17, 0
    %p58 = por %p56, %p57
    %p59 = scmp.ne.s32.totalorder %s51, %s53
    %p60 = scmp.eq.s32.totalorder %s22, 1
    %p61 = por %p59, %p60
    %p62 = scmp.ne.s32.totalorder %s53, %s54
    %p63 = scmp.eq.s32.totalorder %s22, 0
    %p64 = por %p62, %p63
    %p65 = scmp.ne.s32.totalorder %s53, %s54
    %p66 = scmp.eq.s32.totalorder %s23, 1
    %p67 = por %p65, %p66
    %p69 = scmp.ne.s32.totalorder %s54, %s68
    %p70 = scmp.eq.s32.totalorder %s23, 0
    %p71 = por %p69, %p70
    %s73 = sadd.s32 %s72, 1
    %p76 = scmp.eq.s32.totalorder %s17, 1
    %p77 = scmp.ne.s32.totalorder %s72, %s74
    %p78 = scmp.eq.s32.totalorder %s17, 0
    %p79 = por %p77, %p78
    %p80 = scmp.ne.s32.totalorder %s72, %s74
    %p81 = scmp.eq.s32.totalorder %s22, 1
    %p82 = por %p80, %p81
    %p83 = scmp.ne.s32.totalorder %s74, %s75
    %p84 = scmp.eq.s32.totalorder %s22, 0
    %p85 = por %p83, %p84
    %p86 = scmp.ne.s32.totalorder %s74, %s75
    %p87 = scmp.eq.s32.totalorder %s23, 1
    %p88 = por %p86, %p87
    %p90 = scmp.ne.s32.totalorder %s75, %s89
    %p91 = scmp.eq.s32.totalorder %s23, 0
    %p92 = por %p90, %p91
    %s94 = sadd.s32 %s93, 1
    %p97 = scmp.eq.s32.totalorder %s17, 1
    %p98 = scmp.ne.s32.totalorder %s93, %s95
    %p99 = scmp.eq.s32.totalorder %s17, 0
    %p100 = por %p98, %p99
    %p101 = scmp.ne.s32.totalorder %s93, %s95
    %p102 = scmp.eq.s32.totalorder %s22, 1
    %p103 = por %p101, %p102
    %p104 = scmp.ne.s32.totalorder %s95, %s96
    %p105 = scmp.eq.s32.totalorder %s22, 0
    %p106 = por %p104, %p105
    %p107 = scmp.ne.s32.totalorder %s95, %s96
    %p108 = scmp.eq.s32.totalorder %s23, 1
    %p109 = por %p107, %p108
    %p111 = scmp.ne.s32.totalorder %s96, %s110
    %p112 = scmp.eq.s32.totalorder %s23, 0
    %p113 = por %p111, %p112
    %s115 = sadd.s32 %s114, 1
    %p118 = scmp.eq.s32.totalorder %s17, 1
    %p119 = scmp.ne.s32.totalorder %s114, %s116
    %p120 = scmp.eq.s32.totalorder %s17, 0
    %p121 = por %p119, %p120
    %p122 = scmp.ne.s32.totalorder %s114, %s116
    %p123 = scmp.eq.s32.totalorder %s22, 1
    %p124 = por %p122, %p123
    %p125 = scmp.ne.s32.totalorder %s116, %s117
    %p126 = scmp.eq.s32.totalorder %s22, 0
    %p127 = por %p125, %p126
    %p128 = scmp.ne.s32.totalorder %s116, %s117
    %p129 = scmp.eq.s32.totalorder %s23, 1
    %p130 = por %p128, %p129
    %p132 = scmp.ne.s32.totalorder %s117, %s131
    %p133 = scmp.eq.s32.totalorder %s23, 0
    %p134 = por %p132, %p133
    %s136 = sadd.s32 %s135, 1
    %p139 = scmp.eq.s32.totalorder %s17, 1
    %p140 = scmp.ne.s32.totalorder %s135, %s137
    %p141 = scmp.eq.s32.totalorder %s17, 0
    %p142 = por %p140, %p141
    %p143 = scmp.ne.s32.totalorder %s135, %s137
    %p144 = scmp.eq.s32.totalorder %s22, 1
    %p145 = por %p143, %p144
    %p146 = scmp.ne.s32.totalorder %s137, %s138
    %p147 = scmp.eq.s32.totalorder %s22, 0
    %p148 = por %p146, %p147
    %p149 = scmp.ne.s32.totalorder %s137, %s138
    %p150 = scmp.eq.s32.totalorder %s23, 1
    %p151 = por %p149, %p150
    %p153 = scmp.ne.s32.totalorder %s138, %s152
    %p154 = scmp.eq.s32.totalorder %s23, 0
    %p155 = por %p153, %p154
    %s157 = sadd.s32 %s156, 1
    %p160 = scmp.eq.s32.totalorder %s17, 1
    %p161 = scmp.ne.s32.totalorder %s156, %s158
    %p162 = scmp.eq.s32.totalorder %s17, 0
    %p163 = por %p161, %p162
    %p164 = scmp.ne.s32.totalorder %s156, %s158
    %p165 = scmp.eq.s32.totalorder %s22, 1
    %p166 = por %p164, %p165
    %p167 = scmp.ne.s32.totalorder %s158, %s159
    %p168 = scmp.eq.s32.totalorder %s22, 0
    %p169 = por %p167, %p168
    %p170 = scmp.ne.s32.totalorder %s158, %s159
    %p171 = scmp.eq.s32.totalorder %s23, 1
    %p172 = por %p170, %p171
    %p174 = scmp.ne.s32.totalorder %s159, %s173
    %p175 = scmp.eq.s32.totalorder %s23, 0
    %p176 = por %p174, %p175
    %s178 = sadd.s32 %s177, 1
    %p181 = scmp.eq.s32.totalorder %s17, 1
    %p182 = scmp.ne.s32.totalorder %s177, %s179
    %p183 = scmp.eq.s32.totalorder %s17, 0
    %p184 = por %p182, %p183
    %p185 = scmp.ne.s32.totalorder %s177, %s179
    %p186 = scmp.eq.s32.totalorder %s22, 1
    %p187 = por %p185, %p186
    %p188 = scmp.ne.s32.totalorder %s179, %s180
    %p189 = scmp.eq.s32.totalorder %s22, 0
    %p190 = por %p188, %p189
    %p191 = scmp.ne.s32.totalorder %s179, %s180
    %p192 = scmp.eq.s32.totalorder %s23, 1
    %p193 = por %p191, %p192
    %p195 = scmp.ne.s32.totalorder %s180, %s194
    %p196 = scmp.eq.s32.totalorder %s23, 0
    %p197 = por %p195, %p196
    %s199 = sadd.s32 %s198, 1
    %p202 = scmp.eq.s32.totalorder %s17, 1
    %p203 = scmp.ne.s32.totalorder %s198, %s200
    %p204 = scmp.eq.s32.totalorder %s17, 0
    %p205 = por %p203, %p204
    %p206 = scmp.ne.s32.totalorder %s198, %s200
    %p207 = scmp.eq.s32.totalorder %s22, 1
    %p208 = por %p206, %p207
    %p209 = scmp.ne.s32.totalorder %s200, %s201
    %p210 = scmp.eq.s32.totalorder %s22, 0
    %p211 = por %p209, %p210
    %p212 = scmp.ne.s32.totalorder %s200, %s201
    %p213 = scmp.eq.s32.totalorder %s23, 1
    %p214 = por %p212, %p213
    %p216 = scmp.ne.s32.totalorder %s201, %s215
    %p217 = scmp.eq.s32.totalorder %s23, 0
    %p218 = por %p216, %p217
    %s220 = sadd.s32 %s219, 1
    %p223 = scmp.eq.s32.totalorder %s17, 1
    %p224 = scmp.ne.s32.totalorder %s219, %s221
    %p225 = scmp.eq.s32.totalorder %s17, 0
    %p226 = por %p224, %p225
    %p227 = scmp.ne.s32.totalorder %s219, %s221
    %p228 = scmp.eq.s32.totalorder %s22, 1
    %p229 = por %p227, %p228
    %p230 = scmp.ne.s32.totalorder %s221, %s222
    %p231 = scmp.eq.s32.totalorder %s22, 0
    %p232 = por %p230, %p231
    %p233 = scmp.ne.s32.totalorder %s221, %s222
    %p234 = scmp.eq.s32.totalorder %s23, 1
    %p235 = por %p233, %p234
    %p237 = scmp.ne.s32.totalorder %s222, %s236
    %p238 = scmp.eq.s32.totalorder %s23, 0
    %p239 = por %p237, %p238
    %s241 = sadd.s32 %s240, 1
    %p244 = scmp.eq.s32.totalorder %s17, 1
    %p245 = scmp.ne.s32.totalorder %s240, %s242
    %p246 = scmp.eq.s32.totalorder %s17, 0
    %p247 = por %p245, %p246
    %p248 = scmp.ne.s32.totalorder %s240, %s242
    %p249 = scmp.eq.s32.totalorder %s22, 1
    %p250 = por %p248, %p249
    %p251 = scmp.ne.s32.totalorder %s242, %s243
    %p252 = scmp.eq.s32.totalorder %s22, 0
    %p253 = por %p251, %p252
    %p254 = scmp.ne.s32.totalorder %s242, %s243
    %p255 = scmp.eq.s32.totalorder %s23, 1
    %p256 = por %p254, %p255
    %p258 = scmp.ne.s32.totalorder %s243, %s257
    %p259 = scmp.eq.s32.totalorder %s23, 0
    %p260 = por %p258, %p259
    %s261 = ssub.s32 %s17, %s24
    %p262 = scmp.eq.s32.totalorder %s261, 0
    %s264 = sadd.s32 %s263, 1
    %s265 = scalar_select %p262, %s263, %s264
    %p268 = pneg %p262
    %p269 = scmp.eq.s32.totalorder %s17, 1
    %p270 = por %p268, %p269
    %p271 = scmp.ne.s32.totalorder %s263, %s266
    %p272 = scmp.eq.s32.totalorder %s17, 0
    %p273 = por %p271, %p272
    %p274 = scmp.ne.s32.totalorder %s263, %s266
    %p275 = scmp.eq.s32.totalorder %s22, 1
    %p276 = por %p274, %p275
    %p277 = scmp.ne.s32.totalorder %s266, %s267
    %p278 = scmp.eq.s32.totalorder %s22, 0
    %p279 = por %p277, %p278
    %p280 = scmp.ne.s32.totalorder %s266, %s267
    %p281 = scmp.eq.s32.totalorder %s23, 1
    %p282 = por %p280, %p281
    %p284 = scmp.ne.s32.totalorder %s267, %s283
    %p285 = scmp.eq.s32.totalorder %s23, 0
    %p286 = por %p284, %p285
    %p287 = scmp.le.s32.totalorder 1, %s17
    %p288 = scmp.lt.s32.totalorder %s17, 3
    %p289 = pnand %p287, %p288
    %p290 = pneg %p289
    // Predicated region
    $region9: #{tpu_custom_call.1} parent=5 // pred_check
      _
    $region10: #{tpu_custom_call.1} parent=5 // pred_check_branch
      %292 = sbr.rel (%p289) target = $region12
    $region11: #{tpu_custom_call.1} parent=5 // pred_region
      %s293 = ssub.s32 %s17, 1
      // Predicated region
      $region13: #{tpu_custom_call.1} parent=11 // pred_check
        %p294 = pneg %p64
      $region14: #{tpu_custom_call.1} parent=11 // pred_check_branch
        %296 = sbr.rel (%p294) target = $region16
      $region15: #{tpu_custom_call.1} parent=11 // pred_region
        _
      $region16: #{tpu_custom_call.1} parent=11 // pred_fallthru
        _
      // Predicated region
      $region17: #{tpu_custom_call.1} parent=11 // pred_check
        %p297 = pneg %p85
      $region18: #{tpu_custom_call.1} parent=11 // pred_check_branch
        %299 = sbr.rel (%p297) target = $region20
      $region19: #{tpu_custom_call.1} parent=11 // pred_region
        _
      $region20: #{tpu_custom_call.1} parent=11 // pred_fallthru
        _
      // Predicated region
      $region21: #{tpu_custom_call.1} parent=11 // pred_check
        %p300 = pneg %p106
      $region22: #{tpu_custom_call.1} parent=11 // pred_check_branch
        %302 = sbr.rel (%p300) target = $region24
      $region23: #{tpu_custom_call.1} parent=11 // pred_region
        _
      $region24: #{tpu_custom_call.1} parent=11 // pred_fallthru
        _
      // Predicated region
      $region25: #{tpu_custom_call.1} parent=11 // pred_check
        %p303 = pneg %p127
      $region26: #{tpu_custom_call.1} parent=11 // pred_check_branch
        %305 = sbr.rel (%p303) target = $region28
      $region27: #{tpu_custom_call.1} parent=11 // pred_region
        _
      $region28: #{tpu_custom_call.1} parent=11 // pred_fallthru
        _
      // Predicated region
      $region29: #{tpu_custom_call.1} parent=11 // pred_check
        %p306 = pneg %p148
      $region30: #{tpu_custom_call.1} parent=11 // pred_check_branch
        %308 = sbr.rel (%p306) target = $region32
      $region31: #{tpu_custom_call.1} parent=11 // pred_region
        _
      $region32: #{tpu_custom_call.1} parent=11 // pred_fallthru
        _
      // Predicated region
      $region33: #{tpu_custom_call.1} parent=11 // pred_check
        %p309 = pneg %p169
      $region34: #{tpu_custom_call.1} parent=11 // pred_check_branch
        %311 = sbr.rel (%p309) target = $region36
      $region35: #{tpu_custom_call.1} parent=11 // pred_region
        _
      $region36: #{tpu_custom_call.1} parent=11 // pred_fallthru
        _
      // Predicated region
      $region37: #{tpu_custom_call.1} parent=11 // pred_check
        %p312 = pneg %p190
      $region38: #{tpu_custom_call.1} parent=11 // pred_check_branch
        %314 = sbr.rel (%p312) target = $region40
      $region39: #{tpu_custom_call.1} parent=11 // pred_region
        _
      $region40: #{tpu_custom_call.1} parent=11 // pred_fallthru
        _
      // Predicated region
      $region41: #{tpu_custom_call.1} parent=11 // pred_check
        %p315 = pneg %p211
      $region42: #{tpu_custom_call.1} parent=11 // pred_check_branch
        %317 = sbr.rel (%p315) target = $region44
      $region43: #{tpu_custom_call.1} parent=11 // pred_region
        _
      $region44: #{tpu_custom_call.1} parent=11 // pred_fallthru
        _
      // Predicated region
      $region45: #{tpu_custom_call.1} parent=11 // pred_check
        %p318 = pneg %p232
      $region46: #{tpu_custom_call.1} parent=11 // pred_check_branch
        %320 = sbr.rel (%p318) target = $region48
      $region47: #{tpu_custom_call.1} parent=11 // pred_region
        _
      $region48: #{tpu_custom_call.1} parent=11 // pred_fallthru
        _
      // Predicated region
      $region49: #{tpu_custom_call.1} parent=11 // pred_check
        %p321 = pneg %p253
      $region50: #{tpu_custom_call.1} parent=11 // pred_check_branch
        %323 = sbr.rel (%p321) target = $region52
      $region51: #{tpu_custom_call.1} parent=11 // pred_region
        _
      $region52: #{tpu_custom_call.1} parent=11 // pred_fallthru
        _
    $region12: #{tpu_custom_call.1} parent=5 // pred_fallthru
      _
    %p324 = scmp.lt.s32.totalorder %s17, 2
    // Predicated region
    $region53: #{tpu_custom_call.1} parent=5 // pred_check
      %p325 = pneg %p324
    $region54: #{tpu_custom_call.1} parent=5 // pred_check_branch
      %327 = sbr.rel (%p325) target = $region56
    $region55: #{tpu_custom_call.1} parent=5 // pred_region
      // Predicated region
      $region57: #{tpu_custom_call.1} parent=55 // pred_check
        %p328 = pneg %p37
      $region58: #{tpu_custom_call.1} parent=55 // pred_check_branch
        %330 = sbr.rel (%p328) target = $region60
      $region59: #{tpu_custom_call.1} parent=55 // pred_region
        %s331 = smul.u32 32, %s17
        %p332 = scmp.lt.s32.totalorder %s331, 63
        %s333 = scalar_select %p332, %s331, 63
        %s334 = smul.addr %s333, 4
        %s335 = scalar_lea.vmem %s0, %s334
        %s336 = smul.u32 32, %s17
      $region60: #{tpu_custom_call.1} parent=55 // pred_fallthru
        _
    $region56: #{tpu_custom_call.1} parent=5 // pred_fallthru
      _
    %p337 = scmp.le.s32.totalorder 1, %s17
    %p338 = scmp.lt.s32.totalorder %s17, 3
    %p339 = pnand %p337, %p338
    %p340 = pneg %p339
    // Predicated region
    $region61: #{tpu_custom_call.1} parent=5 // pred_check
      _
    $region62: #{tpu_custom_call.1} parent=5 // pred_check_branch
      %342 = sbr.rel (%p339) target = $region64
    $region63: #{tpu_custom_call.1} parent=5 // pred_region
      %s343 = ssub.s32 %s17, 1
      %s344 = smul.u32 32, %s22
      %p345 = scmp.lt.s32.totalorder %s344, 63
      %s346 = scalar_select %p345, %s344, 63
      %s347 = smul.addr %s346, 4
      %s348 = scalar_lea.vmem %s0, %s347
      %p349 = pneg %p43
      %p350 = pneg %p40
      %p351 = pneg %p64
      %p352 = pneg %p61
      %p353 = pneg %p85
      %p354 = pneg %p82
      %p355 = pneg %p106
      %p356 = pneg %p103
      %p357 = pneg %p127
      %p358 = pneg %p124
      %p359 = pneg %p148
      %p360 = pneg %p145
      %p361 = pneg %p169
      %p362 = pneg %p166
      %p363 = pneg %p190
      %p364 = pneg %p187
      %p365 = pneg %p211
      %p366 = pneg %p208
      %p367 = pneg %p232
      %p368 = pneg %p229
      %p369 = pneg %p253
      %p370 = pneg %p250
      %p371 = pneg %p279
      %p372 = pneg %p276
      %s373 = smul.u32 32, %s22
      %p374 = scmp.lt.s32.totalorder %s373, 63
      %s375 = scalar_select %p374, %s373, 63
      %s376 = smul.addr %s375, 4
      %s377 = scalar_lea.vmem %s11, %s376
      %s378 = smul.u32 32, %s22
      %p379 = scmp.lt.s32.totalorder %s378, 63
      %s380 = scalar_select %p379, %s378, 63
      %s381 = smul.addr %s380, 4
      %s382 = scalar_lea.vmem %s0, %s381
      %s383 = smul.u32 32, %s22
      %s384 = smul.u32 32, %s22
      %p385 = scmp.lt.s32.totalorder %s384, 63
      %s386 = scalar_select %p385, %s384, 63
      %s387 = smul.addr %s386, 4
      %s388 = scalar_lea.vmem %s11, %s387
      %s389 = smul.u32 32, %s22
      %v391 = vld [vmem:[%s382] sm:$0xf]
      %v392 = vld [vmem:[%s382 + $0x4] sm:$0xf]
      %v393 = vld [vmem:[%s382 + $0x8] sm:$0xf]
      %v394 = vld [vmem:[%s382 + $0xc] sm:$0xf]
      %v395 = vld [vmem:[%s382 + $0x10] sm:$0xf]
      %v396 = vld [vmem:[%s382 + $0x14] sm:$0xf]
      %v397 = vld [vmem:[%s382 + $0x18] sm:$0xf]
      %v398 = vld [vmem:[%s382 + $0x1c] sm:$0xf]
      %v399 = vld [vmem:[%s382 + $0x20] sm:$0xf]
      %v400 = vld [vmem:[%s382 + $0x24] sm:$0xf]
      %v401 = vld [vmem:[%s382 + $0x28] sm:$0xf]
      %v402 = vld [vmem:[%s382 + $0x2c] sm:$0xf]
      %v403 = vld [vmem:[%s382 + $0x30] sm:$0xf]
      %v404 = vld [vmem:[%s382 + $0x34] sm:$0xf]
      %v405 = vld [vmem:[%s382 + $0x38] sm:$0xf]
      %v406 = vld [vmem:[%s382 + $0x3c] sm:$0xf]
      %v407 = vld [vmem:[%s382 + $0x40] sm:$0xf]
      %v408 = vld [vmem:[%s382 + $0x44] sm:$0xf]
      %v409 = vld [vmem:[%s382 + $0x48] sm:$0xf]
      %v410 = vld [vmem:[%s382 + $0x4c] sm:$0xf]
      %v411 = vld [vmem:[%s382 + $0x50] sm:$0xf]
      %v412 = vld [vmem:[%s382 + $0x54] sm:$0xf]
      %v413 = vld [vmem:[%s382 + $0x58] sm:$0xf]
      %v414 = vld [vmem:[%s382 + $0x5c] sm:$0xf]
      %v415 = vld [vmem:[%s382 + $0x60] sm:$0xf]
      %v416 = vld [vmem:[%s382 + $0x64] sm:$0xf]
      %v417 = vld [vmem:[%s382 + $0x68] sm:$0xf]
      %v418 = vld [vmem:[%s382 + $0x6c] sm:$0xf]
      %v419 = vld [vmem:[%s382 + $0x70] sm:$0xf]
      %v420 = vld [vmem:[%s382 + $0x74] sm:$0xf]
      %v421 = vld [vmem:[%s382 + $0x78] sm:$0xf]
      %v422 = vld [vmem:[%s382 + $0x7c] sm:$0xf]
      %v423 = vld [vmem:[%s1] sm:$0x3]
      %v424 = vld [vmem:[%s2] sm:$0x1]
      %v426 = vlaneseq
      %v427 = vshrl.u32 %v426, 7
      %v428 = vsub.s32 0, %v427
      %v429 = vrot.slane %v424, %v428
      %v463 = vunpack.c.l.b16 %v391
      %v464 = vunpack.c.l.b16 %v392
      %v465 = vunpack.c.l.b16 %v393
      %v466 = vunpack.c.l.b16 %v394
      %v467 = vunpack.c.l.b16 %v395
      %v468 = vunpack.c.l.b16 %v396
      %v469 = vunpack.c.l.b16 %v397
      %v470 = vunpack.c.l.b16 %v398
      %v471 = vunpack.c.l.b16 %v399
      %v472 = vunpack.c.l.b16 %v400
      %v473 = vunpack.c.l.b16 %v401
      %v474 = vunpack.c.l.b16 %v402
      %v475 = vunpack.c.l.b16 %v403
      %v476 = vunpack.c.l.b16 %v404
      %v477 = vunpack.c.l.b16 %v405
      %v478 = vunpack.c.l.b16 %v406
      %v479 = vunpack.c.l.b16 %v407
      %v480 = vunpack.c.l.b16 %v408
      %v481 = vunpack.c.l.b16 %v409
      %v482 = vunpack.c.l.b16 %v410
      %v483 = vunpack.c.l.b16 %v411
      %v484 = vunpack.c.l.b16 %v412
      %v485 = vunpack.c.l.b16 %v413
      %v486 = vunpack.c.l.b16 %v414
      %v487 = vunpack.c.l.b16 %v415
      %v488 = vunpack.c.l.b16 %v416
      %v489 = vunpack.c.l.b16 %v417
      %v490 = vunpack.c.l.b16 %v418
      %v491 = vunpack.c.l.b16 %v419
      %v492 = vunpack.c.l.b16 %v420
      %v493 = vunpack.c.l.b16 %v421
      %v494 = vunpack.c.l.b16 %v422
      %v495 = vpack.c.b16 %v464, %v463
      %v496 = vpack.c.b16 %v466, %v465
      %v497 = vpack.c.b16 %v468, %v467
      %v498 = vpack.c.b16 %v470, %v469
      %v499 = vpack.c.b16 %v472, %v471
      %v500 = vpack.c.b16 %v474, %v473
      %v501 = vpack.c.b16 %v476, %v475
      %v502 = vpack.c.b16 %v478, %v477
      %v503 = vpack.c.b16 %v480, %v479
      %v504 = vpack.c.b16 %v482, %v481
      %v505 = vpack.c.b16 %v484, %v483
      %v506 = vpack.c.b16 %v486, %v485
      %v507 = vpack.c.b16 %v488, %v487
      %v508 = vpack.c.b16 %v490, %v489
      %v509 = vpack.c.b16 %v492, %v491
      %v510 = vpack.c.b16 %v494, %v493
      %vm511 = vcmask 31744
      %v513 = vsel %vm511, %v495, 0
      %v516 = vsel %vm511, %v496, 0
      %v519 = vsel %vm511, %v497, 0
      %v522 = vsel %vm511, %v498, 0
      %v525 = vsel %vm511, %v499, 0
      %v528 = vsel %vm511, %v500, 0
      %v531 = vsel %vm511, %v501, 0
      %v534 = vsel %vm511, %v502, 0
      %v537 = vsel %vm511, %v503, 0
      %v540 = vsel %vm511, %v504, 0
      %v543 = vsel %vm511, %v505, 0
      %v546 = vsel %vm511, %v506, 0
      %v549 = vsel %vm511, %v507, 0
      %v552 = vsel %vm511, %v508, 0
      %v555 = vsel %vm511, %v509, 0
      %v558 = vsel %vm511, %v510, 0
      %vm560 = vcmask 1041408
      %v562 = vsel %vm560, %v423, 0
      %564 = vmatprep.subr.bf16.mxu0 0
      %565 = vmatpush1.bf16.msra.mxu0 0
      %566 = vmatprep.subr.bf16.mxu0 0
      %567 = vmatpush1.bf16.msra.mxu0 0
      %568 = vmatprep.subr.bf16.mxu0 0
      %569 = vmatpush1.bf16.msra.mxu0 0
      %570 = vmatprep.subr.bf16.mxu0 0
      %571 = vmatpush1.bf16.msra.mxu0 0
      %572 = vmatprep.subr.bf16.mxu0 0
      %573 = vmatpush1.bf16.msra.mxu0 0
      %574 = vmatprep.subr.bf16.mxu0 0
      %575 = vmatpush1.bf16.msra.mxu0 0
      %576 = vmatprep.subr.bf16.mxu0 0
      %577 = vmatpush1.bf16.msra.mxu0 0
      %578 = vmatprep.subr.bf16.mxu0 0
      %579 = vmatpush1.bf16.msra.mxu0 %v562
      %580 = vmatprep.subr.bf16.mxu0 0
      %581 = vmatpush2.bf16.msra.mxu0 0
      %582 = vmatprep.subr.bf16.mxu0 0
      %583 = vmatpush2.bf16.msra.mxu0 0
      %584 = vmatprep.subr.bf16.mxu0 0
      %585 = vmatpush2.bf16.msra.mxu0 0
      %586 = vmatprep.subr.bf16.mxu0 0
      %587 = vmatpush2.bf16.msra.mxu0 0
      %588 = vmatprep.subr.bf16.mxu0 0
      %589 = vmatpush2.bf16.msra.mxu0 0
      %590 = vmatprep.subr.bf16.mxu0 0
      %591 = vmatpush2.bf16.msra.mxu0 0
      %592 = vmatprep.subr.bf16.mxu0 0
      %593 = vmatpush2.bf16.msra.mxu0 0
      %594 = vmatprep.subr.bf16.mxu0 0
      %595 = vmatpush2.bf16.msra.mxu0 0
      %596 = vmatprep.mubr.bf16.mxu0 0
      %597 = vmatmul.mubr.bf16.gmra.mxu0 %v513
      %v598 = vpop.f32.mrf.mxu0
      %v599 = vadd.f32 %v429, %v598
      %v600 = vpop.f32.mrf.mxu0
      %v601 = vpop.f32.mrf.mxu0
      %v602 = vadd.f32 %v429, %v601
      %v603 = vpop.f32.mrf.mxu0
      %604 = vmatprep.mubr.bf16.mxu0 0
      %605 = vmatmul.mubr.bf16.gmra.mxu0 %v516
      %v606 = vpop.f32.mrf.mxu0
      %v607 = vadd.f32 %v429, %v606
      %v608 = vpop.f32.mrf.mxu0
      %v609 = vpop.f32.mrf.mxu0
      %v610 = vadd.f32 %v429, %v609
      %v611 = vpop.f32.mrf.mxu0
      %612 = vmatprep.mubr.bf16.mxu0 0
      %613 = vmatmul.mubr.bf16.gmra.mxu0 %v519
      %v614 = vpop.f32.mrf.mxu0
      %v615 = vadd.f32 %v429, %v614
      %v616 = vpop.f32.mrf.mxu0
      %v617 = vpop.f32.mrf.mxu0
      %v618 = vadd.f32 %v429, %v617
      %v619 = vpop.f32.mrf.mxu0
      %620 = vmatprep.mubr.bf16.mxu0 0
      %621 = vmatmul.mubr.bf16.gmra.mxu0 %v522
      %v622 = vpop.f32.mrf.mxu0
      %v623 = vadd.f32 %v429, %v622
      %v624 = vpop.f32.mrf.mxu0
      %v625 = vpop.f32.mrf.mxu0
      %v626 = vadd.f32 %v429, %v625
      %v627 = vpop.f32.mrf.mxu0
      %628 = vmatprep.mubr.bf16.mxu0 0
      %629 = vmatmul.mubr.bf16.gmra.mxu0 %v525
      %v630 = vpop.f32.mrf.mxu0
      %v631 = vadd.f32 %v429, %v630
      %v632 = vpop.f32.mrf.mxu0
      %v633 = vpop.f32.mrf.mxu0
      %v634 = vadd.f32 %v429, %v633
      %v635 = vpop.f32.mrf.mxu0
      %636 = vmatprep.mubr.bf16.mxu0 0
      %637 = vmatmul.mubr.bf16.gmra.mxu0 %v528
      %v638 = vpop.f32.mrf.mxu0
      %v639 = vadd.f32 %v429, %v638
      %v640 = vpop.f32.mrf.mxu0
      %v641 = vpop.f32.mrf.mxu0
      %v642 = vadd.f32 %v429, %v641
      %v643 = vpop.f32.mrf.mxu0
      %644 = vmatprep.mubr.bf16.mxu0 0
      %645 = vmatmul.mubr.bf16.gmra.mxu0 %v531
      %v646 = vpop.f32.mrf.mxu0
      %v647 = vadd.f32 %v429, %v646
      %v648 = vpop.f32.mrf.mxu0
      %v649 = vpop.f32.mrf.mxu0
      %v650 = vadd.f32 %v429, %v649
      %v651 = vpop.f32.mrf.mxu0
      %652 = vmatprep.mubr.bf16.mxu0 0
      %653 = vmatmul.mubr.bf16.gmra.mxu0 %v534
      %v654 = vpop.f32.mrf.mxu0
      %v655 = vadd.f32 %v429, %v654
      %v656 = vpop.f32.mrf.mxu0
      %v657 = vpop.f32.mrf.mxu0
      %v658 = vadd.f32 %v429, %v657
      %v659 = vpop.f32.mrf.mxu0
      %660 = vmatprep.mubr.bf16.mxu0 0
      %661 = vmatmul.mubr.bf16.gmra.mxu0 %v537
      %v662 = vpop.f32.mrf.mxu0
      %v663 = vadd.f32 %v429, %v662
      %v664 = vpop.f32.mrf.mxu0
      %v665 = vpop.f32.mrf.mxu0
      %v666 = vadd.f32 %v429, %v665
      %v667 = vpop.f32.mrf.mxu0
      %668 = vmatprep.mubr.bf16.mxu0 0
      %669 = vmatmul.mubr.bf16.gmra.mxu0 %v540
      %v670 = vpop.f32.mrf.mxu0
      %v671 = vadd.f32 %v429, %v670
      %v672 = vpop.f32.mrf.mxu0
      %v673 = vpop.f32.mrf.mxu0
      %v674 = vadd.f32 %v429, %v673
      %v675 = vpop.f32.mrf.mxu0
      %676 = vmatprep.mubr.bf16.mxu0 0
      %677 = vmatmul.mubr.bf16.gmra.mxu0 %v543
      %v678 = vpop.f32.mrf.mxu0
      %v679 = vadd.f32 %v429, %v678
      %v680 = vpop.f32.mrf.mxu0
      %v681 = vpop.f32.mrf.mxu0
      %v682 = vadd.f32 %v429, %v681
      %v683 = vpop.f32.mrf.mxu0
      %684 = vmatprep.mubr.bf16.mxu0 0
      %685 = vmatmul.mubr.bf16.gmra.mxu0 %v546
      %v686 = vpop.f32.mrf.mxu0
      %v687 = vadd.f32 %v429, %v686
      %v688 = vpop.f32.mrf.mxu0
      %v689 = vpop.f32.mrf.mxu0
      %v690 = vadd.f32 %v429, %v689
      %v691 = vpop.f32.mrf.mxu0
      %692 = vmatprep.mubr.bf16.mxu0 0
      %693 = vmatmul.mubr.bf16.gmra.mxu0 %v549
      %v694 = vpop.f32.mrf.mxu0
      %v695 = vadd.f32 %v429, %v694
      %v696 = vpop.f32.mrf.mxu0
      %v697 = vpop.f32.mrf.mxu0
      %v698 = vadd.f32 %v429, %v697
      %v699 = vpop.f32.mrf.mxu0
      %700 = vmatprep.mubr.bf16.mxu0 0
      %701 = vmatmul.mubr.bf16.gmra.mxu0 %v552
      %v702 = vpop.f32.mrf.mxu0
      %v703 = vadd.f32 %v429, %v702
      %v704 = vpop.f32.mrf.mxu0
      %v705 = vpop.f32.mrf.mxu0
      %v706 = vadd.f32 %v429, %v705
      %v707 = vpop.f32.mrf.mxu0
      %708 = vmatprep.mubr.bf16.mxu0 0
      %709 = vmatmul.mubr.bf16.gmra.mxu0 %v555
      %v710 = vpop.f32.mrf.mxu0
      %v711 = vadd.f32 %v429, %v710
      %v712 = vpop.f32.mrf.mxu0
      %v713 = vpop.f32.mrf.mxu0
      %v714 = vadd.f32 %v429, %v713
      %v715 = vpop.f32.mrf.mxu0
      %716 = vmatprep.mubr.bf16.mxu0 0
      %717 = vmatmul.mubr.bf16.gmra.mxu0 %v558
      %v718 = vpop.f32.mrf.mxu0
      %v719 = vadd.f32 %v429, %v718
      %v720 = vpop.f32.mrf.mxu0
      %v721 = vpop.f32.mrf.mxu0
      %v722 = vadd.f32 %v429, %v721
      %v723 = vpop.f32.mrf.mxu0
      %724 = vdwg.mxu0
      %v725 = vmax.f32 %v599, 0.0
      %v726 = vmax.f32 %v602, 0.0
      %v727 = vmax.f32 %v607, 0.0
      %v728 = vmax.f32 %v610, 0.0
      %v729 = vmax.f32 %v615, 0.0
      %v730 = vmax.f32 %v618, 0.0
      %v731 = vmax.f32 %v623, 0.0
      %v732 = vmax.f32 %v626, 0.0
      %v733 = vmax.f32 %v631, 0.0
      %v734 = vmax.f32 %v634, 0.0
      %v735 = vmax.f32 %v639, 0.0
      %v736 = vmax.f32 %v642, 0.0
      %v737 = vmax.f32 %v647, 0.0
      %v738 = vmax.f32 %v650, 0.0
      %v739 = vmax.f32 %v655, 0.0
      %v740 = vmax.f32 %v658, 0.0
      %v741 = vmax.f32 %v663, 0.0
      %v742 = vmax.f32 %v666, 0.0
      %v743 = vmax.f32 %v671, 0.0
      %v744 = vmax.f32 %v674, 0.0
      %v745 = vmax.f32 %v679, 0.0
      %v746 = vmax.f32 %v682, 0.0
      %v747 = vmax.f32 %v687, 0.0
      %v748 = vmax.f32 %v690, 0.0
      %v749 = vmax.f32 %v695, 0.0
      %v750 = vmax.f32 %v698, 0.0
      %v751 = vmax.f32 %v703, 0.0
      %v752 = vmax.f32 %v706, 0.0
      %v753 = vmax.f32 %v711, 0.0
      %v754 = vmax.f32 %v714, 0.0
      %v755 = vmax.f32 %v719, 0.0
      %v756 = vmax.f32 %v722, 0.0
      %v757 = vpack.c.bf16 %v726, %v725
      %v758 = vpack.c.bf16 %v728, %v727
      %v759 = vpack.c.bf16 %v730, %v729
      %v760 = vpack.c.bf16 %v732, %v731
      %v761 = vpack.c.bf16 %v734, %v733
      %v762 = vpack.c.bf16 %v736, %v735
      %v763 = vpack.c.bf16 %v738, %v737
      %v764 = vpack.c.bf16 %v740, %v739
      %v765 = vpack.c.bf16 %v742, %v741
      %v766 = vpack.c.bf16 %v744, %v743
      %v767 = vpack.c.bf16 %v746, %v745
      %v768 = vpack.c.bf16 %v748, %v747
      %v769 = vpack.c.bf16 %v750, %v749
      %v770 = vpack.c.bf16 %v752, %v751
      %v771 = vpack.c.bf16 %v754, %v753
      %v772 = vpack.c.bf16 %v756, %v755
      %v789 = vunpack.c.l.b16 %v757
      %v790 = vunpack.c.h.b16 %v757
      %v791 = vunpack.c.l.b16 %v758
      %v792 = vunpack.c.h.b16 %v758
      %v793 = vunpack.c.l.b16 %v759
      %v794 = vunpack.c.h.b16 %v759
      %v795 = vunpack.c.l.b16 %v760
      %v796 = vunpack.c.h.b16 %v760
      %v797 = vunpack.c.l.b16 %v761
      %v798 = vunpack.c.h.b16 %v761
      %v799 = vunpack.c.l.b16 %v762
      %v800 = vunpack.c.h.b16 %v762
      %v801 = vunpack.c.l.b16 %v763
      %v802 = vunpack.c.h.b16 %v763
      %v803 = vunpack.c.l.b16 %v764
      %v804 = vunpack.c.h.b16 %v764
      %v805 = vunpack.c.l.b16 %v765
      %v806 = vunpack.c.h.b16 %v765
      %v807 = vunpack.c.l.b16 %v766
      %v808 = vunpack.c.h.b16 %v766
      %v809 = vunpack.c.l.b16 %v767
      %v810 = vunpack.c.h.b16 %v767
      %v811 = vunpack.c.l.b16 %v768
      %v812 = vunpack.c.h.b16 %v768
      %v813 = vunpack.c.l.b16 %v769
      %v814 = vunpack.c.h.b16 %v769
      %v815 = vunpack.c.l.b16 %v770
      %v816 = vunpack.c.h.b16 %v770
      %v817 = vunpack.c.l.b16 %v771
      %v818 = vunpack.c.h.b16 %v771
      %v819 = vunpack.c.l.b16 %v772
      %v820 = vunpack.c.h.b16 %v772
      %v821 = vpack.c.b16 %v789, %v789
      %v822 = vpack.c.b16 %v790, %v790
      %v823 = vpack.c.b16 %v791, %v791
      %v824 = vpack.c.b16 %v792, %v792
      %v825 = vpack.c.b16 %v793, %v793
      %v826 = vpack.c.b16 %v794, %v794
      %v827 = vpack.c.b16 %v795, %v795
      %v828 = vpack.c.b16 %v796, %v796
      %v829 = vpack.c.b16 %v797, %v797
      %v830 = vpack.c.b16 %v798, %v798
      %v831 = vpack.c.b16 %v799, %v799
      %v832 = vpack.c.b16 %v800, %v800
      %v833 = vpack.c.b16 %v801, %v801
      %v834 = vpack.c.b16 %v802, %v802
      %v835 = vpack.c.b16 %v803, %v803
      %v836 = vpack.c.b16 %v804, %v804
      %v837 = vpack.c.b16 %v805, %v805
      %v838 = vpack.c.b16 %v806, %v806
      %v839 = vpack.c.b16 %v807, %v807
      %v840 = vpack.c.b16 %v808, %v808
      %v841 = vpack.c.b16 %v809, %v809
      %v842 = vpack.c.b16 %v810, %v810
      %v843 = vpack.c.b16 %v811, %v811
      %v844 = vpack.c.b16 %v812, %v812
      %v845 = vpack.c.b16 %v813, %v813
      %v846 = vpack.c.b16 %v814, %v814
      %v847 = vpack.c.b16 %v815, %v815
      %v848 = vpack.c.b16 %v816, %v816
      %v849 = vpack.c.b16 %v817, %v817
      %v850 = vpack.c.b16 %v818, %v818
      %v851 = vpack.c.b16 %v819, %v819
      %v852 = vpack.c.b16 %v820, %v820
      %vm885 = vcmask 27648
      %886 = vst.msk [vmem:[#allocation2 + $0x10] sm:$0xf] %vm885, %v821
      %887 = vst.msk [vmem:[#allocation2 + $0x14] sm:$0xf] %vm885, %v822
      %888 = vst.msk [vmem:[#allocation2 + $0x18] sm:$0xf] %vm885, %v823
      %889 = vst.msk [vmem:[#allocation2 + $0x1c] sm:$0xf] %vm885, %v824
      %890 = vst.msk [vmem:[#allocation2 + $0x20] sm:$0xf] %vm885, %v825
      %891 = vst.msk [vmem:[#allocation2 + $0x24] sm:$0xf] %vm885, %v826
      %892 = vst.msk [vmem:[#allocation2 + $0x28] sm:$0xf] %vm885, %v827
      %893 = vst.msk [vmem:[#allocation2 + $0x2c] sm:$0xf] %vm885, %v828
      %894 = vst.msk [vmem:[#allocation2 + $0x30] sm:$0xf] %vm885, %v829
      %895 = vst.msk [vmem:[#allocation2 + $0x34] sm:$0xf] %vm885, %v830
      %896 = vst.msk [vmem:[#allocation2 + $0x38] sm:$0xf] %vm885, %v831
      %897 = vst.msk [vmem:[#allocation2 + $0x3c] sm:$0xf] %vm885, %v832
      %898 = vst.msk [vmem:[#allocation2 + $0x40] sm:$0xf] %vm885, %v833
      %899 = vst.msk [vmem:[#allocation2 + $0x44] sm:$0xf] %vm885, %v834
      %900 = vst.msk [vmem:[#allocation2 + $0x48] sm:$0xf] %vm885, %v835
      %901 = vst.msk [vmem:[#allocation2 + $0x4c] sm:$0xf] %vm885, %v836
      %902 = vst.msk [vmem:[#allocation2 + $0x50] sm:$0xf] %vm885, %v837
      %903 = vst.msk [vmem:[#allocation2 + $0x54] sm:$0xf] %vm885, %v838
      %904 = vst.msk [vmem:[#allocation2 + $0x58] sm:$0xf] %vm885, %v839
      %905 = vst.msk [vmem:[#allocation2 + $0x5c] sm:$0xf] %vm885, %v840
      %906 = vst.msk [vmem:[#allocation2 + $0x60] sm:$0xf] %vm885, %v841
      %907 = vst.msk [vmem:[#allocation2 + $0x64] sm:$0xf] %vm885, %v842
      %908 = vst.msk [vmem:[#allocation2 + $0x68] sm:$0xf] %vm885, %v843
      %909 = vst.msk [vmem:[#allocation2 + $0x6c] sm:$0xf] %vm885, %v844
      %910 = vst.msk [vmem:[#allocation2 + $0x70] sm:$0xf] %vm885, %v845
      %911 = vst.msk [vmem:[#allocation2 + $0x74] sm:$0xf] %vm885, %v846
      %912 = vst.msk [vmem:[#allocation2 + $0x78] sm:$0xf] %vm885, %v847
      %913 = vst.msk [vmem:[#allocation2 + $0x7c] sm:$0xf] %vm885, %v848
      %914 = vst.msk [vmem:[#allocation2 + $0x80] sm:$0xf] %vm885, %v849
      %915 = vst.msk [vmem:[#allocation2 + $0x84] sm:$0xf] %vm885, %v850
      %916 = vst.msk [vmem:[#allocation2 + $0x88] sm:$0xf] %vm885, %v851
      %917 = vst.msk [vmem:[#allocation2 + $0x8c] sm:$0xf] %vm885, %v852
      %918 = vst.msk [vmem:[#allocation2] sm:$0xf] %vm885, 0
      %919 = vst.msk [vmem:[#allocation2 + $0x4] sm:$0xf] %vm885, 0
      %920 = vst.msk [vmem:[#allocation2 + $0x8] sm:$0xf] %vm885, 0
      %921 = vst.msk [vmem:[#allocation2 + $0xc] sm:$0xf] %vm885, 0
      %922 = vst.msk [vmem:[#allocation2 + $0x90] sm:$0xf] %vm885, 0
      %923 = vst.msk [vmem:[#allocation2 + $0x94] sm:$0xf] %vm885, 0
      %924 = vst.msk [vmem:[#allocation2 + $0x98] sm:$0xf] %vm885, 0
      %925 = vst.msk [vmem:[#allocation2 + $0x9c] sm:$0xf] %vm885, 0
      %v926 = vld [vmem:[%s7] sm:$0xf]
      %v927 = vld [vmem:[%s7 + $0x4] sm:$0xf]
      %v928 = vld [vmem:[%s7 + $0x8] sm:$0xf]
      %v929 = vld [vmem:[%s7 + $0xc] sm:$0xf]
      %v930 = vld [vmem:[%s7 + $0x10] sm:$0xf]
      %v931 = vld [vmem:[%s7 + $0x14] sm:$0xf]
      %v932 = vld [vmem:[%s7 + $0x18] sm:$0xf]
      %v933 = vld [vmem:[%s7 + $0x1c] sm:$0xf]
      %v934 = vld [vmem:[%s7 + $0x20] sm:$0xf]
      %v935 = vld [vmem:[%s7 + $0x24] sm:$0xf]
      %v936 = vld [vmem:[%s7 + $0x28] sm:$0xf]
      %v937 = vld [vmem:[%s7 + $0x2c] sm:$0xf]
      %v938 = vld [vmem:[%s7 + $0x30] sm:$0xf]
      %v939 = vld [vmem:[%s7 + $0x34] sm:$0xf]
      %v940 = vld [vmem:[%s7 + $0x38] sm:$0xf]
      %v941 = vld [vmem:[%s7 + $0x3c] sm:$0xf]
      %v942 = vld [vmem:[%s7 + $0x40] sm:$0xf]
      %v943 = vld [vmem:[%s7 + $0x44] sm:$0xf]
      %v944 = vld [vmem:[%s7 + $0x48] sm:$0xf]
      %v945 = vld [vmem:[%s7 + $0x4c] sm:$0xf]
      %v946 = vld [vmem:[%s7 + $0x50] sm:$0xf]
      %v947 = vld [vmem:[%s7 + $0x54] sm:$0xf]
      %v948 = vld [vmem:[%s7 + $0x58] sm:$0xf]
      %v949 = vld [vmem:[%s7 + $0x5c] sm:$0xf]
      %v950 = vld [vmem:[%s7 + $0x60] sm:$0xf]
      %v951 = vld [vmem:[%s7 + $0x64] sm:$0xf]
      %v952 = vld [vmem:[%s7 + $0x68] sm:$0xf]
      %v953 = vld [vmem:[%s7 + $0x6c] sm:$0xf]
      %v954 = vld [vmem:[%s7 + $0x70] sm:$0xf]
      %v955 = vld [vmem:[%s7 + $0x74] sm:$0xf]
      %v956 = vld [vmem:[%s7 + $0x78] sm:$0xf]
      %v957 = vld [vmem:[%s7 + $0x7c] sm:$0xf]
      %v958 = vld [vmem:[%s8] sm:$0xf]
      %v959 = vld [vmem:[%s8 + $0x4] sm:$0xf]
      %v960 = vld [vmem:[%s8 + $0x8] sm:$0xf]
      %v961 = vld [vmem:[%s8 + $0xc] sm:$0xf]
      %v962 = vld [vmem:[%s8 + $0x10] sm:$0xf]
      %v963 = vld [vmem:[%s8 + $0x14] sm:$0xf]
      %v964 = vld [vmem:[%s8 + $0x18] sm:$0xf]
      %v965 = vld [vmem:[%s8 + $0x1c] sm:$0xf]
      %v966 = vld [vmem:[%s8 + $0x20] sm:$0xf]
      %v967 = vld [vmem:[%s8 + $0x24] sm:$0xf]
      %v968 = vld [vmem:[%s8 + $0x28] sm:$0xf]
      %v969 = vld [vmem:[%s8 + $0x2c] sm:$0xf]
      %v970 = vld [vmem:[%s8 + $0x30] sm:$0xf]
      %v971 = vld [vmem:[%s8 + $0x34] sm:$0xf]
      %v972 = vld [vmem:[%s8 + $0x38] sm:$0xf]
      %v973 = vld [vmem:[%s8 + $0x3c] sm:$0xf]
      %v974 = vld [vmem:[%s8 + $0x40] sm:$0xf]
      %v975 = vld [vmem:[%s8 + $0x44] sm:$0xf]
      %v976 = vld [vmem:[%s8 + $0x48] sm:$0xf]
      %v977 = vld [vmem:[%s8 + $0x4c] sm:$0xf]
      %v978 = vld [vmem:[%s8 + $0x50] sm:$0xf]
      %v979 = vld [vmem:[%s8 + $0x54] sm:$0xf]
      %v980 = vld [vmem:[%s8 + $0x58] sm:$0xf]
      %v981 = vld [vmem:[%s8 + $0x5c] sm:$0xf]
      %v982 = vld [vmem:[%s8 + $0x60] sm:$0xf]
      %v983 = vld [vmem:[%s8 + $0x64] sm:$0xf]
      %v984 = vld [vmem:[%s8 + $0x68] sm:$0xf]
      %v985 = vld [vmem:[%s8 + $0x6c] sm:$0xf]
      %v986 = vld [vmem:[%s8 + $0x70] sm:$0xf]
      %v987 = vld [vmem:[%s8 + $0x74] sm:$0xf]
      %v988 = vld [vmem:[%s8 + $0x78] sm:$0xf]
      %v989 = vld [vmem:[%s8 + $0x7c] sm:$0xf]
      %v990 = vld [vmem:[#allocation2 + $0x4] sm:$0x8]
      %v991 = vld [vmem:[#allocation2 + $0x8] sm:$0xf]
      %v992 = vld [vmem:[#allocation2 + $0xc] sm:$0xf]
      %v993 = vld [vmem:[#allocation2 + $0x10] sm:$0xf]
      %v994 = vld [vmem:[#allocation2 + $0x14] sm:$0xf]
      %v995 = vld [vmem:[#allocation2 + $0x18] sm:$0xf]
      %v996 = vld [vmem:[#allocation2 + $0x1c] sm:$0xf]
      %v997 = vld [vmem:[#allocation2 + $0x20] sm:$0xf]
      %v998 = vld [vmem:[#allocation2 + $0x24] sm:$0xf]
      %v999 = vld [vmem:[#allocation2 + $0x28] sm:$0xf]
      %v1000 = vld [vmem:[#allocation2 + $0x2c] sm:$0xf]
      %v1001 = vld [vmem:[#allocation2 + $0x30] sm:$0xf]
      %v1002 = vld [vmem:[#allocation2 + $0x34] sm:$0xf]
      %v1003 = vld [vmem:[#allocation2 + $0x38] sm:$0xf]
      %v1004 = vld [vmem:[#allocation2 + $0x3c] sm:$0xf]
      %v1005 = vld [vmem:[#allocation2 + $0x40] sm:$0xf]
      %v1006 = vld [vmem:[#allocation2 + $0x44] sm:$0xf]
      %v1007 = vld [vmem:[#allocation2 + $0x48] sm:$0xf]
      %v1008 = vld [vmem:[#allocation2 + $0x4c] sm:$0xf]
      %v1009 = vld [vmem:[#allocation2 + $0x50] sm:$0xf]
      %v1010 = vld [vmem:[#allocation2 + $0x54] sm:$0xf]
      %v1011 = vld [vmem:[#allocation2 + $0x58] sm:$0xf]
      %v1012 = vld [vmem:[#allocation2 + $0x5c] sm:$0xf]
      %v1013 = vld [vmem:[#allocation2 + $0x60] sm:$0xf]
      %v1014 = vld [vmem:[#allocation2 + $0x64] sm:$0xf]
      %v1015 = vld [vmem:[#allocation2 + $0x68] sm:$0xf]
      %v1016 = vld [vmem:[#allocation2 + $0x6c] sm:$0xf]
      %v1017 = vld [vmem:[#allocation2 + $0x70] sm:$0xf]
      %v1018 = vld [vmem:[#allocation2 + $0x74] sm:$0xf]
      %v1019 = vld [vmem:[#allocation2 + $0x78] sm:$0xf]
      %v1020 = vld [vmem:[#allocation2 + $0x7c] sm:$0xf]
      %v1021 = vld [vmem:[#allocation2 + $0x80] sm:$0xf]
      %v1022 = vld [vmem:[#allocation2 + $0x84] sm:$0xf]
      %1024 = vset.pattern.permute.xlu0 0
      %1025 = vperm.xlu0 %1024, %v926
      %v1026 = vpop.permute.xlu0 %1025
      %v1029 = vunpack.c.l.s4 839922192
      %v1030 = vunpack.c.0.s8 %v1029
      %v1031 = vlaneseq
      %v1032 = vshrl.u32 %v1031, 7
      %v1033 = vsub.s32 %v1030, %v1032
      %v1034 = vrot.slane %v1026, %v1033
      %1036 = vset.pattern.permute.xlu0 0
      %1037 = vperm.xlu0 %1036, %v927
      %v1038 = vpop.permute.xlu0 %1037
      %v1041 = vunpack.c.l.s4 839922192
      %v1042 = vunpack.c.0.s8 %v1041
      %v1043 = vlaneseq
      %v1044 = vshrl.u32 %v1043, 7
      %v1045 = vsub.s32 %v1042, %v1044
      %v1046 = vrot.slane %v1038, %v1045
      %1048 = vset.pattern.permute.xlu0 0
      %1049 = vperm.xlu0 %1048, %v928
      %v1050 = vpop.permute.xlu0 %1049
      %v1053 = vunpack.c.l.s4 839922192
      %v1054 = vunpack.c.0.s8 %v1053
      %v1055 = vlaneseq
      %v1056 = vshrl.u32 %v1055, 7
      %v1057 = vsub.s32 %v1054, %v1056
      %v1058 = vrot.slane %v1050, %v1057
      %1060 = vset.pattern.permute.xlu0 0
      %1061 = vperm.xlu0 %1060, %v929
      %v1062 = vpop.permute.xlu0 %1061
      %v1065 = vunpack.c.l.s4 839922192
      %v1066 = vunpack.c.0.s8 %v1065
      %v1067 = vlaneseq
      %v1068 = vshrl.u32 %v1067, 7
      %v1069 = vsub.s32 %v1066, %v1068
      %v1070 = vrot.slane %v1062, %v1069
      %1072 = vset.pattern.permute.xlu0 0
      %1073 = vperm.xlu0 %1072, %v930
      %v1074 = vpop.permute.xlu0 %1073
      %v1077 = vunpack.c.l.s4 839922192
      %v1078 = vunpack.c.0.s8 %v1077
      %v1079 = vlaneseq
      %v1080 = vshrl.u32 %v1079, 7
      %v1081 = vsub.s32 %v1078, %v1080
      %v1082 = vrot.slane %v1074, %v1081
      %1084 = vset.pattern.permute.xlu0 0
      %1085 = vperm.xlu0 %1084, %v931
      %v1086 = vpop.permute.xlu0 %1085
      %v1089 = vunpack.c.l.s4 839922192
      %v1090 = vunpack.c.0.s8 %v1089
      %v1091 = vlaneseq
      %v1092 = vshrl.u32 %v1091, 7
      %v1093 = vsub.s32 %v1090, %v1092
      %v1094 = vrot.slane %v1086, %v1093
      %1096 = vset.pattern.permute.xlu0 0
      %1097 = vperm.xlu0 %1096, %v932
      %v1098 = vpop.permute.xlu0 %1097
      %v1101 = vunpack.c.l.s4 839922192
      %v1102 = vunpack.c.0.s8 %v1101
      %v1103 = vlaneseq
      %v1104 = vshrl.u32 %v1103, 7
      %v1105 = vsub.s32 %v1102, %v1104
      %v1106 = vrot.slane %v1098, %v1105
      %1108 = vset.pattern.permute.xlu0 0
      %1109 = vperm.xlu0 %1108, %v933
      %v1110 = vpop.permute.xlu0 %1109
      %v1113 = vunpack.c.l.s4 839922192
      %v1114 = vunpack.c.0.s8 %v1113
      %v1115 = vlaneseq
      %v1116 = vshrl.u32 %v1115, 7
      %v1117 = vsub.s32 %v1114, %v1116
      %v1118 = vrot.slane %v1110, %v1117
      %1120 = vset.pattern.permute.xlu0 0
      %1121 = vperm.xlu0 %1120, %v934
      %v1122 = vpop.permute.xlu0 %1121
      %v1125 = vunpack.c.l.s4 839922192
      %v1126 = vunpack.c.0.s8 %v1125
      %v1127 = vlaneseq
      %v1128 = vshrl.u32 %v1127, 7
      %v1129 = vsub.s32 %v1126, %v1128
      %v1130 = vrot.slane %v1122, %v1129
      %1132 = vset.pattern.permute.xlu0 0
      %1133 = vperm.xlu0 %1132, %v935
      %v1134 = vpop.permute.xlu0 %1133
      %v1137 = vunpack.c.l.s4 839922192
      %v1138 = vunpack.c.0.s8 %v1137
      %v1139 = vlaneseq
      %v1140 = vshrl.u32 %v1139, 7
      %v1141 = vsub.s32 %v1138, %v1140
      %v1142 = vrot.slane %v1134, %v1141
      %1144 = vset.pattern.permute.xlu0 0
      %1145 = vperm.xlu0 %1144, %v936
      %v1146 = vpop.permute.xlu0 %1145
      %v1149 = vunpack.c.l.s4 839922192
      %v1150 = vunpack.c.0.s8 %v1149
      %v1151 = vlaneseq
      %v1152 = vshrl.u32 %v1151, 7
      %v1153 = vsub.s32 %v1150, %v1152
      %v1154 = vrot.slane %v1146, %v1153
      %1156 = vset.pattern.permute.xlu0 0
      %1157 = vperm.xlu0 %1156, %v937
      %v1158 = vpop.permute.xlu0 %1157
      %v1161 = vunpack.c.l.s4 839922192
      %v1162 = vunpack.c.0.s8 %v1161
      %v1163 = vlaneseq
      %v1164 = vshrl.u32 %v1163, 7
      %v1165 = vsub.s32 %v1162, %v1164
      %v1166 = vrot.slane %v1158, %v1165
      %1168 = vset.pattern.permute.xlu0 0
      %1169 = vperm.xlu0 %1168, %v938
      %v1170 = vpop.permute.xlu0 %1169
      %v1173 = vunpack.c.l.s4 839922192
      %v1174 = vunpack.c.0.s8 %v1173
      %v1175 = vlaneseq
      %v1176 = vshrl.u32 %v1175, 7
      %v1177 = vsub.s32 %v1174, %v1176
      %v1178 = vrot.slane %v1170, %v1177
      %1180 = vset.pattern.permute.xlu0 0
      %1181 = vperm.xlu0 %1180, %v939
      %v1182 = vpop.permute.xlu0 %1181
      %v1185 = vunpack.c.l.s4 839922192
      %v1186 = vunpack.c.0.s8 %v1185
      %v1187 = vlaneseq
      %v1188 = vshrl.u32 %v1187, 7
      %v1189 = vsub.s32 %v1186, %v1188
      %v1190 = vrot.slane %v1182, %v1189
      %1192 = vset.pattern.permute.xlu0 0
      %1193 = vperm.xlu0 %1192, %v940
      %v1194 = vpop.permute.xlu0 %1193
      %v1197 = vunpack.c.l.s4 839922192
      %v1198 = vunpack.c.0.s8 %v1197
      %v1199 = vlaneseq
      %v1200 = vshrl.u32 %v1199, 7
      %v1201 = vsub.s32 %v1198, %v1200
      %v1202 = vrot.slane %v1194, %v1201
      %1204 = vset.pattern.permute.xlu0 0
      %1205 = vperm.xlu0 %1204, %v941
      %v1206 = vpop.permute.xlu0 %1205
      %v1209 = vunpack.c.l.s4 839922192
      %v1210 = vunpack.c.0.s8 %v1209
      %v1211 = vlaneseq
      %v1212 = vshrl.u32 %v1211, 7
      %v1213 = vsub.s32 %v1210, %v1212
      %v1214 = vrot.slane %v1206, %v1213
      %1216 = vset.pattern.permute.xlu0 0
      %1217 = vperm.xlu0 %1216, %v942
      %v1218 = vpop.permute.xlu0 %1217
      %v1221 = vunpack.c.l.s4 839922192
      %v1222 = vunpack.c.0.s8 %v1221
      %v1223 = vlaneseq
      %v1224 = vshrl.u32 %v1223, 7
      %v1225 = vsub.s32 %v1222, %v1224
      %v1226 = vrot.slane %v1218, %v1225
      %1228 = vset.pattern.permute.xlu0 0
      %1229 = vperm.xlu0 %1228, %v943
      %v1230 = vpop.permute.xlu0 %1229
      %v1233 = vunpack.c.l.s4 839922192
      %v1234 = vunpack.c.0.s8 %v1233
      %v1235 = vlaneseq
      %v1236 = vshrl.u32 %v1235, 7
      %v1237 = vsub.s32 %v1234, %v1236
      %v1238 = vrot.slane %v1230, %v1237
      %1240 = vset.pattern.permute.xlu0 0
      %1241 = vperm.xlu0 %1240, %v944
      %v1242 = vpop.permute.xlu0 %1241
      %v1245 = vunpack.c.l.s4 839922192
      %v1246 = vunpack.c.0.s8 %v1245
      %v1247 = vlaneseq
      %v1248 = vshrl.u32 %v1247, 7
      %v1249 = vsub.s32 %v1246, %v1248
      %v1250 = vrot.slane %v1242, %v1249
      %1252 = vset.pattern.permute.xlu0 0
      %1253 = vperm.xlu0 %1252, %v945
      %v1254 = vpop.permute.xlu0 %1253
      %v1257 = vunpack.c.l.s4 839922192
      %v1258 = vunpack.c.0.s8 %v1257
      %v1259 = vlaneseq
      %v1260 = vshrl.u32 %v1259, 7
      %v1261 = vsub.s32 %v1258, %v1260
      %v1262 = vrot.slane %v1254, %v1261
      %1264 = vset.pattern.permute.xlu0 0
      %1265 = vperm.xlu0 %1264, %v946
      %v1266 = vpop.permute.xlu0 %1265
      %v1269 = vunpack.c.l.s4 839922192
      %v1270 = vunpack.c.0.s8 %v1269
      %v1271 = vlaneseq
      %v1272 = vshrl.u32 %v1271, 7
      %v1273 = vsub.s32 %v1270, %v1272
      %v1274 = vrot.slane %v1266, %v1273
      %1276 = vset.pattern.permute.xlu0 0
      %1277 = vperm.xlu0 %1276, %v947
      %v1278 = vpop.permute.xlu0 %1277
      %v1281 = vunpack.c.l.s4 839922192
      %v1282 = vunpack.c.0.s8 %v1281
      %v1283 = vlaneseq
      %v1284 = vshrl.u32 %v1283, 7
      %v1285 = vsub.s32 %v1282, %v1284
      %v1286 = vrot.slane %v1278, %v1285
      %1288 = vset.pattern.permute.xlu0 0
      %1289 = vperm.xlu0 %1288, %v948
      %v1290 = vpop.permute.xlu0 %1289
      %v1293 = vunpack.c.l.s4 839922192
      %v1294 = vunpack.c.0.s8 %v1293
      %v1295 = vlaneseq
      %v1296 = vshrl.u32 %v1295, 7
      %v1297 = vsub.s32 %v1294, %v1296
      %v1298 = vrot.slane %v1290, %v1297
      %1300 = vset.pattern.permute.xlu0 0
      %1301 = vperm.xlu0 %1300, %v949
      %v1302 = vpop.permute.xlu0 %1301
      %v1305 = vunpack.c.l.s4 839922192
      %v1306 = vunpack.c.0.s8 %v1305
      %v1307 = vlaneseq
      %v1308 = vshrl.u32 %v1307, 7
      %v1309 = vsub.s32 %v1306, %v1308
      %v1310 = vrot.slane %v1302, %v1309
      %1312 = vset.pattern.permute.xlu0 0
      %1313 = vperm.xlu0 %1312, %v950
      %v1314 = vpop.permute.xlu0 %1313
      %v1317 = vunpack.c.l.s4 839922192
      %v1318 = vunpack.c.0.s8 %v1317
      %v1319 = vlaneseq
      %v1320 = vshrl.u32 %v1319, 7
      %v1321 = vsub.s32 %v1318, %v1320
      %v1322 = vrot.slane %v1314, %v1321
      %1324 = vset.pattern.permute.xlu0 0
      %1325 = vperm.xlu0 %1324, %v951
      %v1326 = vpop.permute.xlu0 %1325
      %v1329 = vunpack.c.l.s4 839922192
      %v1330 = vunpack.c.0.s8 %v1329
      %v1331 = vlaneseq
      %v1332 = vshrl.u32 %v1331, 7
      %v1333 = vsub.s32 %v1330, %v1332
      %v1334 = vrot.slane %v1326, %v1333
      %1336 = vset.pattern.permute.xlu0 0
      %1337 = vperm.xlu0 %1336, %v952
      %v1338 = vpop.permute.xlu0 %1337
      %v1341 = vunpack.c.l.s4 839922192
      %v1342 = vunpack.c.0.s8 %v1341
      %v1343 = vlaneseq
      %v1344 = vshrl.u32 %v1343, 7
      %v1345 = vsub.s32 %v1342, %v1344
      %v1346 = vrot.slane %v1338, %v1345
      %1348 = vset.pattern.permute.xlu0 0
      %1349 = vperm.xlu0 %1348, %v953
      %v1350 = vpop.permute.xlu0 %1349
      %v1353 = vunpack.c.l.s4 839922192
      %v1354 = vunpack.c.0.s8 %v1353
      %v1355 = vlaneseq
      %v1356 = vshrl.u32 %v1355, 7
      %v1357 = vsub.s32 %v1354, %v1356
      %v1358 = vrot.slane %v1350, %v1357
      %1360 = vset.pattern.permute.xlu0 0
      %1361 = vperm.xlu0 %1360, %v954
      %v1362 = vpop.permute.xlu0 %1361
      %v1365 = vunpack.c.l.s4 839922192
      %v1366 = vunpack.c.0.s8 %v1365
      %v1367 = vlaneseq
      %v1368 = vshrl.u32 %v1367, 7
      %v1369 = vsub.s32 %v1366, %v1368
      %v1370 = vrot.slane %v1362, %v1369
      %1372 = vset.pattern.permute.xlu0 0
      %1373 = vperm.xlu0 %1372, %v955
      %v1374 = vpop.permute.xlu0 %1373
      %v1377 = vunpack.c.l.s4 839922192
      %v1378 = vunpack.c.0.s8 %v1377
      %v1379 = vlaneseq
      %v1380 = vshrl.u32 %v1379, 7
      %v1381 = vsub.s32 %v1378, %v1380
      %v1382 = vrot.slane %v1374, %v1381
      %1384 = vset.pattern.permute.xlu0 0
      %1385 = vperm.xlu0 %1384, %v956
      %v1386 = vpop.permute.xlu0 %1385
      %v1389 = vunpack.c.l.s4 839922192
      %v1390 = vunpack.c.0.s8 %v1389
      %v1391 = vlaneseq
      %v1392 = vshrl.u32 %v1391, 7
      %v1393 = vsub.s32 %v1390, %v1392
      %v1394 = vrot.slane %v1386, %v1393
      %1396 = vset.pattern.permute.xlu0 0
      %1397 = vperm.xlu0 %1396, %v957
      %v1398 = vpop.permute.xlu0 %1397
      %v1401 = vunpack.c.l.s4 839922192
      %v1402 = vunpack.c.0.s8 %v1401
      %v1403 = vlaneseq
      %v1404 = vshrl.u32 %v1403, 7
      %v1405 = vsub.s32 %v1402, %v1404
      %v1406 = vrot.slane %v1398, %v1405
      %vm1407 = vsmask.f32 3328
      %vm1408 = vsmask.f32 7440
      %vm1409 = vmor %vm1407, %vm1408
      %v1411 = vshll.u32 %v1034, 16
      %v1413 = vrot.slane %v1411, 5
      %v1414 = vshrl.u32 %v1034, 16
      %v1416 = vrot.slane %v1414, 4
      %v1417 = vor.u32 %v1416, %v1413
      %v1418 = vrot.slane %v1417, 4
      %v1420 = vshll.u32 %v1046, 16
      %v1422 = vrot.slane %v1420, 5
      %v1423 = vsel %vm1409, %v1418, %v1422
      %v1424 = vshrl.u32 %v1046, 16
      %v1426 = vrot.slane %v1424, 4
      %v1427 = vor.u32 %v1426, %v1422
      %v1428 = vrot.slane %v1427, 4
      %v1430 = vshll.u32 %v1058, 16
      %v1432 = vrot.slane %v1430, 5
      %v1433 = vsel %vm1409, %v1428, %v1432
      %v1434 = vshrl.u32 %v1058, 16
      %v1436 = vrot.slane %v1434, 4
      %v1437 = vor.u32 %v1436, %v1432
      %v1438 = vrot.slane %v1437, 4
      %v1440 = vshll.u32 %v1070, 16
      %v1442 = vrot.slane %v1440, 5
      %v1443 = vsel %vm1409, %v1438, %v1442
      %v1444 = vshrl.u32 %v1070, 16
      %v1446 = vrot.slane %v1444, 4
      %v1447 = vor.u32 %v1446, %v1442
      %v1448 = vrot.slane %v1447, 4
      %v1450 = vshll.u32 %v1082, 16
      %v1452 = vrot.slane %v1450, 5
      %v1453 = vsel %vm1409, %v1448, %v1452
      %v1454 = vshrl.u32 %v1082, 16
      %v1456 = vrot.slane %v1454, 4
      %v1457 = vor.u32 %v1456, %v1452
      %v1458 = vrot.slane %v1457, 4
      %v1460 = vshll.u32 %v1094, 16
      %v1462 = vrot.slane %v1460, 5
      %v1463 = vsel %vm1409, %v1458, %v1462
      %v1464 = vshrl.u32 %v1094, 16
      %v1466 = vrot.slane %v1464, 4
      %v1467 = vor.u32 %v1466, %v1462
      %v1468 = vrot.slane %v1467, 4
      %v1470 = vshll.u32 %v1106, 16
      %v1472 = vrot.slane %v1470, 5
      %v1473 = vsel %vm1409, %v1468, %v1472
      %v1474 = vshrl.u32 %v1106, 16
      %v1476 = vrot.slane %v1474, 4
      %v1477 = vor.u32 %v1476, %v1472
      %v1478 = vrot.slane %v1477, 4
      %v1480 = vshll.u32 %v1118, 16
      %v1482 = vrot.slane %v1480, 5
      %v1483 = vsel %vm1409, %v1478, %v1482
      %v1484 = vshrl.u32 %v1118, 16
      %v1486 = vrot.slane %v1484, 4
      %v1487 = vor.u32 %v1486, %v1482
      %v1488 = vrot.slane %v1487, 4
      %v1490 = vshll.u32 %v1130, 16
      %v1492 = vrot.slane %v1490, 5
      %v1493 = vsel %vm1409, %v1488, %v1492
      %v1494 = vshrl.u32 %v1130, 16
      %v1496 = vrot.slane %v1494, 4
      %v1497 = vor.u32 %v1496, %v1492
      %v1498 = vrot.slane %v1497, 4
      %v1500 = vshll.u32 %v1142, 16
      %v1502 = vrot.slane %v1500, 5
      %v1503 = vsel %vm1409, %v1498, %v1502
      %v1504 = vshrl.u32 %v1142, 16
      %v1506 = vrot.slane %v1504, 4
      %v1507 = vor.u32 %v1506, %v1502
      %v1508 = vrot.slane %v1507, 4
      %v1510 = vshll.u32 %v1154, 16
      %v1512 = vrot.slane %v1510, 5
      %v1513 = vsel %vm1409, %v1508, %v1512
      %v1514 = vshrl.u32 %v1154, 16
      %v1516 = vrot.slane %v1514, 4
      %v1517 = vor.u32 %v1516, %v1512
      %v1518 = vrot.slane %v1517, 4
      %v1520 = vshll.u32 %v1166, 16
      %v1522 = vrot.slane %v1520, 5
      %v1523 = vsel %vm1409, %v1518, %v1522
      %v1524 = vshrl.u32 %v1166, 16
      %v1526 = vrot.slane %v1524, 4
      %v1527 = vor.u32 %v1526, %v1522
      %v1528 = vrot.slane %v1527, 4
      %v1530 = vshll.u32 %v1178, 16
      %v1532 = vrot.slane %v1530, 5
      %v1533 = vsel %vm1409, %v1528, %v1532
      %v1534 = vshrl.u32 %v1178, 16
      %v1536 = vrot.slane %v1534, 4
      %v1537 = vor.u32 %v1536, %v1532
      %v1538 = vrot.slane %v1537, 4
      %v1540 = vshll.u32 %v1190, 16
      %v1542 = vrot.slane %v1540, 5
      %v1543 = vsel %vm1409, %v1538, %v1542
      %v1544 = vshrl.u32 %v1190, 16
      %v1546 = vrot.slane %v1544, 4
      %v1547 = vor.u32 %v1546, %v1542
      %v1548 = vrot.slane %v1547, 4
      %v1550 = vshll.u32 %v1202, 16
      %v1552 = vrot.slane %v1550, 5
      %v1553 = vsel %vm1409, %v1548, %v1552
      %v1554 = vshrl.u32 %v1202, 16
      %v1556 = vrot.slane %v1554, 4
      %v1557 = vor.u32 %v1556, %v1552
      %v1558 = vrot.slane %v1557, 4
      %v1560 = vshll.u32 %v1214, 16
      %v1562 = vrot.slane %v1560, 5
      %v1563 = vsel %vm1409, %v1558, %v1562
      %v1564 = vshrl.u32 %v1214, 16
      %v1566 = vrot.slane %v1564, 4
      %v1567 = vor.u32 %v1566, %v1562
      %v1568 = vrot.slane %v1567, 4
      %v1570 = vshll.u32 %v1226, 16
      %v1572 = vrot.slane %v1570, 5
      %v1573 = vsel %vm1409, %v1568, %v1572
      %v1574 = vshrl.u32 %v1226, 16
      %v1576 = vrot.slane %v1574, 4
      %v1577 = vor.u32 %v1576, %v1572
      %v1578 = vrot.slane %v1577, 4
      %v1580 = vshll.u32 %v1238, 16
      %v1582 = vrot.slane %v1580, 5
      %v1583 = vsel %vm1409, %v1578, %v1582
      %v1584 = vshrl.u32 %v1238, 16
      %v1586 = vrot.slane %v1584, 4
      %v1587 = vor.u32 %v1586, %v1582
      %v1588 = vrot.slane %v1587, 4
      %v1590 = vshll.u32 %v1250, 16
      %v1592 = vrot.slane %v1590, 5
      %v1593 = vsel %vm1409, %v1588, %v1592
      %v1594 = vshrl.u32 %v1250, 16
      %v1596 = vrot.slane %v1594, 4
      %v1597 = vor.u32 %v1596, %v1592
      %v1598 = vrot.slane %v1597, 4
      %v1600 = vshll.u32 %v1262, 16
      %v1602 = vrot.slane %v1600, 5
      %v1603 = vsel %vm1409, %v1598, %v1602
      %v1604 = vshrl.u32 %v1262, 16
      %v1606 = vrot.slane %v1604, 4
      %v1607 = vor.u32 %v1606, %v1602
      %v1608 = vrot.slane %v1607, 4
      %v1610 = vshll.u32 %v1274, 16
      %v1612 = vrot.slane %v1610, 5
      %v1613 = vsel %vm1409, %v1608, %v1612
      %v1614 = vshrl.u32 %v1274, 16
      %v1616 = vrot.slane %v1614, 4
      %v1617 = vor.u32 %v1616, %v1612
      %v1618 = vrot.slane %v1617, 4
      %v1620 = vshll.u32 %v1286, 16
      %v1622 = vrot.slane %v1620, 5
      %v1623 = vsel %vm1409, %v1618, %v1622
      %v1624 = vshrl.u32 %v1286, 16
      %v1626 = vrot.slane %v1624, 4
      %v1627 = vor.u32 %v1626, %v1622
      %v1628 = vrot.slane %v1627, 4
      %v1630 = vshll.u32 %v1298, 16
      %v1632 = vrot.slane %v1630, 5
      %v1633 = vsel %vm1409, %v1628, %v1632
      %v1634 = vshrl.u32 %v1298, 16
      %v1636 = vrot.slane %v1634, 4
      %v1637 = vor.u32 %v1636, %v1632
      %v1638 = vrot.slane %v1637, 4
      %v1640 = vshll.u32 %v1310, 16
      %v1642 = vrot.slane %v1640, 5
      %v1643 = vsel %vm1409, %v1638, %v1642
      %v1644 = vshrl.u32 %v1310, 16
      %v1646 = vrot.slane %v1644, 4
      %v1647 = vor.u32 %v1646, %v1642
      %v1648 = vrot.slane %v1647, 4
      %v1650 = vshll.u32 %v1322, 16
      %v1652 = vrot.slane %v1650, 5
      %v1653 = vsel %vm1409, %v1648, %v1652
      %v1654 = vshrl.u32 %v1322, 16
      %v1656 = vrot.slane %v1654, 4
      %v1657 = vor.u32 %v1656, %v1652
      %v1658 = vrot.slane %v1657, 4
      %v1660 = vshll.u32 %v1334, 16
      %v1662 = vrot.slane %v1660, 5
      %v1663 = vsel %vm1409, %v1658, %v1662
      %v1664 = vshrl.u32 %v1334, 16
      %v1666 = vrot.slane %v1664, 4
      %v1667 = vor.u32 %v1666, %v1662
      %v1668 = vrot.slane %v1667, 4
      %v1670 = vshll.u32 %v1346, 16
      %v1672 = vrot.slane %v1670, 5
      %v1673 = vsel %vm1409, %v1668, %v1672
      %v1674 = vshrl.u32 %v1346, 16
      %v1676 = vrot.slane %v1674, 4
      %v1677 = vor.u32 %v1676, %v1672
      %v1678 = vrot.slane %v1677, 4
      %v1680 = vshll.u32 %v1358, 16
      %v1682 = vrot.slane %v1680, 5
      %v1683 = vsel %vm1409, %v1678, %v1682
      %v1684 = vshrl.u32 %v1358, 16
      %v1686 = vrot.slane %v1684, 4
      %v1687 = vor.u32 %v1686, %v1682
      %v1688 = vrot.slane %v1687, 4
      %v1690 = vshll.u32 %v1370, 16
      %v1692 = vrot.slane %v1690, 5
      %v1693 = vsel %vm1409, %v1688, %v1692
      %v1694 = vshrl.u32 %v1370, 16
      %v1696 = vrot.slane %v1694, 4
      %v1697 = vor.u32 %v1696, %v1692
      %v1698 = vrot.slane %v1697, 4
      %v1700 = vshll.u32 %v1382, 16
      %v1702 = vrot.slane %v1700, 5
      %v1703 = vsel %vm1409, %v1698, %v1702
      %v1704 = vshrl.u32 %v1382, 16
      %v1706 = vrot.slane %v1704, 4
      %v1707 = vor.u32 %v1706, %v1702
      %v1708 = vrot.slane %v1707, 4
      %v1710 = vshll.u32 %v1394, 16
      %v1712 = vrot.slane %v1710, 5
      %v1713 = vsel %vm1409, %v1708, %v1712
      %v1714 = vshrl.u32 %v1394, 16
      %v1716 = vrot.slane %v1714, 4
      %v1717 = vor.u32 %v1716, %v1712
      %v1718 = vrot.slane %v1717, 4
      %v1720 = vshll.u32 %v1406, 16
      %v1722 = vrot.slane %v1720, 5
      %v1723 = vsel %vm1409, %v1718, %v1722
      %v1724 = vshrl.u32 %v1406, 16
      %v1726 = vrot.slane %v1724, 4
      %v1727 = vor.u32 %v1726, %v1722
      %v1728 = vrot.slane %v1727, 4
      %v1762 = vmul.bf16 %v990, %v1413
      %v1763 = vmul.bf16 %v991, %v1423
      %v1764 = vmul.bf16 %v992, %v1433
      %v1765 = vmul.bf16 %v993, %v1443
      %v1766 = vmul.bf16 %v994, %v1453
      %v1767 = vmul.bf16 %v995, %v1463
      %v1768 = vmul.bf16 %v996, %v1473
      %v1769 = vmul.bf16 %v997, %v1483
      %v1770 = vmul.bf16 %v998, %v1493
      %v1771 = vmul.bf16 %v999, %v1503
      %v1772 = vmul.bf16 %v1000, %v1513
      %v1773 = vmul.bf16 %v1001, %v1523
      %v1774 = vmul.bf16 %v1002, %v1533
      %v1775 = vmul.bf16 %v1003, %v1543
      %v1776 = vmul.bf16 %v1004, %v1553
      %v1777 = vmul.bf16 %v1005, %v1563
      %v1778 = vmul.bf16 %v1006, %v1573
      %v1779 = vmul.bf16 %v1007, %v1583
      %v1780 = vmul.bf16 %v1008, %v1593
      %v1781 = vmul.bf16 %v1009, %v1603
      %v1782 = vmul.bf16 %v1010, %v1613
      %v1783 = vmul.bf16 %v1011, %v1623
      %v1784 = vmul.bf16 %v1012, %v1633
      %v1785 = vmul.bf16 %v1013, %v1643
      %v1786 = vmul.bf16 %v1014, %v1653
      %v1787 = vmul.bf16 %v1015, %v1663
      %v1788 = vmul.bf16 %v1016, %v1673
      %v1789 = vmul.bf16 %v1017, %v1683
      %v1790 = vmul.bf16 %v1018, %v1693
      %v1791 = vmul.bf16 %v1019, %v1703
      %v1792 = vmul.bf16 %v1020, %v1713
      %v1793 = vmul.bf16 %v1021, %v1723
      %v1794 = vmul.bf16 %v1022, %v1728
      %v1795 = vld [vmem:[%s3] sm:$0x3]
      %s1796 = scalar_lea.vmem %s3, 2
      %v1797 = vld [vmem:[%s1796] sm:$0x3]
      %v1830 = vunpack.c.l.b16 %v991
      %v1831 = vunpack.c.l.b16 %v992
      %v1832 = vunpack.c.l.b16 %v993
      %v1833 = vunpack.c.l.b16 %v994
      %v1834 = vunpack.c.l.b16 %v995
      %v1835 = vunpack.c.l.b16 %v996
      %v1836 = vunpack.c.l.b16 %v997
      %v1837 = vunpack.c.l.b16 %v998
      %v1838 = vunpack.c.l.b16 %v999
      %v1839 = vunpack.c.l.b16 %v1000
      %v1840 = vunpack.c.l.b16 %v1001
      %v1841 = vunpack.c.l.b16 %v1002
      %v1842 = vunpack.c.l.b16 %v1003
      %v1843 = vunpack.c.l.b16 %v1004
      %v1844 = vunpack.c.l.b16 %v1005
      %v1845 = vunpack.c.l.b16 %v1006
      %v1846 = vunpack.c.l.b16 %v1007
      %v1847 = vunpack.c.l.b16 %v1008
      %v1848 = vunpack.c.l.b16 %v1009
      %v1849 = vunpack.c.l.b16 %v1010
      %v1850 = vunpack.c.l.b16 %v1011
      %v1851 = vunpack.c.l.b16 %v1012
      %v1852 = vunpack.c.l.b16 %v1013
      %v1853 = vunpack.c.l.b16 %v1014
      %v1854 = vunpack.c.l.b16 %v1015
      %v1855 = vunpack.c.l.b16 %v1016
      %v1856 = vunpack.c.l.b16 %v1017
      %v1857 = vunpack.c.l.b16 %v1018
      %v1858 = vunpack.c.l.b16 %v1019
      %v1859 = vunpack.c.l.b16 %v1020
      %v1860 = vunpack.c.l.b16 %v1021
      %v1861 = vunpack.c.l.b16 %v1022
      %v1862 = vpack.c.b16 %v1831, %v1830
      %v1863 = vpack.c.b16 %v1833, %v1832
      %v1864 = vpack.c.b16 %v1835, %v1834
      %v1865 = vpack.c.b16 %v1837, %v1836
      %v1866 = vpack.c.b16 %v1839, %v1838
      %v1867 = vpack.c.b16 %v1841, %v1840
      %v1868 = vpack.c.b16 %v1843, %v1842
      %v1869 = vpack.c.b16 %v1845, %v1844
      %v1870 = vpack.c.b16 %v1847, %v1846
      %v1871 = vpack.c.b16 %v1849, %v1848
      %v1872 = vpack.c.b16 %v1851, %v1850
      %v1873 = vpack.c.b16 %v1853, %v1852
      %v1874 = vpack.c.b16 %v1855, %v1854
      %v1875 = vpack.c.b16 %v1857, %v1856
      %v1876 = vpack.c.b16 %v1859, %v1858
      %v1877 = vpack.c.b16 %v1861, %v1860
      %v1879 = vsel %vm511, %v1862, 0
      %v1882 = vsel %vm511, %v1863, 0
      %v1885 = vsel %vm511, %v1864, 0
      %v1888 = vsel %vm511, %v1865, 0
      %v1891 = vsel %vm511, %v1866, 0
      %v1894 = vsel %vm511, %v1867, 0
      %v1897 = vsel %vm511, %v1868, 0
      %v1900 = vsel %vm511, %v1869, 0
      %v1903 = vsel %vm511, %v1870, 0
      %v1906 = vsel %vm511, %v1871, 0
      %v1909 = vsel %vm511, %v1872, 0
      %v1912 = vsel %vm511, %v1873, 0
      %v1915 = vsel %vm511, %v1874, 0
      %v1918 = vsel %vm511, %v1875, 0
      %v1921 = vsel %vm511, %v1876, 0
      %v1924 = vsel %vm511, %v1877, 0
      %v1927 = vsel %vm560, %v1797, 0
      %1929 = vmatprep.subr.bf16.mxu0 0
      %1930 = vmatpush1.bf16.msra.mxu0 0
      %1931 = vmatprep.subr.bf16.mxu0 0
      %1932 = vmatpush1.bf16.msra.mxu0 0
      %1933 = vmatprep.subr.bf16.mxu0 0
      %1934 = vmatpush1.bf16.msra.mxu0 0
      %1935 = vmatprep.subr.bf16.mxu0 0
      %1936 = vmatpush1.bf16.msra.mxu0 0
      %1937 = vmatprep.subr.bf16.mxu0 0
      %1938 = vmatpush1.bf16.msra.mxu0 0
      %1939 = vmatprep.subr.bf16.mxu0 0
      %1940 = vmatpush1.bf16.msra.mxu0 0
      %1941 = vmatprep.subr.bf16.mxu0 0
      %1942 = vmatpush1.bf16.msra.mxu0 0
      %1943 = vmatprep.subr.bf16.mxu0 0
      %1944 = vmatpush1.bf16.msra.mxu0 %v1927
      %1945 = vmatprep.subr.bf16.mxu0 0
      %1946 = vmatpush2.bf16.msra.mxu0 0
      %1947 = vmatprep.subr.bf16.mxu0 0
      %1948 = vmatpush2.bf16.msra.mxu0 0
      %1949 = vmatprep.subr.bf16.mxu0 0
      %1950 = vmatpush2.bf16.msra.mxu0 0
      %1951 = vmatprep.subr.bf16.mxu0 0
      %1952 = vmatpush2.bf16.msra.mxu0 0
      %1953 = vmatprep.subr.bf16.mxu0 0
      %1954 = vmatpush2.bf16.msra.mxu0 0
      %1955 = vmatprep.subr.bf16.mxu0 0
      %1956 = vmatpush2.bf16.msra.mxu0 0
      %1957 = vmatprep.subr.bf16.mxu0 0
      %1958 = vmatpush2.bf16.msra.mxu0 0
      %1959 = vmatprep.subr.bf16.mxu0 0
      %1960 = vmatpush2.bf16.msra.mxu0 0
      %1961 = vmatprep.mubr.bf16.mxu0 0
      %1962 = vmatmul.mubr.bf16.gmra.mxu0 %v1879
      %v1963 = vpop.f32.mrf.mxu0
      %v1964 = vadd.f32 0.0, %v1963
      %v1965 = vpop.f32.mrf.mxu0
      %v1966 = vpop.f32.mrf.mxu0
      %v1967 = vadd.f32 0.0, %v1966
      %v1968 = vpop.f32.mrf.mxu0
      %1969 = vmatprep.mubr.bf16.mxu0 0
      %1970 = vmatmul.mubr.bf16.gmra.mxu0 %v1882
      %v1971 = vpop.f32.mrf.mxu0
      %v1972 = vadd.f32 0.0, %v1971
      %v1973 = vpop.f32.mrf.mxu0
      %v1974 = vpop.f32.mrf.mxu0
      %v1975 = vadd.f32 0.0, %v1974
      %v1976 = vpop.f32.mrf.mxu0
      %1977 = vmatprep.mubr.bf16.mxu0 0
      %1978 = vmatmul.mubr.bf16.gmra.mxu0 %v1885
      %v1979 = vpop.f32.mrf.mxu0
      %v1980 = vadd.f32 0.0, %v1979
      %v1981 = vpop.f32.mrf.mxu0
      %v1982 = vpop.f32.mrf.mxu0
      %v1983 = vadd.f32 0.0, %v1982
      %v1984 = vpop.f32.mrf.mxu0
      %1985 = vmatprep.mubr.bf16.mxu0 0
      %1986 = vmatmul.mubr.bf16.gmra.mxu0 %v1888
      %v1987 = vpop.f32.mrf.mxu0
      %v1988 = vadd.f32 0.0, %v1987
      %v1989 = vpop.f32.mrf.mxu0
      %v1990 = vpop.f32.mrf.mxu0
      %v1991 = vadd.f32 0.0, %v1990
      %v1992 = vpop.f32.mrf.mxu0
      %1993 = vmatprep.mubr.bf16.mxu0 0
      %1994 = vmatmul.mubr.bf16.gmra.mxu0 %v1891
      %v1995 = vpop.f32.mrf.mxu0
      %v1996 = vadd.f32 0.0, %v1995
      %v1997 = vpop.f32.mrf.mxu0
      %v1998 = vpop.f32.mrf.mxu0
      %v1999 = vadd.f32 0.0, %v1998
      %v2000 = vpop.f32.mrf.mxu0
      %2001 = vmatprep.mubr.bf16.mxu0 0
      %2002 = vmatmul.mubr.bf16.gmra.mxu0 %v1894
      %v2003 = vpop.f32.mrf.mxu0
      %v2004 = vadd.f32 0.0, %v2003
      %v2005 = vpop.f32.mrf.mxu0
      %v2006 = vpop.f32.mrf.mxu0
      %v2007 = vadd.f32 0.0, %v2006
      %v2008 = vpop.f32.mrf.mxu0
      %2009 = vmatprep.mubr.bf16.mxu0 0
      %2010 = vmatmul.mubr.bf16.gmra.mxu0 %v1897
      %v2011 = vpop.f32.mrf.mxu0
      %v2012 = vadd.f32 0.0, %v2011
      %v2013 = vpop.f32.mrf.mxu0
      %v2014 = vpop.f32.mrf.mxu0
      %v2015 = vadd.f32 0.0, %v2014
      %v2016 = vpop.f32.mrf.mxu0
      %2017 = vmatprep.mubr.bf16.mxu0 0
      %2018 = vmatmul.mubr.bf16.gmra.mxu0 %v1900
      %v2019 = vpop.f32.mrf.mxu0
      %v2020 = vadd.f32 0.0, %v2019
      %v2021 = vpop.f32.mrf.mxu0
      %v2022 = vpop.f32.mrf.mxu0
      %v2023 = vadd.f32 0.0, %v2022
      %v2024 = vpop.f32.mrf.mxu0
      %2025 = vmatprep.mubr.bf16.mxu0 0
      %2026 = vmatmul.mubr.bf16.gmra.mxu0 %v1903
      %v2027 = vpop.f32.mrf.mxu0
      %v2028 = vadd.f32 0.0, %v2027
      %v2029 = vpop.f32.mrf.mxu0
      %v2030 = vpop.f32.mrf.mxu0
      %v2031 = vadd.f32 0.0, %v2030
      %v2032 = vpop.f32.mrf.mxu0
      %2033 = vmatprep.mubr.bf16.mxu0 0
      %2034 = vmatmul.mubr.bf16.gmra.mxu0 %v1906
      %v2035 = vpop.f32.mrf.mxu0
      %v2036 = vadd.f32 0.0, %v2035
      %v2037 = vpop.f32.mrf.mxu0
      %v2038 = vpop.f32.mrf.mxu0
      %v2039 = vadd.f32 0.0, %v2038
      %v2040 = vpop.f32.mrf.mxu0
      %2041 = vmatprep.mubr.bf16.mxu0 0
      %2042 = vmatmul.mubr.bf16.gmra.mxu0 %v1909
      %v2043 = vpop.f32.mrf.mxu0
      %v2044 = vadd.f32 0.0, %v2043
      %v2045 = vpop.f32.mrf.mxu0
      %v2046 = vpop.f32.mrf.mxu0
      %v2047 = vadd.f32 0.0, %v2046
      %v2048 = vpop.f32.mrf.mxu0
      %2049 = vmatprep.mubr.bf16.mxu0 0
      %2050 = vmatmul.mubr.bf16.gmra.mxu0 %v1912
      %v2051 = vpop.f32.mrf.mxu0
      %v2052 = vadd.f32 0.0, %v2051
      %v2053 = vpop.f32.mrf.mxu0
      %v2054 = vpop.f32.mrf.mxu0
      %v2055 = vadd.f32 0.0, %v2054
      %v2056 = vpop.f32.mrf.mxu0
      %2057 = vmatprep.mubr.bf16.mxu0 0
      %2058 = vmatmul.mubr.bf16.gmra.mxu0 %v1915
      %v2059 = vpop.f32.mrf.mxu0
      %v2060 = vadd.f32 0.0, %v2059
      %v2061 = vpop.f32.mrf.mxu0
      %v2062 = vpop.f32.mrf.mxu0
      %v2063 = vadd.f32 0.0, %v2062
      %v2064 = vpop.f32.mrf.mxu0
      %2065 = vmatprep.mubr.bf16.mxu0 0
      %2066 = vmatmul.mubr.bf16.gmra.mxu0 %v1918
      %v2067 = vpop.f32.mrf.mxu0
      %v2068 = vadd.f32 0.0, %v2067
      %v2069 = vpop.f32.mrf.mxu0
      %v2070 = vpop.f32.mrf.mxu0
      %v2071 = vadd.f32 0.0, %v2070
      %v2072 = vpop.f32.mrf.mxu0
      %2073 = vmatprep.mubr.bf16.mxu0 0
      %2074 = vmatmul.mubr.bf16.gmra.mxu0 %v1921
      %v2075 = vpop.f32.mrf.mxu0
      %v2076 = vadd.f32 0.0, %v2075
      %v2077 = vpop.f32.mrf.mxu0
      %v2078 = vpop.f32.mrf.mxu0
      %v2079 = vadd.f32 0.0, %v2078
      %v2080 = vpop.f32.mrf.mxu0
      %2081 = vmatprep.mubr.bf16.mxu0 0
      %2082 = vmatmul.mubr.bf16.gmra.mxu0 %v1924
      %v2083 = vpop.f32.mrf.mxu0
      %v2084 = vadd.f32 0.0, %v2083
      %v2085 = vpop.f32.mrf.mxu0
      %v2086 = vpop.f32.mrf.mxu0
      %v2087 = vadd.f32 0.0, %v2086
      %v2088 = vpop.f32.mrf.mxu0
      %2089 = vdwg.mxu0
      %v2123 = vunpack.c.l.b16 %v1762
      %v2124 = vunpack.c.l.b16 %v1763
      %v2125 = vunpack.c.l.b16 %v1764
      %v2126 = vunpack.c.l.b16 %v1765
      %v2127 = vunpack.c.l.b16 %v1766
      %v2128 = vunpack.c.l.b16 %v1767
      %v2129 = vunpack.c.l.b16 %v1768
      %v2130 = vunpack.c.l.b16 %v1769
      %v2131 = vunpack.c.l.b16 %v1770
      %v2132 = vunpack.c.l.b16 %v1771
      %v2133 = vunpack.c.l.b16 %v1772
      %v2134 = vunpack.c.l.b16 %v1773
      %v2135 = vunpack.c.l.b16 %v1774
      %v2136 = vunpack.c.l.b16 %v1775
      %v2137 = vunpack.c.l.b16 %v1776
      %v2138 = vunpack.c.l.b16 %v1777
      %v2139 = vunpack.c.l.b16 %v1778
      %v2140 = vunpack.c.l.b16 %v1779
      %v2141 = vunpack.c.l.b16 %v1780
      %v2142 = vunpack.c.l.b16 %v1781
      %v2143 = vunpack.c.l.b16 %v1782
      %v2144 = vunpack.c.l.b16 %v1783
      %v2145 = vunpack.c.l.b16 %v1784
      %v2146 = vunpack.c.l.b16 %v1785
      %v2147 = vunpack.c.l.b16 %v1786
      %v2148 = vunpack.c.l.b16 %v1787
      %v2149 = vunpack.c.l.b16 %v1788
      %v2150 = vunpack.c.l.b16 %v1789
      %v2151 = vunpack.c.l.b16 %v1790
      %v2152 = vunpack.c.l.b16 %v1791
      %v2153 = vunpack.c.l.b16 %v1792
      %v2154 = vunpack.c.l.b16 %v1793
      %v2155 = vunpack.c.l.b16 %v1794
      %v2156 = vpack.c.b16 %v2124, %v2123
      %v2157 = vpack.c.b16 %v2126, %v2125
      %v2158 = vpack.c.b16 %v2128, %v2127
      %v2159 = vpack.c.b16 %v2130, %v2129
      %v2160 = vpack.c.b16 %v2132, %v2131
      %v2161 = vpack.c.b16 %v2134, %v2133
      %v2162 = vpack.c.b16 %v2136, %v2135
      %v2163 = vpack.c.b16 %v2138, %v2137
      %v2164 = vpack.c.b16 %v2140, %v2139
      %v2165 = vpack.c.b16 %v2142, %v2141
      %v2166 = vpack.c.b16 %v2144, %v2143
      %v2167 = vpack.c.b16 %v2146, %v2145
      %v2168 = vpack.c.b16 %v2148, %v2147
      %v2169 = vpack.c.b16 %v2150, %v2149
      %v2170 = vpack.c.b16 %v2152, %v2151
      %v2171 = vpack.c.b16 %v2154, %v2153
      %v2172 = vpack.c.b16 %v2155, %v2155
      %vm2173 = vsmask.f32 4352
      %v2175 = vshrl.u32 %v2156, 16
      %v2177 = vrot.slane %v2175, 3
      %v2178 = vshll.u32 %v2156, 16
      %v2180 = vrot.slane %v2178, 4
      %v2181 = vor.u32 %v2177, %v2180
      %v2183 = vshrl.u32 %v2157, 16
      %v2185 = vrot.slane %v2183, 3
      %v2186 = vshll.u32 %v2157, 16
      %v2188 = vrot.slane %v2186, 4
      %v2189 = vor.u32 %v2185, %v2188
      %v2190 = vsel %vm2173, %v2181, %v2189
      %v2192 = vshrl.u32 %v2158, 16
      %v2194 = vrot.slane %v2192, 3
      %v2195 = vshll.u32 %v2158, 16
      %v2197 = vrot.slane %v2195, 4
      %v2198 = vor.u32 %v2194, %v2197
      %v2199 = vsel %vm2173, %v2189, %v2198
      %v2201 = vshrl.u32 %v2159, 16
      %v2203 = vrot.slane %v2201, 3
      %v2204 = vshll.u32 %v2159, 16
      %v2206 = vrot.slane %v2204, 4
      %v2207 = vor.u32 %v2203, %v2206
      %v2208 = vsel %vm2173, %v2198, %v2207
      %v2210 = vshrl.u32 %v2160, 16
      %v2212 = vrot.slane %v2210, 3
      %v2213 = vshll.u32 %v2160, 16
      %v2215 = vrot.slane %v2213, 4
      %v2216 = vor.u32 %v2212, %v2215
      %v2217 = vsel %vm2173, %v2207, %v2216
      %v2219 = vshrl.u32 %v2161, 16
      %v2221 = vrot.slane %v2219, 3
      %v2222 = vshll.u32 %v2161, 16
      %v2224 = vrot.slane %v2222, 4
      %v2225 = vor.u32 %v2221, %v2224
      %v2226 = vsel %vm2173, %v2216, %v2225
      %v2228 = vshrl.u32 %v2162, 16
      %v2230 = vrot.slane %v2228, 3
      %v2231 = vshll.u32 %v2162, 16
      %v2233 = vrot.slane %v2231, 4
      %v2234 = vor.u32 %v2230, %v2233
      %v2235 = vsel %vm2173, %v2225, %v2234
      %v2237 = vshrl.u32 %v2163, 16
      %v2239 = vrot.slane %v2237, 3
      %v2240 = vshll.u32 %v2163, 16
      %v2242 = vrot.slane %v2240, 4
      %v2243 = vor.u32 %v2239, %v2242
      %v2244 = vsel %vm2173, %v2234, %v2243
      %v2246 = vshrl.u32 %v2164, 16
      %v2248 = vrot.slane %v2246, 3
      %v2249 = vshll.u32 %v2164, 16
      %v2251 = vrot.slane %v2249, 4
      %v2252 = vor.u32 %v2248, %v2251
      %v2253 = vsel %vm2173, %v2243, %v2252
      %v2255 = vshrl.u32 %v2165, 16
      %v2257 = vrot.slane %v2255, 3
      %v2258 = vshll.u32 %v2165, 16
      %v2260 = vrot.slane %v2258, 4
      %v2261 = vor.u32 %v2257, %v2260
      %v2262 = vsel %vm2173, %v2252, %v2261
      %v2264 = vshrl.u32 %v2166, 16
      %v2266 = vrot.slane %v2264, 3
      %v2267 = vshll.u32 %v2166, 16
      %v2269 = vrot.slane %v2267, 4
      %v2270 = vor.u32 %v2266, %v2269
      %v2271 = vsel %vm2173, %v2261, %v2270
      %v2273 = vshrl.u32 %v2167, 16
      %v2275 = vrot.slane %v2273, 3
      %v2276 = vshll.u32 %v2167, 16
      %v2278 = vrot.slane %v2276, 4
      %v2279 = vor.u32 %v2275, %v2278
      %v2280 = vsel %vm2173, %v2270, %v2279
      %v2282 = vshrl.u32 %v2168, 16
      %v2284 = vrot.slane %v2282, 3
      %v2285 = vshll.u32 %v2168, 16
      %v2287 = vrot.slane %v2285, 4
      %v2288 = vor.u32 %v2284, %v2287
      %v2289 = vsel %vm2173, %v2279, %v2288
      %v2291 = vshrl.u32 %v2169, 16
      %v2293 = vrot.slane %v2291, 3
      %v2294 = vshll.u32 %v2169, 16
      %v2296 = vrot.slane %v2294, 4
      %v2297 = vor.u32 %v2293, %v2296
      %v2298 = vsel %vm2173, %v2288, %v2297
      %v2300 = vshrl.u32 %v2170, 16
      %v2302 = vrot.slane %v2300, 3
      %v2303 = vshll.u32 %v2170, 16
      %v2305 = vrot.slane %v2303, 4
      %v2306 = vor.u32 %v2302, %v2305
      %v2307 = vsel %vm2173, %v2297, %v2306
      %v2309 = vshrl.u32 %v2171, 16
      %v2311 = vrot.slane %v2309, 3
      %v2312 = vshll.u32 %v2171, 16
      %v2314 = vrot.slane %v2312, 4
      %v2315 = vor.u32 %v2311, %v2314
      %v2316 = vsel %vm2173, %v2306, %v2315
      %v2318 = vshrl.u32 %v2172, 16
      %v2320 = vrot.slane %v2318, 3
      %v2321 = vshll.u32 %v2172, 16
      %v2323 = vrot.slane %v2321, 4
      %v2324 = vor.u32 %v2320, %v2323
      %v2325 = vsel %vm2173, %v2315, %v2324
      %v2327 = vsel %vm511, %v2190, 0
      %v2330 = vsel %vm511, %v2199, 0
      %v2333 = vsel %vm511, %v2208, 0
      %v2336 = vsel %vm511, %v2217, 0
      %v2339 = vsel %vm511, %v2226, 0
      %v2342 = vsel %vm511, %v2235, 0
      %v2345 = vsel %vm511, %v2244, 0
      %v2348 = vsel %vm511, %v2253, 0
      %v2351 = vsel %vm511, %v2262, 0
      %v2354 = vsel %vm511, %v2271, 0
      %v2357 = vsel %vm511, %v2280, 0
      %v2360 = vsel %vm511, %v2289, 0
      %v2363 = vsel %vm511, %v2298, 0
      %v2366 = vsel %vm511, %v2307, 0
      %v2369 = vsel %vm511, %v2316, 0
      %v2372 = vsel %vm511, %v2325, 0
      %v2375 = vsel %vm560, %v1795, 0
      %2377 = vmatprep.subr.bf16.mxu0 0
      %2378 = vmatpush1.bf16.msra.mxu0 0
      %2379 = vmatprep.subr.bf16.mxu0 0
      %2380 = vmatpush1.bf16.msra.mxu0 0
      %2381 = vmatprep.subr.bf16.mxu0 0
      %2382 = vmatpush1.bf16.msra.mxu0 0
      %2383 = vmatprep.subr.bf16.mxu0 0
      %2384 = vmatpush1.bf16.msra.mxu0 0
      %2385 = vmatprep.subr.bf16.mxu0 0
      %2386 = vmatpush1.bf16.msra.mxu0 0
      %2387 = vmatprep.subr.bf16.mxu0 0
      %2388 = vmatpush1.bf16.msra.mxu0 0
      %2389 = vmatprep.subr.bf16.mxu0 0
      %2390 = vmatpush1.bf16.msra.mxu0 0
      %2391 = vmatprep.subr.bf16.mxu0 0
      %2392 = vmatpush1.bf16.msra.mxu0 %v2375
      %2393 = vmatprep.subr.bf16.mxu0 0
      %2394 = vmatpush2.bf16.msra.mxu0 0
      %2395 = vmatprep.subr.bf16.mxu0 0
      %2396 = vmatpush2.bf16.msra.mxu0 0
      %2397 = vmatprep.subr.bf16.mxu0 0
      %2398 = vmatpush2.bf16.msra.mxu0 0
      %2399 = vmatprep.subr.bf16.mxu0 0
      %2400 = vmatpush2.bf16.msra.mxu0 0
      %2401 = vmatprep.subr.bf16.mxu0 0
      %2402 = vmatpush2.bf16.msra.mxu0 0
      %2403 = vmatprep.subr.bf16.mxu0 0
      %2404 = vmatpush2.bf16.msra.mxu0 0
      %2405 = vmatprep.subr.bf16.mxu0 0
      %2406 = vmatpush2.bf16.msra.mxu0 0
      %2407 = vmatprep.subr.bf16.mxu0 0
      %2408 = vmatpush2.bf16.msra.mxu0 0
      %2409 = vmatprep.mubr.bf16.mxu0 0
      %2410 = vmatmul.mubr.bf16.gmra.mxu0 %v2327
      %v2411 = vpop.f32.mrf.mxu0
      %v2412 = vadd.f32 %v1964, %v2411
      %v2413 = vpop.f32.mrf.mxu0
      %v2414 = vpop.f32.mrf.mxu0
      %v2415 = vadd.f32 %v1967, %v2414
      %v2416 = vpop.f32.mrf.mxu0
      %2417 = vmatprep.mubr.bf16.mxu0 0
      %2418 = vmatmul.mubr.bf16.gmra.mxu0 %v2330
      %v2419 = vpop.f32.mrf.mxu0
      %v2420 = vadd.f32 %v1972, %v2419
      %v2421 = vpop.f32.mrf.mxu0
      %v2422 = vpop.f32.mrf.mxu0
      %v2423 = vadd.f32 %v1975, %v2422
      %v2424 = vpop.f32.mrf.mxu0
      %2425 = vmatprep.mubr.bf16.mxu0 0
      %2426 = vmatmul.mubr.bf16.gmra.mxu0 %v2333
      %v2427 = vpop.f32.mrf.mxu0
      %v2428 = vadd.f32 %v1980, %v2427
      %v2429 = vpop.f32.mrf.mxu0
      %v2430 = vpop.f32.mrf.mxu0
      %v2431 = vadd.f32 %v1983, %v2430
      %v2432 = vpop.f32.mrf.mxu0
      %2433 = vmatprep.mubr.bf16.mxu0 0
      %2434 = vmatmul.mubr.bf16.gmra.mxu0 %v2336
      %v2435 = vpop.f32.mrf.mxu0
      %v2436 = vadd.f32 %v1988, %v2435
      %v2437 = vpop.f32.mrf.mxu0
      %v2438 = vpop.f32.mrf.mxu0
      %v2439 = vadd.f32 %v1991, %v2438
      %v2440 = vpop.f32.mrf.mxu0
      %2441 = vmatprep.mubr.bf16.mxu0 0
      %2442 = vmatmul.mubr.bf16.gmra.mxu0 %v2339
      %v2443 = vpop.f32.mrf.mxu0
      %v2444 = vadd.f32 %v1996, %v2443
      %v2445 = vpop.f32.mrf.mxu0
      %v2446 = vpop.f32.mrf.mxu0
      %v2447 = vadd.f32 %v1999, %v2446
      %v2448 = vpop.f32.mrf.mxu0
      %2449 = vmatprep.mubr.bf16.mxu0 0
      %2450 = vmatmul.mubr.bf16.gmra.mxu0 %v2342
      %v2451 = vpop.f32.mrf.mxu0
      %v2452 = vadd.f32 %v2004, %v2451
      %v2453 = vpop.f32.mrf.mxu0
      %v2454 = vpop.f32.mrf.mxu0
      %v2455 = vadd.f32 %v2007, %v2454
      %v2456 = vpop.f32.mrf.mxu0
      %2457 = vmatprep.mubr.bf16.mxu0 0
      %2458 = vmatmul.mubr.bf16.gmra.mxu0 %v2345
      %v2459 = vpop.f32.mrf.mxu0
      %v2460 = vadd.f32 %v2012, %v2459
      %v2461 = vpop.f32.mrf.mxu0
      %v2462 = vpop.f32.mrf.mxu0
      %v2463 = vadd.f32 %v2015, %v2462
      %v2464 = vpop.f32.mrf.mxu0
      %2465 = vmatprep.mubr.bf16.mxu0 0
      %2466 = vmatmul.mubr.bf16.gmra.mxu0 %v2348
      %v2467 = vpop.f32.mrf.mxu0
      %v2468 = vadd.f32 %v2020, %v2467
      %v2469 = vpop.f32.mrf.mxu0
      %v2470 = vpop.f32.mrf.mxu0
      %v2471 = vadd.f32 %v2023, %v2470
      %v2472 = vpop.f32.mrf.mxu0
      %2473 = vmatprep.mubr.bf16.mxu0 0
      %2474 = vmatmul.mubr.bf16.gmra.mxu0 %v2351
      %v2475 = vpop.f32.mrf.mxu0
      %v2476 = vadd.f32 %v2028, %v2475
      %v2477 = vpop.f32.mrf.mxu0
      %v2478 = vpop.f32.mrf.mxu0
      %v2479 = vadd.f32 %v2031, %v2478
      %v2480 = vpop.f32.mrf.mxu0
      %2481 = vmatprep.mubr.bf16.mxu0 0
      %2482 = vmatmul.mubr.bf16.gmra.mxu0 %v2354
      %v2483 = vpop.f32.mrf.mxu0
      %v2484 = vadd.f32 %v2036, %v2483
      %v2485 = vpop.f32.mrf.mxu0
      %v2486 = vpop.f32.mrf.mxu0
      %v2487 = vadd.f32 %v2039, %v2486
      %v2488 = vpop.f32.mrf.mxu0
      %2489 = vmatprep.mubr.bf16.mxu0 0
      %2490 = vmatmul.mubr.bf16.gmra.mxu0 %v2357
      %v2491 = vpop.f32.mrf.mxu0
      %v2492 = vadd.f32 %v2044, %v2491
      %v2493 = vpop.f32.mrf.mxu0
      %v2494 = vpop.f32.mrf.mxu0
      %v2495 = vadd.f32 %v2047, %v2494
      %v2496 = vpop.f32.mrf.mxu0
      %2497 = vmatprep.mubr.bf16.mxu0 0
      %2498 = vmatmul.mubr.bf16.gmra.mxu0 %v2360
      %v2499 = vpop.f32.mrf.mxu0
      %v2500 = vadd.f32 %v2052, %v2499
      %v2501 = vpop.f32.mrf.mxu0
      %v2502 = vpop.f32.mrf.mxu0
      %v2503 = vadd.f32 %v2055, %v2502
      %v2504 = vpop.f32.mrf.mxu0
      %2505 = vmatprep.mubr.bf16.mxu0 0
      %2506 = vmatmul.mubr.bf16.gmra.mxu0 %v2363
      %v2507 = vpop.f32.mrf.mxu0
      %v2508 = vadd.f32 %v2060, %v2507
      %v2509 = vpop.f32.mrf.mxu0
      %v2510 = vpop.f32.mrf.mxu0
      %v2511 = vadd.f32 %v2063, %v2510
      %v2512 = vpop.f32.mrf.mxu0
      %2513 = vmatprep.mubr.bf16.mxu0 0
      %2514 = vmatmul.mubr.bf16.gmra.mxu0 %v2366
      %v2515 = vpop.f32.mrf.mxu0
      %v2516 = vadd.f32 %v2068, %v2515
      %v2517 = vpop.f32.mrf.mxu0
      %v2518 = vpop.f32.mrf.mxu0
      %v2519 = vadd.f32 %v2071, %v2518
      %v2520 = vpop.f32.mrf.mxu0
      %2521 = vmatprep.mubr.bf16.mxu0 0
      %2522 = vmatmul.mubr.bf16.gmra.mxu0 %v2369
      %v2523 = vpop.f32.mrf.mxu0
      %v2524 = vadd.f32 %v2076, %v2523
      %v2525 = vpop.f32.mrf.mxu0
      %v2526 = vpop.f32.mrf.mxu0
      %v2527 = vadd.f32 %v2079, %v2526
      %v2528 = vpop.f32.mrf.mxu0
      %2529 = vmatprep.mubr.bf16.mxu0 0
      %2530 = vmatmul.mubr.bf16.gmra.mxu0 %v2372
      %v2531 = vpop.f32.mrf.mxu0
      %v2532 = vadd.f32 %v2084, %v2531
      %v2533 = vpop.f32.mrf.mxu0
      %v2534 = vpop.f32.mrf.mxu0
      %v2535 = vadd.f32 %v2087, %v2534
      %v2536 = vpop.f32.mrf.mxu0
      %2537 = vdwg.mxu0
      %v2538 = vld [vmem:[#allocation2 + $0x8] sm:$0xf]
      %v2539 = vld [vmem:[#allocation2 + $0xc] sm:$0xf]
      %v2540 = vld [vmem:[#allocation2 + $0x10] sm:$0xf]
      %v2541 = vld [vmem:[#allocation2 + $0x14] sm:$0xf]
      %v2542 = vld [vmem:[#allocation2 + $0x18] sm:$0xf]
      %v2543 = vld [vmem:[#allocation2 + $0x1c] sm:$0xf]
      %v2544 = vld [vmem:[#allocation2 + $0x20] sm:$0xf]
      %v2545 = vld [vmem:[#allocation2 + $0x24] sm:$0xf]
      %v2546 = vld [vmem:[#allocation2 + $0x28] sm:$0xf]
      %v2547 = vld [vmem:[#allocation2 + $0x2c] sm:$0xf]
      %v2548 = vld [vmem:[#allocation2 + $0x30] sm:$0xf]
      %v2549 = vld [vmem:[#allocation2 + $0x34] sm:$0xf]
      %v2550 = vld [vmem:[#allocation2 + $0x38] sm:$0xf]
      %v2551 = vld [vmem:[#allocation2 + $0x3c] sm:$0xf]
      %v2552 = vld [vmem:[#allocation2 + $0x40] sm:$0xf]
      %v2553 = vld [vmem:[#allocation2 + $0x44] sm:$0xf]
      %v2554 = vld [vmem:[#allocation2 + $0x48] sm:$0xf]
      %v2555 = vld [vmem:[#allocation2 + $0x4c] sm:$0xf]
      %v2556 = vld [vmem:[#allocation2 + $0x50] sm:$0xf]
      %v2557 = vld [vmem:[#allocation2 + $0x54] sm:$0xf]
      %v2558 = vld [vmem:[#allocation2 + $0x58] sm:$0xf]
      %v2559 = vld [vmem:[#allocation2 + $0x5c] sm:$0xf]
      %v2560 = vld [vmem:[#allocation2 + $0x60] sm:$0xf]
      %v2561 = vld [vmem:[#allocation2 + $0x64] sm:$0xf]
      %v2562 = vld [vmem:[#allocation2 + $0x68] sm:$0xf]
      %v2563 = vld [vmem:[#allocation2 + $0x6c] sm:$0xf]
      %v2564 = vld [vmem:[#allocation2 + $0x70] sm:$0xf]
      %v2565 = vld [vmem:[#allocation2 + $0x74] sm:$0xf]
      %v2566 = vld [vmem:[#allocation2 + $0x78] sm:$0xf]
      %v2567 = vld [vmem:[#allocation2 + $0x7c] sm:$0xf]
      %v2568 = vld [vmem:[#allocation2 + $0x80] sm:$0xf]
      %v2569 = vld [vmem:[#allocation2 + $0x84] sm:$0xf]
      %v2570 = vld [vmem:[#allocation2 + $0x88] sm:$0x1]
      %2572 = vset.pattern.permute.xlu0 0
      %2573 = vperm.xlu0 %2572, %v958
      %v2574 = vpop.permute.xlu0 %2573
      %v2577 = vunpack.c.l.s4 839922192
      %v2578 = vunpack.c.0.s8 %v2577
      %v2579 = vlaneseq
      %v2580 = vshrl.u32 %v2579, 7
      %v2581 = vsub.s32 %v2578, %v2580
      %v2582 = vrot.slane %v2574, %v2581
      %2584 = vset.pattern.permute.xlu0 0
      %2585 = vperm.xlu0 %2584, %v959
      %v2586 = vpop.permute.xlu0 %2585
      %v2589 = vunpack.c.l.s4 839922192
      %v2590 = vunpack.c.0.s8 %v2589
      %v2591 = vlaneseq
      %v2592 = vshrl.u32 %v2591, 7
      %v2593 = vsub.s32 %v2590, %v2592
      %v2594 = vrot.slane %v2586, %v2593
      %2596 = vset.pattern.permute.xlu0 0
      %2597 = vperm.xlu0 %2596, %v960
      %v2598 = vpop.permute.xlu0 %2597
      %v2601 = vunpack.c.l.s4 839922192
      %v2602 = vunpack.c.0.s8 %v2601
      %v2603 = vlaneseq
      %v2604 = vshrl.u32 %v2603, 7
      %v2605 = vsub.s32 %v2602, %v2604
      %v2606 = vrot.slane %v2598, %v2605
      %2608 = vset.pattern.permute.xlu0 0
      %2609 = vperm.xlu0 %2608, %v961
      %v2610 = vpop.permute.xlu0 %2609
      %v2613 = vunpack.c.l.s4 839922192
      %v2614 = vunpack.c.0.s8 %v2613
      %v2615 = vlaneseq
      %v2616 = vshrl.u32 %v2615, 7
      %v2617 = vsub.s32 %v2614, %v2616
      %v2618 = vrot.slane %v2610, %v2617
      %2620 = vset.pattern.permute.xlu0 0
      %2621 = vperm.xlu0 %2620, %v962
      %v2622 = vpop.permute.xlu0 %2621
      %v2625 = vunpack.c.l.s4 839922192
      %v2626 = vunpack.c.0.s8 %v2625
      %v2627 = vlaneseq
      %v2628 = vshrl.u32 %v2627, 7
      %v2629 = vsub.s32 %v2626, %v2628
      %v2630 = vrot.slane %v2622, %v2629
      %2632 = vset.pattern.permute.xlu0 0
      %2633 = vperm.xlu0 %2632, %v963
      %v2634 = vpop.permute.xlu0 %2633
      %v2637 = vunpack.c.l.s4 839922192
      %v2638 = vunpack.c.0.s8 %v2637
      %v2639 = vlaneseq
      %v2640 = vshrl.u32 %v2639, 7
      %v2641 = vsub.s32 %v2638, %v2640
      %v2642 = vrot.slane %v2634, %v2641
      %2644 = vset.pattern.permute.xlu0 0
      %2645 = vperm.xlu0 %2644, %v964
      %v2646 = vpop.permute.xlu0 %2645
      %v2649 = vunpack.c.l.s4 839922192
      %v2650 = vunpack.c.0.s8 %v2649
      %v2651 = vlaneseq
      %v2652 = vshrl.u32 %v2651, 7
      %v2653 = vsub.s32 %v2650, %v2652
      %v2654 = vrot.slane %v2646, %v2653
      %2656 = vset.pattern.permute.xlu0 0
      %2657 = vperm.xlu0 %2656, %v965
      %v2658 = vpop.permute.xlu0 %2657
      %v2661 = vunpack.c.l.s4 839922192
      %v2662 = vunpack.c.0.s8 %v2661
      %v2663 = vlaneseq
      %v2664 = vshrl.u32 %v2663, 7
      %v2665 = vsub.s32 %v2662, %v2664
      %v2666 = vrot.slane %v2658, %v2665
      %2668 = vset.pattern.permute.xlu0 0
      %2669 = vperm.xlu0 %2668, %v966
      %v2670 = vpop.permute.xlu0 %2669
      %v2673 = vunpack.c.l.s4 839922192
      %v2674 = vunpack.c.0.s8 %v2673
      %v2675 = vlaneseq
      %v2676 = vshrl.u32 %v2675, 7
      %v2677 = vsub.s32 %v2674, %v2676
      %v2678 = vrot.slane %v2670, %v2677
      %2680 = vset.pattern.permute.xlu0 0
      %2681 = vperm.xlu0 %2680, %v967
      %v2682 = vpop.permute.xlu0 %2681
      %v2685 = vunpack.c.l.s4 839922192
      %v2686 = vunpack.c.0.s8 %v2685
      %v2687 = vlaneseq
      %v2688 = vshrl.u32 %v2687, 7
      %v2689 = vsub.s32 %v2686, %v2688
      %v2690 = vrot.slane %v2682, %v2689
      %2692 = vset.pattern.permute.xlu0 0
      %2693 = vperm.xlu0 %2692, %v968
      %v2694 = vpop.permute.xlu0 %2693
      %v2697 = vunpack.c.l.s4 839922192
      %v2698 = vunpack.c.0.s8 %v2697
      %v2699 = vlaneseq
      %v2700 = vshrl.u32 %v2699, 7
      %v2701 = vsub.s32 %v2698, %v2700
      %v2702 = vrot.slane %v2694, %v2701
      %2704 = vset.pattern.permute.xlu0 0
      %2705 = vperm.xlu0 %2704, %v969
      %v2706 = vpop.permute.xlu0 %2705
      %v2709 = vunpack.c.l.s4 839922192
      %v2710 = vunpack.c.0.s8 %v2709
      %v2711 = vlaneseq
      %v2712 = vshrl.u32 %v2711, 7
      %v2713 = vsub.s32 %v2710, %v2712
      %v2714 = vrot.slane %v2706, %v2713
      %2716 = vset.pattern.permute.xlu0 0
      %2717 = vperm.xlu0 %2716, %v970
      %v2718 = vpop.permute.xlu0 %2717
      %v2721 = vunpack.c.l.s4 839922192
      %v2722 = vunpack.c.0.s8 %v2721
      %v2723 = vlaneseq
      %v2724 = vshrl.u32 %v2723, 7
      %v2725 = vsub.s32 %v2722, %v2724
      %v2726 = vrot.slane %v2718, %v2725
      %2728 = vset.pattern.permute.xlu0 0
      %2729 = vperm.xlu0 %2728, %v971
      %v2730 = vpop.permute.xlu0 %2729
      %v2733 = vunpack.c.l.s4 839922192
      %v2734 = vunpack.c.0.s8 %v2733
      %v2735 = vlaneseq
      %v2736 = vshrl.u32 %v2735, 7
      %v2737 = vsub.s32 %v2734, %v2736
      %v2738 = vrot.slane %v2730, %v2737
      %2740 = vset.pattern.permute.xlu0 0
      %2741 = vperm.xlu0 %2740, %v972
      %v2742 = vpop.permute.xlu0 %2741
      %v2745 = vunpack.c.l.s4 839922192
      %v2746 = vunpack.c.0.s8 %v2745
      %v2747 = vlaneseq
      %v2748 = vshrl.u32 %v2747, 7
      %v2749 = vsub.s32 %v2746, %v2748
      %v2750 = vrot.slane %v2742, %v2749
      %2752 = vset.pattern.permute.xlu0 0
      %2753 = vperm.xlu0 %2752, %v973
      %v2754 = vpop.permute.xlu0 %2753
      %v2757 = vunpack.c.l.s4 839922192
      %v2758 = vunpack.c.0.s8 %v2757
      %v2759 = vlaneseq
      %v2760 = vshrl.u32 %v2759, 7
      %v2761 = vsub.s32 %v2758, %v2760
      %v2762 = vrot.slane %v2754, %v2761
      %2764 = vset.pattern.permute.xlu0 0
      %2765 = vperm.xlu0 %2764, %v974
      %v2766 = vpop.permute.xlu0 %2765
      %v2769 = vunpack.c.l.s4 839922192
      %v2770 = vunpack.c.0.s8 %v2769
      %v2771 = vlaneseq
      %v2772 = vshrl.u32 %v2771, 7
      %v2773 = vsub.s32 %v2770, %v2772
      %v2774 = vrot.slane %v2766, %v2773
      %2776 = vset.pattern.permute.xlu0 0
      %2777 = vperm.xlu0 %2776, %v975
      %v2778 = vpop.permute.xlu0 %2777
      %v2781 = vunpack.c.l.s4 839922192
      %v2782 = vunpack.c.0.s8 %v2781
      %v2783 = vlaneseq
      %v2784 = vshrl.u32 %v2783, 7
      %v2785 = vsub.s32 %v2782, %v2784
      %v2786 = vrot.slane %v2778, %v2785
      %2788 = vset.pattern.permute.xlu0 0
      %2789 = vperm.xlu0 %2788, %v976
      %v2790 = vpop.permute.xlu0 %2789
      %v2793 = vunpack.c.l.s4 839922192
      %v2794 = vunpack.c.0.s8 %v2793
      %v2795 = vlaneseq
      %v2796 = vshrl.u32 %v2795, 7
      %v2797 = vsub.s32 %v2794, %v2796
      %v2798 = vrot.slane %v2790, %v2797
      %2800 = vset.pattern.permute.xlu0 0
      %2801 = vperm.xlu0 %2800, %v977
      %v2802 = vpop.permute.xlu0 %2801
      %v2805 = vunpack.c.l.s4 839922192
      %v2806 = vunpack.c.0.s8 %v2805
      %v2807 = vlaneseq
      %v2808 = vshrl.u32 %v2807, 7
      %v2809 = vsub.s32 %v2806, %v2808
      %v2810 = vrot.slane %v2802, %v2809
      %2812 = vset.pattern.permute.xlu0 0
      %2813 = vperm.xlu0 %2812, %v978
      %v2814 = vpop.permute.xlu0 %2813
      %v2817 = vunpack.c.l.s4 839922192
      %v2818 = vunpack.c.0.s8 %v2817
      %v2819 = vlaneseq
      %v2820 = vshrl.u32 %v2819, 7
      %v2821 = vsub.s32 %v2818, %v2820
      %v2822 = vrot.slane %v2814, %v2821
      %2824 = vset.pattern.permute.xlu0 0
      %2825 = vperm.xlu0 %2824, %v979
      %v2826 = vpop.permute.xlu0 %2825
      %v2829 = vunpack.c.l.s4 839922192
      %v2830 = vunpack.c.0.s8 %v2829
      %v2831 = vlaneseq
      %v2832 = vshrl.u32 %v2831, 7
      %v2833 = vsub.s32 %v2830, %v2832
      %v2834 = vrot.slane %v2826, %v2833
      %2836 = vset.pattern.permute.xlu0 0
      %2837 = vperm.xlu0 %2836, %v980
      %v2838 = vpop.permute.xlu0 %2837
      %v2841 = vunpack.c.l.s4 839922192
      %v2842 = vunpack.c.0.s8 %v2841
      %v2843 = vlaneseq
      %v2844 = vshrl.u32 %v2843, 7
      %v2845 = vsub.s32 %v2842, %v2844
      %v2846 = vrot.slane %v2838, %v2845
      %2848 = vset.pattern.permute.xlu0 0
      %2849 = vperm.xlu0 %2848, %v981
      %v2850 = vpop.permute.xlu0 %2849
      %v2853 = vunpack.c.l.s4 839922192
      %v2854 = vunpack.c.0.s8 %v2853
      %v2855 = vlaneseq
      %v2856 = vshrl.u32 %v2855, 7
      %v2857 = vsub.s32 %v2854, %v2856
      %v2858 = vrot.slane %v2850, %v2857
      %2860 = vset.pattern.permute.xlu0 0
      %2861 = vperm.xlu0 %2860, %v982
      %v2862 = vpop.permute.xlu0 %2861
      %v2865 = vunpack.c.l.s4 839922192
      %v2866 = vunpack.c.0.s8 %v2865
      %v2867 = vlaneseq
      %v2868 = vshrl.u32 %v2867, 7
      %v2869 = vsub.s32 %v2866, %v2868
      %v2870 = vrot.slane %v2862, %v2869
      %2872 = vset.pattern.permute.xlu0 0
      %2873 = vperm.xlu0 %2872, %v983
      %v2874 = vpop.permute.xlu0 %2873
      %v2877 = vunpack.c.l.s4 839922192
      %v2878 = vunpack.c.0.s8 %v2877
      %v2879 = vlaneseq
      %v2880 = vshrl.u32 %v2879, 7
      %v2881 = vsub.s32 %v2878, %v2880
      %v2882 = vrot.slane %v2874, %v2881
      %2884 = vset.pattern.permute.xlu0 0
      %2885 = vperm.xlu0 %2884, %v984
      %v2886 = vpop.permute.xlu0 %2885
      %v2889 = vunpack.c.l.s4 839922192
      %v2890 = vunpack.c.0.s8 %v2889
      %v2891 = vlaneseq
      %v2892 = vshrl.u32 %v2891, 7
      %v2893 = vsub.s32 %v2890, %v2892
      %v2894 = vrot.slane %v2886, %v2893
      %2896 = vset.pattern.permute.xlu0 0
      %2897 = vperm.xlu0 %2896, %v985
      %v2898 = vpop.permute.xlu0 %2897
      %v2901 = vunpack.c.l.s4 839922192
      %v2902 = vunpack.c.0.s8 %v2901
      %v2903 = vlaneseq
      %v2904 = vshrl.u32 %v2903, 7
      %v2905 = vsub.s32 %v2902, %v2904
      %v2906 = vrot.slane %v2898, %v2905
      %2908 = vset.pattern.permute.xlu0 0
      %2909 = vperm.xlu0 %2908, %v986
      %v2910 = vpop.permute.xlu0 %2909
      %v2913 = vunpack.c.l.s4 839922192
      %v2914 = vunpack.c.0.s8 %v2913
      %v2915 = vlaneseq
      %v2916 = vshrl.u32 %v2915, 7
      %v2917 = vsub.s32 %v2914, %v2916
      %v2918 = vrot.slane %v2910, %v2917
      %2920 = vset.pattern.permute.xlu0 0
      %2921 = vperm.xlu0 %2920, %v987
      %v2922 = vpop.permute.xlu0 %2921
      %v2925 = vunpack.c.l.s4 839922192
      %v2926 = vunpack.c.0.s8 %v2925
      %v2927 = vlaneseq
      %v2928 = vshrl.u32 %v2927, 7
      %v2929 = vsub.s32 %v2926, %v2928
      %v2930 = vrot.slane %v2922, %v2929
      %2932 = vset.pattern.permute.xlu0 0
      %2933 = vperm.xlu0 %2932, %v988
      %v2934 = vpop.permute.xlu0 %2933
      %v2937 = vunpack.c.l.s4 839922192
      %v2938 = vunpack.c.0.s8 %v2937
      %v2939 = vlaneseq
      %v2940 = vshrl.u32 %v2939, 7
      %v2941 = vsub.s32 %v2938, %v2940
      %v2942 = vrot.slane %v2934, %v2941
      %2944 = vset.pattern.permute.xlu0 0
      %2945 = vperm.xlu0 %2944, %v989
      %v2946 = vpop.permute.xlu0 %2945
      %v2949 = vunpack.c.l.s4 839922192
      %v2950 = vunpack.c.0.s8 %v2949
      %v2951 = vlaneseq
      %v2952 = vshrl.u32 %v2951, 7
      %v2953 = vsub.s32 %v2950, %v2952
      %v2954 = vrot.slane %v2946, %v2953
      %vm2955 = vsmask.f32 256
      %vm2956 = vsmask.f32 4368
      %vm2957 = vmor %vm2955, %vm2956
      %v2959 = vshrl.u32 %v2582, 16
      %v2961 = vrot.slane %v2959, 7
      %v2962 = vshll.u32 %v2582, 16
      %v2964 = vor.u32 %v2961, %v2962
      %v2965 = vrot.slane %v2961, 4
      %v2967 = vshrl.u32 %v2594, 16
      %v2969 = vrot.slane %v2967, 7
      %v2970 = vshll.u32 %v2594, 16
      %v2972 = vor.u32 %v2969, %v2970
      %v2973 = vsel %vm2957, %v2965, %v2972
      %v2974 = vrot.slane %v2969, 4
      %v2976 = vshrl.u32 %v2606, 16
      %v2978 = vrot.slane %v2976, 7
      %v2979 = vshll.u32 %v2606, 16
      %v2981 = vor.u32 %v2978, %v2979
      %v2982 = vsel %vm2957, %v2974, %v2981
      %v2983 = vrot.slane %v2978, 4
      %v2985 = vshrl.u32 %v2618, 16
      %v2987 = vrot.slane %v2985, 7
      %v2988 = vshll.u32 %v2618, 16
      %v2990 = vor.u32 %v2987, %v2988
      %v2991 = vsel %vm2957, %v2983, %v2990
      %v2992 = vrot.slane %v2987, 4
      %v2994 = vshrl.u32 %v2630, 16
      %v2996 = vrot.slane %v2994, 7
      %v2997 = vshll.u32 %v2630, 16
      %v2999 = vor.u32 %v2996, %v2997
      %v3000 = vsel %vm2957, %v2992, %v2999
      %v3001 = vrot.slane %v2996, 4
      %v3003 = vshrl.u32 %v2642, 16
      %v3005 = vrot.slane %v3003, 7
      %v3006 = vshll.u32 %v2642, 16
      %v3008 = vor.u32 %v3005, %v3006
      %v3009 = vsel %vm2957, %v3001, %v3008
      %v3010 = vrot.slane %v3005, 4
      %v3012 = vshrl.u32 %v2654, 16
      %v3014 = vrot.slane %v3012, 7
      %v3015 = vshll.u32 %v2654, 16
      %v3017 = vor.u32 %v3014, %v3015
      %v3018 = vsel %vm2957, %v3010, %v3017
      %v3019 = vrot.slane %v3014, 4
      %v3021 = vshrl.u32 %v2666, 16
      %v3023 = vrot.slane %v3021, 7
      %v3024 = vshll.u32 %v2666, 16
      %v3026 = vor.u32 %v3023, %v3024
      %v3027 = vsel %vm2957, %v3019, %v3026
      %v3028 = vrot.slane %v3023, 4
      %v3030 = vshrl.u32 %v2678, 16
      %v3032 = vrot.slane %v3030, 7
      %v3033 = vshll.u32 %v2678, 16
      %v3035 = vor.u32 %v3032, %v3033
      %v3036 = vsel %vm2957, %v3028, %v3035
      %v3037 = vrot.slane %v3032, 4
      %v3039 = vshrl.u32 %v2690, 16
      %v3041 = vrot.slane %v3039, 7
      %v3042 = vshll.u32 %v2690, 16
      %v3044 = vor.u32 %v3041, %v3042
      %v3045 = vsel %vm2957, %v3037, %v3044
      %v3046 = vrot.slane %v3041, 4
      %v3048 = vshrl.u32 %v2702, 16
      %v3050 = vrot.slane %v3048, 7
      %v3051 = vshll.u32 %v2702, 16
      %v3053 = vor.u32 %v3050, %v3051
      %v3054 = vsel %vm2957, %v3046, %v3053
      %v3055 = vrot.slane %v3050, 4
      %v3057 = vshrl.u32 %v2714, 16
      %v3059 = vrot.slane %v3057, 7
      %v3060 = vshll.u32 %v2714, 16
      %v3062 = vor.u32 %v3059, %v3060
      %v3063 = vsel %vm2957, %v3055, %v3062
      %v3064 = vrot.slane %v3059, 4
      %v3066 = vshrl.u32 %v2726, 16
      %v3068 = vrot.slane %v3066, 7
      %v3069 = vshll.u32 %v2726, 16
      %v3071 = vor.u32 %v3068, %v3069
      %v3072 = vsel %vm2957, %v3064, %v3071
      %v3073 = vrot.slane %v3068, 4
      %v3075 = vshrl.u32 %v2738, 16
      %v3077 = vrot.slane %v3075, 7
      %v3078 = vshll.u32 %v2738, 16
      %v3080 = vor.u32 %v3077, %v3078
      %v3081 = vsel %vm2957, %v3073, %v3080
      %v3082 = vrot.slane %v3077, 4
      %v3084 = vshrl.u32 %v2750, 16
      %v3086 = vrot.slane %v3084, 7
      %v3087 = vshll.u32 %v2750, 16
      %v3089 = vor.u32 %v3086, %v3087
      %v3090 = vsel %vm2957, %v3082, %v3089
      %v3091 = vrot.slane %v3086, 4
      %v3093 = vshrl.u32 %v2762, 16
      %v3095 = vrot.slane %v3093, 7
      %v3096 = vshll.u32 %v2762, 16
      %v3098 = vor.u32 %v3095, %v3096
      %v3099 = vsel %vm2957, %v3091, %v3098
      %v3100 = vrot.slane %v3095, 4
      %v3102 = vshrl.u32 %v2774, 16
      %v3104 = vrot.slane %v3102, 7
      %v3105 = vshll.u32 %v2774, 16
      %v3107 = vor.u32 %v3104, %v3105
      %v3108 = vsel %vm2957, %v3100, %v3107
      %v3109 = vrot.slane %v3104, 4
      %v3111 = vshrl.u32 %v2786, 16
      %v3113 = vrot.slane %v3111, 7
      %v3114 = vshll.u32 %v2786, 16
      %v3116 = vor.u32 %v3113, %v3114
      %v3117 = vsel %vm2957, %v3109, %v3116
      %v3118 = vrot.slane %v3113, 4
      %v3120 = vshrl.u32 %v2798, 16
      %v3122 = vrot.slane %v3120, 7
      %v3123 = vshll.u32 %v2798, 16
      %v3125 = vor.u32 %v3122, %v3123
      %v3126 = vsel %vm2957, %v3118, %v3125
      %v3127 = vrot.slane %v3122, 4
      %v3129 = vshrl.u32 %v2810, 16
      %v3131 = vrot.slane %v3129, 7
      %v3132 = vshll.u32 %v2810, 16
      %v3134 = vor.u32 %v3131, %v3132
      %v3135 = vsel %vm2957, %v3127, %v3134
      %v3136 = vrot.slane %v3131, 4
      %v3138 = vshrl.u32 %v2822, 16
      %v3140 = vrot.slane %v3138, 7
      %v3141 = vshll.u32 %v2822, 16
      %v3143 = vor.u32 %v3140, %v3141
      %v3144 = vsel %vm2957, %v3136, %v3143
      %v3145 = vrot.slane %v3140, 4
      %v3147 = vshrl.u32 %v2834, 16
      %v3149 = vrot.slane %v3147, 7
      %v3150 = vshll.u32 %v2834, 16
      %v3152 = vor.u32 %v3149, %v3150
      %v3153 = vsel %vm2957, %v3145, %v3152
      %v3154 = vrot.slane %v3149, 4
      %v3156 = vshrl.u32 %v2846, 16
      %v3158 = vrot.slane %v3156, 7
      %v3159 = vshll.u32 %v2846, 16
      %v3161 = vor.u32 %v3158, %v3159
      %v3162 = vsel %vm2957, %v3154, %v3161
      %v3163 = vrot.slane %v3158, 4
      %v3165 = vshrl.u32 %v2858, 16
      %v3167 = vrot.slane %v3165, 7
      %v3168 = vshll.u32 %v2858, 16
      %v3170 = vor.u32 %v3167, %v3168
      %v3171 = vsel %vm2957, %v3163, %v3170
      %v3172 = vrot.slane %v3167, 4
      %v3174 = vshrl.u32 %v2870, 16
      %v3176 = vrot.slane %v3174, 7
      %v3177 = vshll.u32 %v2870, 16
      %v3179 = vor.u32 %v3176, %v3177
      %v3180 = vsel %vm2957, %v3172, %v3179
      %v3181 = vrot.slane %v3176, 4
      %v3183 = vshrl.u32 %v2882, 16
      %v3185 = vrot.slane %v3183, 7
      %v3186 = vshll.u32 %v2882, 16
      %v3188 = vor.u32 %v3185, %v3186
      %v3189 = vsel %vm2957, %v3181, %v3188
      %v3190 = vrot.slane %v3185, 4
      %v3192 = vshrl.u32 %v2894, 16
      %v3194 = vrot.slane %v3192, 7
      %v3195 = vshll.u32 %v2894, 16
      %v3197 = vor.u32 %v3194, %v3195
      %v3198 = vsel %vm2957, %v3190, %v3197
      %v3199 = vrot.slane %v3194, 4
      %v3201 = vshrl.u32 %v2906, 16
      %v3203 = vrot.slane %v3201, 7
      %v3204 = vshll.u32 %v2906, 16
      %v3206 = vor.u32 %v3203, %v3204
      %v3207 = vsel %vm2957, %v3199, %v3206
      %v3208 = vrot.slane %v3203, 4
      %v3210 = vshrl.u32 %v2918, 16
      %v3212 = vrot.slane %v3210, 7
      %v3213 = vshll.u32 %v2918, 16
      %v3215 = vor.u32 %v3212, %v3213
      %v3216 = vsel %vm2957, %v3208, %v3215
      %v3217 = vrot.slane %v3212, 4
      %v3219 = vshrl.u32 %v2930, 16
      %v3221 = vrot.slane %v3219, 7
      %v3222 = vshll.u32 %v2930, 16
      %v3224 = vor.u32 %v3221, %v3222
      %v3225 = vsel %vm2957, %v3217, %v3224
      %v3226 = vrot.slane %v3221, 4
      %v3228 = vshrl.u32 %v2942, 16
      %v3230 = vrot.slane %v3228, 7
      %v3231 = vshll.u32 %v2942, 16
      %v3233 = vor.u32 %v3230, %v3231
      %v3234 = vsel %vm2957, %v3226, %v3233
      %v3235 = vrot.slane %v3230, 4
      %v3237 = vshrl.u32 %v2954, 16
      %v3239 = vrot.slane %v3237, 7
      %v3240 = vshll.u32 %v2954, 16
      %v3242 = vor.u32 %v3239, %v3240
      %v3243 = vsel %vm2957, %v3235, %v3242
      %v3244 = vrot.slane %v3239, 4
      %v3278 = vmul.bf16 %v2538, %v2964
      %v3279 = vmul.bf16 %v2539, %v2973
      %v3280 = vmul.bf16 %v2540, %v2982
      %v3281 = vmul.bf16 %v2541, %v2991
      %v3282 = vmul.bf16 %v2542, %v3000
      %v3283 = vmul.bf16 %v2543, %v3009
      %v3284 = vmul.bf16 %v2544, %v3018
      %v3285 = vmul.bf16 %v2545, %v3027
      %v3286 = vmul.bf16 %v2546, %v3036
      %v3287 = vmul.bf16 %v2547, %v3045
      %v3288 = vmul.bf16 %v2548, %v3054
      %v3289 = vmul.bf16 %v2549, %v3063
      %v3290 = vmul.bf16 %v2550, %v3072
      %v3291 = vmul.bf16 %v2551, %v3081
      %v3292 = vmul.bf16 %v2552, %v3090
      %v3293 = vmul.bf16 %v2553, %v3099
      %v3294 = vmul.bf16 %v2554, %v3108
      %v3295 = vmul.bf16 %v2555, %v3117
      %v3296 = vmul.bf16 %v2556, %v3126
      %v3297 = vmul.bf16 %v2557, %v3135
      %v3298 = vmul.bf16 %v2558, %v3144
      %v3299 = vmul.bf16 %v2559, %v3153
      %v3300 = vmul.bf16 %v2560, %v3162
      %v3301 = vmul.bf16 %v2561, %v3171
      %v3302 = vmul.bf16 %v2562, %v3180
      %v3303 = vmul.bf16 %v2563, %v3189
      %v3304 = vmul.bf16 %v2564, %v3198
      %v3305 = vmul.bf16 %v2565, %v3207
      %v3306 = vmul.bf16 %v2566, %v3216
      %v3307 = vmul.bf16 %v2567, %v3225
      %v3308 = vmul.bf16 %v2568, %v3234
      %v3309 = vmul.bf16 %v2569, %v3243
      %v3310 = vmul.bf16 %v2570, %v3244
      %s3311 = scalar_lea.vmem %s3, 4
      %v3312 = vld [vmem:[%s3311] sm:$0x3]
      %v3346 = vunpack.c.l.b16 %v3278
      %v3347 = vunpack.c.l.b16 %v3279
      %v3348 = vunpack.c.l.b16 %v3280
      %v3349 = vunpack.c.l.b16 %v3281
      %v3350 = vunpack.c.l.b16 %v3282
      %v3351 = vunpack.c.l.b16 %v3283
      %v3352 = vunpack.c.l.b16 %v3284
      %v3353 = vunpack.c.l.b16 %v3285
      %v3354 = vunpack.c.l.b16 %v3286
      %v3355 = vunpack.c.l.b16 %v3287
      %v3356 = vunpack.c.l.b16 %v3288
      %v3357 = vunpack.c.l.b16 %v3289
      %v3358 = vunpack.c.l.b16 %v3290
      %v3359 = vunpack.c.l.b16 %v3291
      %v3360 = vunpack.c.l.b16 %v3292
      %v3361 = vunpack.c.l.b16 %v3293
      %v3362 = vunpack.c.l.b16 %v3294
      %v3363 = vunpack.c.l.b16 %v3295
      %v3364 = vunpack.c.l.b16 %v3296
      %v3365 = vunpack.c.l.b16 %v3297
      %v3366 = vunpack.c.l.b16 %v3298
      %v3367 = vunpack.c.l.b16 %v3299
      %v3368 = vunpack.c.l.b16 %v3300
      %v3369 = vunpack.c.l.b16 %v3301
      %v3370 = vunpack.c.l.b16 %v3302
      %v3371 = vunpack.c.l.b16 %v3303
      %v3372 = vunpack.c.l.b16 %v3304
      %v3373 = vunpack.c.l.b16 %v3305
      %v3374 = vunpack.c.l.b16 %v3306
      %v3375 = vunpack.c.l.b16 %v3307
      %v3376 = vunpack.c.l.b16 %v3308
      %v3377 = vunpack.c.l.b16 %v3309
      %v3378 = vunpack.c.l.b16 %v3310
      %v3379 = vpack.c.b16 %v3347, %v3346
      %v3380 = vpack.c.b16 %v3349, %v3348
      %v3381 = vpack.c.b16 %v3351, %v3350
      %v3382 = vpack.c.b16 %v3353, %v3352
      %v3383 = vpack.c.b16 %v3355, %v3354
      %v3384 = vpack.c.b16 %v3357, %v3356
      %v3385 = vpack.c.b16 %v3359, %v3358
      %v3386 = vpack.c.b16 %v3361, %v3360
      %v3387 = vpack.c.b16 %v3363, %v3362
      %v3388 = vpack.c.b16 %v3365, %v3364
      %v3389 = vpack.c.b16 %v3367, %v3366
      %v3390 = vpack.c.b16 %v3369, %v3368
      %v3391 = vpack.c.b16 %v3371, %v3370
      %v3392 = vpack.c.b16 %v3373, %v3372
      %v3393 = vpack.c.b16 %v3375, %v3374
      %v3394 = vpack.c.b16 %v3377, %v3376
      %v3395 = vpack.c.b16 %v3378, %v3378
      %vm3396 = vsmask.f32 7424
      %v3398 = vshrl.u32 %v3379, 16
      %v3400 = vshll.u32 %v3379, 16
      %v3402 = vrot.slane %v3400, 1
      %v3403 = vor.u32 %v3398, %v3402
      %v3405 = vshll.u32 %v3380, 16
      %v3407 = vrot.slane %v3405, 1
      %v3408 = vsel %vm3396, %v3403, %v3407
      %v3409 = vshrl.u32 %v3380, 16
      %v3411 = vor.u32 %v3409, %v3407
      %v3413 = vshll.u32 %v3381, 16
      %v3415 = vrot.slane %v3413, 1
      %v3416 = vsel %vm3396, %v3411, %v3415
      %v3417 = vshrl.u32 %v3381, 16
      %v3419 = vor.u32 %v3417, %v3415
      %v3421 = vshll.u32 %v3382, 16
      %v3423 = vrot.slane %v3421, 1
      %v3424 = vsel %vm3396, %v3419, %v3423
      %v3425 = vshrl.u32 %v3382, 16
      %v3427 = vor.u32 %v3425, %v3423
      %v3429 = vshll.u32 %v3383, 16
      %v3431 = vrot.slane %v3429, 1
      %v3432 = vsel %vm3396, %v3427, %v3431
      %v3433 = vshrl.u32 %v3383, 16
      %v3435 = vor.u32 %v3433, %v3431
      %v3437 = vshll.u32 %v3384, 16
      %v3439 = vrot.slane %v3437, 1
      %v3440 = vsel %vm3396, %v3435, %v3439
      %v3441 = vshrl.u32 %v3384, 16
      %v3443 = vor.u32 %v3441, %v3439
      %v3445 = vshll.u32 %v3385, 16
      %v3447 = vrot.slane %v3445, 1
      %v3448 = vsel %vm3396, %v3443, %v3447
      %v3449 = vshrl.u32 %v3385, 16
      %v3451 = vor.u32 %v3449, %v3447
      %v3453 = vshll.u32 %v3386, 16
      %v3455 = vrot.slane %v3453, 1
      %v3456 = vsel %vm3396, %v3451, %v3455
      %v3457 = vshrl.u32 %v3386, 16
      %v3459 = vor.u32 %v3457, %v3455
      %v3461 = vshll.u32 %v3387, 16
      %v3463 = vrot.slane %v3461, 1
      %v3464 = vsel %vm3396, %v3459, %v3463
      %v3465 = vshrl.u32 %v3387, 16
      %v3467 = vor.u32 %v3465, %v3463
      %v3469 = vshll.u32 %v3388, 16
      %v3471 = vrot.slane %v3469, 1
      %v3472 = vsel %vm3396, %v3467, %v3471
      %v3473 = vshrl.u32 %v3388, 16
      %v3475 = vor.u32 %v3473, %v3471
      %v3477 = vshll.u32 %v3389, 16
      %v3479 = vrot.slane %v3477, 1
      %v3480 = vsel %vm3396, %v3475, %v3479
      %v3481 = vshrl.u32 %v3389, 16
      %v3483 = vor.u32 %v3481, %v3479
      %v3485 = vshll.u32 %v3390, 16
      %v3487 = vrot.slane %v3485, 1
      %v3488 = vsel %vm3396, %v3483, %v3487
      %v3489 = vshrl.u32 %v3390, 16
      %v3491 = vor.u32 %v3489, %v3487
      %v3493 = vshll.u32 %v3391, 16
      %v3495 = vrot.slane %v3493, 1
      %v3496 = vsel %vm3396, %v3491, %v3495
      %v3497 = vshrl.u32 %v3391, 16
      %v3499 = vor.u32 %v3497, %v3495
      %v3501 = vshll.u32 %v3392, 16
      %v3503 = vrot.slane %v3501, 1
      %v3504 = vsel %vm3396, %v3499, %v3503
      %v3505 = vshrl.u32 %v3392, 16
      %v3507 = vor.u32 %v3505, %v3503
      %v3509 = vshll.u32 %v3393, 16
      %v3511 = vrot.slane %v3509, 1
      %v3512 = vsel %vm3396, %v3507, %v3511
      %v3513 = vshrl.u32 %v3393, 16
      %v3515 = vor.u32 %v3513, %v3511
      %v3517 = vshll.u32 %v3394, 16
      %v3519 = vrot.slane %v3517, 1
      %v3520 = vsel %vm3396, %v3515, %v3519
      %v3521 = vshrl.u32 %v3394, 16
      %v3523 = vor.u32 %v3521, %v3519
      %v3525 = vshll.u32 %v3395, 16
      %v3527 = vrot.slane %v3525, 1
      %v3528 = vsel %vm3396, %v3523, %v3527
      %v3530 = vsel %vm511, %v3408, 0
      %v3533 = vsel %vm511, %v3416, 0
      %v3536 = vsel %vm511, %v3424, 0
      %v3539 = vsel %vm511, %v3432, 0
      %v3542 = vsel %vm511, %v3440, 0
      %v3545 = vsel %vm511, %v3448, 0
      %v3548 = vsel %vm511, %v3456, 0
      %v3551 = vsel %vm511, %v3464, 0
      %v3554 = vsel %vm511, %v3472, 0
      %v3557 = vsel %vm511, %v3480, 0
      %v3560 = vsel %vm511, %v3488, 0
      %v3563 = vsel %vm511, %v3496, 0
      %v3566 = vsel %vm511, %v3504, 0
      %v3569 = vsel %vm511, %v3512, 0
      %v3572 = vsel %vm511, %v3520, 0
      %v3575 = vsel %vm511, %v3528, 0
      %v3578 = vsel %vm560, %v3312, 0
      %3580 = vmatprep.subr.bf16.mxu0 0
      %3581 = vmatpush1.bf16.msra.mxu0 0
      %3582 = vmatprep.subr.bf16.mxu0 0
      %3583 = vmatpush1.bf16.msra.mxu0 0
      %3584 = vmatprep.subr.bf16.mxu0 0
      %3585 = vmatpush1.bf16.msra.mxu0 0
      %3586 = vmatprep.subr.bf16.mxu0 0
      %3587 = vmatpush1.bf16.msra.mxu0 0
      %3588 = vmatprep.subr.bf16.mxu0 0
      %3589 = vmatpush1.bf16.msra.mxu0 0
      %3590 = vmatprep.subr.bf16.mxu0 0
      %3591 = vmatpush1.bf16.msra.mxu0 0
      %3592 = vmatprep.subr.bf16.mxu0 0
      %3593 = vmatpush1.bf16.msra.mxu0 0
      %3594 = vmatprep.subr.bf16.mxu0 0
      %3595 = vmatpush1.bf16.msra.mxu0 %v3578
      %3596 = vmatprep.subr.bf16.mxu0 0
      %3597 = vmatpush2.bf16.msra.mxu0 0
      %3598 = vmatprep.subr.bf16.mxu0 0
      %3599 = vmatpush2.bf16.msra.mxu0 0
      %3600 = vmatprep.subr.bf16.mxu0 0
      %3601 = vmatpush2.bf16.msra.mxu0 0
      %3602 = vmatprep.subr.bf16.mxu0 0
      %3603 = vmatpush2.bf16.msra.mxu0 0
      %3604 = vmatprep.subr.bf16.mxu0 0
      %3605 = vmatpush2.bf16.msra.mxu0 0
      %3606 = vmatprep.subr.bf16.mxu0 0
      %3607 = vmatpush2.bf16.msra.mxu0 0
      %3608 = vmatprep.subr.bf16.mxu0 0
      %3609 = vmatpush2.bf16.msra.mxu0 0
      %3610 = vmatprep.subr.bf16.mxu0 0
      %3611 = vmatpush2.bf16.msra.mxu0 0
      %3612 = vmatprep.mubr.bf16.mxu0 0
      %3613 = vmatmul.mubr.bf16.gmra.mxu0 %v3530
      %v3614 = vpop.f32.mrf.mxu0
      %v3615 = vadd.f32 0.0, %v3614
      %v3616 = vpop.f32.mrf.mxu0
      %v3617 = vpop.f32.mrf.mxu0
      %v3618 = vadd.f32 0.0, %v3617
      %v3619 = vpop.f32.mrf.mxu0
      %3620 = vmatprep.mubr.bf16.mxu0 0
      %3621 = vmatmul.mubr.bf16.gmra.mxu0 %v3533
      %v3622 = vpop.f32.mrf.mxu0
      %v3623 = vadd.f32 0.0, %v3622
      %v3624 = vpop.f32.mrf.mxu0
      %v3625 = vpop.f32.mrf.mxu0
      %v3626 = vadd.f32 0.0, %v3625
      %v3627 = vpop.f32.mrf.mxu0
      %3628 = vmatprep.mubr.bf16.mxu0 0
      %3629 = vmatmul.mubr.bf16.gmra.mxu0 %v3536
      %v3630 = vpop.f32.mrf.mxu0
      %v3631 = vadd.f32 0.0, %v3630
      %v3632 = vpop.f32.mrf.mxu0
      %v3633 = vpop.f32.mrf.mxu0
      %v3634 = vadd.f32 0.0, %v3633
      %v3635 = vpop.f32.mrf.mxu0
      %3636 = vmatprep.mubr.bf16.mxu0 0
      %3637 = vmatmul.mubr.bf16.gmra.mxu0 %v3539
      %v3638 = vpop.f32.mrf.mxu0
      %v3639 = vadd.f32 0.0, %v3638
      %v3640 = vpop.f32.mrf.mxu0
      %v3641 = vpop.f32.mrf.mxu0
      %v3642 = vadd.f32 0.0, %v3641
      %v3643 = vpop.f32.mrf.mxu0
      %3644 = vmatprep.mubr.bf16.mxu0 0
      %3645 = vmatmul.mubr.bf16.gmra.mxu0 %v3542
      %v3646 = vpop.f32.mrf.mxu0
      %v3647 = vadd.f32 0.0, %v3646
      %v3648 = vpop.f32.mrf.mxu0
      %v3649 = vpop.f32.mrf.mxu0
      %v3650 = vadd.f32 0.0, %v3649
      %v3651 = vpop.f32.mrf.mxu0
      %3652 = vmatprep.mubr.bf16.mxu0 0
      %3653 = vmatmul.mubr.bf16.gmra.mxu0 %v3545
      %v3654 = vpop.f32.mrf.mxu0
      %v3655 = vadd.f32 0.0, %v3654
      %v3656 = vpop.f32.mrf.mxu0
      %v3657 = vpop.f32.mrf.mxu0
      %v3658 = vadd.f32 0.0, %v3657
      %v3659 = vpop.f32.mrf.mxu0
      %3660 = vmatprep.mubr.bf16.mxu0 0
      %3661 = vmatmul.mubr.bf16.gmra.mxu0 %v3548
      %v3662 = vpop.f32.mrf.mxu0
      %v3663 = vadd.f32 0.0, %v3662
      %v3664 = vpop.f32.mrf.mxu0
      %v3665 = vpop.f32.mrf.mxu0
      %v3666 = vadd.f32 0.0, %v3665
      %v3667 = vpop.f32.mrf.mxu0
      %3668 = vmatprep.mubr.bf16.mxu0 0
      %3669 = vmatmul.mubr.bf16.gmra.mxu0 %v3551
      %v3670 = vpop.f32.mrf.mxu0
      %v3671 = vadd.f32 0.0, %v3670
      %v3672 = vpop.f32.mrf.mxu0
      %v3673 = vpop.f32.mrf.mxu0
      %v3674 = vadd.f32 0.0, %v3673
      %v3675 = vpop.f32.mrf.mxu0
      %3676 = vmatprep.mubr.bf16.mxu0 0
      %3677 = vmatmul.mubr.bf16.gmra.mxu0 %v3554
      %v3678 = vpop.f32.mrf.mxu0
      %v3679 = vadd.f32 0.0, %v3678
      %v3680 = vpop.f32.mrf.mxu0
      %v3681 = vpop.f32.mrf.mxu0
      %v3682 = vadd.f32 0.0, %v3681
      %v3683 = vpop.f32.mrf.mxu0
      %3684 = vmatprep.mubr.bf16.mxu0 0
      %3685 = vmatmul.mubr.bf16.gmra.mxu0 %v3557
      %v3686 = vpop.f32.mrf.mxu0
      %v3687 = vadd.f32 0.0, %v3686
      %v3688 = vpop.f32.mrf.mxu0
      %v3689 = vpop.f32.mrf.mxu0
      %v3690 = vadd.f32 0.0, %v3689
      %v3691 = vpop.f32.mrf.mxu0
      %3692 = vmatprep.mubr.bf16.mxu0 0
      %3693 = vmatmul.mubr.bf16.gmra.mxu0 %v3560
      %v3694 = vpop.f32.mrf.mxu0
      %v3695 = vadd.f32 0.0, %v3694
      %v3696 = vpop.f32.mrf.mxu0
      %v3697 = vpop.f32.mrf.mxu0
      %v3698 = vadd.f32 0.0, %v3697
      %v3699 = vpop.f32.mrf.mxu0
      %3700 = vmatprep.mubr.bf16.mxu0 0
      %3701 = vmatmul.mubr.bf16.gmra.mxu0 %v3563
      %v3702 = vpop.f32.mrf.mxu0
      %v3703 = vadd.f32 0.0, %v3702
      %v3704 = vpop.f32.mrf.mxu0
      %v3705 = vpop.f32.mrf.mxu0
      %v3706 = vadd.f32 0.0, %v3705
      %v3707 = vpop.f32.mrf.mxu0
      %3708 = vmatprep.mubr.bf16.mxu0 0
      %3709 = vmatmul.mubr.bf16.gmra.mxu0 %v3566
      %v3710 = vpop.f32.mrf.mxu0
      %v3711 = vadd.f32 0.0, %v3710
      %v3712 = vpop.f32.mrf.mxu0
      %v3713 = vpop.f32.mrf.mxu0
      %v3714 = vadd.f32 0.0, %v3713
      %v3715 = vpop.f32.mrf.mxu0
      %3716 = vmatprep.mubr.bf16.mxu0 0
      %3717 = vmatmul.mubr.bf16.gmra.mxu0 %v3569
      %v3718 = vpop.f32.mrf.mxu0
      %v3719 = vadd.f32 0.0, %v3718
      %v3720 = vpop.f32.mrf.mxu0
      %v3721 = vpop.f32.mrf.mxu0
      %v3722 = vadd.f32 0.0, %v3721
      %v3723 = vpop.f32.mrf.mxu0
      %3724 = vmatprep.mubr.bf16.mxu0 0
      %3725 = vmatmul.mubr.bf16.gmra.mxu0 %v3572
      %v3726 = vpop.f32.mrf.mxu0
      %v3727 = vadd.f32 0.0, %v3726
      %v3728 = vpop.f32.mrf.mxu0
      %v3729 = vpop.f32.mrf.mxu0
      %v3730 = vadd.f32 0.0, %v3729
      %v3731 = vpop.f32.mrf.mxu0
      %3732 = vmatprep.mubr.bf16.mxu0 0
      %3733 = vmatmul.mubr.bf16.gmra.mxu0 %v3575
      %v3734 = vpop.f32.mrf.mxu0
      %v3735 = vadd.f32 0.0, %v3734
      %v3736 = vpop.f32.mrf.mxu0
      %v3737 = vpop.f32.mrf.mxu0
      %v3738 = vadd.f32 0.0, %v3737
      %v3739 = vpop.f32.mrf.mxu0
      %3740 = vdwg.mxu0
      %v3741 = vadd.f32 %v2412, %v3615
      %v3742 = vadd.f32 %v2415, %v3618
      %v3743 = vadd.f32 %v2420, %v3623
      %v3744 = vadd.f32 %v2423, %v3626
      %v3745 = vadd.f32 %v2428, %v3631
      %v3746 = vadd.f32 %v2431, %v3634
      %v3747 = vadd.f32 %v2436, %v3639
      %v3748 = vadd.f32 %v2439, %v3642
      %v3749 = vadd.f32 %v2444, %v3647
      %v3750 = vadd.f32 %v2447, %v3650
      %v3751 = vadd.f32 %v2452, %v3655
      %v3752 = vadd.f32 %v2455, %v3658
      %v3753 = vadd.f32 %v2460, %v3663
      %v3754 = vadd.f32 %v2463, %v3666
      %v3755 = vadd.f32 %v2468, %v3671
      %v3756 = vadd.f32 %v2471, %v3674
      %v3757 = vadd.f32 %v2476, %v3679
      %v3758 = vadd.f32 %v2479, %v3682
      %v3759 = vadd.f32 %v2484, %v3687
      %v3760 = vadd.f32 %v2487, %v3690
      %v3761 = vadd.f32 %v2492, %v3695
      %v3762 = vadd.f32 %v2495, %v3698
      %v3763 = vadd.f32 %v2500, %v3703
      %v3764 = vadd.f32 %v2503, %v3706
      %v3765 = vadd.f32 %v2508, %v3711
      %v3766 = vadd.f32 %v2511, %v3714
      %v3767 = vadd.f32 %v2516, %v3719
      %v3768 = vadd.f32 %v2519, %v3722
      %v3769 = vadd.f32 %v2524, %v3727
      %v3770 = vadd.f32 %v2527, %v3730
      %v3771 = vadd.f32 %v2532, %v3735
      %v3772 = vadd.f32 %v2535, %v3738
      %v3773 = vld [vmem:[#allocation2 + $0xc] sm:$0x8]
      %v3774 = vld [vmem:[#allocation2 + $0x10] sm:$0xf]
      %v3775 = vld [vmem:[#allocation2 + $0x14] sm:$0xf]
      %v3776 = vld [vmem:[#allocation2 + $0x18] sm:$0xf]
      %v3777 = vld [vmem:[#allocation2 + $0x1c] sm:$0xf]
      %v3778 = vld [vmem:[#allocation2 + $0x20] sm:$0xf]
      %v3779 = vld [vmem:[#allocation2 + $0x24] sm:$0xf]
      %v3780 = vld [vmem:[#allocation2 + $0x28] sm:$0xf]
      %v3781 = vld [vmem:[#allocation2 + $0x2c] sm:$0xf]
      %v3782 = vld [vmem:[#allocation2 + $0x30] sm:$0xf]
      %v3783 = vld [vmem:[#allocation2 + $0x34] sm:$0xf]
      %v3784 = vld [vmem:[#allocation2 + $0x38] sm:$0xf]
      %v3785 = vld [vmem:[#allocation2 + $0x3c] sm:$0xf]
      %v3786 = vld [vmem:[#allocation2 + $0x40] sm:$0xf]
      %v3787 = vld [vmem:[#allocation2 + $0x44] sm:$0xf]
      %v3788 = vld [vmem:[#allocation2 + $0x48] sm:$0xf]
      %v3789 = vld [vmem:[#allocation2 + $0x4c] sm:$0xf]
      %v3790 = vld [vmem:[#allocation2 + $0x50] sm:$0xf]
      %v3791 = vld [vmem:[#allocation2 + $0x54] sm:$0xf]
      %v3792 = vld [vmem:[#allocation2 + $0x58] sm:$0xf]
      %v3793 = vld [vmem:[#allocation2 + $0x5c] sm:$0xf]
      %v3794 = vld [vmem:[#allocation2 + $0x60] sm:$0xf]
      %v3795 = vld [vmem:[#allocation2 + $0x64] sm:$0xf]
      %v3796 = vld [vmem:[#allocation2 + $0x68] sm:$0xf]
      %v3797 = vld [vmem:[#allocation2 + $0x6c] sm:$0xf]
      %v3798 = vld [vmem:[#allocation2 + $0x70] sm:$0xf]
      %v3799 = vld [vmem:[#allocation2 + $0x74] sm:$0xf]
      %v3800 = vld [vmem:[#allocation2 + $0x78] sm:$0xf]
      %v3801 = vld [vmem:[#allocation2 + $0x7c] sm:$0xf]
      %v3802 = vld [vmem:[#allocation2 + $0x80] sm:$0xf]
      %v3803 = vld [vmem:[#allocation2 + $0x84] sm:$0xf]
      %v3804 = vld [vmem:[#allocation2 + $0x88] sm:$0xf]
      %v3805 = vld [vmem:[#allocation2 + $0x8c] sm:$0xf]
      %v3806 = vmul.bf16 %v3773, %v1413
      %v3807 = vmul.bf16 %v3774, %v1423
      %v3808 = vmul.bf16 %v3775, %v1433
      %v3809 = vmul.bf16 %v3776, %v1443
      %v3810 = vmul.bf16 %v3777, %v1453
      %v3811 = vmul.bf16 %v3778, %v1463
      %v3812 = vmul.bf16 %v3779, %v1473
      %v3813 = vmul.bf16 %v3780, %v1483
      %v3814 = vmul.bf16 %v3781, %v1493
      %v3815 = vmul.bf16 %v3782, %v1503
      %v3816 = vmul.bf16 %v3783, %v1513
      %v3817 = vmul.bf16 %v3784, %v1523
      %v3818 = vmul.bf16 %v3785, %v1533
      %v3819 = vmul.bf16 %v3786, %v1543
      %v3820 = vmul.bf16 %v3787, %v1553
      %v3821 = vmul.bf16 %v3788, %v1563
      %v3822 = vmul.bf16 %v3789, %v1573
      %v3823 = vmul.bf16 %v3790, %v1583
      %v3824 = vmul.bf16 %v3791, %v1593
      %v3825 = vmul.bf16 %v3792, %v1603
      %v3826 = vmul.bf16 %v3793, %v1613
      %v3827 = vmul.bf16 %v3794, %v1623
      %v3828 = vmul.bf16 %v3795, %v1633
      %v3829 = vmul.bf16 %v3796, %v1643
      %v3830 = vmul.bf16 %v3797, %v1653
      %v3831 = vmul.bf16 %v3798, %v1663
      %v3832 = vmul.bf16 %v3799, %v1673
      %v3833 = vmul.bf16 %v3800, %v1683
      %v3834 = vmul.bf16 %v3801, %v1693
      %v3835 = vmul.bf16 %v3802, %v1703
      %v3836 = vmul.bf16 %v3803, %v1713
      %v3837 = vmul.bf16 %v3804, %v1723
      %v3838 = vmul.bf16 %v3805, %v1728
      %s3839 = scalar_lea.vmem %s3, 6
      %v3840 = vld [vmem:[%s3839] sm:$0x3]
      %v3874 = vunpack.c.l.b16 %v3806
      %v3875 = vunpack.c.l.b16 %v3807
      %v3876 = vunpack.c.l.b16 %v3808
      %v3877 = vunpack.c.l.b16 %v3809
      %v3878 = vunpack.c.l.b16 %v3810
      %v3879 = vunpack.c.l.b16 %v3811
      %v3880 = vunpack.c.l.b16 %v3812
      %v3881 = vunpack.c.l.b16 %v3813
      %v3882 = vunpack.c.l.b16 %v3814
      %v3883 = vunpack.c.l.b16 %v3815
      %v3884 = vunpack.c.l.b16 %v3816
      %v3885 = vunpack.c.l.b16 %v3817
      %v3886 = vunpack.c.l.b16 %v3818
      %v3887 = vunpack.c.l.b16 %v3819
      %v3888 = vunpack.c.l.b16 %v3820
      %v3889 = vunpack.c.l.b16 %v3821
      %v3890 = vunpack.c.l.b16 %v3822
      %v3891 = vunpack.c.l.b16 %v3823
      %v3892 = vunpack.c.l.b16 %v3824
      %v3893 = vunpack.c.l.b16 %v3825
      %v3894 = vunpack.c.l.b16 %v3826
      %v3895 = vunpack.c.l.b16 %v3827
      %v3896 = vunpack.c.l.b16 %v3828
      %v3897 = vunpack.c.l.b16 %v3829
      %v3898 = vunpack.c.l.b16 %v3830
      %v3899 = vunpack.c.l.b16 %v3831
      %v3900 = vunpack.c.l.b16 %v3832
      %v3901 = vunpack.c.l.b16 %v3833
      %v3902 = vunpack.c.l.b16 %v3834
      %v3903 = vunpack.c.l.b16 %v3835
      %v3904 = vunpack.c.l.b16 %v3836
      %v3905 = vunpack.c.l.b16 %v3837
      %v3906 = vunpack.c.l.b16 %v3838
      %v3907 = vpack.c.b16 %v3875, %v3874
      %v3908 = vpack.c.b16 %v3877, %v3876
      %v3909 = vpack.c.b16 %v3879, %v3878
      %v3910 = vpack.c.b16 %v3881, %v3880
      %v3911 = vpack.c.b16 %v3883, %v3882
      %v3912 = vpack.c.b16 %v3885, %v3884
      %v3913 = vpack.c.b16 %v3887, %v3886
      %v3914 = vpack.c.b16 %v3889, %v3888
      %v3915 = vpack.c.b16 %v3891, %v3890
      %v3916 = vpack.c.b16 %v3893, %v3892
      %v3917 = vpack.c.b16 %v3895, %v3894
      %v3918 = vpack.c.b16 %v3897, %v3896
      %v3919 = vpack.c.b16 %v3899, %v3898
      %v3920 = vpack.c.b16 %v3901, %v3900
      %v3921 = vpack.c.b16 %v3903, %v3902
      %v3922 = vpack.c.b16 %v3905, %v3904
      %v3923 = vpack.c.b16 %v3906, %v3906
      %v3925 = vshrl.u32 %v3907, 16
      %v3927 = vrot.slane %v3925, 3
      %v3928 = vshll.u32 %v3907, 16
      %v3930 = vrot.slane %v3928, 4
      %v3931 = vor.u32 %v3927, %v3930
      %v3933 = vshrl.u32 %v3908, 16
      %v3935 = vrot.slane %v3933, 3
      %v3936 = vshll.u32 %v3908, 16
      %v3938 = vrot.slane %v3936, 4
      %v3939 = vor.u32 %v3935, %v3938
      %v3940 = vsel %vm2173, %v3931, %v3939
      %v3942 = vshrl.u32 %v3909, 16
      %v3944 = vrot.slane %v3942, 3
      %v3945 = vshll.u32 %v3909, 16
      %v3947 = vrot.slane %v3945, 4
      %v3948 = vor.u32 %v3944, %v3947
      %v3949 = vsel %vm2173, %v3939, %v3948
      %v3951 = vshrl.u32 %v3910, 16
      %v3953 = vrot.slane %v3951, 3
      %v3954 = vshll.u32 %v3910, 16
      %v3956 = vrot.slane %v3954, 4
      %v3957 = vor.u32 %v3953, %v3956
      %v3958 = vsel %vm2173, %v3948, %v3957
      %v3960 = vshrl.u32 %v3911, 16
      %v3962 = vrot.slane %v3960, 3
      %v3963 = vshll.u32 %v3911, 16
      %v3965 = vrot.slane %v3963, 4
      %v3966 = vor.u32 %v3962, %v3965
      %v3967 = vsel %vm2173, %v3957, %v3966
      %v3969 = vshrl.u32 %v3912, 16
      %v3971 = vrot.slane %v3969, 3
      %v3972 = vshll.u32 %v3912, 16
      %v3974 = vrot.slane %v3972, 4
      %v3975 = vor.u32 %v3971, %v3974
      %v3976 = vsel %vm2173, %v3966, %v3975
      %v3978 = vshrl.u32 %v3913, 16
      %v3980 = vrot.slane %v3978, 3
      %v3981 = vshll.u32 %v3913, 16
      %v3983 = vrot.slane %v3981, 4
      %v3984 = vor.u32 %v3980, %v3983
      %v3985 = vsel %vm2173, %v3975, %v3984
      %v3987 = vshrl.u32 %v3914, 16
      %v3989 = vrot.slane %v3987, 3
      %v3990 = vshll.u32 %v3914, 16
      %v3992 = vrot.slane %v3990, 4
      %v3993 = vor.u32 %v3989, %v3992
      %v3994 = vsel %vm2173, %v3984, %v3993
      %v3996 = vshrl.u32 %v3915, 16
      %v3998 = vrot.slane %v3996, 3
      %v3999 = vshll.u32 %v3915, 16
      %v4001 = vrot.slane %v3999, 4
      %v4002 = vor.u32 %v3998, %v4001
      %v4003 = vsel %vm2173, %v3993, %v4002
      %v4005 = vshrl.u32 %v3916, 16
      %v4007 = vrot.slane %v4005, 3
      %v4008 = vshll.u32 %v3916, 16
      %v4010 = vrot.slane %v4008, 4
      %v4011 = vor.u32 %v4007, %v4010
      %v4012 = vsel %vm2173, %v4002, %v4011
      %v4014 = vshrl.u32 %v3917, 16
      %v4016 = vrot.slane %v4014, 3
      %v4017 = vshll.u32 %v3917, 16
      %v4019 = vrot.slane %v4017, 4
      %v4020 = vor.u32 %v4016, %v4019
      %v4021 = vsel %vm2173, %v4011, %v4020
      %v4023 = vshrl.u32 %v3918, 16
      %v4025 = vrot.slane %v4023, 3
      %v4026 = vshll.u32 %v3918, 16
      %v4028 = vrot.slane %v4026, 4
      %v4029 = vor.u32 %v4025, %v4028
      %v4030 = vsel %vm2173, %v4020, %v4029
      %v4032 = vshrl.u32 %v3919, 16
      %v4034 = vrot.slane %v4032, 3
      %v4035 = vshll.u32 %v3919, 16
      %v4037 = vrot.slane %v4035, 4
      %v4038 = vor.u32 %v4034, %v4037
      %v4039 = vsel %vm2173, %v4029, %v4038
      %v4041 = vshrl.u32 %v3920, 16
      %v4043 = vrot.slane %v4041, 3
      %v4044 = vshll.u32 %v3920, 16
      %v4046 = vrot.slane %v4044, 4
      %v4047 = vor.u32 %v4043, %v4046
      %v4048 = vsel %vm2173, %v4038, %v4047
      %v4050 = vshrl.u32 %v3921, 16
      %v4052 = vrot.slane %v4050, 3
      %v4053 = vshll.u32 %v3921, 16
      %v4055 = vrot.slane %v4053, 4
      %v4056 = vor.u32 %v4052, %v4055
      %v4057 = vsel %vm2173, %v4047, %v4056
      %v4059 = vshrl.u32 %v3922, 16
      %v4061 = vrot.slane %v4059, 3
      %v4062 = vshll.u32 %v3922, 16
      %v4064 = vrot.slane %v4062, 4
      %v4065 = vor.u32 %v4061, %v4064
      %v4066 = vsel %vm2173, %v4056, %v4065
      %v4068 = vshrl.u32 %v3923, 16
      %v4070 = vrot.slane %v4068, 3
      %v4071 = vshll.u32 %v3923, 16
      %v4073 = vrot.slane %v4071, 4
      %v4074 = vor.u32 %v4070, %v4073
      %v4075 = vsel %vm2173, %v4065, %v4074
      %v4077 = vsel %vm511, %v3940, 0
      %v4080 = vsel %vm511, %v3949, 0
      %v4083 = vsel %vm511, %v3958, 0
      %v4086 = vsel %vm511, %v3967, 0
      %v4089 = vsel %vm511, %v3976, 0
      %v4092 = vsel %vm511, %v3985, 0
      %v4095 = vsel %vm511, %v3994, 0
      %v4098 = vsel %vm511, %v4003, 0
      %v4101 = vsel %vm511, %v4012, 0
      %v4104 = vsel %vm511, %v4021, 0
      %v4107 = vsel %vm511, %v4030, 0
      %v4110 = vsel %vm511, %v4039, 0
      %v4113 = vsel %vm511, %v4048, 0
      %v4116 = vsel %vm511, %v4057, 0
      %v4119 = vsel %vm511, %v4066, 0
      %v4122 = vsel %vm511, %v4075, 0
      %v4125 = vsel %vm560, %v3840, 0
      %4127 = vmatprep.subr.bf16.mxu0 0
      %4128 = vmatpush1.bf16.msra.mxu0 0
      %4129 = vmatprep.subr.bf16.mxu0 0
      %4130 = vmatpush1.bf16.msra.mxu0 0
      %4131 = vmatprep.subr.bf16.mxu0 0
      %4132 = vmatpush1.bf16.msra.mxu0 0
      %4133 = vmatprep.subr.bf16.mxu0 0
      %4134 = vmatpush1.bf16.msra.mxu0 0
      %4135 = vmatprep.subr.bf16.mxu0 0
      %4136 = vmatpush1.bf16.msra.mxu0 0
      %4137 = vmatprep.subr.bf16.mxu0 0
      %4138 = vmatpush1.bf16.msra.mxu0 0
      %4139 = vmatprep.subr.bf16.mxu0 0
      %4140 = vmatpush1.bf16.msra.mxu0 0
      %4141 = vmatprep.subr.bf16.mxu0 0
      %4142 = vmatpush1.bf16.msra.mxu0 %v4125
      %4143 = vmatprep.subr.bf16.mxu0 0
      %4144 = vmatpush2.bf16.msra.mxu0 0
      %4145 = vmatprep.subr.bf16.mxu0 0
      %4146 = vmatpush2.bf16.msra.mxu0 0
      %4147 = vmatprep.subr.bf16.mxu0 0
      %4148 = vmatpush2.bf16.msra.mxu0 0
      %4149 = vmatprep.subr.bf16.mxu0 0
      %4150 = vmatpush2.bf16.msra.mxu0 0
      %4151 = vmatprep.subr.bf16.mxu0 0
      %4152 = vmatpush2.bf16.msra.mxu0 0
      %4153 = vmatprep.subr.bf16.mxu0 0
      %4154 = vmatpush2.bf16.msra.mxu0 0
      %4155 = vmatprep.subr.bf16.mxu0 0
      %4156 = vmatpush2.bf16.msra.mxu0 0
      %4157 = vmatprep.subr.bf16.mxu0 0
      %4158 = vmatpush2.bf16.msra.mxu0 0
      %4159 = vmatprep.mubr.bf16.mxu0 0
      %4160 = vmatmul.mubr.bf16.gmra.mxu0 %v4077
      %v4161 = vpop.f32.mrf.mxu0
      %v4162 = vadd.f32 0.0, %v4161
      %v4163 = vpop.f32.mrf.mxu0
      %v4164 = vpop.f32.mrf.mxu0
      %v4165 = vadd.f32 0.0, %v4164
      %v4166 = vpop.f32.mrf.mxu0
      %4167 = vmatprep.mubr.bf16.mxu0 0
      %4168 = vmatmul.mubr.bf16.gmra.mxu0 %v4080
      %v4169 = vpop.f32.mrf.mxu0
      %v4170 = vadd.f32 0.0, %v4169
      %v4171 = vpop.f32.mrf.mxu0
      %v4172 = vpop.f32.mrf.mxu0
      %v4173 = vadd.f32 0.0, %v4172
      %v4174 = vpop.f32.mrf.mxu0
      %4175 = vmatprep.mubr.bf16.mxu0 0
      %4176 = vmatmul.mubr.bf16.gmra.mxu0 %v4083
      %v4177 = vpop.f32.mrf.mxu0
      %v4178 = vadd.f32 0.0, %v4177
      %v4179 = vpop.f32.mrf.mxu0
      %v4180 = vpop.f32.mrf.mxu0
      %v4181 = vadd.f32 0.0, %v4180
      %v4182 = vpop.f32.mrf.mxu0
      %4183 = vmatprep.mubr.bf16.mxu0 0
      %4184 = vmatmul.mubr.bf16.gmra.mxu0 %v4086
      %v4185 = vpop.f32.mrf.mxu0
      %v4186 = vadd.f32 0.0, %v4185
      %v4187 = vpop.f32.mrf.mxu0
      %v4188 = vpop.f32.mrf.mxu0
      %v4189 = vadd.f32 0.0, %v4188
      %v4190 = vpop.f32.mrf.mxu0
      %4191 = vmatprep.mubr.bf16.mxu0 0
      %4192 = vmatmul.mubr.bf16.gmra.mxu0 %v4089
      %v4193 = vpop.f32.mrf.mxu0
      %v4194 = vadd.f32 0.0, %v4193
      %v4195 = vpop.f32.mrf.mxu0
      %v4196 = vpop.f32.mrf.mxu0
      %v4197 = vadd.f32 0.0, %v4196
      %v4198 = vpop.f32.mrf.mxu0
      %4199 = vmatprep.mubr.bf16.mxu0 0
      %4200 = vmatmul.mubr.bf16.gmra.mxu0 %v4092
      %v4201 = vpop.f32.mrf.mxu0
      %v4202 = vadd.f32 0.0, %v4201
      %v4203 = vpop.f32.mrf.mxu0
      %v4204 = vpop.f32.mrf.mxu0
      %v4205 = vadd.f32 0.0, %v4204
      %v4206 = vpop.f32.mrf.mxu0
      %4207 = vmatprep.mubr.bf16.mxu0 0
      %4208 = vmatmul.mubr.bf16.gmra.mxu0 %v4095
      %v4209 = vpop.f32.mrf.mxu0
      %v4210 = vadd.f32 0.0, %v4209
      %v4211 = vpop.f32.mrf.mxu0
      %v4212 = vpop.f32.mrf.mxu0
      %v4213 = vadd.f32 0.0, %v4212
      %v4214 = vpop.f32.mrf.mxu0
      %4215 = vmatprep.mubr.bf16.mxu0 0
      %4216 = vmatmul.mubr.bf16.gmra.mxu0 %v4098
      %v4217 = vpop.f32.mrf.mxu0
      %v4218 = vadd.f32 0.0, %v4217
      %v4219 = vpop.f32.mrf.mxu0
      %v4220 = vpop.f32.mrf.mxu0
      %v4221 = vadd.f32 0.0, %v4220
      %v4222 = vpop.f32.mrf.mxu0
      %4223 = vmatprep.mubr.bf16.mxu0 0
      %4224 = vmatmul.mubr.bf16.gmra.mxu0 %v4101
      %v4225 = vpop.f32.mrf.mxu0
      %v4226 = vadd.f32 0.0, %v4225
      %v4227 = vpop.f32.mrf.mxu0
      %v4228 = vpop.f32.mrf.mxu0
      %v4229 = vadd.f32 0.0, %v4228
      %v4230 = vpop.f32.mrf.mxu0
      %4231 = vmatprep.mubr.bf16.mxu0 0
      %4232 = vmatmul.mubr.bf16.gmra.mxu0 %v4104
      %v4233 = vpop.f32.mrf.mxu0
      %v4234 = vadd.f32 0.0, %v4233
      %v4235 = vpop.f32.mrf.mxu0
      %v4236 = vpop.f32.mrf.mxu0
      %v4237 = vadd.f32 0.0, %v4236
      %v4238 = vpop.f32.mrf.mxu0
      %4239 = vmatprep.mubr.bf16.mxu0 0
      %4240 = vmatmul.mubr.bf16.gmra.mxu0 %v4107
      %v4241 = vpop.f32.mrf.mxu0
      %v4242 = vadd.f32 0.0, %v4241
      %v4243 = vpop.f32.mrf.mxu0
      %v4244 = vpop.f32.mrf.mxu0
      %v4245 = vadd.f32 0.0, %v4244
      %v4246 = vpop.f32.mrf.mxu0
      %4247 = vmatprep.mubr.bf16.mxu0 0
      %4248 = vmatmul.mubr.bf16.gmra.mxu0 %v4110
      %v4249 = vpop.f32.mrf.mxu0
      %v4250 = vadd.f32 0.0, %v4249
      %v4251 = vpop.f32.mrf.mxu0
      %v4252 = vpop.f32.mrf.mxu0
      %v4253 = vadd.f32 0.0, %v4252
      %v4254 = vpop.f32.mrf.mxu0
      %4255 = vmatprep.mubr.bf16.mxu0 0
      %4256 = vmatmul.mubr.bf16.gmra.mxu0 %v4113
      %v4257 = vpop.f32.mrf.mxu0
      %v4258 = vadd.f32 0.0, %v4257
      %v4259 = vpop.f32.mrf.mxu0
      %v4260 = vpop.f32.mrf.mxu0
      %v4261 = vadd.f32 0.0, %v4260
      %v4262 = vpop.f32.mrf.mxu0
      %4263 = vmatprep.mubr.bf16.mxu0 0
      %4264 = vmatmul.mubr.bf16.gmra.mxu0 %v4116
      %v4265 = vpop.f32.mrf.mxu0
      %v4266 = vadd.f32 0.0, %v4265
      %v4267 = vpop.f32.mrf.mxu0
      %v4268 = vpop.f32.mrf.mxu0
      %v4269 = vadd.f32 0.0, %v4268
      %v4270 = vpop.f32.mrf.mxu0
      %4271 = vmatprep.mubr.bf16.mxu0 0
      %4272 = vmatmul.mubr.bf16.gmra.mxu0 %v4119
      %v4273 = vpop.f32.mrf.mxu0
      %v4274 = vadd.f32 0.0, %v4273
      %v4275 = vpop.f32.mrf.mxu0
      %v4276 = vpop.f32.mrf.mxu0
      %v4277 = vadd.f32 0.0, %v4276
      %v4278 = vpop.f32.mrf.mxu0
      %4279 = vmatprep.mubr.bf16.mxu0 0
      %4280 = vmatmul.mubr.bf16.gmra.mxu0 %v4122
      %v4281 = vpop.f32.mrf.mxu0
      %v4282 = vadd.f32 0.0, %v4281
      %v4283 = vpop.f32.mrf.mxu0
      %v4284 = vpop.f32.mrf.mxu0
      %v4285 = vadd.f32 0.0, %v4284
      %v4286 = vpop.f32.mrf.mxu0
      %4287 = vdwg.mxu0
      %v4288 = vadd.f32 %v3741, %v4162
      %v4289 = vadd.f32 %v3742, %v4165
      %v4290 = vadd.f32 %v3743, %v4170
      %v4291 = vadd.f32 %v3744, %v4173
      %v4292 = vadd.f32 %v3745, %v4178
      %v4293 = vadd.f32 %v3746, %v4181
      %v4294 = vadd.f32 %v3747, %v4186
      %v4295 = vadd.f32 %v3748, %v4189
      %v4296 = vadd.f32 %v3749, %v4194
      %v4297 = vadd.f32 %v3750, %v4197
      %v4298 = vadd.f32 %v3751, %v4202
      %v4299 = vadd.f32 %v3752, %v4205
      %v4300 = vadd.f32 %v3753, %v4210
      %v4301 = vadd.f32 %v3754, %v4213
      %v4302 = vadd.f32 %v3755, %v4218
      %v4303 = vadd.f32 %v3756, %v4221
      %v4304 = vadd.f32 %v3757, %v4226
      %v4305 = vadd.f32 %v3758, %v4229
      %v4306 = vadd.f32 %v3759, %v4234
      %v4307 = vadd.f32 %v3760, %v4237
      %v4308 = vadd.f32 %v3761, %v4242
      %v4309 = vadd.f32 %v3762, %v4245
      %v4310 = vadd.f32 %v3763, %v4250
      %v4311 = vadd.f32 %v3764, %v4253
      %v4312 = vadd.f32 %v3765, %v4258
      %v4313 = vadd.f32 %v3766, %v4261
      %v4314 = vadd.f32 %v3767, %v4266
      %v4315 = vadd.f32 %v3768, %v4269
      %v4316 = vadd.f32 %v3769, %v4274
      %v4317 = vadd.f32 %v3770, %v4277
      %v4318 = vadd.f32 %v3771, %v4282
      %v4319 = vadd.f32 %v3772, %v4285
      %s4320 = scalar_lea.vmem %s3, 8
      %v4321 = vld [vmem:[%s4320] sm:$0x3]
      %v4354 = vunpack.c.l.b16 %v3774
      %v4355 = vunpack.c.l.b16 %v3775
      %v4356 = vunpack.c.l.b16 %v3776
      %v4357 = vunpack.c.l.b16 %v3777
      %v4358 = vunpack.c.l.b16 %v3778
      %v4359 = vunpack.c.l.b16 %v3779
      %v4360 = vunpack.c.l.b16 %v3780
      %v4361 = vunpack.c.l.b16 %v3781
      %v4362 = vunpack.c.l.b16 %v3782
      %v4363 = vunpack.c.l.b16 %v3783
      %v4364 = vunpack.c.l.b16 %v3784
      %v4365 = vunpack.c.l.b16 %v3785
      %v4366 = vunpack.c.l.b16 %v3786
      %v4367 = vunpack.c.l.b16 %v3787
      %v4368 = vunpack.c.l.b16 %v3788
      %v4369 = vunpack.c.l.b16 %v3789
      %v4370 = vunpack.c.l.b16 %v3790
      %v4371 = vunpack.c.l.b16 %v3791
      %v4372 = vunpack.c.l.b16 %v3792
      %v4373 = vunpack.c.l.b16 %v3793
      %v4374 = vunpack.c.l.b16 %v3794
      %v4375 = vunpack.c.l.b16 %v3795
      %v4376 = vunpack.c.l.b16 %v3796
      %v4377 = vunpack.c.l.b16 %v3797
      %v4378 = vunpack.c.l.b16 %v3798
      %v4379 = vunpack.c.l.b16 %v3799
      %v4380 = vunpack.c.l.b16 %v3800
      %v4381 = vunpack.c.l.b16 %v3801
      %v4382 = vunpack.c.l.b16 %v3802
      %v4383 = vunpack.c.l.b16 %v3803
      %v4384 = vunpack.c.l.b16 %v3804
      %v4385 = vunpack.c.l.b16 %v3805
      %v4386 = vpack.c.b16 %v4355, %v4354
      %v4387 = vpack.c.b16 %v4357, %v4356
      %v4388 = vpack.c.b16 %v4359, %v4358
      %v4389 = vpack.c.b16 %v4361, %v4360
      %v4390 = vpack.c.b16 %v4363, %v4362
      %v4391 = vpack.c.b16 %v4365, %v4364
      %v4392 = vpack.c.b16 %v4367, %v4366
      %v4393 = vpack.c.b16 %v4369, %v4368
      %v4394 = vpack.c.b16 %v4371, %v4370
      %v4395 = vpack.c.b16 %v4373, %v4372
      %v4396 = vpack.c.b16 %v4375, %v4374
      %v4397 = vpack.c.b16 %v4377, %v4376
      %v4398 = vpack.c.b16 %v4379, %v4378
      %v4399 = vpack.c.b16 %v4381, %v4380
      %v4400 = vpack.c.b16 %v4383, %v4382
      %v4401 = vpack.c.b16 %v4385, %v4384
      %v4403 = vsel %vm511, %v4386, 0
      %v4406 = vsel %vm511, %v4387, 0
      %v4409 = vsel %vm511, %v4388, 0
      %v4412 = vsel %vm511, %v4389, 0
      %v4415 = vsel %vm511, %v4390, 0
      %v4418 = vsel %vm511, %v4391, 0
      %v4421 = vsel %vm511, %v4392, 0
      %v4424 = vsel %vm511, %v4393, 0
      %v4427 = vsel %vm511, %v4394, 0
      %v4430 = vsel %vm511, %v4395, 0
      %v4433 = vsel %vm511, %v4396, 0
      %v4436 = vsel %vm511, %v4397, 0
      %v4439 = vsel %vm511, %v4398, 0
      %v4442 = vsel %vm511, %v4399, 0
      %v4445 = vsel %vm511, %v4400, 0
      %v4448 = vsel %vm511, %v4401, 0
      %v4451 = vsel %vm560, %v4321, 0
      %4453 = vmatprep.subr.bf16.mxu0 0
      %4454 = vmatpush1.bf16.msra.mxu0 0
      %4455 = vmatprep.subr.bf16.mxu0 0
      %4456 = vmatpush1.bf16.msra.mxu0 0
      %4457 = vmatprep.subr.bf16.mxu0 0
      %4458 = vmatpush1.bf16.msra.mxu0 0
      %4459 = vmatprep.subr.bf16.mxu0 0
      %4460 = vmatpush1.bf16.msra.mxu0 0
      %4461 = vmatprep.subr.bf16.mxu0 0
      %4462 = vmatpush1.bf16.msra.mxu0 0
      %4463 = vmatprep.subr.bf16.mxu0 0
      %4464 = vmatpush1.bf16.msra.mxu0 0
      %4465 = vmatprep.subr.bf16.mxu0 0
      %4466 = vmatpush1.bf16.msra.mxu0 0
      %4467 = vmatprep.subr.bf16.mxu0 0
      %4468 = vmatpush1.bf16.msra.mxu0 %v4451
      %4469 = vmatprep.subr.bf16.mxu0 0
      %4470 = vmatpush2.bf16.msra.mxu0 0
      %4471 = vmatprep.subr.bf16.mxu0 0
      %4472 = vmatpush2.bf16.msra.mxu0 0
      %4473 = vmatprep.subr.bf16.mxu0 0
      %4474 = vmatpush2.bf16.msra.mxu0 0
      %4475 = vmatprep.subr.bf16.mxu0 0
      %4476 = vmatpush2.bf16.msra.mxu0 0
      %4477 = vmatprep.subr.bf16.mxu0 0
      %4478 = vmatpush2.bf16.msra.mxu0 0
      %4479 = vmatprep.subr.bf16.mxu0 0
      %4480 = vmatpush2.bf16.msra.mxu0 0
      %4481 = vmatprep.subr.bf16.mxu0 0
      %4482 = vmatpush2.bf16.msra.mxu0 0
      %4483 = vmatprep.subr.bf16.mxu0 0
      %4484 = vmatpush2.bf16.msra.mxu0 0
      %4485 = vmatprep.mubr.bf16.mxu0 0
      %4486 = vmatmul.mubr.bf16.gmra.mxu0 %v4403
      %v4487 = vpop.f32.mrf.mxu0
      %v4488 = vadd.f32 0.0, %v4487
      %v4489 = vpop.f32.mrf.mxu0
      %v4490 = vpop.f32.mrf.mxu0
      %v4491 = vadd.f32 0.0, %v4490
      %v4492 = vpop.f32.mrf.mxu0
      %4493 = vmatprep.mubr.bf16.mxu0 0
      %4494 = vmatmul.mubr.bf16.gmra.mxu0 %v4406
      %v4495 = vpop.f32.mrf.mxu0
      %v4496 = vadd.f32 0.0, %v4495
      %v4497 = vpop.f32.mrf.mxu0
      %v4498 = vpop.f32.mrf.mxu0
      %v4499 = vadd.f32 0.0, %v4498
      %v4500 = vpop.f32.mrf.mxu0
      %4501 = vmatprep.mubr.bf16.mxu0 0
      %4502 = vmatmul.mubr.bf16.gmra.mxu0 %v4409
      %v4503 = vpop.f32.mrf.mxu0
      %v4504 = vadd.f32 0.0, %v4503
      %v4505 = vpop.f32.mrf.mxu0
      %v4506 = vpop.f32.mrf.mxu0
      %v4507 = vadd.f32 0.0, %v4506
      %v4508 = vpop.f32.mrf.mxu0
      %4509 = vmatprep.mubr.bf16.mxu0 0
      %4510 = vmatmul.mubr.bf16.gmra.mxu0 %v4412
      %v4511 = vpop.f32.mrf.mxu0
      %v4512 = vadd.f32 0.0, %v4511
      %v4513 = vpop.f32.mrf.mxu0
      %v4514 = vpop.f32.mrf.mxu0
      %v4515 = vadd.f32 0.0, %v4514
      %v4516 = vpop.f32.mrf.mxu0
      %4517 = vmatprep.mubr.bf16.mxu0 0
      %4518 = vmatmul.mubr.bf16.gmra.mxu0 %v4415
      %v4519 = vpop.f32.mrf.mxu0
      %v4520 = vadd.f32 0.0, %v4519
      %v4521 = vpop.f32.mrf.mxu0
      %v4522 = vpop.f32.mrf.mxu0
      %v4523 = vadd.f32 0.0, %v4522
      %v4524 = vpop.f32.mrf.mxu0
      %4525 = vmatprep.mubr.bf16.mxu0 0
      %4526 = vmatmul.mubr.bf16.gmra.mxu0 %v4418
      %v4527 = vpop.f32.mrf.mxu0
      %v4528 = vadd.f32 0.0, %v4527
      %v4529 = vpop.f32.mrf.mxu0
      %v4530 = vpop.f32.mrf.mxu0
      %v4531 = vadd.f32 0.0, %v4530
      %v4532 = vpop.f32.mrf.mxu0
      %4533 = vmatprep.mubr.bf16.mxu0 0
      %4534 = vmatmul.mubr.bf16.gmra.mxu0 %v4421
      %v4535 = vpop.f32.mrf.mxu0
      %v4536 = vadd.f32 0.0, %v4535
      %v4537 = vpop.f32.mrf.mxu0
      %v4538 = vpop.f32.mrf.mxu0
      %v4539 = vadd.f32 0.0, %v4538
      %v4540 = vpop.f32.mrf.mxu0
      %4541 = vmatprep.mubr.bf16.mxu0 0
      %4542 = vmatmul.mubr.bf16.gmra.mxu0 %v4424
      %v4543 = vpop.f32.mrf.mxu0
      %v4544 = vadd.f32 0.0, %v4543
      %v4545 = vpop.f32.mrf.mxu0
      %v4546 = vpop.f32.mrf.mxu0
      %v4547 = vadd.f32 0.0, %v4546
      %v4548 = vpop.f32.mrf.mxu0
      %4549 = vmatprep.mubr.bf16.mxu0 0
      %4550 = vmatmul.mubr.bf16.gmra.mxu0 %v4427
      %v4551 = vpop.f32.mrf.mxu0
      %v4552 = vadd.f32 0.0, %v4551
      %v4553 = vpop.f32.mrf.mxu0
      %v4554 = vpop.f32.mrf.mxu0
      %v4555 = vadd.f32 0.0, %v4554
      %v4556 = vpop.f32.mrf.mxu0
      %4557 = vmatprep.mubr.bf16.mxu0 0
      %4558 = vmatmul.mubr.bf16.gmra.mxu0 %v4430
      %v4559 = vpop.f32.mrf.mxu0
      %v4560 = vadd.f32 0.0, %v4559
      %v4561 = vpop.f32.mrf.mxu0
      %v4562 = vpop.f32.mrf.mxu0
      %v4563 = vadd.f32 0.0, %v4562
      %v4564 = vpop.f32.mrf.mxu0
      %4565 = vmatprep.mubr.bf16.mxu0 0
      %4566 = vmatmul.mubr.bf16.gmra.mxu0 %v4433
      %v4567 = vpop.f32.mrf.mxu0
      %v4568 = vadd.f32 0.0, %v4567
      %v4569 = vpop.f32.mrf.mxu0
      %v4570 = vpop.f32.mrf.mxu0
      %v4571 = vadd.f32 0.0, %v4570
      %v4572 = vpop.f32.mrf.mxu0
      %4573 = vmatprep.mubr.bf16.mxu0 0
      %4574 = vmatmul.mubr.bf16.gmra.mxu0 %v4436
      %v4575 = vpop.f32.mrf.mxu0
      %v4576 = vadd.f32 0.0, %v4575
      %v4577 = vpop.f32.mrf.mxu0
      %v4578 = vpop.f32.mrf.mxu0
      %v4579 = vadd.f32 0.0, %v4578
      %v4580 = vpop.f32.mrf.mxu0
      %4581 = vmatprep.mubr.bf16.mxu0 0
      %4582 = vmatmul.mubr.bf16.gmra.mxu0 %v4439
      %v4583 = vpop.f32.mrf.mxu0
      %v4584 = vadd.f32 0.0, %v4583
      %v4585 = vpop.f32.mrf.mxu0
      %v4586 = vpop.f32.mrf.mxu0
      %v4587 = vadd.f32 0.0, %v4586
      %v4588 = vpop.f32.mrf.mxu0
      %4589 = vmatprep.mubr.bf16.mxu0 0
      %4590 = vmatmul.mubr.bf16.gmra.mxu0 %v4442
      %v4591 = vpop.f32.mrf.mxu0
      %v4592 = vadd.f32 0.0, %v4591
      %v4593 = vpop.f32.mrf.mxu0
      %v4594 = vpop.f32.mrf.mxu0
      %v4595 = vadd.f32 0.0, %v4594
      %v4596 = vpop.f32.mrf.mxu0
      %4597 = vmatprep.mubr.bf16.mxu0 0
      %4598 = vmatmul.mubr.bf16.gmra.mxu0 %v4445
      %v4599 = vpop.f32.mrf.mxu0
      %v4600 = vadd.f32 0.0, %v4599
      %v4601 = vpop.f32.mrf.mxu0
      %v4602 = vpop.f32.mrf.mxu0
      %v4603 = vadd.f32 0.0, %v4602
      %v4604 = vpop.f32.mrf.mxu0
      %4605 = vmatprep.mubr.bf16.mxu0 0
      %4606 = vmatmul.mubr.bf16.gmra.mxu0 %v4448
      %v4607 = vpop.f32.mrf.mxu0
      %v4608 = vadd.f32 0.0, %v4607
      %v4609 = vpop.f32.mrf.mxu0
      %v4610 = vpop.f32.mrf.mxu0
      %v4611 = vadd.f32 0.0, %v4610
      %v4612 = vpop.f32.mrf.mxu0
      %4613 = vdwg.mxu0
      %v4614 = vadd.f32 %v4288, %v4488
      %v4615 = vadd.f32 %v4289, %v4491
      %v4616 = vadd.f32 %v4290, %v4496
      %v4617 = vadd.f32 %v4291, %v4499
      %v4618 = vadd.f32 %v4292, %v4504
      %v4619 = vadd.f32 %v4293, %v4507
      %v4620 = vadd.f32 %v4294, %v4512
      %v4621 = vadd.f32 %v4295, %v4515
      %v4622 = vadd.f32 %v4296, %v4520
      %v4623 = vadd.f32 %v4297, %v4523
      %v4624 = vadd.f32 %v4298, %v4528
      %v4625 = vadd.f32 %v4299, %v4531
      %v4626 = vadd.f32 %v4300, %v4536
      %v4627 = vadd.f32 %v4301, %v4539
      %v4628 = vadd.f32 %v4302, %v4544
      %v4629 = vadd.f32 %v4303, %v4547
      %v4630 = vadd.f32 %v4304, %v4552
      %v4631 = vadd.f32 %v4305, %v4555
      %v4632 = vadd.f32 %v4306, %v4560
      %v4633 = vadd.f32 %v4307, %v4563
      %v4634 = vadd.f32 %v4308, %v4568
      %v4635 = vadd.f32 %v4309, %v4571
      %v4636 = vadd.f32 %v4310, %v4576
      %v4637 = vadd.f32 %v4311, %v4579
      %v4638 = vadd.f32 %v4312, %v4584
      %v4639 = vadd.f32 %v4313, %v4587
      %v4640 = vadd.f32 %v4314, %v4592
      %v4641 = vadd.f32 %v4315, %v4595
      %v4642 = vadd.f32 %v4316, %v4600
      %v4643 = vadd.f32 %v4317, %v4603
      %v4644 = vadd.f32 %v4318, %v4608
      %v4645 = vadd.f32 %v4319, %v4611
      %v4646 = vld [vmem:[#allocation2 + $0x10] sm:$0xf]
      %v4647 = vld [vmem:[#allocation2 + $0x14] sm:$0xf]
      %v4648 = vld [vmem:[#allocation2 + $0x18] sm:$0xf]
      %v4649 = vld [vmem:[#allocation2 + $0x1c] sm:$0xf]
      %v4650 = vld [vmem:[#allocation2 + $0x20] sm:$0xf]
      %v4651 = vld [vmem:[#allocation2 + $0x24] sm:$0xf]
      %v4652 = vld [vmem:[#allocation2 + $0x28] sm:$0xf]
      %v4653 = vld [vmem:[#allocation2 + $0x2c] sm:$0xf]
      %v4654 = vld [vmem:[#allocation2 + $0x30] sm:$0xf]
      %v4655 = vld [vmem:[#allocation2 + $0x34] sm:$0xf]
      %v4656 = vld [vmem:[#allocation2 + $0x38] sm:$0xf]
      %v4657 = vld [vmem:[#allocation2 + $0x3c] sm:$0xf]
      %v4658 = vld [vmem:[#allocation2 + $0x40] sm:$0xf]
      %v4659 = vld [vmem:[#allocation2 + $0x44] sm:$0xf]
      %v4660 = vld [vmem:[#allocation2 + $0x48] sm:$0xf]
      %v4661 = vld [vmem:[#allocation2 + $0x4c] sm:$0xf]
      %v4662 = vld [vmem:[#allocation2 + $0x50] sm:$0xf]
      %v4663 = vld [vmem:[#allocation2 + $0x54] sm:$0xf]
      %v4664 = vld [vmem:[#allocation2 + $0x58] sm:$0xf]
      %v4665 = vld [vmem:[#allocation2 + $0x5c] sm:$0xf]
      %v4666 = vld [vmem:[#allocation2 + $0x60] sm:$0xf]
      %v4667 = vld [vmem:[#allocation2 + $0x64] sm:$0xf]
      %v4668 = vld [vmem:[#allocation2 + $0x68] sm:$0xf]
      %v4669 = vld [vmem:[#allocation2 + $0x6c] sm:$0xf]
      %v4670 = vld [vmem:[#allocation2 + $0x70] sm:$0xf]
      %v4671 = vld [vmem:[#allocation2 + $0x74] sm:$0xf]
      %v4672 = vld [vmem:[#allocation2 + $0x78] sm:$0xf]
      %v4673 = vld [vmem:[#allocation2 + $0x7c] sm:$0xf]
      %v4674 = vld [vmem:[#allocation2 + $0x80] sm:$0xf]
      %v4675 = vld [vmem:[#allocation2 + $0x84] sm:$0xf]
      %v4676 = vld [vmem:[#allocation2 + $0x88] sm:$0xf]
      %v4677 = vld [vmem:[#allocation2 + $0x8c] sm:$0xf]
      %v4678 = vld [vmem:[#allocation2 + $0x90] sm:$0x1]
      %v4679 = vmul.bf16 %v4646, %v2964
      %v4680 = vmul.bf16 %v4647, %v2973
      %v4681 = vmul.bf16 %v4648, %v2982
      %v4682 = vmul.bf16 %v4649, %v2991
      %v4683 = vmul.bf16 %v4650, %v3000
      %v4684 = vmul.bf16 %v4651, %v3009
      %v4685 = vmul.bf16 %v4652, %v3018
      %v4686 = vmul.bf16 %v4653, %v3027
      %v4687 = vmul.bf16 %v4654, %v3036
      %v4688 = vmul.bf16 %v4655, %v3045
      %v4689 = vmul.bf16 %v4656, %v3054
      %v4690 = vmul.bf16 %v4657, %v3063
      %v4691 = vmul.bf16 %v4658, %v3072
      %v4692 = vmul.bf16 %v4659, %v3081
      %v4693 = vmul.bf16 %v4660, %v3090
      %v4694 = vmul.bf16 %v4661, %v3099
      %v4695 = vmul.bf16 %v4662, %v3108
      %v4696 = vmul.bf16 %v4663, %v3117
      %v4697 = vmul.bf16 %v4664, %v3126
      %v4698 = vmul.bf16 %v4665, %v3135
      %v4699 = vmul.bf16 %v4666, %v3144
      %v4700 = vmul.bf16 %v4667, %v3153
      %v4701 = vmul.bf16 %v4668, %v3162
      %v4702 = vmul.bf16 %v4669, %v3171
      %v4703 = vmul.bf16 %v4670, %v3180
      %v4704 = vmul.bf16 %v4671, %v3189
      %v4705 = vmul.bf16 %v4672, %v3198
      %v4706 = vmul.bf16 %v4673, %v3207
      %v4707 = vmul.bf16 %v4674, %v3216
      %v4708 = vmul.bf16 %v4675, %v3225
      %v4709 = vmul.bf16 %v4676, %v3234
      %v4710 = vmul.bf16 %v4677, %v3243
      %v4711 = vmul.bf16 %v4678, %v3244
      %s4712 = scalar_lea.vmem %s3, 10
      %v4713 = vld [vmem:[%s4712] sm:$0x3]
      %v4747 = vunpack.c.l.b16 %v4679
      %v4748 = vunpack.c.l.b16 %v4680
      %v4749 = vunpack.c.l.b16 %v4681
      %v4750 = vunpack.c.l.b16 %v4682
      %v4751 = vunpack.c.l.b16 %v4683
      %v4752 = vunpack.c.l.b16 %v4684
      %v4753 = vunpack.c.l.b16 %v4685
      %v4754 = vunpack.c.l.b16 %v4686
      %v4755 = vunpack.c.l.b16 %v4687
      %v4756 = vunpack.c.l.b16 %v4688
      %v4757 = vunpack.c.l.b16 %v4689
      %v4758 = vunpack.c.l.b16 %v4690
      %v4759 = vunpack.c.l.b16 %v4691
      %v4760 = vunpack.c.l.b16 %v4692
      %v4761 = vunpack.c.l.b16 %v4693
      %v4762 = vunpack.c.l.b16 %v4694
      %v4763 = vunpack.c.l.b16 %v4695
      %v4764 = vunpack.c.l.b16 %v4696
      %v4765 = vunpack.c.l.b16 %v4697
      %v4766 = vunpack.c.l.b16 %v4698
      %v4767 = vunpack.c.l.b16 %v4699
      %v4768 = vunpack.c.l.b16 %v4700
      %v4769 = vunpack.c.l.b16 %v4701
      %v4770 = vunpack.c.l.b16 %v4702
      %v4771 = vunpack.c.l.b16 %v4703
      %v4772 = vunpack.c.l.b16 %v4704
      %v4773 = vunpack.c.l.b16 %v4705
      %v4774 = vunpack.c.l.b16 %v4706
      %v4775 = vunpack.c.l.b16 %v4707
      %v4776 = vunpack.c.l.b16 %v4708
      %v4777 = vunpack.c.l.b16 %v4709
      %v4778 = vunpack.c.l.b16 %v4710
      %v4779 = vunpack.c.l.b16 %v4711
      %v4780 = vpack.c.b16 %v4748, %v4747
      %v4781 = vpack.c.b16 %v4750, %v4749
      %v4782 = vpack.c.b16 %v4752, %v4751
      %v4783 = vpack.c.b16 %v4754, %v4753
      %v4784 = vpack.c.b16 %v4756, %v4755
      %v4785 = vpack.c.b16 %v4758, %v4757
      %v4786 = vpack.c.b16 %v4760, %v4759
      %v4787 = vpack.c.b16 %v4762, %v4761
      %v4788 = vpack.c.b16 %v4764, %v4763
      %v4789 = vpack.c.b16 %v4766, %v4765
      %v4790 = vpack.c.b16 %v4768, %v4767
      %v4791 = vpack.c.b16 %v4770, %v4769
      %v4792 = vpack.c.b16 %v4772, %v4771
      %v4793 = vpack.c.b16 %v4774, %v4773
      %v4794 = vpack.c.b16 %v4776, %v4775
      %v4795 = vpack.c.b16 %v4778, %v4777
      %v4796 = vpack.c.b16 %v4779, %v4779
      %v4798 = vshrl.u32 %v4780, 16
      %v4800 = vshll.u32 %v4780, 16
      %v4802 = vrot.slane %v4800, 1
      %v4803 = vor.u32 %v4798, %v4802
      %v4805 = vshll.u32 %v4781, 16
      %v4807 = vrot.slane %v4805, 1
      %v4808 = vsel %vm3396, %v4803, %v4807
      %v4809 = vshrl.u32 %v4781, 16
      %v4811 = vor.u32 %v4809, %v4807
      %v4813 = vshll.u32 %v4782, 16
      %v4815 = vrot.slane %v4813, 1
      %v4816 = vsel %vm3396, %v4811, %v4815
      %v4817 = vshrl.u32 %v4782, 16
      %v4819 = vor.u32 %v4817, %v4815
      %v4821 = vshll.u32 %v4783, 16
      %v4823 = vrot.slane %v4821, 1
      %v4824 = vsel %vm3396, %v4819, %v4823
      %v4825 = vshrl.u32 %v4783, 16
      %v4827 = vor.u32 %v4825, %v4823
      %v4829 = vshll.u32 %v4784, 16
      %v4831 = vrot.slane %v4829, 1
      %v4832 = vsel %vm3396, %v4827, %v4831
      %v4833 = vshrl.u32 %v4784, 16
      %v4835 = vor.u32 %v4833, %v4831
      %v4837 = vshll.u32 %v4785, 16
      %v4839 = vrot.slane %v4837, 1
      %v4840 = vsel %vm3396, %v4835, %v4839
      %v4841 = vshrl.u32 %v4785, 16
      %v4843 = vor.u32 %v4841, %v4839
      %v4845 = vshll.u32 %v4786, 16
      %v4847 = vrot.slane %v4845, 1
      %v4848 = vsel %vm3396, %v4843, %v4847
      %v4849 = vshrl.u32 %v4786, 16
      %v4851 = vor.u32 %v4849, %v4847
      %v4853 = vshll.u32 %v4787, 16
      %v4855 = vrot.slane %v4853, 1
      %v4856 = vsel %vm3396, %v4851, %v4855
      %v4857 = vshrl.u32 %v4787, 16
      %v4859 = vor.u32 %v4857, %v4855
      %v4861 = vshll.u32 %v4788, 16
      %v4863 = vrot.slane %v4861, 1
      %v4864 = vsel %vm3396, %v4859, %v4863
      %v4865 = vshrl.u32 %v4788, 16
      %v4867 = vor.u32 %v4865, %v4863
      %v4869 = vshll.u32 %v4789, 16
      %v4871 = vrot.slane %v4869, 1
      %v4872 = vsel %vm3396, %v4867, %v4871
      %v4873 = vshrl.u32 %v4789, 16
      %v4875 = vor.u32 %v4873, %v4871
      %v4877 = vshll.u32 %v4790, 16
      %v4879 = vrot.slane %v4877, 1
      %v4880 = vsel %vm3396, %v4875, %v4879
      %v4881 = vshrl.u32 %v4790, 16
      %v4883 = vor.u32 %v4881, %v4879
      %v4885 = vshll.u32 %v4791, 16
      %v4887 = vrot.slane %v4885, 1
      %v4888 = vsel %vm3396, %v4883, %v4887
      %v4889 = vshrl.u32 %v4791, 16
      %v4891 = vor.u32 %v4889, %v4887
      %v4893 = vshll.u32 %v4792, 16
      %v4895 = vrot.slane %v4893, 1
      %v4896 = vsel %vm3396, %v4891, %v4895
      %v4897 = vshrl.u32 %v4792, 16
      %v4899 = vor.u32 %v4897, %v4895
      %v4901 = vshll.u32 %v4793, 16
      %v4903 = vrot.slane %v4901, 1
      %v4904 = vsel %vm3396, %v4899, %v4903
      %v4905 = vshrl.u32 %v4793, 16
      %v4907 = vor.u32 %v4905, %v4903
      %v4909 = vshll.u32 %v4794, 16
      %v4911 = vrot.slane %v4909, 1
      %v4912 = vsel %vm3396, %v4907, %v4911
      %v4913 = vshrl.u32 %v4794, 16
      %v4915 = vor.u32 %v4913, %v4911
      %v4917 = vshll.u32 %v4795, 16
      %v4919 = vrot.slane %v4917, 1
      %v4920 = vsel %vm3396, %v4915, %v4919
      %v4921 = vshrl.u32 %v4795, 16
      %v4923 = vor.u32 %v4921, %v4919
      %v4925 = vshll.u32 %v4796, 16
      %v4927 = vrot.slane %v4925, 1
      %v4928 = vsel %vm3396, %v4923, %v4927
      %v4930 = vsel %vm511, %v4808, 0
      %v4933 = vsel %vm511, %v4816, 0
      %v4936 = vsel %vm511, %v4824, 0
      %v4939 = vsel %vm511, %v4832, 0
      %v4942 = vsel %vm511, %v4840, 0
      %v4945 = vsel %vm511, %v4848, 0
      %v4948 = vsel %vm511, %v4856, 0
      %v4951 = vsel %vm511, %v4864, 0
      %v4954 = vsel %vm511, %v4872, 0
      %v4957 = vsel %vm511, %v4880, 0
      %v4960 = vsel %vm511, %v4888, 0
      %v4963 = vsel %vm511, %v4896, 0
      %v4966 = vsel %vm511, %v4904, 0
      %v4969 = vsel %vm511, %v4912, 0
      %v4972 = vsel %vm511, %v4920, 0
      %v4975 = vsel %vm511, %v4928, 0
      %v4978 = vsel %vm560, %v4713, 0
      %4980 = vmatprep.subr.bf16.mxu0 0
      %4981 = vmatpush1.bf16.msra.mxu0 0
      %4982 = vmatprep.subr.bf16.mxu0 0
      %4983 = vmatpush1.bf16.msra.mxu0 0
      %4984 = vmatprep.subr.bf16.mxu0 0
      %4985 = vmatpush1.bf16.msra.mxu0 0
      %4986 = vmatprep.subr.bf16.mxu0 0
      %4987 = vmatpush1.bf16.msra.mxu0 0
      %4988 = vmatprep.subr.bf16.mxu0 0
      %4989 = vmatpush1.bf16.msra.mxu0 0
      %4990 = vmatprep.subr.bf16.mxu0 0
      %4991 = vmatpush1.bf16.msra.mxu0 0
      %4992 = vmatprep.subr.bf16.mxu0 0
      %4993 = vmatpush1.bf16.msra.mxu0 0
      %4994 = vmatprep.subr.bf16.mxu0 0
      %4995 = vmatpush1.bf16.msra.mxu0 %v4978
      %4996 = vmatprep.subr.bf16.mxu0 0
      %4997 = vmatpush2.bf16.msra.mxu0 0
      %4998 = vmatprep.subr.bf16.mxu0 0
      %4999 = vmatpush2.bf16.msra.mxu0 0
      %5000 = vmatprep.subr.bf16.mxu0 0
      %5001 = vmatpush2.bf16.msra.mxu0 0
      %5002 = vmatprep.subr.bf16.mxu0 0
      %5003 = vmatpush2.bf16.msra.mxu0 0
      %5004 = vmatprep.subr.bf16.mxu0 0
      %5005 = vmatpush2.bf16.msra.mxu0 0
      %5006 = vmatprep.subr.bf16.mxu0 0
      %5007 = vmatpush2.bf16.msra.mxu0 0
      %5008 = vmatprep.subr.bf16.mxu0 0
      %5009 = vmatpush2.bf16.msra.mxu0 0
      %5010 = vmatprep.subr.bf16.mxu0 0
      %5011 = vmatpush2.bf16.msra.mxu0 0
      %5012 = vmatprep.mubr.bf16.mxu0 0
      %5013 = vmatmul.mubr.bf16.gmra.mxu0 %v4930
      %v5014 = vpop.f32.mrf.mxu0
      %v5015 = vadd.f32 0.0, %v5014
      %v5016 = vpop.f32.mrf.mxu0
      %v5017 = vpop.f32.mrf.mxu0
      %v5018 = vadd.f32 0.0, %v5017
      %v5019 = vpop.f32.mrf.mxu0
      %5020 = vmatprep.mubr.bf16.mxu0 0
      %5021 = vmatmul.mubr.bf16.gmra.mxu0 %v4933
      %v5022 = vpop.f32.mrf.mxu0
      %v5023 = vadd.f32 0.0, %v5022
      %v5024 = vpop.f32.mrf.mxu0
      %v5025 = vpop.f32.mrf.mxu0
      %v5026 = vadd.f32 0.0, %v5025
      %v5027 = vpop.f32.mrf.mxu0
      %5028 = vmatprep.mubr.bf16.mxu0 0
      %5029 = vmatmul.mubr.bf16.gmra.mxu0 %v4936
      %v5030 = vpop.f32.mrf.mxu0
      %v5031 = vadd.f32 0.0, %v5030
      %v5032 = vpop.f32.mrf.mxu0
      %v5033 = vpop.f32.mrf.mxu0
      %v5034 = vadd.f32 0.0, %v5033
      %v5035 = vpop.f32.mrf.mxu0
      %5036 = vmatprep.mubr.bf16.mxu0 0
      %5037 = vmatmul.mubr.bf16.gmra.mxu0 %v4939
      %v5038 = vpop.f32.mrf.mxu0
      %v5039 = vadd.f32 0.0, %v5038
      %v5040 = vpop.f32.mrf.mxu0
      %v5041 = vpop.f32.mrf.mxu0
      %v5042 = vadd.f32 0.0, %v5041
      %v5043 = vpop.f32.mrf.mxu0
      %5044 = vmatprep.mubr.bf16.mxu0 0
      %5045 = vmatmul.mubr.bf16.gmra.mxu0 %v4942
      %v5046 = vpop.f32.mrf.mxu0
      %v5047 = vadd.f32 0.0, %v5046
      %v5048 = vpop.f32.mrf.mxu0
      %v5049 = vpop.f32.mrf.mxu0
      %v5050 = vadd.f32 0.0, %v5049
      %v5051 = vpop.f32.mrf.mxu0
      %5052 = vmatprep.mubr.bf16.mxu0 0
      %5053 = vmatmul.mubr.bf16.gmra.mxu0 %v4945
      %v5054 = vpop.f32.mrf.mxu0
      %v5055 = vadd.f32 0.0, %v5054
      %v5056 = vpop.f32.mrf.mxu0
      %v5057 = vpop.f32.mrf.mxu0
      %v5058 = vadd.f32 0.0, %v5057
      %v5059 = vpop.f32.mrf.mxu0
      %5060 = vmatprep.mubr.bf16.mxu0 0
      %5061 = vmatmul.mubr.bf16.gmra.mxu0 %v4948
      %v5062 = vpop.f32.mrf.mxu0
      %v5063 = vadd.f32 0.0, %v5062
      %v5064 = vpop.f32.mrf.mxu0
      %v5065 = vpop.f32.mrf.mxu0
      %v5066 = vadd.f32 0.0, %v5065
      %v5067 = vpop.f32.mrf.mxu0
      %5068 = vmatprep.mubr.bf16.mxu0 0
      %5069 = vmatmul.mubr.bf16.gmra.mxu0 %v4951
      %v5070 = vpop.f32.mrf.mxu0
      %v5071 = vadd.f32 0.0, %v5070
      %v5072 = vpop.f32.mrf.mxu0
      %v5073 = vpop.f32.mrf.mxu0
      %v5074 = vadd.f32 0.0, %v5073
      %v5075 = vpop.f32.mrf.mxu0
      %5076 = vmatprep.mubr.bf16.mxu0 0
      %5077 = vmatmul.mubr.bf16.gmra.mxu0 %v4954
      %v5078 = vpop.f32.mrf.mxu0
      %v5079 = vadd.f32 0.0, %v5078
      %v5080 = vpop.f32.mrf.mxu0
      %v5081 = vpop.f32.mrf.mxu0
      %v5082 = vadd.f32 0.0, %v5081
      %v5083 = vpop.f32.mrf.mxu0
      %5084 = vmatprep.mubr.bf16.mxu0 0
      %5085 = vmatmul.mubr.bf16.gmra.mxu0 %v4957
      %v5086 = vpop.f32.mrf.mxu0
      %v5087 = vadd.f32 0.0, %v5086
      %v5088 = vpop.f32.mrf.mxu0
      %v5089 = vpop.f32.mrf.mxu0
      %v5090 = vadd.f32 0.0, %v5089
      %v5091 = vpop.f32.mrf.mxu0
      %5092 = vmatprep.mubr.bf16.mxu0 0
      %5093 = vmatmul.mubr.bf16.gmra.mxu0 %v4960
      %v5094 = vpop.f32.mrf.mxu0
      %v5095 = vadd.f32 0.0, %v5094
      %v5096 = vpop.f32.mrf.mxu0
      %v5097 = vpop.f32.mrf.mxu0
      %v5098 = vadd.f32 0.0, %v5097
      %v5099 = vpop.f32.mrf.mxu0
      %5100 = vmatprep.mubr.bf16.mxu0 0
      %5101 = vmatmul.mubr.bf16.gmra.mxu0 %v4963
      %v5102 = vpop.f32.mrf.mxu0
      %v5103 = vadd.f32 0.0, %v5102
      %v5104 = vpop.f32.mrf.mxu0
      %v5105 = vpop.f32.mrf.mxu0
      %v5106 = vadd.f32 0.0, %v5105
      %v5107 = vpop.f32.mrf.mxu0
      %5108 = vmatprep.mubr.bf16.mxu0 0
      %5109 = vmatmul.mubr.bf16.gmra.mxu0 %v4966
      %v5110 = vpop.f32.mrf.mxu0
      %v5111 = vadd.f32 0.0, %v5110
      %v5112 = vpop.f32.mrf.mxu0
      %v5113 = vpop.f32.mrf.mxu0
      %v5114 = vadd.f32 0.0, %v5113
      %v5115 = vpop.f32.mrf.mxu0
      %5116 = vmatprep.mubr.bf16.mxu0 0
      %5117 = vmatmul.mubr.bf16.gmra.mxu0 %v4969
      %v5118 = vpop.f32.mrf.mxu0
      %v5119 = vadd.f32 0.0, %v5118
      %v5120 = vpop.f32.mrf.mxu0
      %v5121 = vpop.f32.mrf.mxu0
      %v5122 = vadd.f32 0.0, %v5121
      %v5123 = vpop.f32.mrf.mxu0
      %5124 = vmatprep.mubr.bf16.mxu0 0
      %5125 = vmatmul.mubr.bf16.gmra.mxu0 %v4972
      %v5126 = vpop.f32.mrf.mxu0
      %v5127 = vadd.f32 0.0, %v5126
      %v5128 = vpop.f32.mrf.mxu0
      %v5129 = vpop.f32.mrf.mxu0
      %v5130 = vadd.f32 0.0, %v5129
      %v5131 = vpop.f32.mrf.mxu0
      %5132 = vmatprep.mubr.bf16.mxu0 0
      %5133 = vmatmul.mubr.bf16.gmra.mxu0 %v4975
      %v5134 = vpop.f32.mrf.mxu0
      %v5135 = vadd.f32 0.0, %v5134
      %v5136 = vpop.f32.mrf.mxu0
      %v5137 = vpop.f32.mrf.mxu0
      %v5138 = vadd.f32 0.0, %v5137
      %v5139 = vpop.f32.mrf.mxu0
      %5140 = vdwg.mxu0
      %v5141 = vadd.f32 %v4614, %v5015
      %v5142 = vadd.f32 %v4615, %v5018
      %v5143 = vadd.f32 %v4616, %v5023
      %v5144 = vadd.f32 %v4617, %v5026
      %v5145 = vadd.f32 %v4618, %v5031
      %v5146 = vadd.f32 %v4619, %v5034
      %v5147 = vadd.f32 %v4620, %v5039
      %v5148 = vadd.f32 %v4621, %v5042
      %v5149 = vadd.f32 %v4622, %v5047
      %v5150 = vadd.f32 %v4623, %v5050
      %v5151 = vadd.f32 %v4624, %v5055
      %v5152 = vadd.f32 %v4625, %v5058
      %v5153 = vadd.f32 %v4626, %v5063
      %v5154 = vadd.f32 %v4627, %v5066
      %v5155 = vadd.f32 %v4628, %v5071
      %v5156 = vadd.f32 %v4629, %v5074
      %v5157 = vadd.f32 %v4630, %v5079
      %v5158 = vadd.f32 %v4631, %v5082
      %v5159 = vadd.f32 %v4632, %v5087
      %v5160 = vadd.f32 %v4633, %v5090
      %v5161 = vadd.f32 %v4634, %v5095
      %v5162 = vadd.f32 %v4635, %v5098
      %v5163 = vadd.f32 %v4636, %v5103
      %v5164 = vadd.f32 %v4637, %v5106
      %v5165 = vadd.f32 %v4638, %v5111
      %v5166 = vadd.f32 %v4639, %v5114
      %v5167 = vadd.f32 %v4640, %v5119
      %v5168 = vadd.f32 %v4641, %v5122
      %v5169 = vadd.f32 %v4642, %v5127
      %v5170 = vadd.f32 %v4643, %v5130
      %v5171 = vadd.f32 %v4644, %v5135
      %v5172 = vadd.f32 %v4645, %v5138
      %v5173 = vld [vmem:[#allocation2 + $0x14] sm:$0x8]
      %v5174 = vld [vmem:[#allocation2 + $0x18] sm:$0xf]
      %v5175 = vld [vmem:[#allocation2 + $0x1c] sm:$0xf]
      %v5176 = vld [vmem:[#allocation2 + $0x20] sm:$0xf]
      %v5177 = vld [vmem:[#allocation2 + $0x24] sm:$0xf]
      %v5178 = vld [vmem:[#allocation2 + $0x28] sm:$0xf]
      %v5179 = vld [vmem:[#allocation2 + $0x2c] sm:$0xf]
      %v5180 = vld [vmem:[#allocation2 + $0x30] sm:$0xf]
      %v5181 = vld [vmem:[#allocation2 + $0x34] sm:$0xf]
      %v5182 = vld [vmem:[#allocation2 + $0x38] sm:$0xf]
      %v5183 = vld [vmem:[#allocation2 + $0x3c] sm:$0xf]
      %v5184 = vld [vmem:[#allocation2 + $0x40] sm:$0xf]
      %v5185 = vld [vmem:[#allocation2 + $0x44] sm:$0xf]
      %v5186 = vld [vmem:[#allocation2 + $0x48] sm:$0xf]
      %v5187 = vld [vmem:[#allocation2 + $0x4c] sm:$0xf]
      %v5188 = vld [vmem:[#allocation2 + $0x50] sm:$0xf]
      %v5189 = vld [vmem:[#allocation2 + $0x54] sm:$0xf]
      %v5190 = vld [vmem:[#allocation2 + $0x58] sm:$0xf]
      %v5191 = vld [vmem:[#allocation2 + $0x5c] sm:$0xf]
      %v5192 = vld [vmem:[#allocation2 + $0x60] sm:$0xf]
      %v5193 = vld [vmem:[#allocation2 + $0x64] sm:$0xf]
      %v5194 = vld [vmem:[#allocation2 + $0x68] sm:$0xf]
      %v5195 = vld [vmem:[#allocation2 + $0x6c] sm:$0xf]
      %v5196 = vld [vmem:[#allocation2 + $0x70] sm:$0xf]
      %v5197 = vld [vmem:[#allocation2 + $0x74] sm:$0xf]
      %v5198 = vld [vmem:[#allocation2 + $0x78] sm:$0xf]
      %v5199 = vld [vmem:[#allocation2 + $0x7c] sm:$0xf]
      %v5200 = vld [vmem:[#allocation2 + $0x80] sm:$0xf]
      %v5201 = vld [vmem:[#allocation2 + $0x84] sm:$0xf]
      %v5202 = vld [vmem:[#allocation2 + $0x88] sm:$0xf]
      %v5203 = vld [vmem:[#allocation2 + $0x8c] sm:$0xf]
      %v5204 = vld [vmem:[#allocation2 + $0x90] sm:$0xf]
      %v5205 = vld [vmem:[#allocation2 + $0x94] sm:$0xf]
      %v5206 = vmul.bf16 %v5173, %v1413
      %v5207 = vmul.bf16 %v5174, %v1423
      %v5208 = vmul.bf16 %v5175, %v1433
      %v5209 = vmul.bf16 %v5176, %v1443
      %v5210 = vmul.bf16 %v5177, %v1453
      %v5211 = vmul.bf16 %v5178, %v1463
      %v5212 = vmul.bf16 %v5179, %v1473
      %v5213 = vmul.bf16 %v5180, %v1483
      %v5214 = vmul.bf16 %v5181, %v1493
      %v5215 = vmul.bf16 %v5182, %v1503
      %v5216 = vmul.bf16 %v5183, %v1513
      %v5217 = vmul.bf16 %v5184, %v1523
      %v5218 = vmul.bf16 %v5185, %v1533
      %v5219 = vmul.bf16 %v5186, %v1543
      %v5220 = vmul.bf16 %v5187, %v1553
      %v5221 = vmul.bf16 %v5188, %v1563
      %v5222 = vmul.bf16 %v5189, %v1573
      %v5223 = vmul.bf16 %v5190, %v1583
      %v5224 = vmul.bf16 %v5191, %v1593
      %v5225 = vmul.bf16 %v5192, %v1603
      %v5226 = vmul.bf16 %v5193, %v1613
      %v5227 = vmul.bf16 %v5194, %v1623
      %v5228 = vmul.bf16 %v5195, %v1633
      %v5229 = vmul.bf16 %v5196, %v1643
      %v5230 = vmul.bf16 %v5197, %v1653
      %v5231 = vmul.bf16 %v5198, %v1663
      %v5232 = vmul.bf16 %v5199, %v1673
      %v5233 = vmul.bf16 %v5200, %v1683
      %v5234 = vmul.bf16 %v5201, %v1693
      %v5235 = vmul.bf16 %v5202, %v1703
      %v5236 = vmul.bf16 %v5203, %v1713
      %v5237 = vmul.bf16 %v5204, %v1723
      %v5238 = vmul.bf16 %v5205, %v1728
      %s5239 = scalar_lea.vmem %s3, 12
      %v5240 = vld [vmem:[%s5239] sm:$0x3]
      %v5274 = vunpack.c.l.b16 %v5206
      %v5275 = vunpack.c.l.b16 %v5207
      %v5276 = vunpack.c.l.b16 %v5208
      %v5277 = vunpack.c.l.b16 %v5209
      %v5278 = vunpack.c.l.b16 %v5210
      %v5279 = vunpack.c.l.b16 %v5211
      %v5280 = vunpack.c.l.b16 %v5212
      %v5281 = vunpack.c.l.b16 %v5213
      %v5282 = vunpack.c.l.b16 %v5214
      %v5283 = vunpack.c.l.b16 %v5215
      %v5284 = vunpack.c.l.b16 %v5216
      %v5285 = vunpack.c.l.b16 %v5217
      %v5286 = vunpack.c.l.b16 %v5218
      %v5287 = vunpack.c.l.b16 %v5219
      %v5288 = vunpack.c.l.b16 %v5220
      %v5289 = vunpack.c.l.b16 %v5221
      %v5290 = vunpack.c.l.b16 %v5222
      %v5291 = vunpack.c.l.b16 %v5223
      %v5292 = vunpack.c.l.b16 %v5224
      %v5293 = vunpack.c.l.b16 %v5225
      %v5294 = vunpack.c.l.b16 %v5226
      %v5295 = vunpack.c.l.b16 %v5227
      %v5296 = vunpack.c.l.b16 %v5228
      %v5297 = vunpack.c.l.b16 %v5229
      %v5298 = vunpack.c.l.b16 %v5230
      %v5299 = vunpack.c.l.b16 %v5231
      %v5300 = vunpack.c.l.b16 %v5232
      %v5301 = vunpack.c.l.b16 %v5233
      %v5302 = vunpack.c.l.b16 %v5234
      %v5303 = vunpack.c.l.b16 %v5235
      %v5304 = vunpack.c.l.b16 %v5236
      %v5305 = vunpack.c.l.b16 %v5237
      %v5306 = vunpack.c.l.b16 %v5238
      %v5307 = vpack.c.b16 %v5275, %v5274
      %v5308 = vpack.c.b16 %v5277, %v5276
      %v5309 = vpack.c.b16 %v5279, %v5278
      %v5310 = vpack.c.b16 %v5281, %v5280
      %v5311 = vpack.c.b16 %v5283, %v5282
      %v5312 = vpack.c.b16 %v5285, %v5284
      %v5313 = vpack.c.b16 %v5287, %v5286
      %v5314 = vpack.c.b16 %v5289, %v5288
      %v5315 = vpack.c.b16 %v5291, %v5290
      %v5316 = vpack.c.b16 %v5293, %v5292
      %v5317 = vpack.c.b16 %v5295, %v5294
      %v5318 = vpack.c.b16 %v5297, %v5296
      %v5319 = vpack.c.b16 %v5299, %v5298
      %v5320 = vpack.c.b16 %v5301, %v5300
      %v5321 = vpack.c.b16 %v5303, %v5302
      %v5322 = vpack.c.b16 %v5305, %v5304
      %v5323 = vpack.c.b16 %v5306, %v5306
      %v5325 = vshrl.u32 %v5307, 16
      %v5327 = vrot.slane %v5325, 3
      %v5328 = vshll.u32 %v5307, 16
      %v5330 = vrot.slane %v5328, 4
      %v5331 = vor.u32 %v5327, %v5330
      %v5333 = vshrl.u32 %v5308, 16
      %v5335 = vrot.slane %v5333, 3
      %v5336 = vshll.u32 %v5308, 16
      %v5338 = vrot.slane %v5336, 4
      %v5339 = vor.u32 %v5335, %v5338
      %v5340 = vsel %vm2173, %v5331, %v5339
      %v5342 = vshrl.u32 %v5309, 16
      %v5344 = vrot.slane %v5342, 3
      %v5345 = vshll.u32 %v5309, 16
      %v5347 = vrot.slane %v5345, 4
      %v5348 = vor.u32 %v5344, %v5347
      %v5349 = vsel %vm2173, %v5339, %v5348
      %v5351 = vshrl.u32 %v5310, 16
      %v5353 = vrot.slane %v5351, 3
      %v5354 = vshll.u32 %v5310, 16
      %v5356 = vrot.slane %v5354, 4
      %v5357 = vor.u32 %v5353, %v5356
      %v5358 = vsel %vm2173, %v5348, %v5357
      %v5360 = vshrl.u32 %v5311, 16
      %v5362 = vrot.slane %v5360, 3
      %v5363 = vshll.u32 %v5311, 16
      %v5365 = vrot.slane %v5363, 4
      %v5366 = vor.u32 %v5362, %v5365
      %v5367 = vsel %vm2173, %v5357, %v5366
      %v5369 = vshrl.u32 %v5312, 16
      %v5371 = vrot.slane %v5369, 3
      %v5372 = vshll.u32 %v5312, 16
      %v5374 = vrot.slane %v5372, 4
      %v5375 = vor.u32 %v5371, %v5374
      %v5376 = vsel %vm2173, %v5366, %v5375
      %v5378 = vshrl.u32 %v5313, 16
      %v5380 = vrot.slane %v5378, 3
      %v5381 = vshll.u32 %v5313, 16
      %v5383 = vrot.slane %v5381, 4
      %v5384 = vor.u32 %v5380, %v5383
      %v5385 = vsel %vm2173, %v5375, %v5384
      %v5387 = vshrl.u32 %v5314, 16
      %v5389 = vrot.slane %v5387, 3
      %v5390 = vshll.u32 %v5314, 16
      %v5392 = vrot.slane %v5390, 4
      %v5393 = vor.u32 %v5389, %v5392
      %v5394 = vsel %vm2173, %v5384, %v5393
      %v5396 = vshrl.u32 %v5315, 16
      %v5398 = vrot.slane %v5396, 3
      %v5399 = vshll.u32 %v5315, 16
      %v5401 = vrot.slane %v5399, 4
      %v5402 = vor.u32 %v5398, %v5401
      %v5403 = vsel %vm2173, %v5393, %v5402
      %v5405 = vshrl.u32 %v5316, 16
      %v5407 = vrot.slane %v5405, 3
      %v5408 = vshll.u32 %v5316, 16
      %v5410 = vrot.slane %v5408, 4
      %v5411 = vor.u32 %v5407, %v5410
      %v5412 = vsel %vm2173, %v5402, %v5411
      %v5414 = vshrl.u32 %v5317, 16
      %v5416 = vrot.slane %v5414, 3
      %v5417 = vshll.u32 %v5317, 16
      %v5419 = vrot.slane %v5417, 4
      %v5420 = vor.u32 %v5416, %v5419
      %v5421 = vsel %vm2173, %v5411, %v5420
      %v5423 = vshrl.u32 %v5318, 16
      %v5425 = vrot.slane %v5423, 3
      %v5426 = vshll.u32 %v5318, 16
      %v5428 = vrot.slane %v5426, 4
      %v5429 = vor.u32 %v5425, %v5428
      %v5430 = vsel %vm2173, %v5420, %v5429
      %v5432 = vshrl.u32 %v5319, 16
      %v5434 = vrot.slane %v5432, 3
      %v5435 = vshll.u32 %v5319, 16
      %v5437 = vrot.slane %v5435, 4
      %v5438 = vor.u32 %v5434, %v5437
      %v5439 = vsel %vm2173, %v5429, %v5438
      %v5441 = vshrl.u32 %v5320, 16
      %v5443 = vrot.slane %v5441, 3
      %v5444 = vshll.u32 %v5320, 16
      %v5446 = vrot.slane %v5444, 4
      %v5447 = vor.u32 %v5443, %v5446
      %v5448 = vsel %vm2173, %v5438, %v5447
      %v5450 = vshrl.u32 %v5321, 16
      %v5452 = vrot.slane %v5450, 3
      %v5453 = vshll.u32 %v5321, 16
      %v5455 = vrot.slane %v5453, 4
      %v5456 = vor.u32 %v5452, %v5455
      %v5457 = vsel %vm2173, %v5447, %v5456
      %v5459 = vshrl.u32 %v5322, 16
      %v5461 = vrot.slane %v5459, 3
      %v5462 = vshll.u32 %v5322, 16
      %v5464 = vrot.slane %v5462, 4
      %v5465 = vor.u32 %v5461, %v5464
      %v5466 = vsel %vm2173, %v5456, %v5465
      %v5468 = vshrl.u32 %v5323, 16
      %v5470 = vrot.slane %v5468, 3
      %v5471 = vshll.u32 %v5323, 16
      %v5473 = vrot.slane %v5471, 4
      %v5474 = vor.u32 %v5470, %v5473
      %v5475 = vsel %vm2173, %v5465, %v5474
      %v5477 = vsel %vm511, %v5340, 0
      %v5480 = vsel %vm511, %v5349, 0
      %v5483 = vsel %vm511, %v5358, 0
      %v5486 = vsel %vm511, %v5367, 0
      %v5489 = vsel %vm511, %v5376, 0
      %v5492 = vsel %vm511, %v5385, 0
      %v5495 = vsel %vm511, %v5394, 0
      %v5498 = vsel %vm511, %v5403, 0
      %v5501 = vsel %vm511, %v5412, 0
      %v5504 = vsel %vm511, %v5421, 0
      %v5507 = vsel %vm511, %v5430, 0
      %v5510 = vsel %vm511, %v5439, 0
      %v5513 = vsel %vm511, %v5448, 0
      %v5516 = vsel %vm511, %v5457, 0
      %v5519 = vsel %vm511, %v5466, 0
      %v5522 = vsel %vm511, %v5475, 0
      %v5525 = vsel %vm560, %v5240, 0
      %5527 = vmatprep.subr.bf16.mxu0 0
      %5528 = vmatpush1.bf16.msra.mxu0 0
      %5529 = vmatprep.subr.bf16.mxu0 0
      %5530 = vmatpush1.bf16.msra.mxu0 0
      %5531 = vmatprep.subr.bf16.mxu0 0
      %5532 = vmatpush1.bf16.msra.mxu0 0
      %5533 = vmatprep.subr.bf16.mxu0 0
      %5534 = vmatpush1.bf16.msra.mxu0 0
      %5535 = vmatprep.subr.bf16.mxu0 0
      %5536 = vmatpush1.bf16.msra.mxu0 0
      %5537 = vmatprep.subr.bf16.mxu0 0
      %5538 = vmatpush1.bf16.msra.mxu0 0
      %5539 = vmatprep.subr.bf16.mxu0 0
      %5540 = vmatpush1.bf16.msra.mxu0 0
      %5541 = vmatprep.subr.bf16.mxu0 0
      %5542 = vmatpush1.bf16.msra.mxu0 %v5525
      %5543 = vmatprep.subr.bf16.mxu0 0
      %5544 = vmatpush2.bf16.msra.mxu0 0
      %5545 = vmatprep.subr.bf16.mxu0 0
      %5546 = vmatpush2.bf16.msra.mxu0 0
      %5547 = vmatprep.subr.bf16.mxu0 0
      %5548 = vmatpush2.bf16.msra.mxu0 0
      %5549 = vmatprep.subr.bf16.mxu0 0
      %5550 = vmatpush2.bf16.msra.mxu0 0
      %5551 = vmatprep.subr.bf16.mxu0 0
      %5552 = vmatpush2.bf16.msra.mxu0 0
      %5553 = vmatprep.subr.bf16.mxu0 0
      %5554 = vmatpush2.bf16.msra.mxu0 0
      %5555 = vmatprep.subr.bf16.mxu0 0
      %5556 = vmatpush2.bf16.msra.mxu0 0
      %5557 = vmatprep.subr.bf16.mxu0 0
      %5558 = vmatpush2.bf16.msra.mxu0 0
      %5559 = vmatprep.mubr.bf16.mxu0 0
      %5560 = vmatmul.mubr.bf16.gmra.mxu0 %v5477
      %v5561 = vpop.f32.mrf.mxu0
      %v5562 = vadd.f32 0.0, %v5561
      %v5563 = vpop.f32.mrf.mxu0
      %v5564 = vpop.f32.mrf.mxu0
      %v5565 = vadd.f32 0.0, %v5564
      %v5566 = vpop.f32.mrf.mxu0
      %5567 = vmatprep.mubr.bf16.mxu0 0
      %5568 = vmatmul.mubr.bf16.gmra.mxu0 %v5480
      %v5569 = vpop.f32.mrf.mxu0
      %v5570 = vadd.f32 0.0, %v5569
      %v5571 = vpop.f32.mrf.mxu0
      %v5572 = vpop.f32.mrf.mxu0
      %v5573 = vadd.f32 0.0, %v5572
      %v5574 = vpop.f32.mrf.mxu0
      %5575 = vmatprep.mubr.bf16.mxu0 0
      %5576 = vmatmul.mubr.bf16.gmra.mxu0 %v5483
      %v5577 = vpop.f32.mrf.mxu0
      %v5578 = vadd.f32 0.0, %v5577
      %v5579 = vpop.f32.mrf.mxu0
      %v5580 = vpop.f32.mrf.mxu0
      %v5581 = vadd.f32 0.0, %v5580
      %v5582 = vpop.f32.mrf.mxu0
      %5583 = vmatprep.mubr.bf16.mxu0 0
      %5584 = vmatmul.mubr.bf16.gmra.mxu0 %v5486
      %v5585 = vpop.f32.mrf.mxu0
      %v5586 = vadd.f32 0.0, %v5585
      %v5587 = vpop.f32.mrf.mxu0
      %v5588 = vpop.f32.mrf.mxu0
      %v5589 = vadd.f32 0.0, %v5588
      %v5590 = vpop.f32.mrf.mxu0
      %5591 = vmatprep.mubr.bf16.mxu0 0
      %5592 = vmatmul.mubr.bf16.gmra.mxu0 %v5489
      %v5593 = vpop.f32.mrf.mxu0
      %v5594 = vadd.f32 0.0, %v5593
      %v5595 = vpop.f32.mrf.mxu0
      %v5596 = vpop.f32.mrf.mxu0
      %v5597 = vadd.f32 0.0, %v5596
      %v5598 = vpop.f32.mrf.mxu0
      %5599 = vmatprep.mubr.bf16.mxu0 0
      %5600 = vmatmul.mubr.bf16.gmra.mxu0 %v5492
      %v5601 = vpop.f32.mrf.mxu0
      %v5602 = vadd.f32 0.0, %v5601
      %v5603 = vpop.f32.mrf.mxu0
      %v5604 = vpop.f32.mrf.mxu0
      %v5605 = vadd.f32 0.0, %v5604
      %v5606 = vpop.f32.mrf.mxu0
      %5607 = vmatprep.mubr.bf16.mxu0 0
      %5608 = vmatmul.mubr.bf16.gmra.mxu0 %v5495
      %v5609 = vpop.f32.mrf.mxu0
      %v5610 = vadd.f32 0.0, %v5609
      %v5611 = vpop.f32.mrf.mxu0
      %v5612 = vpop.f32.mrf.mxu0
      %v5613 = vadd.f32 0.0, %v5612
      %v5614 = vpop.f32.mrf.mxu0
      %5615 = vmatprep.mubr.bf16.mxu0 0
      %5616 = vmatmul.mubr.bf16.gmra.mxu0 %v5498
      %v5617 = vpop.f32.mrf.mxu0
      %v5618 = vadd.f32 0.0, %v5617
      %v5619 = vpop.f32.mrf.mxu0
      %v5620 = vpop.f32.mrf.mxu0
      %v5621 = vadd.f32 0.0, %v5620
      %v5622 = vpop.f32.mrf.mxu0
      %5623 = vmatprep.mubr.bf16.mxu0 0
      %5624 = vmatmul.mubr.bf16.gmra.mxu0 %v5501
      %v5625 = vpop.f32.mrf.mxu0
      %v5626 = vadd.f32 0.0, %v5625
      %v5627 = vpop.f32.mrf.mxu0
      %v5628 = vpop.f32.mrf.mxu0
      %v5629 = vadd.f32 0.0, %v5628
      %v5630 = vpop.f32.mrf.mxu0
      %5631 = vmatprep.mubr.bf16.mxu0 0
      %5632 = vmatmul.mubr.bf16.gmra.mxu0 %v5504
      %v5633 = vpop.f32.mrf.mxu0
      %v5634 = vadd.f32 0.0, %v5633
      %v5635 = vpop.f32.mrf.mxu0
      %v5636 = vpop.f32.mrf.mxu0
      %v5637 = vadd.f32 0.0, %v5636
      %v5638 = vpop.f32.mrf.mxu0
      %5639 = vmatprep.mubr.bf16.mxu0 0
      %5640 = vmatmul.mubr.bf16.gmra.mxu0 %v5507
      %v5641 = vpop.f32.mrf.mxu0
      %v5642 = vadd.f32 0.0, %v5641
      %v5643 = vpop.f32.mrf.mxu0
      %v5644 = vpop.f32.mrf.mxu0
      %v5645 = vadd.f32 0.0, %v5644
      %v5646 = vpop.f32.mrf.mxu0
      %5647 = vmatprep.mubr.bf16.mxu0 0
      %5648 = vmatmul.mubr.bf16.gmra.mxu0 %v5510
      %v5649 = vpop.f32.mrf.mxu0
      %v5650 = vadd.f32 0.0, %v5649
      %v5651 = vpop.f32.mrf.mxu0
      %v5652 = vpop.f32.mrf.mxu0
      %v5653 = vadd.f32 0.0, %v5652
      %v5654 = vpop.f32.mrf.mxu0
      %5655 = vmatprep.mubr.bf16.mxu0 0
      %5656 = vmatmul.mubr.bf16.gmra.mxu0 %v5513
      %v5657 = vpop.f32.mrf.mxu0
      %v5658 = vadd.f32 0.0, %v5657
      %v5659 = vpop.f32.mrf.mxu0
      %v5660 = vpop.f32.mrf.mxu0
      %v5661 = vadd.f32 0.0, %v5660
      %v5662 = vpop.f32.mrf.mxu0
      %5663 = vmatprep.mubr.bf16.mxu0 0
      %5664 = vmatmul.mubr.bf16.gmra.mxu0 %v5516
      %v5665 = vpop.f32.mrf.mxu0
      %v5666 = vadd.f32 0.0, %v5665
      %v5667 = vpop.f32.mrf.mxu0
      %v5668 = vpop.f32.mrf.mxu0
      %v5669 = vadd.f32 0.0, %v5668
      %v5670 = vpop.f32.mrf.mxu0
      %5671 = vmatprep.mubr.bf16.mxu0 0
      %5672 = vmatmul.mubr.bf16.gmra.mxu0 %v5519
      %v5673 = vpop.f32.mrf.mxu0
      %v5674 = vadd.f32 0.0, %v5673
      %v5675 = vpop.f32.mrf.mxu0
      %v5676 = vpop.f32.mrf.mxu0
      %v5677 = vadd.f32 0.0, %v5676
      %v5678 = vpop.f32.mrf.mxu0
      %5679 = vmatprep.mubr.bf16.mxu0 0
      %5680 = vmatmul.mubr.bf16.gmra.mxu0 %v5522
      %v5681 = vpop.f32.mrf.mxu0
      %v5682 = vadd.f32 0.0, %v5681
      %v5683 = vpop.f32.mrf.mxu0
      %v5684 = vpop.f32.mrf.mxu0
      %v5685 = vadd.f32 0.0, %v5684
      %v5686 = vpop.f32.mrf.mxu0
      %5687 = vdwg.mxu0
      %v5688 = vadd.f32 %v5141, %v5562
      %v5689 = vadd.f32 %v5142, %v5565
      %v5690 = vadd.f32 %v5143, %v5570
      %v5691 = vadd.f32 %v5144, %v5573
      %v5692 = vadd.f32 %v5145, %v5578
      %v5693 = vadd.f32 %v5146, %v5581
      %v5694 = vadd.f32 %v5147, %v5586
      %v5695 = vadd.f32 %v5148, %v5589
      %v5696 = vadd.f32 %v5149, %v5594
      %v5697 = vadd.f32 %v5150, %v5597
      %v5698 = vadd.f32 %v5151, %v5602
      %v5699 = vadd.f32 %v5152, %v5605
      %v5700 = vadd.f32 %v5153, %v5610
      %v5701 = vadd.f32 %v5154, %v5613
      %v5702 = vadd.f32 %v5155, %v5618
      %v5703 = vadd.f32 %v5156, %v5621
      %v5704 = vadd.f32 %v5157, %v5626
      %v5705 = vadd.f32 %v5158, %v5629
      %v5706 = vadd.f32 %v5159, %v5634
      %v5707 = vadd.f32 %v5160, %v5637
      %v5708 = vadd.f32 %v5161, %v5642
      %v5709 = vadd.f32 %v5162, %v5645
      %v5710 = vadd.f32 %v5163, %v5650
      %v5711 = vadd.f32 %v5164, %v5653
      %v5712 = vadd.f32 %v5165, %v5658
      %v5713 = vadd.f32 %v5166, %v5661
      %v5714 = vadd.f32 %v5167, %v5666
      %v5715 = vadd.f32 %v5168, %v5669
      %v5716 = vadd.f32 %v5169, %v5674
      %v5717 = vadd.f32 %v5170, %v5677
      %v5718 = vadd.f32 %v5171, %v5682
      %v5719 = vadd.f32 %v5172, %v5685
      %s5720 = scalar_lea.vmem %s3, 14
      %v5721 = vld [vmem:[%s5720] sm:$0x3]
      %v5754 = vunpack.c.l.b16 %v5174
      %v5755 = vunpack.c.l.b16 %v5175
      %v5756 = vunpack.c.l.b16 %v5176
      %v5757 = vunpack.c.l.b16 %v5177
      %v5758 = vunpack.c.l.b16 %v5178
      %v5759 = vunpack.c.l.b16 %v5179
      %v5760 = vunpack.c.l.b16 %v5180
      %v5761 = vunpack.c.l.b16 %v5181
      %v5762 = vunpack.c.l.b16 %v5182
      %v5763 = vunpack.c.l.b16 %v5183
      %v5764 = vunpack.c.l.b16 %v5184
      %v5765 = vunpack.c.l.b16 %v5185
      %v5766 = vunpack.c.l.b16 %v5186
      %v5767 = vunpack.c.l.b16 %v5187
      %v5768 = vunpack.c.l.b16 %v5188
      %v5769 = vunpack.c.l.b16 %v5189
      %v5770 = vunpack.c.l.b16 %v5190
      %v5771 = vunpack.c.l.b16 %v5191
      %v5772 = vunpack.c.l.b16 %v5192
      %v5773 = vunpack.c.l.b16 %v5193
      %v5774 = vunpack.c.l.b16 %v5194
      %v5775 = vunpack.c.l.b16 %v5195
      %v5776 = vunpack.c.l.b16 %v5196
      %v5777 = vunpack.c.l.b16 %v5197
      %v5778 = vunpack.c.l.b16 %v5198
      %v5779 = vunpack.c.l.b16 %v5199
      %v5780 = vunpack.c.l.b16 %v5200
      %v5781 = vunpack.c.l.b16 %v5201
      %v5782 = vunpack.c.l.b16 %v5202
      %v5783 = vunpack.c.l.b16 %v5203
      %v5784 = vunpack.c.l.b16 %v5204
      %v5785 = vunpack.c.l.b16 %v5205
      %v5786 = vpack.c.b16 %v5755, %v5754
      %v5787 = vpack.c.b16 %v5757, %v5756
      %v5788 = vpack.c.b16 %v5759, %v5758
      %v5789 = vpack.c.b16 %v5761, %v5760
      %v5790 = vpack.c.b16 %v5763, %v5762
      %v5791 = vpack.c.b16 %v5765, %v5764
      %v5792 = vpack.c.b16 %v5767, %v5766
      %v5793 = vpack.c.b16 %v5769, %v5768
      %v5794 = vpack.c.b16 %v5771, %v5770
      %v5795 = vpack.c.b16 %v5773, %v5772
      %v5796 = vpack.c.b16 %v5775, %v5774
      %v5797 = vpack.c.b16 %v5777, %v5776
      %v5798 = vpack.c.b16 %v5779, %v5778
      %v5799 = vpack.c.b16 %v5781, %v5780
      %v5800 = vpack.c.b16 %v5783, %v5782
      %v5801 = vpack.c.b16 %v5785, %v5784
      %v5803 = vsel %vm511, %v5786, 0
      %v5806 = vsel %vm511, %v5787, 0
      %v5809 = vsel %vm511, %v5788, 0
      %v5812 = vsel %vm511, %v5789, 0
      %v5815 = vsel %vm511, %v5790, 0
      %v5818 = vsel %vm511, %v5791, 0
      %v5821 = vsel %vm511, %v5792, 0
      %v5824 = vsel %vm511, %v5793, 0
      %v5827 = vsel %vm511, %v5794, 0
      %v5830 = vsel %vm511, %v5795, 0
      %v5833 = vsel %vm511, %v5796, 0
      %v5836 = vsel %vm511, %v5797, 0
      %v5839 = vsel %vm511, %v5798, 0
      %v5842 = vsel %vm511, %v5799, 0
      %v5845 = vsel %vm511, %v5800, 0
      %v5848 = vsel %vm511, %v5801, 0
      %v5851 = vsel %vm560, %v5721, 0
      %5853 = vmatprep.subr.bf16.mxu0 0
      %5854 = vmatpush1.bf16.msra.mxu0 0
      %5855 = vmatprep.subr.bf16.mxu0 0
      %5856 = vmatpush1.bf16.msra.mxu0 0
      %5857 = vmatprep.subr.bf16.mxu0 0
      %5858 = vmatpush1.bf16.msra.mxu0 0
      %5859 = vmatprep.subr.bf16.mxu0 0
      %5860 = vmatpush1.bf16.msra.mxu0 0
      %5861 = vmatprep.subr.bf16.mxu0 0
      %5862 = vmatpush1.bf16.msra.mxu0 0
      %5863 = vmatprep.subr.bf16.mxu0 0
      %5864 = vmatpush1.bf16.msra.mxu0 0
      %5865 = vmatprep.subr.bf16.mxu0 0
      %5866 = vmatpush1.bf16.msra.mxu0 0
      %5867 = vmatprep.subr.bf16.mxu0 0
      %5868 = vmatpush1.bf16.msra.mxu0 %v5851
      %5869 = vmatprep.subr.bf16.mxu0 0
      %5870 = vmatpush2.bf16.msra.mxu0 0
      %5871 = vmatprep.subr.bf16.mxu0 0
      %5872 = vmatpush2.bf16.msra.mxu0 0
      %5873 = vmatprep.subr.bf16.mxu0 0
      %5874 = vmatpush2.bf16.msra.mxu0 0
      %5875 = vmatprep.subr.bf16.mxu0 0
      %5876 = vmatpush2.bf16.msra.mxu0 0
      %5877 = vmatprep.subr.bf16.mxu0 0
      %5878 = vmatpush2.bf16.msra.mxu0 0
      %5879 = vmatprep.subr.bf16.mxu0 0
      %5880 = vmatpush2.bf16.msra.mxu0 0
      %5881 = vmatprep.subr.bf16.mxu0 0
      %5882 = vmatpush2.bf16.msra.mxu0 0
      %5883 = vmatprep.subr.bf16.mxu0 0
      %5884 = vmatpush2.bf16.msra.mxu0 0
      %5885 = vmatprep.mubr.bf16.mxu0 0
      %5886 = vmatmul.mubr.bf16.gmra.mxu0 %v5803
      %v5887 = vpop.f32.mrf.mxu0
      %v5888 = vadd.f32 0.0, %v5887
      %v5889 = vpop.f32.mrf.mxu0
      %v5890 = vpop.f32.mrf.mxu0
      %v5891 = vadd.f32 0.0, %v5890
      %v5892 = vpop.f32.mrf.mxu0
      %5893 = vmatprep.mubr.bf16.mxu0 0
      %5894 = vmatmul.mubr.bf16.gmra.mxu0 %v5806
      %v5895 = vpop.f32.mrf.mxu0
      %v5896 = vadd.f32 0.0, %v5895
      %v5897 = vpop.f32.mrf.mxu0
      %v5898 = vpop.f32.mrf.mxu0
      %v5899 = vadd.f32 0.0, %v5898
      %v5900 = vpop.f32.mrf.mxu0
      %5901 = vmatprep.mubr.bf16.mxu0 0
      %5902 = vmatmul.mubr.bf16.gmra.mxu0 %v5809
      %v5903 = vpop.f32.mrf.mxu0
      %v5904 = vadd.f32 0.0, %v5903
      %v5905 = vpop.f32.mrf.mxu0
      %v5906 = vpop.f32.mrf.mxu0
      %v5907 = vadd.f32 0.0, %v5906
      %v5908 = vpop.f32.mrf.mxu0
      %5909 = vmatprep.mubr.bf16.mxu0 0
      %5910 = vmatmul.mubr.bf16.gmra.mxu0 %v5812
      %v5911 = vpop.f32.mrf.mxu0
      %v5912 = vadd.f32 0.0, %v5911
      %v5913 = vpop.f32.mrf.mxu0
      %v5914 = vpop.f32.mrf.mxu0
      %v5915 = vadd.f32 0.0, %v5914
      %v5916 = vpop.f32.mrf.mxu0
      %5917 = vmatprep.mubr.bf16.mxu0 0
      %5918 = vmatmul.mubr.bf16.gmra.mxu0 %v5815
      %v5919 = vpop.f32.mrf.mxu0
      %v5920 = vadd.f32 0.0, %v5919
      %v5921 = vpop.f32.mrf.mxu0
      %v5922 = vpop.f32.mrf.mxu0
      %v5923 = vadd.f32 0.0, %v5922
      %v5924 = vpop.f32.mrf.mxu0
      %5925 = vmatprep.mubr.bf16.mxu0 0
      %5926 = vmatmul.mubr.bf16.gmra.mxu0 %v5818
      %v5927 = vpop.f32.mrf.mxu0
      %v5928 = vadd.f32 0.0, %v5927
      %v5929 = vpop.f32.mrf.mxu0
      %v5930 = vpop.f32.mrf.mxu0
      %v5931 = vadd.f32 0.0, %v5930
      %v5932 = vpop.f32.mrf.mxu0
      %5933 = vmatprep.mubr.bf16.mxu0 0
      %5934 = vmatmul.mubr.bf16.gmra.mxu0 %v5821
      %v5935 = vpop.f32.mrf.mxu0
      %v5936 = vadd.f32 0.0, %v5935
      %v5937 = vpop.f32.mrf.mxu0
      %v5938 = vpop.f32.mrf.mxu0
      %v5939 = vadd.f32 0.0, %v5938
      %v5940 = vpop.f32.mrf.mxu0
      %5941 = vmatprep.mubr.bf16.mxu0 0
      %5942 = vmatmul.mubr.bf16.gmra.mxu0 %v5824
      %v5943 = vpop.f32.mrf.mxu0
      %v5944 = vadd.f32 0.0, %v5943
      %v5945 = vpop.f32.mrf.mxu0
      %v5946 = vpop.f32.mrf.mxu0
      %v5947 = vadd.f32 0.0, %v5946
      %v5948 = vpop.f32.mrf.mxu0
      %5949 = vmatprep.mubr.bf16.mxu0 0
      %5950 = vmatmul.mubr.bf16.gmra.mxu0 %v5827
      %v5951 = vpop.f32.mrf.mxu0
      %v5952 = vadd.f32 0.0, %v5951
      %v5953 = vpop.f32.mrf.mxu0
      %v5954 = vpop.f32.mrf.mxu0
      %v5955 = vadd.f32 0.0, %v5954
      %v5956 = vpop.f32.mrf.mxu0
      %5957 = vmatprep.mubr.bf16.mxu0 0
      %5958 = vmatmul.mubr.bf16.gmra.mxu0 %v5830
      %v5959 = vpop.f32.mrf.mxu0
      %v5960 = vadd.f32 0.0, %v5959
      %v5961 = vpop.f32.mrf.mxu0
      %v5962 = vpop.f32.mrf.mxu0
      %v5963 = vadd.f32 0.0, %v5962
      %v5964 = vpop.f32.mrf.mxu0
      %5965 = vmatprep.mubr.bf16.mxu0 0
      %5966 = vmatmul.mubr.bf16.gmra.mxu0 %v5833
      %v5967 = vpop.f32.mrf.mxu0
      %v5968 = vadd.f32 0.0, %v5967
      %v5969 = vpop.f32.mrf.mxu0
      %v5970 = vpop.f32.mrf.mxu0
      %v5971 = vadd.f32 0.0, %v5970
      %v5972 = vpop.f32.mrf.mxu0
      %5973 = vmatprep.mubr.bf16.mxu0 0
      %5974 = vmatmul.mubr.bf16.gmra.mxu0 %v5836
      %v5975 = vpop.f32.mrf.mxu0
      %v5976 = vadd.f32 0.0, %v5975
      %v5977 = vpop.f32.mrf.mxu0
      %v5978 = vpop.f32.mrf.mxu0
      %v5979 = vadd.f32 0.0, %v5978
      %v5980 = vpop.f32.mrf.mxu0
      %5981 = vmatprep.mubr.bf16.mxu0 0
      %5982 = vmatmul.mubr.bf16.gmra.mxu0 %v5839
      %v5983 = vpop.f32.mrf.mxu0
      %v5984 = vadd.f32 0.0, %v5983
      %v5985 = vpop.f32.mrf.mxu0
      %v5986 = vpop.f32.mrf.mxu0
      %v5987 = vadd.f32 0.0, %v5986
      %v5988 = vpop.f32.mrf.mxu0
      %5989 = vmatprep.mubr.bf16.mxu0 0
      %5990 = vmatmul.mubr.bf16.gmra.mxu0 %v5842
      %v5991 = vpop.f32.mrf.mxu0
      %v5992 = vadd.f32 0.0, %v5991
      %v5993 = vpop.f32.mrf.mxu0
      %v5994 = vpop.f32.mrf.mxu0
      %v5995 = vadd.f32 0.0, %v5994
      %v5996 = vpop.f32.mrf.mxu0
      %5997 = vmatprep.mubr.bf16.mxu0 0
      %5998 = vmatmul.mubr.bf16.gmra.mxu0 %v5845
      %v5999 = vpop.f32.mrf.mxu0
      %v6000 = vadd.f32 0.0, %v5999
      %v6001 = vpop.f32.mrf.mxu0
      %v6002 = vpop.f32.mrf.mxu0
      %v6003 = vadd.f32 0.0, %v6002
      %v6004 = vpop.f32.mrf.mxu0
      %6005 = vmatprep.mubr.bf16.mxu0 0
      %6006 = vmatmul.mubr.bf16.gmra.mxu0 %v5848
      %v6007 = vpop.f32.mrf.mxu0
      %v6008 = vadd.f32 0.0, %v6007
      %v6009 = vpop.f32.mrf.mxu0
      %v6010 = vpop.f32.mrf.mxu0
      %v6011 = vadd.f32 0.0, %v6010
      %v6012 = vpop.f32.mrf.mxu0
      %6013 = vdwg.mxu0
      %v6014 = vadd.f32 %v5688, %v5888
      %v6015 = vadd.f32 %v5689, %v5891
      %v6016 = vadd.f32 %v5690, %v5896
      %v6017 = vadd.f32 %v5691, %v5899
      %v6018 = vadd.f32 %v5692, %v5904
      %v6019 = vadd.f32 %v5693, %v5907
      %v6020 = vadd.f32 %v5694, %v5912
      %v6021 = vadd.f32 %v5695, %v5915
      %v6022 = vadd.f32 %v5696, %v5920
      %v6023 = vadd.f32 %v5697, %v5923
      %v6024 = vadd.f32 %v5698, %v5928
      %v6025 = vadd.f32 %v5699, %v5931
      %v6026 = vadd.f32 %v5700, %v5936
      %v6027 = vadd.f32 %v5701, %v5939
      %v6028 = vadd.f32 %v5702, %v5944
      %v6029 = vadd.f32 %v5703, %v5947
      %v6030 = vadd.f32 %v5704, %v5952
      %v6031 = vadd.f32 %v5705, %v5955
      %v6032 = vadd.f32 %v5706, %v5960
      %v6033 = vadd.f32 %v5707, %v5963
      %v6034 = vadd.f32 %v5708, %v5968
      %v6035 = vadd.f32 %v5709, %v5971
      %v6036 = vadd.f32 %v5710, %v5976
      %v6037 = vadd.f32 %v5711, %v5979
      %v6038 = vadd.f32 %v5712, %v5984
      %v6039 = vadd.f32 %v5713, %v5987
      %v6040 = vadd.f32 %v5714, %v5992
      %v6041 = vadd.f32 %v5715, %v5995
      %v6042 = vadd.f32 %v5716, %v6000
      %v6043 = vadd.f32 %v5717, %v6003
      %v6044 = vadd.f32 %v5718, %v6008
      %v6045 = vadd.f32 %v5719, %v6011
      %v6046 = vld [vmem:[#allocation2 + $0x18] sm:$0xf]
      %v6047 = vld [vmem:[#allocation2 + $0x1c] sm:$0xf]
      %v6048 = vld [vmem:[#allocation2 + $0x20] sm:$0xf]
      %v6049 = vld [vmem:[#allocation2 + $0x24] sm:$0xf]
      %v6050 = vld [vmem:[#allocation2 + $0x28] sm:$0xf]
      %v6051 = vld [vmem:[#allocation2 + $0x2c] sm:$0xf]
      %v6052 = vld [vmem:[#allocation2 + $0x30] sm:$0xf]
      %v6053 = vld [vmem:[#allocation2 + $0x34] sm:$0xf]
      %v6054 = vld [vmem:[#allocation2 + $0x38] sm:$0xf]
      %v6055 = vld [vmem:[#allocation2 + $0x3c] sm:$0xf]
      %v6056 = vld [vmem:[#allocation2 + $0x40] sm:$0xf]
      %v6057 = vld [vmem:[#allocation2 + $0x44] sm:$0xf]
      %v6058 = vld [vmem:[#allocation2 + $0x48] sm:$0xf]
      %v6059 = vld [vmem:[#allocation2 + $0x4c] sm:$0xf]
      %v6060 = vld [vmem:[#allocation2 + $0x50] sm:$0xf]
      %v6061 = vld [vmem:[#allocation2 + $0x54] sm:$0xf]
      %v6062 = vld [vmem:[#allocation2 + $0x58] sm:$0xf]
      %v6063 = vld [vmem:[#allocation2 + $0x5c] sm:$0xf]
      %v6064 = vld [vmem:[#allocation2 + $0x60] sm:$0xf]
      %v6065 = vld [vmem:[#allocation2 + $0x64] sm:$0xf]
      %v6066 = vld [vmem:[#allocation2 + $0x68] sm:$0xf]
      %v6067 = vld [vmem:[#allocation2 + $0x6c] sm:$0xf]
      %v6068 = vld [vmem:[#allocation2 + $0x70] sm:$0xf]
      %v6069 = vld [vmem:[#allocation2 + $0x74] sm:$0xf]
      %v6070 = vld [vmem:[#allocation2 + $0x78] sm:$0xf]
      %v6071 = vld [vmem:[#allocation2 + $0x7c] sm:$0xf]
      %v6072 = vld [vmem:[#allocation2 + $0x80] sm:$0xf]
      %v6073 = vld [vmem:[#allocation2 + $0x84] sm:$0xf]
      %v6074 = vld [vmem:[#allocation2 + $0x88] sm:$0xf]
      %v6075 = vld [vmem:[#allocation2 + $0x8c] sm:$0xf]
      %v6076 = vld [vmem:[#allocation2 + $0x90] sm:$0xf]
      %v6077 = vld [vmem:[#allocation2 + $0x94] sm:$0xf]
      %v6078 = vld [vmem:[#allocation2 + $0x98] sm:$0x1]
      %v6079 = vmul.bf16 %v6046, %v2964
      %v6080 = vmul.bf16 %v6047, %v2973
      %v6081 = vmul.bf16 %v6048, %v2982
      %v6082 = vmul.bf16 %v6049, %v2991
      %v6083 = vmul.bf16 %v6050, %v3000
      %v6084 = vmul.bf16 %v6051, %v3009
      %v6085 = vmul.bf16 %v6052, %v3018
      %v6086 = vmul.bf16 %v6053, %v3027
      %v6087 = vmul.bf16 %v6054, %v3036
      %v6088 = vmul.bf16 %v6055, %v3045
      %v6089 = vmul.bf16 %v6056, %v3054
      %v6090 = vmul.bf16 %v6057, %v3063
      %v6091 = vmul.bf16 %v6058, %v3072
      %v6092 = vmul.bf16 %v6059, %v3081
      %v6093 = vmul.bf16 %v6060, %v3090
      %v6094 = vmul.bf16 %v6061, %v3099
      %v6095 = vmul.bf16 %v6062, %v3108
      %v6096 = vmul.bf16 %v6063, %v3117
      %v6097 = vmul.bf16 %v6064, %v3126
      %v6098 = vmul.bf16 %v6065, %v3135
      %v6099 = vmul.bf16 %v6066, %v3144
      %v6100 = vmul.bf16 %v6067, %v3153
      %v6101 = vmul.bf16 %v6068, %v3162
      %v6102 = vmul.bf16 %v6069, %v3171
      %v6103 = vmul.bf16 %v6070, %v3180
      %v6104 = vmul.bf16 %v6071, %v3189
      %v6105 = vmul.bf16 %v6072, %v3198
      %v6106 = vmul.bf16 %v6073, %v3207
      %v6107 = vmul.bf16 %v6074, %v3216
      %v6108 = vmul.bf16 %v6075, %v3225
      %v6109 = vmul.bf16 %v6076, %v3234
      %v6110 = vmul.bf16 %v6077, %v3243
      %v6111 = vmul.bf16 %v6078, %v3244
      %s6112 = scalar_lea.vmem %s3, 16
      %v6113 = vld [vmem:[%s6112] sm:$0x3]
      %v6147 = vunpack.c.l.b16 %v6079
      %v6148 = vunpack.c.l.b16 %v6080
      %v6149 = vunpack.c.l.b16 %v6081
      %v6150 = vunpack.c.l.b16 %v6082
      %v6151 = vunpack.c.l.b16 %v6083
      %v6152 = vunpack.c.l.b16 %v6084
      %v6153 = vunpack.c.l.b16 %v6085
      %v6154 = vunpack.c.l.b16 %v6086
      %v6155 = vunpack.c.l.b16 %v6087
      %v6156 = vunpack.c.l.b16 %v6088
      %v6157 = vunpack.c.l.b16 %v6089
      %v6158 = vunpack.c.l.b16 %v6090
      %v6159 = vunpack.c.l.b16 %v6091
      %v6160 = vunpack.c.l.b16 %v6092
      %v6161 = vunpack.c.l.b16 %v6093
      %v6162 = vunpack.c.l.b16 %v6094
      %v6163 = vunpack.c.l.b16 %v6095
      %v6164 = vunpack.c.l.b16 %v6096
      %v6165 = vunpack.c.l.b16 %v6097
      %v6166 = vunpack.c.l.b16 %v6098
      %v6167 = vunpack.c.l.b16 %v6099
      %v6168 = vunpack.c.l.b16 %v6100
      %v6169 = vunpack.c.l.b16 %v6101
      %v6170 = vunpack.c.l.b16 %v6102
      %v6171 = vunpack.c.l.b16 %v6103
      %v6172 = vunpack.c.l.b16 %v6104
      %v6173 = vunpack.c.l.b16 %v6105
      %v6174 = vunpack.c.l.b16 %v6106
      %v6175 = vunpack.c.l.b16 %v6107
      %v6176 = vunpack.c.l.b16 %v6108
      %v6177 = vunpack.c.l.b16 %v6109
      %v6178 = vunpack.c.l.b16 %v6110
      %v6179 = vunpack.c.l.b16 %v6111
      %v6180 = vpack.c.b16 %v6148, %v6147
      %v6181 = vpack.c.b16 %v6150, %v6149
      %v6182 = vpack.c.b16 %v6152, %v6151
      %v6183 = vpack.c.b16 %v6154, %v6153
      %v6184 = vpack.c.b16 %v6156, %v6155
      %v6185 = vpack.c.b16 %v6158, %v6157
      %v6186 = vpack.c.b16 %v6160, %v6159
      %v6187 = vpack.c.b16 %v6162, %v6161
      %v6188 = vpack.c.b16 %v6164, %v6163
      %v6189 = vpack.c.b16 %v6166, %v6165
      %v6190 = vpack.c.b16 %v6168, %v6167
      %v6191 = vpack.c.b16 %v6170, %v6169
      %v6192 = vpack.c.b16 %v6172, %v6171
      %v6193 = vpack.c.b16 %v6174, %v6173
      %v6194 = vpack.c.b16 %v6176, %v6175
      %v6195 = vpack.c.b16 %v6178, %v6177
      %v6196 = vpack.c.b16 %v6179, %v6179
      %v6198 = vshrl.u32 %v6180, 16
      %v6200 = vshll.u32 %v6180, 16
      %v6202 = vrot.slane %v6200, 1
      %v6203 = vor.u32 %v6198, %v6202
      %v6205 = vshll.u32 %v6181, 16
      %v6207 = vrot.slane %v6205, 1
      %v6208 = vsel %vm3396, %v6203, %v6207
      %v6209 = vshrl.u32 %v6181, 16
      %v6211 = vor.u32 %v6209, %v6207
      %v6213 = vshll.u32 %v6182, 16
      %v6215 = vrot.slane %v6213, 1
      %v6216 = vsel %vm3396, %v6211, %v6215
      %v6217 = vshrl.u32 %v6182, 16
      %v6219 = vor.u32 %v6217, %v6215
      %v6221 = vshll.u32 %v6183, 16
      %v6223 = vrot.slane %v6221, 1
      %v6224 = vsel %vm3396, %v6219, %v6223
      %v6225 = vshrl.u32 %v6183, 16
      %v6227 = vor.u32 %v6225, %v6223
      %v6229 = vshll.u32 %v6184, 16
      %v6231 = vrot.slane %v6229, 1
      %v6232 = vsel %vm3396, %v6227, %v6231
      %v6233 = vshrl.u32 %v6184, 16
      %v6235 = vor.u32 %v6233, %v6231
      %v6237 = vshll.u32 %v6185, 16
      %v6239 = vrot.slane %v6237, 1
      %v6240 = vsel %vm3396, %v6235, %v6239
      %v6241 = vshrl.u32 %v6185, 16
      %v6243 = vor.u32 %v6241, %v6239
      %v6245 = vshll.u32 %v6186, 16
      %v6247 = vrot.slane %v6245, 1
      %v6248 = vsel %vm3396, %v6243, %v6247
      %v6249 = vshrl.u32 %v6186, 16
      %v6251 = vor.u32 %v6249, %v6247
      %v6253 = vshll.u32 %v6187, 16
      %v6255 = vrot.slane %v6253, 1
      %v6256 = vsel %vm3396, %v6251, %v6255
      %v6257 = vshrl.u32 %v6187, 16
      %v6259 = vor.u32 %v6257, %v6255
      %v6261 = vshll.u32 %v6188, 16
      %v6263 = vrot.slane %v6261, 1
      %v6264 = vsel %vm3396, %v6259, %v6263
      %v6265 = vshrl.u32 %v6188, 16
      %v6267 = vor.u32 %v6265, %v6263
      %v6269 = vshll.u32 %v6189, 16
      %v6271 = vrot.slane %v6269, 1
      %v6272 = vsel %vm3396, %v6267, %v6271
      %v6273 = vshrl.u32 %v6189, 16
      %v6275 = vor.u32 %v6273, %v6271
      %v6277 = vshll.u32 %v6190, 16
      %v6279 = vrot.slane %v6277, 1
      %v6280 = vsel %vm3396, %v6275, %v6279
      %v6281 = vshrl.u32 %v6190, 16
      %v6283 = vor.u32 %v6281, %v6279
      %v6285 = vshll.u32 %v6191, 16
      %v6287 = vrot.slane %v6285, 1
      %v6288 = vsel %vm3396, %v6283, %v6287
      %v6289 = vshrl.u32 %v6191, 16
      %v6291 = vor.u32 %v6289, %v6287
      %v6293 = vshll.u32 %v6192, 16
      %v6295 = vrot.slane %v6293, 1
      %v6296 = vsel %vm3396, %v6291, %v6295
      %v6297 = vshrl.u32 %v6192, 16
      %v6299 = vor.u32 %v6297, %v6295
      %v6301 = vshll.u32 %v6193, 16
      %v6303 = vrot.slane %v6301, 1
      %v6304 = vsel %vm3396, %v6299, %v6303
      %v6305 = vshrl.u32 %v6193, 16
      %v6307 = vor.u32 %v6305, %v6303
      %v6309 = vshll.u32 %v6194, 16
      %v6311 = vrot.slane %v6309, 1
      %v6312 = vsel %vm3396, %v6307, %v6311
      %v6313 = vshrl.u32 %v6194, 16
      %v6315 = vor.u32 %v6313, %v6311
      %v6317 = vshll.u32 %v6195, 16
      %v6319 = vrot.slane %v6317, 1
      %v6320 = vsel %vm3396, %v6315, %v6319
      %v6321 = vshrl.u32 %v6195, 16
      %v6323 = vor.u32 %v6321, %v6319
      %v6325 = vshll.u32 %v6196, 16
      %v6327 = vrot.slane %v6325, 1
      %v6328 = vsel %vm3396, %v6323, %v6327
      %v6330 = vsel %vm511, %v6208, 0
      %v6333 = vsel %vm511, %v6216, 0
      %v6336 = vsel %vm511, %v6224, 0
      %v6339 = vsel %vm511, %v6232, 0
      %v6342 = vsel %vm511, %v6240, 0
      %v6345 = vsel %vm511, %v6248, 0
      %v6348 = vsel %vm511, %v6256, 0
      %v6351 = vsel %vm511, %v6264, 0
      %v6354 = vsel %vm511, %v6272, 0
      %v6357 = vsel %vm511, %v6280, 0
      %v6360 = vsel %vm511, %v6288, 0
      %v6363 = vsel %vm511, %v6296, 0
      %v6366 = vsel %vm511, %v6304, 0
      %v6369 = vsel %vm511, %v6312, 0
      %v6372 = vsel %vm511, %v6320, 0
      %v6375 = vsel %vm511, %v6328, 0
      %v6378 = vsel %vm560, %v6113, 0
      %6380 = vmatprep.subr.bf16.mxu0 0
      %6381 = vmatpush1.bf16.msra.mxu0 0
      %6382 = vmatprep.subr.bf16.mxu0 0
      %6383 = vmatpush1.bf16.msra.mxu0 0
      %6384 = vmatprep.subr.bf16.mxu0 0
      %6385 = vmatpush1.bf16.msra.mxu0 0
      %6386 = vmatprep.subr.bf16.mxu0 0
      %6387 = vmatpush1.bf16.msra.mxu0 0
      %6388 = vmatprep.subr.bf16.mxu0 0
      %6389 = vmatpush1.bf16.msra.mxu0 0
      %6390 = vmatprep.subr.bf16.mxu0 0
      %6391 = vmatpush1.bf16.msra.mxu0 0
      %6392 = vmatprep.subr.bf16.mxu0 0
      %6393 = vmatpush1.bf16.msra.mxu0 0
      %6394 = vmatprep.subr.bf16.mxu0 0
      %6395 = vmatpush1.bf16.msra.mxu0 %v6378
      %6396 = vmatprep.subr.bf16.mxu0 0
      %6397 = vmatpush2.bf16.msra.mxu0 0
      %6398 = vmatprep.subr.bf16.mxu0 0
      %6399 = vmatpush2.bf16.msra.mxu0 0
      %6400 = vmatprep.subr.bf16.mxu0 0
      %6401 = vmatpush2.bf16.msra.mxu0 0
      %6402 = vmatprep.subr.bf16.mxu0 0
      %6403 = vmatpush2.bf16.msra.mxu0 0
      %6404 = vmatprep.subr.bf16.mxu0 0
      %6405 = vmatpush2.bf16.msra.mxu0 0
      %6406 = vmatprep.subr.bf16.mxu0 0
      %6407 = vmatpush2.bf16.msra.mxu0 0
      %6408 = vmatprep.subr.bf16.mxu0 0
      %6409 = vmatpush2.bf16.msra.mxu0 0
      %6410 = vmatprep.subr.bf16.mxu0 0
      %6411 = vmatpush2.bf16.msra.mxu0 0
      %6412 = vmatprep.mubr.bf16.mxu0 0
      %6413 = vmatmul.mubr.bf16.gmra.mxu0 %v6330
      %v6414 = vpop.f32.mrf.mxu0
      %v6415 = vadd.f32 0.0, %v6414
      %v6416 = vpop.f32.mrf.mxu0
      %v6417 = vpop.f32.mrf.mxu0
      %v6418 = vadd.f32 0.0, %v6417
      %v6419 = vpop.f32.mrf.mxu0
      %6420 = vmatprep.mubr.bf16.mxu0 0
      %6421 = vmatmul.mubr.bf16.gmra.mxu0 %v6333
      %v6422 = vpop.f32.mrf.mxu0
      %v6423 = vadd.f32 0.0, %v6422
      %v6424 = vpop.f32.mrf.mxu0
      %v6425 = vpop.f32.mrf.mxu0
      %v6426 = vadd.f32 0.0, %v6425
      %v6427 = vpop.f32.mrf.mxu0
      %6428 = vmatprep.mubr.bf16.mxu0 0
      %6429 = vmatmul.mubr.bf16.gmra.mxu0 %v6336
      %v6430 = vpop.f32.mrf.mxu0
      %v6431 = vadd.f32 0.0, %v6430
      %v6432 = vpop.f32.mrf.mxu0
      %v6433 = vpop.f32.mrf.mxu0
      %v6434 = vadd.f32 0.0, %v6433
      %v6435 = vpop.f32.mrf.mxu0
      %6436 = vmatprep.mubr.bf16.mxu0 0
      %6437 = vmatmul.mubr.bf16.gmra.mxu0 %v6339
      %v6438 = vpop.f32.mrf.mxu0
      %v6439 = vadd.f32 0.0, %v6438
      %v6440 = vpop.f32.mrf.mxu0
      %v6441 = vpop.f32.mrf.mxu0
      %v6442 = vadd.f32 0.0, %v6441
      %v6443 = vpop.f32.mrf.mxu0
      %6444 = vmatprep.mubr.bf16.mxu0 0
      %6445 = vmatmul.mubr.bf16.gmra.mxu0 %v6342
      %v6446 = vpop.f32.mrf.mxu0
      %v6447 = vadd.f32 0.0, %v6446
      %v6448 = vpop.f32.mrf.mxu0
      %v6449 = vpop.f32.mrf.mxu0
      %v6450 = vadd.f32 0.0, %v6449
      %v6451 = vpop.f32.mrf.mxu0
      %6452 = vmatprep.mubr.bf16.mxu0 0
      %6453 = vmatmul.mubr.bf16.gmra.mxu0 %v6345
      %v6454 = vpop.f32.mrf.mxu0
      %v6455 = vadd.f32 0.0, %v6454
      %v6456 = vpop.f32.mrf.mxu0
      %v6457 = vpop.f32.mrf.mxu0
      %v6458 = vadd.f32 0.0, %v6457
      %v6459 = vpop.f32.mrf.mxu0
      %6460 = vmatprep.mubr.bf16.mxu0 0
      %6461 = vmatmul.mubr.bf16.gmra.mxu0 %v6348
      %v6462 = vpop.f32.mrf.mxu0
      %v6463 = vadd.f32 0.0, %v6462
      %v6464 = vpop.f32.mrf.mxu0
      %v6465 = vpop.f32.mrf.mxu0
      %v6466 = vadd.f32 0.0, %v6465
      %v6467 = vpop.f32.mrf.mxu0
      %6468 = vmatprep.mubr.bf16.mxu0 0
      %6469 = vmatmul.mubr.bf16.gmra.mxu0 %v6351
      %v6470 = vpop.f32.mrf.mxu0
      %v6471 = vadd.f32 0.0, %v6470
      %v6472 = vpop.f32.mrf.mxu0
      %v6473 = vpop.f32.mrf.mxu0
      %v6474 = vadd.f32 0.0, %v6473
      %v6475 = vpop.f32.mrf.mxu0
      %6476 = vmatprep.mubr.bf16.mxu0 0
      %6477 = vmatmul.mubr.bf16.gmra.mxu0 %v6354
      %v6478 = vpop.f32.mrf.mxu0
      %v6479 = vadd.f32 0.0, %v6478
      %v6480 = vpop.f32.mrf.mxu0
      %v6481 = vpop.f32.mrf.mxu0
      %v6482 = vadd.f32 0.0, %v6481
      %v6483 = vpop.f32.mrf.mxu0
      %6484 = vmatprep.mubr.bf16.mxu0 0
      %6485 = vmatmul.mubr.bf16.gmra.mxu0 %v6357
      %v6486 = vpop.f32.mrf.mxu0
      %v6487 = vadd.f32 0.0, %v6486
      %v6488 = vpop.f32.mrf.mxu0
      %v6489 = vpop.f32.mrf.mxu0
      %v6490 = vadd.f32 0.0, %v6489
      %v6491 = vpop.f32.mrf.mxu0
      %6492 = vmatprep.mubr.bf16.mxu0 0
      %6493 = vmatmul.mubr.bf16.gmra.mxu0 %v6360
      %v6494 = vpop.f32.mrf.mxu0
      %v6495 = vadd.f32 0.0, %v6494
      %v6496 = vpop.f32.mrf.mxu0
      %v6497 = vpop.f32.mrf.mxu0
      %v6498 = vadd.f32 0.0, %v6497
      %v6499 = vpop.f32.mrf.mxu0
      %6500 = vmatprep.mubr.bf16.mxu0 0
      %6501 = vmatmul.mubr.bf16.gmra.mxu0 %v6363
      %v6502 = vpop.f32.mrf.mxu0
      %v6503 = vadd.f32 0.0, %v6502
      %v6504 = vpop.f32.mrf.mxu0
      %v6505 = vpop.f32.mrf.mxu0
      %v6506 = vadd.f32 0.0, %v6505
      %v6507 = vpop.f32.mrf.mxu0
      %6508 = vmatprep.mubr.bf16.mxu0 0
      %6509 = vmatmul.mubr.bf16.gmra.mxu0 %v6366
      %v6510 = vpop.f32.mrf.mxu0
      %v6511 = vadd.f32 0.0, %v6510
      %v6512 = vpop.f32.mrf.mxu0
      %v6513 = vpop.f32.mrf.mxu0
      %v6514 = vadd.f32 0.0, %v6513
      %v6515 = vpop.f32.mrf.mxu0
      %6516 = vmatprep.mubr.bf16.mxu0 0
      %6517 = vmatmul.mubr.bf16.gmra.mxu0 %v6369
      %v6518 = vpop.f32.mrf.mxu0
      %v6519 = vadd.f32 0.0, %v6518
      %v6520 = vpop.f32.mrf.mxu0
      %v6521 = vpop.f32.mrf.mxu0
      %v6522 = vadd.f32 0.0, %v6521
      %v6523 = vpop.f32.mrf.mxu0
      %6524 = vmatprep.mubr.bf16.mxu0 0
      %6525 = vmatmul.mubr.bf16.gmra.mxu0 %v6372
      %v6526 = vpop.f32.mrf.mxu0
      %v6527 = vadd.f32 0.0, %v6526
      %v6528 = vpop.f32.mrf.mxu0
      %v6529 = vpop.f32.mrf.mxu0
      %v6530 = vadd.f32 0.0, %v6529
      %v6531 = vpop.f32.mrf.mxu0
      %6532 = vmatprep.mubr.bf16.mxu0 0
      %6533 = vmatmul.mubr.bf16.gmra.mxu0 %v6375
      %v6534 = vpop.f32.mrf.mxu0
      %v6535 = vadd.f32 0.0, %v6534
      %v6536 = vpop.f32.mrf.mxu0
      %v6537 = vpop.f32.mrf.mxu0
      %v6538 = vadd.f32 0.0, %v6537
      %v6539 = vpop.f32.mrf.mxu0
      %6540 = vdwg.mxu0
      %v6541 = vadd.f32 %v6014, %v6415
      %v6542 = vadd.f32 %v6015, %v6418
      %v6543 = vadd.f32 %v6016, %v6423
      %v6544 = vadd.f32 %v6017, %v6426
      %v6545 = vadd.f32 %v6018, %v6431
      %v6546 = vadd.f32 %v6019, %v6434
      %v6547 = vadd.f32 %v6020, %v6439
      %v6548 = vadd.f32 %v6021, %v6442
      %v6549 = vadd.f32 %v6022, %v6447
      %v6550 = vadd.f32 %v6023, %v6450
      %v6551 = vadd.f32 %v6024, %v6455
      %v6552 = vadd.f32 %v6025, %v6458
      %v6553 = vadd.f32 %v6026, %v6463
      %v6554 = vadd.f32 %v6027, %v6466
      %v6555 = vadd.f32 %v6028, %v6471
      %v6556 = vadd.f32 %v6029, %v6474
      %v6557 = vadd.f32 %v6030, %v6479
      %v6558 = vadd.f32 %v6031, %v6482
      %v6559 = vadd.f32 %v6032, %v6487
      %v6560 = vadd.f32 %v6033, %v6490
      %v6561 = vadd.f32 %v6034, %v6495
      %v6562 = vadd.f32 %v6035, %v6498
      %v6563 = vadd.f32 %v6036, %v6503
      %v6564 = vadd.f32 %v6037, %v6506
      %v6565 = vadd.f32 %v6038, %v6511
      %v6566 = vadd.f32 %v6039, %v6514
      %v6567 = vadd.f32 %v6040, %v6519
      %v6568 = vadd.f32 %v6041, %v6522
      %v6569 = vadd.f32 %v6042, %v6527
      %v6570 = vadd.f32 %v6043, %v6530
      %v6571 = vadd.f32 %v6044, %v6535
      %v6572 = vadd.f32 %v6045, %v6538
      %v6573 = vld [vmem:[%s4] sm:$0x1]
      %v6575 = vlaneseq
      %v6576 = vshrl.u32 %v6575, 7
      %v6577 = vsub.s32 0, %v6576
      %v6578 = vrot.slane %v6573, %v6577
      %v6580 = vadd.f32 %v6541, %v6578
      %v6581 = vadd.f32 %v6542, %v6578
      %v6582 = vadd.f32 %v6543, %v6578
      %v6583 = vadd.f32 %v6544, %v6578
      %v6584 = vadd.f32 %v6545, %v6578
      %v6585 = vadd.f32 %v6546, %v6578
      %v6586 = vadd.f32 %v6547, %v6578
      %v6587 = vadd.f32 %v6548, %v6578
      %v6588 = vadd.f32 %v6549, %v6578
      %v6589 = vadd.f32 %v6550, %v6578
      %v6590 = vadd.f32 %v6551, %v6578
      %v6591 = vadd.f32 %v6552, %v6578
      %v6592 = vadd.f32 %v6553, %v6578
      %v6593 = vadd.f32 %v6554, %v6578
      %v6594 = vadd.f32 %v6555, %v6578
      %v6595 = vadd.f32 %v6556, %v6578
      %v6596 = vadd.f32 %v6557, %v6578
      %v6597 = vadd.f32 %v6558, %v6578
      %v6598 = vadd.f32 %v6559, %v6578
      %v6599 = vadd.f32 %v6560, %v6578
      %v6600 = vadd.f32 %v6561, %v6578
      %v6601 = vadd.f32 %v6562, %v6578
      %v6602 = vadd.f32 %v6563, %v6578
      %v6603 = vadd.f32 %v6564, %v6578
      %v6604 = vadd.f32 %v6565, %v6578
      %v6605 = vadd.f32 %v6566, %v6578
      %v6606 = vadd.f32 %v6567, %v6578
      %v6607 = vadd.f32 %v6568, %v6578
      %v6608 = vadd.f32 %v6569, %v6578
      %v6609 = vadd.f32 %v6570, %v6578
      %v6610 = vadd.f32 %v6571, %v6578
      %v6611 = vadd.f32 %v6572, %v6578
      %v6612 = vmax.f32 %v6580, 0.0
      %v6613 = vmax.f32 %v6581, 0.0
      %v6614 = vmax.f32 %v6582, 0.0
      %v6615 = vmax.f32 %v6583, 0.0
      %v6616 = vmax.f32 %v6584, 0.0
      %v6617 = vmax.f32 %v6585, 0.0
      %v6618 = vmax.f32 %v6586, 0.0
      %v6619 = vmax.f32 %v6587, 0.0
      %v6620 = vmax.f32 %v6588, 0.0
      %v6621 = vmax.f32 %v6589, 0.0
      %v6622 = vmax.f32 %v6590, 0.0
      %v6623 = vmax.f32 %v6591, 0.0
      %v6624 = vmax.f32 %v6592, 0.0
      %v6625 = vmax.f32 %v6593, 0.0
      %v6626 = vmax.f32 %v6594, 0.0
      %v6627 = vmax.f32 %v6595, 0.0
      %v6628 = vmax.f32 %v6596, 0.0
      %v6629 = vmax.f32 %v6597, 0.0
      %v6630 = vmax.f32 %v6598, 0.0
      %v6631 = vmax.f32 %v6599, 0.0
      %v6632 = vmax.f32 %v6600, 0.0
      %v6633 = vmax.f32 %v6601, 0.0
      %v6634 = vmax.f32 %v6602, 0.0
      %v6635 = vmax.f32 %v6603, 0.0
      %v6636 = vmax.f32 %v6604, 0.0
      %v6637 = vmax.f32 %v6605, 0.0
      %v6638 = vmax.f32 %v6606, 0.0
      %v6639 = vmax.f32 %v6607, 0.0
      %v6640 = vmax.f32 %v6608, 0.0
      %v6641 = vmax.f32 %v6609, 0.0
      %v6642 = vmax.f32 %v6610, 0.0
      %v6643 = vmax.f32 %v6611, 0.0
      %v6644 = vpack.c.bf16 %v6613, %v6612
      %v6645 = vpack.c.bf16 %v6615, %v6614
      %v6646 = vpack.c.bf16 %v6617, %v6616
      %v6647 = vpack.c.bf16 %v6619, %v6618
      %v6648 = vpack.c.bf16 %v6621, %v6620
      %v6649 = vpack.c.bf16 %v6623, %v6622
      %v6650 = vpack.c.bf16 %v6625, %v6624
      %v6651 = vpack.c.bf16 %v6627, %v6626
      %v6652 = vpack.c.bf16 %v6629, %v6628
      %v6653 = vpack.c.bf16 %v6631, %v6630
      %v6654 = vpack.c.bf16 %v6633, %v6632
      %v6655 = vpack.c.bf16 %v6635, %v6634
      %v6656 = vpack.c.bf16 %v6637, %v6636
      %v6657 = vpack.c.bf16 %v6639, %v6638
      %v6658 = vpack.c.bf16 %v6641, %v6640
      %v6659 = vpack.c.bf16 %v6643, %v6642
      %v6660 = vld [vmem:[%s5] sm:$0x3]
      %v6661 = vld [vmem:[%s6] sm:$0x1]
      %v6663 = vlaneseq
      %v6664 = vshrl.u32 %v6663, 7
      %v6665 = vsub.s32 0, %v6664
      %v6666 = vrot.slane %v6661, %v6665
      %v6669 = vsel %vm511, %v6644, 0
      %v6672 = vsel %vm511, %v6645, 0
      %v6675 = vsel %vm511, %v6646, 0
      %v6678 = vsel %vm511, %v6647, 0
      %v6681 = vsel %vm511, %v6648, 0
      %v6684 = vsel %vm511, %v6649, 0
      %v6687 = vsel %vm511, %v6650, 0
      %v6690 = vsel %vm511, %v6651, 0
      %v6693 = vsel %vm511, %v6652, 0
      %v6696 = vsel %vm511, %v6653, 0
      %v6699 = vsel %vm511, %v6654, 0
      %v6702 = vsel %vm511, %v6655, 0
      %v6705 = vsel %vm511, %v6656, 0
      %v6708 = vsel %vm511, %v6657, 0
      %v6711 = vsel %vm511, %v6658, 0
      %v6714 = vsel %vm511, %v6659, 0
      %v6717 = vsel %vm560, %v6660, 0
      %6719 = vmatprep.subr.bf16.mxu0 0
      %6720 = vmatpush1.bf16.msra.mxu0 0
      %6721 = vmatprep.subr.bf16.mxu0 0
      %6722 = vmatpush1.bf16.msra.mxu0 0
      %6723 = vmatprep.subr.bf16.mxu0 0
      %6724 = vmatpush1.bf16.msra.mxu0 0
      %6725 = vmatprep.subr.bf16.mxu0 0
      %6726 = vmatpush1.bf16.msra.mxu0 0
      %6727 = vmatprep.subr.bf16.mxu0 0
      %6728 = vmatpush1.bf16.msra.mxu0 0
      %6729 = vmatprep.subr.bf16.mxu0 0
      %6730 = vmatpush1.bf16.msra.mxu0 0
      %6731 = vmatprep.subr.bf16.mxu0 0
      %6732 = vmatpush1.bf16.msra.mxu0 0
      %6733 = vmatprep.subr.bf16.mxu0 0
      %6734 = vmatpush1.bf16.msra.mxu0 %v6717
      %6735 = vmatprep.subr.bf16.mxu0 0
      %6736 = vmatpush2.bf16.msra.mxu0 0
      %6737 = vmatprep.subr.bf16.mxu0 0
      %6738 = vmatpush2.bf16.msra.mxu0 0
      %6739 = vmatprep.subr.bf16.mxu0 0
      %6740 = vmatpush2.bf16.msra.mxu0 0
      %6741 = vmatprep.subr.bf16.mxu0 0
      %6742 = vmatpush2.bf16.msra.mxu0 0
      %6743 = vmatprep.subr.bf16.mxu0 0
      %6744 = vmatpush2.bf16.msra.mxu0 0
      %6745 = vmatprep.subr.bf16.mxu0 0
      %6746 = vmatpush2.bf16.msra.mxu0 0
      %6747 = vmatprep.subr.bf16.mxu0 0
      %6748 = vmatpush2.bf16.msra.mxu0 0
      %6749 = vmatprep.subr.bf16.mxu0 0
      %6750 = vmatpush2.bf16.msra.mxu0 0
      %6751 = vmatprep.mubr.bf16.mxu0 0
      %6752 = vmatmul.mubr.bf16.gmra.mxu0 %v6669
      %v6753 = vpop.f32.mrf.mxu0
      %v6754 = vadd.f32 %v6666, %v6753
      %v6755 = vpop.f32.mrf.mxu0
      %v6756 = vpop.f32.mrf.mxu0
      %v6757 = vadd.f32 %v6666, %v6756
      %v6758 = vpop.f32.mrf.mxu0
      %6759 = vmatprep.mubr.bf16.mxu0 0
      %6760 = vmatmul.mubr.bf16.gmra.mxu0 %v6672
      %v6761 = vpop.f32.mrf.mxu0
      %v6762 = vadd.f32 %v6666, %v6761
      %v6763 = vpop.f32.mrf.mxu0
      %v6764 = vpop.f32.mrf.mxu0
      %v6765 = vadd.f32 %v6666, %v6764
      %v6766 = vpop.f32.mrf.mxu0
      %6767 = vmatprep.mubr.bf16.mxu0 0
      %6768 = vmatmul.mubr.bf16.gmra.mxu0 %v6675
      %v6769 = vpop.f32.mrf.mxu0
      %v6770 = vadd.f32 %v6666, %v6769
      %v6771 = vpop.f32.mrf.mxu0
      %v6772 = vpop.f32.mrf.mxu0
      %v6773 = vadd.f32 %v6666, %v6772
      %v6774 = vpop.f32.mrf.mxu0
      %6775 = vmatprep.mubr.bf16.mxu0 0
      %6776 = vmatmul.mubr.bf16.gmra.mxu0 %v6678
      %v6777 = vpop.f32.mrf.mxu0
      %v6778 = vadd.f32 %v6666, %v6777
      %v6779 = vpop.f32.mrf.mxu0
      %v6780 = vpop.f32.mrf.mxu0
      %v6781 = vadd.f32 %v6666, %v6780
      %v6782 = vpop.f32.mrf.mxu0
      %6783 = vmatprep.mubr.bf16.mxu0 0
      %6784 = vmatmul.mubr.bf16.gmra.mxu0 %v6681
      %v6785 = vpop.f32.mrf.mxu0
      %v6786 = vadd.f32 %v6666, %v6785
      %v6787 = vpop.f32.mrf.mxu0
      %v6788 = vpop.f32.mrf.mxu0
      %v6789 = vadd.f32 %v6666, %v6788
      %v6790 = vpop.f32.mrf.mxu0
      %6791 = vmatprep.mubr.bf16.mxu0 0
      %6792 = vmatmul.mubr.bf16.gmra.mxu0 %v6684
      %v6793 = vpop.f32.mrf.mxu0
      %v6794 = vadd.f32 %v6666, %v6793
      %v6795 = vpop.f32.mrf.mxu0
      %v6796 = vpop.f32.mrf.mxu0
      %v6797 = vadd.f32 %v6666, %v6796
      %v6798 = vpop.f32.mrf.mxu0
      %6799 = vmatprep.mubr.bf16.mxu0 0
      %6800 = vmatmul.mubr.bf16.gmra.mxu0 %v6687
      %v6801 = vpop.f32.mrf.mxu0
      %v6802 = vadd.f32 %v6666, %v6801
      %v6803 = vpop.f32.mrf.mxu0
      %v6804 = vpop.f32.mrf.mxu0
      %v6805 = vadd.f32 %v6666, %v6804
      %v6806 = vpop.f32.mrf.mxu0
      %6807 = vmatprep.mubr.bf16.mxu0 0
      %6808 = vmatmul.mubr.bf16.gmra.mxu0 %v6690
      %v6809 = vpop.f32.mrf.mxu0
      %v6810 = vadd.f32 %v6666, %v6809
      %v6811 = vpop.f32.mrf.mxu0
      %v6812 = vpop.f32.mrf.mxu0
      %v6813 = vadd.f32 %v6666, %v6812
      %v6814 = vpop.f32.mrf.mxu0
      %6815 = vmatprep.mubr.bf16.mxu0 0
      %6816 = vmatmul.mubr.bf16.gmra.mxu0 %v6693
      %v6817 = vpop.f32.mrf.mxu0
      %v6818 = vadd.f32 %v6666, %v6817
      %v6819 = vpop.f32.mrf.mxu0
      %v6820 = vpop.f32.mrf.mxu0
      %v6821 = vadd.f32 %v6666, %v6820
      %v6822 = vpop.f32.mrf.mxu0
      %6823 = vmatprep.mubr.bf16.mxu0 0
      %6824 = vmatmul.mubr.bf16.gmra.mxu0 %v6696
      %v6825 = vpop.f32.mrf.mxu0
      %v6826 = vadd.f32 %v6666, %v6825
      %v6827 = vpop.f32.mrf.mxu0
      %v6828 = vpop.f32.mrf.mxu0
      %v6829 = vadd.f32 %v6666, %v6828
      %v6830 = vpop.f32.mrf.mxu0
      %6831 = vmatprep.mubr.bf16.mxu0 0
      %6832 = vmatmul.mubr.bf16.gmra.mxu0 %v6699
      %v6833 = vpop.f32.mrf.mxu0
      %v6834 = vadd.f32 %v6666, %v6833
      %v6835 = vpop.f32.mrf.mxu0
      %v6836 = vpop.f32.mrf.mxu0
      %v6837 = vadd.f32 %v6666, %v6836
      %v6838 = vpop.f32.mrf.mxu0
      %6839 = vmatprep.mubr.bf16.mxu0 0
      %6840 = vmatmul.mubr.bf16.gmra.mxu0 %v6702
      %v6841 = vpop.f32.mrf.mxu0
      %v6842 = vadd.f32 %v6666, %v6841
      %v6843 = vpop.f32.mrf.mxu0
      %v6844 = vpop.f32.mrf.mxu0
      %v6845 = vadd.f32 %v6666, %v6844
      %v6846 = vpop.f32.mrf.mxu0
      %6847 = vmatprep.mubr.bf16.mxu0 0
      %6848 = vmatmul.mubr.bf16.gmra.mxu0 %v6705
      %v6849 = vpop.f32.mrf.mxu0
      %v6850 = vadd.f32 %v6666, %v6849
      %v6851 = vpop.f32.mrf.mxu0
      %v6852 = vpop.f32.mrf.mxu0
      %v6853 = vadd.f32 %v6666, %v6852
      %v6854 = vpop.f32.mrf.mxu0
      %6855 = vmatprep.mubr.bf16.mxu0 0
      %6856 = vmatmul.mubr.bf16.gmra.mxu0 %v6708
      %v6857 = vpop.f32.mrf.mxu0
      %v6858 = vadd.f32 %v6666, %v6857
      %v6859 = vpop.f32.mrf.mxu0
      %v6860 = vpop.f32.mrf.mxu0
      %v6861 = vadd.f32 %v6666, %v6860
      %v6862 = vpop.f32.mrf.mxu0
      %6863 = vmatprep.mubr.bf16.mxu0 0
      %6864 = vmatmul.mubr.bf16.gmra.mxu0 %v6711
      %v6865 = vpop.f32.mrf.mxu0
      %v6866 = vadd.f32 %v6666, %v6865
      %v6867 = vpop.f32.mrf.mxu0
      %v6868 = vpop.f32.mrf.mxu0
      %v6869 = vadd.f32 %v6666, %v6868
      %v6870 = vpop.f32.mrf.mxu0
      %6871 = vmatprep.mubr.bf16.mxu0 0
      %6872 = vmatmul.mubr.bf16.gmra.mxu0 %v6714
      %v6873 = vpop.f32.mrf.mxu0
      %v6874 = vadd.f32 %v6666, %v6873
      %v6875 = vpop.f32.mrf.mxu0
      %v6876 = vpop.f32.mrf.mxu0
      %v6877 = vadd.f32 %v6666, %v6876
      %v6878 = vpop.f32.mrf.mxu0
      %6879 = vdwg.mxu0
      %v6880 = vld [vmem:[%s382] sm:$0xf]
      %v6881 = vld [vmem:[%s382 + $0x4] sm:$0xf]
      %v6882 = vld [vmem:[%s382 + $0x8] sm:$0xf]
      %v6883 = vld [vmem:[%s382 + $0xc] sm:$0xf]
      %v6884 = vld [vmem:[%s382 + $0x10] sm:$0xf]
      %v6885 = vld [vmem:[%s382 + $0x14] sm:$0xf]
      %v6886 = vld [vmem:[%s382 + $0x18] sm:$0xf]
      %v6887 = vld [vmem:[%s382 + $0x1c] sm:$0xf]
      %v6888 = vld [vmem:[%s382 + $0x20] sm:$0xf]
      %v6889 = vld [vmem:[%s382 + $0x24] sm:$0xf]
      %v6890 = vld [vmem:[%s382 + $0x28] sm:$0xf]
      %v6891 = vld [vmem:[%s382 + $0x2c] sm:$0xf]
      %v6892 = vld [vmem:[%s382 + $0x30] sm:$0xf]
      %v6893 = vld [vmem:[%s382 + $0x34] sm:$0xf]
      %v6894 = vld [vmem:[%s382 + $0x38] sm:$0xf]
      %v6895 = vld [vmem:[%s382 + $0x3c] sm:$0xf]
      %v6896 = vld [vmem:[%s382 + $0x40] sm:$0xf]
      %v6897 = vld [vmem:[%s382 + $0x44] sm:$0xf]
      %v6898 = vld [vmem:[%s382 + $0x48] sm:$0xf]
      %v6899 = vld [vmem:[%s382 + $0x4c] sm:$0xf]
      %v6900 = vld [vmem:[%s382 + $0x50] sm:$0xf]
      %v6901 = vld [vmem:[%s382 + $0x54] sm:$0xf]
      %v6902 = vld [vmem:[%s382 + $0x58] sm:$0xf]
      %v6903 = vld [vmem:[%s382 + $0x5c] sm:$0xf]
      %v6904 = vld [vmem:[%s382 + $0x60] sm:$0xf]
      %v6905 = vld [vmem:[%s382 + $0x64] sm:$0xf]
      %v6906 = vld [vmem:[%s382 + $0x68] sm:$0xf]
      %v6907 = vld [vmem:[%s382 + $0x6c] sm:$0xf]
      %v6908 = vld [vmem:[%s382 + $0x70] sm:$0xf]
      %v6909 = vld [vmem:[%s382 + $0x74] sm:$0xf]
      %v6910 = vld [vmem:[%s382 + $0x78] sm:$0xf]
      %v6911 = vld [vmem:[%s382 + $0x7c] sm:$0xf]
      %v6912 = vld [vmem:[%s9] sm:$0x3]
      %v6913 = vld [vmem:[%s10] sm:$0x1]
      %v6915 = vlaneseq
      %v6916 = vshrl.u32 %v6915, 7
      %v6917 = vsub.s32 0, %v6916
      %v6918 = vrot.slane %v6913, %v6917
      %v6952 = vunpack.c.l.b16 %v6880
      %v6953 = vunpack.c.l.b16 %v6881
      %v6954 = vunpack.c.l.b16 %v6882
      %v6955 = vunpack.c.l.b16 %v6883
      %v6956 = vunpack.c.l.b16 %v6884
      %v6957 = vunpack.c.l.b16 %v6885
      %v6958 = vunpack.c.l.b16 %v6886
      %v6959 = vunpack.c.l.b16 %v6887
      %v6960 = vunpack.c.l.b16 %v6888
      %v6961 = vunpack.c.l.b16 %v6889
      %v6962 = vunpack.c.l.b16 %v6890
      %v6963 = vunpack.c.l.b16 %v6891
      %v6964 = vunpack.c.l.b16 %v6892
      %v6965 = vunpack.c.l.b16 %v6893
      %v6966 = vunpack.c.l.b16 %v6894
      %v6967 = vunpack.c.l.b16 %v6895
      %v6968 = vunpack.c.l.b16 %v6896
      %v6969 = vunpack.c.l.b16 %v6897
      %v6970 = vunpack.c.l.b16 %v6898
      %v6971 = vunpack.c.l.b16 %v6899
      %v6972 = vunpack.c.l.b16 %v6900
      %v6973 = vunpack.c.l.b16 %v6901
      %v6974 = vunpack.c.l.b16 %v6902
      %v6975 = vunpack.c.l.b16 %v6903
      %v6976 = vunpack.c.l.b16 %v6904
      %v6977 = vunpack.c.l.b16 %v6905
      %v6978 = vunpack.c.l.b16 %v6906
      %v6979 = vunpack.c.l.b16 %v6907
      %v6980 = vunpack.c.l.b16 %v6908
      %v6981 = vunpack.c.l.b16 %v6909
      %v6982 = vunpack.c.l.b16 %v6910
      %v6983 = vunpack.c.l.b16 %v6911
      %v6984 = vpack.c.b16 %v6953, %v6952
      %v6985 = vpack.c.b16 %v6955, %v6954
      %v6986 = vpack.c.b16 %v6957, %v6956
      %v6987 = vpack.c.b16 %v6959, %v6958
      %v6988 = vpack.c.b16 %v6961, %v6960
      %v6989 = vpack.c.b16 %v6963, %v6962
      %v6990 = vpack.c.b16 %v6965, %v6964
      %v6991 = vpack.c.b16 %v6967, %v6966
      %v6992 = vpack.c.b16 %v6969, %v6968
      %v6993 = vpack.c.b16 %v6971, %v6970
      %v6994 = vpack.c.b16 %v6973, %v6972
      %v6995 = vpack.c.b16 %v6975, %v6974
      %v6996 = vpack.c.b16 %v6977, %v6976
      %v6997 = vpack.c.b16 %v6979, %v6978
      %v6998 = vpack.c.b16 %v6981, %v6980
      %v6999 = vpack.c.b16 %v6983, %v6982
      %v7001 = vsel %vm511, %v6984, 0
      %v7004 = vsel %vm511, %v6985, 0
      %v7007 = vsel %vm511, %v6986, 0
      %v7010 = vsel %vm511, %v6987, 0
      %v7013 = vsel %vm511, %v6988, 0
      %v7016 = vsel %vm511, %v6989, 0
      %v7019 = vsel %vm511, %v6990, 0
      %v7022 = vsel %vm511, %v6991, 0
      %v7025 = vsel %vm511, %v6992, 0
      %v7028 = vsel %vm511, %v6993, 0
      %v7031 = vsel %vm511, %v6994, 0
      %v7034 = vsel %vm511, %v6995, 0
      %v7037 = vsel %vm511, %v6996, 0
      %v7040 = vsel %vm511, %v6997, 0
      %v7043 = vsel %vm511, %v6998, 0
      %v7046 = vsel %vm511, %v6999, 0
      %v7049 = vsel %vm560, %v6912, 0
      %7051 = vmatprep.subr.bf16.mxu0 0
      %7052 = vmatpush1.bf16.msra.mxu0 0
      %7053 = vmatprep.subr.bf16.mxu0 0
      %7054 = vmatpush1.bf16.msra.mxu0 0
      %7055 = vmatprep.subr.bf16.mxu0 0
      %7056 = vmatpush1.bf16.msra.mxu0 0
      %7057 = vmatprep.subr.bf16.mxu0 0
      %7058 = vmatpush1.bf16.msra.mxu0 0
      %7059 = vmatprep.subr.bf16.mxu0 0
      %7060 = vmatpush1.bf16.msra.mxu0 0
      %7061 = vmatprep.subr.bf16.mxu0 0
      %7062 = vmatpush1.bf16.msra.mxu0 0
      %7063 = vmatprep.subr.bf16.mxu0 0
      %7064 = vmatpush1.bf16.msra.mxu0 0
      %7065 = vmatprep.subr.bf16.mxu0 0
      %7066 = vmatpush1.bf16.msra.mxu0 %v7049
      %7067 = vmatprep.subr.bf16.mxu0 0
      %7068 = vmatpush2.bf16.msra.mxu0 0
      %7069 = vmatprep.subr.bf16.mxu0 0
      %7070 = vmatpush2.bf16.msra.mxu0 0
      %7071 = vmatprep.subr.bf16.mxu0 0
      %7072 = vmatpush2.bf16.msra.mxu0 0
      %7073 = vmatprep.subr.bf16.mxu0 0
      %7074 = vmatpush2.bf16.msra.mxu0 0
      %7075 = vmatprep.subr.bf16.mxu0 0
      %7076 = vmatpush2.bf16.msra.mxu0 0
      %7077 = vmatprep.subr.bf16.mxu0 0
      %7078 = vmatpush2.bf16.msra.mxu0 0
      %7079 = vmatprep.subr.bf16.mxu0 0
      %7080 = vmatpush2.bf16.msra.mxu0 0
      %7081 = vmatprep.subr.bf16.mxu0 0
      %7082 = vmatpush2.bf16.msra.mxu0 0
      %7083 = vmatprep.mubr.bf16.mxu0 0
      %7084 = vmatmul.mubr.bf16.gmra.mxu0 %v7001
      %v7085 = vpop.f32.mrf.mxu0
      %v7086 = vadd.f32 %v6918, %v7085
      %v7087 = vpop.f32.mrf.mxu0
      %v7088 = vpop.f32.mrf.mxu0
      %v7089 = vadd.f32 %v6918, %v7088
      %v7090 = vpop.f32.mrf.mxu0
      %7091 = vmatprep.mubr.bf16.mxu0 0
      %7092 = vmatmul.mubr.bf16.gmra.mxu0 %v7004
      %v7093 = vpop.f32.mrf.mxu0
      %v7094 = vadd.f32 %v6918, %v7093
      %v7095 = vpop.f32.mrf.mxu0
      %v7096 = vpop.f32.mrf.mxu0
      %v7097 = vadd.f32 %v6918, %v7096
      %v7098 = vpop.f32.mrf.mxu0
      %7099 = vmatprep.mubr.bf16.mxu0 0
      %7100 = vmatmul.mubr.bf16.gmra.mxu0 %v7007
      %v7101 = vpop.f32.mrf.mxu0
      %v7102 = vadd.f32 %v6918, %v7101
      %v7103 = vpop.f32.mrf.mxu0
      %v7104 = vpop.f32.mrf.mxu0
      %v7105 = vadd.f32 %v6918, %v7104
      %v7106 = vpop.f32.mrf.mxu0
      %7107 = vmatprep.mubr.bf16.mxu0 0
      %7108 = vmatmul.mubr.bf16.gmra.mxu0 %v7010
      %v7109 = vpop.f32.mrf.mxu0
      %v7110 = vadd.f32 %v6918, %v7109
      %v7111 = vpop.f32.mrf.mxu0
      %v7112 = vpop.f32.mrf.mxu0
      %v7113 = vadd.f32 %v6918, %v7112
      %v7114 = vpop.f32.mrf.mxu0
      %7115 = vmatprep.mubr.bf16.mxu0 0
      %7116 = vmatmul.mubr.bf16.gmra.mxu0 %v7013
      %v7117 = vpop.f32.mrf.mxu0
      %v7118 = vadd.f32 %v6918, %v7117
      %v7119 = vpop.f32.mrf.mxu0
      %v7120 = vpop.f32.mrf.mxu0
      %v7121 = vadd.f32 %v6918, %v7120
      %v7122 = vpop.f32.mrf.mxu0
      %7123 = vmatprep.mubr.bf16.mxu0 0
      %7124 = vmatmul.mubr.bf16.gmra.mxu0 %v7016
      %v7125 = vpop.f32.mrf.mxu0
      %v7126 = vadd.f32 %v6918, %v7125
      %v7127 = vpop.f32.mrf.mxu0
      %v7128 = vpop.f32.mrf.mxu0
      %v7129 = vadd.f32 %v6918, %v7128
      %v7130 = vpop.f32.mrf.mxu0
      %7131 = vmatprep.mubr.bf16.mxu0 0
      %7132 = vmatmul.mubr.bf16.gmra.mxu0 %v7019
      %v7133 = vpop.f32.mrf.mxu0
      %v7134 = vadd.f32 %v6918, %v7133
      %v7135 = vpop.f32.mrf.mxu0
      %v7136 = vpop.f32.mrf.mxu0
      %v7137 = vadd.f32 %v6918, %v7136
      %v7138 = vpop.f32.mrf.mxu0
      %7139 = vmatprep.mubr.bf16.mxu0 0
      %7140 = vmatmul.mubr.bf16.gmra.mxu0 %v7022
      %v7141 = vpop.f32.mrf.mxu0
      %v7142 = vadd.f32 %v6918, %v7141
      %v7143 = vpop.f32.mrf.mxu0
      %v7144 = vpop.f32.mrf.mxu0
      %v7145 = vadd.f32 %v6918, %v7144
      %v7146 = vpop.f32.mrf.mxu0
      %7147 = vmatprep.mubr.bf16.mxu0 0
      %7148 = vmatmul.mubr.bf16.gmra.mxu0 %v7025
      %v7149 = vpop.f32.mrf.mxu0
      %v7150 = vadd.f32 %v6918, %v7149
      %v7151 = vpop.f32.mrf.mxu0
      %v7152 = vpop.f32.mrf.mxu0
      %v7153 = vadd.f32 %v6918, %v7152
      %v7154 = vpop.f32.mrf.mxu0
      %7155 = vmatprep.mubr.bf16.mxu0 0
      %7156 = vmatmul.mubr.bf16.gmra.mxu0 %v7028
      %v7157 = vpop.f32.mrf.mxu0
      %v7158 = vadd.f32 %v6918, %v7157
      %v7159 = vpop.f32.mrf.mxu0
      %v7160 = vpop.f32.mrf.mxu0
      %v7161 = vadd.f32 %v6918, %v7160
      %v7162 = vpop.f32.mrf.mxu0
      %7163 = vmatprep.mubr.bf16.mxu0 0
      %7164 = vmatmul.mubr.bf16.gmra.mxu0 %v7031
      %v7165 = vpop.f32.mrf.mxu0
      %v7166 = vadd.f32 %v6918, %v7165
      %v7167 = vpop.f32.mrf.mxu0
      %v7168 = vpop.f32.mrf.mxu0
      %v7169 = vadd.f32 %v6918, %v7168
      %v7170 = vpop.f32.mrf.mxu0
      %7171 = vmatprep.mubr.bf16.mxu0 0
      %7172 = vmatmul.mubr.bf16.gmra.mxu0 %v7034
      %v7173 = vpop.f32.mrf.mxu0
      %v7174 = vadd.f32 %v6918, %v7173
      %v7175 = vpop.f32.mrf.mxu0
      %v7176 = vpop.f32.mrf.mxu0
      %v7177 = vadd.f32 %v6918, %v7176
      %v7178 = vpop.f32.mrf.mxu0
      %7179 = vmatprep.mubr.bf16.mxu0 0
      %7180 = vmatmul.mubr.bf16.gmra.mxu0 %v7037
      %v7181 = vpop.f32.mrf.mxu0
      %v7182 = vadd.f32 %v6918, %v7181
      %v7183 = vpop.f32.mrf.mxu0
      %v7184 = vpop.f32.mrf.mxu0
      %v7185 = vadd.f32 %v6918, %v7184
      %v7186 = vpop.f32.mrf.mxu0
      %7187 = vmatprep.mubr.bf16.mxu0 0
      %7188 = vmatmul.mubr.bf16.gmra.mxu0 %v7040
      %v7189 = vpop.f32.mrf.mxu0
      %v7190 = vadd.f32 %v6918, %v7189
      %v7191 = vpop.f32.mrf.mxu0
      %v7192 = vpop.f32.mrf.mxu0
      %v7193 = vadd.f32 %v6918, %v7192
      %v7194 = vpop.f32.mrf.mxu0
      %7195 = vmatprep.mubr.bf16.mxu0 0
      %7196 = vmatmul.mubr.bf16.gmra.mxu0 %v7043
      %v7197 = vpop.f32.mrf.mxu0
      %v7198 = vadd.f32 %v6918, %v7197
      %v7199 = vpop.f32.mrf.mxu0
      %v7200 = vpop.f32.mrf.mxu0
      %v7201 = vadd.f32 %v6918, %v7200
      %v7202 = vpop.f32.mrf.mxu0
      %7203 = vmatprep.mubr.bf16.mxu0 0
      %7204 = vmatmul.mubr.bf16.gmra.mxu0 %v7046
      %v7205 = vpop.f32.mrf.mxu0
      %v7206 = vadd.f32 %v6918, %v7205
      %v7207 = vpop.f32.mrf.mxu0
      %v7208 = vpop.f32.mrf.mxu0
      %v7209 = vadd.f32 %v6918, %v7208
      %v7210 = vpop.f32.mrf.mxu0
      %7211 = vdwg.mxu0
      %v7212 = vadd.f32 %v6754, %v7086
      %v7213 = vadd.f32 %v6757, %v7089
      %v7214 = vadd.f32 %v6762, %v7094
      %v7215 = vadd.f32 %v6765, %v7097
      %v7216 = vadd.f32 %v6770, %v7102
      %v7217 = vadd.f32 %v6773, %v7105
      %v7218 = vadd.f32 %v6778, %v7110
      %v7219 = vadd.f32 %v6781, %v7113
      %v7220 = vadd.f32 %v6786, %v7118
      %v7221 = vadd.f32 %v6789, %v7121
      %v7222 = vadd.f32 %v6794, %v7126
      %v7223 = vadd.f32 %v6797, %v7129
      %v7224 = vadd.f32 %v6802, %v7134
      %v7225 = vadd.f32 %v6805, %v7137
      %v7226 = vadd.f32 %v6810, %v7142
      %v7227 = vadd.f32 %v6813, %v7145
      %v7228 = vadd.f32 %v6818, %v7150
      %v7229 = vadd.f32 %v6821, %v7153
      %v7230 = vadd.f32 %v6826, %v7158
      %v7231 = vadd.f32 %v6829, %v7161
      %v7232 = vadd.f32 %v6834, %v7166
      %v7233 = vadd.f32 %v6837, %v7169
      %v7234 = vadd.f32 %v6842, %v7174
      %v7235 = vadd.f32 %v6845, %v7177
      %v7236 = vadd.f32 %v6850, %v7182
      %v7237 = vadd.f32 %v6853, %v7185
      %v7238 = vadd.f32 %v6858, %v7190
      %v7239 = vadd.f32 %v6861, %v7193
      %v7240 = vadd.f32 %v6866, %v7198
      %v7241 = vadd.f32 %v6869, %v7201
      %v7242 = vadd.f32 %v6874, %v7206
      %v7243 = vadd.f32 %v6877, %v7209
      %v7244 = vmax.f32 %v7212, 0.0
      %v7245 = vmax.f32 %v7213, 0.0
      %v7246 = vmax.f32 %v7214, 0.0
      %v7247 = vmax.f32 %v7215, 0.0
      %v7248 = vmax.f32 %v7216, 0.0
      %v7249 = vmax.f32 %v7217, 0.0
      %v7250 = vmax.f32 %v7218, 0.0
      %v7251 = vmax.f32 %v7219, 0.0
      %v7252 = vmax.f32 %v7220, 0.0
      %v7253 = vmax.f32 %v7221, 0.0
      %v7254 = vmax.f32 %v7222, 0.0
      %v7255 = vmax.f32 %v7223, 0.0
      %v7256 = vmax.f32 %v7224, 0.0
      %v7257 = vmax.f32 %v7225, 0.0
      %v7258 = vmax.f32 %v7226, 0.0
      %v7259 = vmax.f32 %v7227, 0.0
      %v7260 = vmax.f32 %v7228, 0.0
      %v7261 = vmax.f32 %v7229, 0.0
      %v7262 = vmax.f32 %v7230, 0.0
      %v7263 = vmax.f32 %v7231, 0.0
      %v7264 = vmax.f32 %v7232, 0.0
      %v7265 = vmax.f32 %v7233, 0.0
      %v7266 = vmax.f32 %v7234, 0.0
      %v7267 = vmax.f32 %v7235, 0.0
      %v7268 = vmax.f32 %v7236, 0.0
      %v7269 = vmax.f32 %v7237, 0.0
      %v7270 = vmax.f32 %v7238, 0.0
      %v7271 = vmax.f32 %v7239, 0.0
      %v7272 = vmax.f32 %v7240, 0.0
      %v7273 = vmax.f32 %v7241, 0.0
      %v7274 = vmax.f32 %v7242, 0.0
      %v7275 = vmax.f32 %v7243, 0.0
      %v7276 = vpack.c.bf16 %v7245, %v7244
      %v7277 = vpack.c.bf16 %v7247, %v7246
      %v7278 = vpack.c.bf16 %v7249, %v7248
      %v7279 = vpack.c.bf16 %v7251, %v7250
      %v7280 = vpack.c.bf16 %v7253, %v7252
      %v7281 = vpack.c.bf16 %v7255, %v7254
      %v7282 = vpack.c.bf16 %v7257, %v7256
      %v7283 = vpack.c.bf16 %v7259, %v7258
      %v7284 = vpack.c.bf16 %v7261, %v7260
      %v7285 = vpack.c.bf16 %v7263, %v7262
      %v7286 = vpack.c.bf16 %v7265, %v7264
      %v7287 = vpack.c.bf16 %v7267, %v7266
      %v7288 = vpack.c.bf16 %v7269, %v7268
      %v7289 = vpack.c.bf16 %v7271, %v7270
      %v7290 = vpack.c.bf16 %v7273, %v7272
      %v7291 = vpack.c.bf16 %v7275, %v7274
      %v7308 = vunpack.c.l.b16 %v7276
      %v7309 = vunpack.c.h.b16 %v7276
      %v7310 = vunpack.c.l.b16 %v7277
      %v7311 = vunpack.c.h.b16 %v7277
      %v7312 = vunpack.c.l.b16 %v7278
      %v7313 = vunpack.c.h.b16 %v7278
      %v7314 = vunpack.c.l.b16 %v7279
      %v7315 = vunpack.c.h.b16 %v7279
      %v7316 = vunpack.c.l.b16 %v7280
      %v7317 = vunpack.c.h.b16 %v7280
      %v7318 = vunpack.c.l.b16 %v7281
      %v7319 = vunpack.c.h.b16 %v7281
      %v7320 = vunpack.c.l.b16 %v7282
      %v7321 = vunpack.c.h.b16 %v7282
      %v7322 = vunpack.c.l.b16 %v7283
      %v7323 = vunpack.c.h.b16 %v7283
      %v7324 = vunpack.c.l.b16 %v7284
      %v7325 = vunpack.c.h.b16 %v7284
      %v7326 = vunpack.c.l.b16 %v7285
      %v7327 = vunpack.c.h.b16 %v7285
      %v7328 = vunpack.c.l.b16 %v7286
      %v7329 = vunpack.c.h.b16 %v7286
      %v7330 = vunpack.c.l.b16 %v7287
      %v7331 = vunpack.c.h.b16 %v7287
      %v7332 = vunpack.c.l.b16 %v7288
      %v7333 = vunpack.c.h.b16 %v7288
      %v7334 = vunpack.c.l.b16 %v7289
      %v7335 = vunpack.c.h.b16 %v7289
      %v7336 = vunpack.c.l.b16 %v7290
      %v7337 = vunpack.c.h.b16 %v7290
      %v7338 = vunpack.c.l.b16 %v7291
      %v7339 = vunpack.c.h.b16 %v7291
      %v7340 = vpack.c.b16 %v7308, %v7308
      %v7341 = vpack.c.b16 %v7309, %v7309
      %v7342 = vpack.c.b16 %v7310, %v7310
      %v7343 = vpack.c.b16 %v7311, %v7311
      %v7344 = vpack.c.b16 %v7312, %v7312
      %v7345 = vpack.c.b16 %v7313, %v7313
      %v7346 = vpack.c.b16 %v7314, %v7314
      %v7347 = vpack.c.b16 %v7315, %v7315
      %v7348 = vpack.c.b16 %v7316, %v7316
      %v7349 = vpack.c.b16 %v7317, %v7317
      %v7350 = vpack.c.b16 %v7318, %v7318
      %v7351 = vpack.c.b16 %v7319, %v7319
      %v7352 = vpack.c.b16 %v7320, %v7320
      %v7353 = vpack.c.b16 %v7321, %v7321
      %v7354 = vpack.c.b16 %v7322, %v7322
      %v7355 = vpack.c.b16 %v7323, %v7323
      %v7356 = vpack.c.b16 %v7324, %v7324
      %v7357 = vpack.c.b16 %v7325, %v7325
      %v7358 = vpack.c.b16 %v7326, %v7326
      %v7359 = vpack.c.b16 %v7327, %v7327
      %v7360 = vpack.c.b16 %v7328, %v7328
      %v7361 = vpack.c.b16 %v7329, %v7329
      %v7362 = vpack.c.b16 %v7330, %v7330
      %v7363 = vpack.c.b16 %v7331, %v7331
      %v7364 = vpack.c.b16 %v7332, %v7332
      %v7365 = vpack.c.b16 %v7333, %v7333
      %v7366 = vpack.c.b16 %v7334, %v7334
      %v7367 = vpack.c.b16 %v7335, %v7335
      %v7368 = vpack.c.b16 %v7336, %v7336
      %v7369 = vpack.c.b16 %v7337, %v7337
      %v7370 = vpack.c.b16 %v7338, %v7338
      %v7371 = vpack.c.b16 %v7339, %v7339
      %vm7404 = vcmask 125952
      %7405 = vst.msk [vmem:[%s388] sm:$0xf] %vm7404, %v7340
      %7406 = vst.msk [vmem:[%s388 + $0x4] sm:$0xf] %vm7404, %v7341
      %7407 = vst.msk [vmem:[%s388 + $0x8] sm:$0xf] %vm7404, %v7342
      %7408 = vst.msk [vmem:[%s388 + $0xc] sm:$0xf] %vm7404, %v7343
      %7409 = vst.msk [vmem:[%s388 + $0x10] sm:$0xf] %vm7404, %v7344
      %7410 = vst.msk [vmem:[%s388 + $0x14] sm:$0xf] %vm7404, %v7345
      %7411 = vst.msk [vmem:[%s388 + $0x18] sm:$0xf] %vm7404, %v7346
      %7412 = vst.msk [vmem:[%s388 + $0x1c] sm:$0xf] %vm7404, %v7347
      %7413 = vst.msk [vmem:[%s388 + $0x20] sm:$0xf] %vm7404, %v7348
      %7414 = vst.msk [vmem:[%s388 + $0x24] sm:$0xf] %vm7404, %v7349
      %7415 = vst.msk [vmem:[%s388 + $0x28] sm:$0xf] %vm7404, %v7350
      %7416 = vst.msk [vmem:[%s388 + $0x2c] sm:$0xf] %vm7404, %v7351
      %7417 = vst.msk [vmem:[%s388 + $0x30] sm:$0xf] %vm7404, %v7352
      %7418 = vst.msk [vmem:[%s388 + $0x34] sm:$0xf] %vm7404, %v7353
      %7419 = vst.msk [vmem:[%s388 + $0x38] sm:$0xf] %vm7404, %v7354
      %7420 = vst.msk [vmem:[%s388 + $0x3c] sm:$0xf] %vm7404, %v7355
      %7421 = vst.msk [vmem:[%s388 + $0x40] sm:$0xf] %vm7404, %v7356
      %7422 = vst.msk [vmem:[%s388 + $0x44] sm:$0xf] %vm7404, %v7357
      %7423 = vst.msk [vmem:[%s388 + $0x48] sm:$0xf] %vm7404, %v7358
      %7424 = vst.msk [vmem:[%s388 + $0x4c] sm:$0xf] %vm7404, %v7359
      %7425 = vst.msk [vmem:[%s388 + $0x50] sm:$0xf] %vm7404, %v7360
      %7426 = vst.msk [vmem:[%s388 + $0x54] sm:$0xf] %vm7404, %v7361
      %7427 = vst.msk [vmem:[%s388 + $0x58] sm:$0xf] %vm7404, %v7362
      %7428 = vst.msk [vmem:[%s388 + $0x5c] sm:$0xf] %vm7404, %v7363
      %7429 = vst.msk [vmem:[%s388 + $0x60] sm:$0xf] %vm7404, %v7364
      %7430 = vst.msk [vmem:[%s388 + $0x64] sm:$0xf] %vm7404, %v7365
      %7431 = vst.msk [vmem:[%s388 + $0x68] sm:$0xf] %vm7404, %v7366
      %7432 = vst.msk [vmem:[%s388 + $0x6c] sm:$0xf] %vm7404, %v7367
      %7433 = vst.msk [vmem:[%s388 + $0x70] sm:$0xf] %vm7404, %v7368
      %7434 = vst.msk [vmem:[%s388 + $0x74] sm:$0xf] %vm7404, %v7369
      %7435 = vst.msk [vmem:[%s388 + $0x78] sm:$0xf] %vm7404, %v7370
      %7436 = vst.msk [vmem:[%s388 + $0x7c] sm:$0xf] %vm7404, %v7371
      %s7437 = smul.u32 32, %s22
      %p7438 = scmp.lt.s32.totalorder %s7437, 63
      %s7439 = scalar_select %p7438, %s7437, 63
      %s7440 = smul.addr %s7439, 4
      %s7441 = scalar_lea.vmem %s11, %s7440
      // Predicated region
      $region65: #{tpu_custom_call.1} parent=63 // pred_check
        %p7442 = pneg %p276
      $region66: #{tpu_custom_call.1} parent=63 // pred_check_branch
        %7444 = sbr.rel (%p7442) target = $region68
      $region67: #{tpu_custom_call.1} parent=63 // pred_region
        %s7445 = smul.u32 32, %s22
      $region68: #{tpu_custom_call.1} parent=63 // pred_fallthru
        _
    $region64: #{tpu_custom_call.1} parent=5 // pred_fallthru
      _
    %p7446 = scmp.le.s32.totalorder 2, %s17
    // Predicated region
    $region69: #{tpu_custom_call.1} parent=5 // pred_check
      %p7447 = pneg %p7446
    $region70: #{tpu_custom_call.1} parent=5 // pred_check_branch
      %7449 = sbr.rel (%p7447) target = $region72
    $region71: #{tpu_custom_call.1} parent=5 // pred_region
      %s7450 = ssub.s32 %s17, 2
      // Predicated region
      $region73: #{tpu_custom_call.1} parent=71 // pred_check
        %p7451 = pneg %p282
      $region74: #{tpu_custom_call.1} parent=71 // pred_check_branch
        %7453 = sbr.rel (%p7451) target = $region76
      $region75: #{tpu_custom_call.1} parent=71 // pred_region
        %s7454 = smul.u32 32, %s23
        %p7455 = scmp.lt.s32.totalorder %s7454, 63
        %s7456 = scalar_select %p7455, %s7454, 63
        %s7457 = smul.addr %s7456, 4
        %s7458 = scalar_lea.vmem %s11, %s7457
      $region76: #{tpu_custom_call.1} parent=71 // pred_fallthru
        _
    $region72: #{tpu_custom_call.1} parent=5 // pred_fallthru
      _
  $region6: #{tpu_custom_call.1} parent=0 // loop_footer
    %s21 = sadd.s32 1, %s17
  $region7: #{tpu_custom_call.1} parent=0 // loop_footer_branch
    %16 = sbr.rel target = $region3
  $region8: #{tpu_custom_call.1} parent=0 // loop_exit
    _

// kernel: tpu_custom_call.1
$region0: #{tpu_custom_call.1}
  #allocation0 [shape = 'u32[]', space=smem, size = 0x4, offset = 0x4, fixed_abs, tag = 'smem constant byte address 0x4 - core index']
  #allocation1 [shape = 'u32[144,128]{1,0:T(1,128)}', space=vmem, size = 0x12000, scoped, tag = 'internal scratch']
  #allocation2 [shape = 'f32[320,4]{1,0:T(8,128)}', space=vmem, size = 0x28000, scoped, tag = 'scratch operand']
  %s0 = inlined_call_operand.vmem [shape: bf16[512,4], index: 0, kind: input, shape index: {}]
  %s1 = inlined_call_operand.vmem [shape: bf16[4,4], index: 1, kind: input, shape index: {}]
  %s2 = inlined_call_operand.vmem [shape: f32[1,4], index: 2, kind: input, shape index: {}]
  %s3 = inlined_call_operand.vmem [shape: bf16[9,4,4], index: 3, kind: input, shape index: {}]
  %s4 = inlined_call_operand.vmem [shape: f32[1,4], index: 4, kind: input, shape index: {}]
  %s5 = inlined_call_operand.vmem [shape: bf16[4,16], index: 5, kind: input, shape index: {}]
  %s6 = inlined_call_operand.vmem [shape: f32[1,16], index: 6, kind: input, shape index: {}]
  %s7 = inlined_call_operand.vmem [shape: bf16[256,1], index: 7, kind: input, shape index: {}]
  %s8 = inlined_call_operand.vmem [shape: bf16[256,1], index: 8, kind: input, shape index: {}]
  %s9 = inlined_call_operand.vmem [shape: bf16[4,16], index: 9, kind: input, shape index: {}]
  %s10 = inlined_call_operand.vmem [shape: f32[1,16], index: 10, kind: input, shape index: {}]
  %s11 = inlined_call_operand.vmem [shape: bf16[512,16], index: 11, kind: output, shape index: {}]
  %s12 = sld [smem:[#allocation0]]
  $region77: #{tpu_custom_call.1} parent=0
    _
  %s14 = ssub.s32 1, %s12
  %s15 = scalar_select 0, %s14, %s12
  loop: start=0, step=1, limit=4
  $region2: #{tpu_custom_call.1} parent=0 // loop_pre_header
    _
  $region3: #{tpu_custom_call.1} parent=0 // loop_header
    %s17 = sphi 0, %s21
    %p18 = scmp.ge.s32.totalorder %s17, 4
    %s27 = sphi 0, %s29
    %s30 = sphi 0, %s27
    %s31 = sphi 0, %s30
    %s47 = sphi 0, %s31
    %s51 = sphi 0, %s51
    %s53 = sphi 0, %s51
    %s54 = sphi 0, %s53
    %s68 = sphi 0, %s54
    %s72 = sphi 0, %s72
    %s74 = sphi 0, %s72
    %s75 = sphi 0, %s74
    %s89 = sphi 0, %s75
    %s93 = sphi 0, %s93
    %s95 = sphi 0, %s93
    %s96 = sphi 0, %s95
    %s110 = sphi 0, %s96
    %s114 = sphi 0, %s114
    %s116 = sphi 0, %s114
    %s117 = sphi 0, %s116
    %s131 = sphi 0, %s117
    %s135 = sphi 0, %s135
    %s137 = sphi 0, %s135
    %s138 = sphi 0, %s137
    %s152 = sphi 0, %s138
    %s156 = sphi 0, %s156
    %s158 = sphi 0, %s156
    %s159 = sphi 0, %s158
    %s173 = sphi 0, %s159
    %s177 = sphi 0, %s177
    %s179 = sphi 0, %s177
    %s180 = sphi 0, %s179
    %s194 = sphi 0, %s180
    %s198 = sphi 0, %s198
    %s200 = sphi 0, %s198
    %s201 = sphi 0, %s200
    %s215 = sphi 0, %s201
    %s219 = sphi 0, %s219
    %s221 = sphi 0, %s219
    %s222 = sphi 0, %s221
    %s236 = sphi 0, %s222
    %s240 = sphi 0, %s240
    %s242 = sphi 0, %s240
    %s243 = sphi 0, %s242
    %s257 = sphi 0, %s243
    %s263 = sphi 0, %s265
    %s266 = sphi 0, %s263
    %s267 = sphi 0, %s266
    %s283 = sphi 0, %s267
  $region4: #{tpu_custom_call.1} parent=0 // loop_header_branch
    %20 = sbr.rel (%p18) target = $region8
  $region5: #{tpu_custom_call.1} parent=0 // loop_body
    %s22 = ssub.s32 %s17, 1
    %s23 = ssub.s32 %s17, 2
    %s24 = sadd.s32 %s17, 1
    %s25 = ssub.s32 %s17, %s24
    %p26 = scmp.eq.s32.totalorder %s25, 0
    %s28 = sadd.s32 %s27, 1
    %s29 = scalar_select %p26, %s27, %s28
    %p32 = pneg %p26
    %p33 = scmp.eq.s32.totalorder %s17, 1
    %p34 = por %p32, %p33
    %p35 = scmp.ne.s32.totalorder %s27, %s30
    %p36 = scmp.eq.s32.totalorder %s17, 0
    %p37 = por %p35, %p36
    %p38 = scmp.ne.s32.totalorder %s27, %s30
    %p39 = scmp.eq.s32.totalorder %s22, 1
    %p40 = por %p38, %p39
    %p41 = scmp.ne.s32.totalorder %s30, %s31
    %p42 = scmp.eq.s32.totalorder %s22, 0
    %p43 = por %p41, %p42
    %p44 = scmp.ne.s32.totalorder %s30, %s31
    %p45 = scmp.eq.s32.totalorder %s23, 1
    %p46 = por %p44, %p45
    %p48 = scmp.ne.s32.totalorder %s31, %s47
    %p49 = scmp.eq.s32.totalorder %s23, 0
    %p50 = por %p48, %p49
    %s52 = sadd.s32 %s51, 1
    %p55 = scmp.eq.s32.totalorder %s17, 1
    %p56 = scmp.ne.s32.totalorder %s51, %s53
    %p57 = scmp.eq.s32.totalorder %s17, 0
    %p58 = por %p56, %p57
    %p59 = scmp.ne.s32.totalorder %s51, %s53
    %p60 = scmp.eq.s32.totalorder %s22, 1
    %p61 = por %p59, %p60
    %p62 = scmp.ne.s32.totalorder %s53, %s54
    %p63 = scmp.eq.s32.totalorder %s22, 0
    %p64 = por %p62, %p63
    %p65 = scmp.ne.s32.totalorder %s53, %s54
    %p66 = scmp.eq.s32.totalorder %s23, 1
    %p67 = por %p65, %p66
    %p69 = scmp.ne.s32.totalorder %s54, %s68
    %p70 = scmp.eq.s32.totalorder %s23, 0
    %p71 = por %p69, %p70
    %s73 = sadd.s32 %s72, 1
    %p76 = scmp.eq.s32.totalorder %s17, 1
    %p77 = scmp.ne.s32.totalorder %s72, %s74
    %p78 = scmp.eq.s32.totalorder %s17, 0
    %p79 = por %p77, %p78
    %p80 = scmp.ne.s32.totalorder %s72, %s74
    %p81 = scmp.eq.s32.totalorder %s22, 1
    %p82 = por %p80, %p81
    %p83 = scmp.ne.s32.totalorder %s74, %s75
    %p84 = scmp.eq.s32.totalorder %s22, 0
    %p85 = por %p83, %p84
    %p86 = scmp.ne.s32.totalorder %s74, %s75
    %p87 = scmp.eq.s32.totalorder %s23, 1
    %p88 = por %p86, %p87
    %p90 = scmp.ne.s32.totalorder %s75, %s89
    %p91 = scmp.eq.s32.totalorder %s23, 0
    %p92 = por %p90, %p91
    %s94 = sadd.s32 %s93, 1
    %p97 = scmp.eq.s32.totalorder %s17, 1
    %p98 = scmp.ne.s32.totalorder %s93, %s95
    %p99 = scmp.eq.s32.totalorder %s17, 0
    %p100 = por %p98, %p99
    %p101 = scmp.ne.s32.totalorder %s93, %s95
    %p102 = scmp.eq.s32.totalorder %s22, 1
    %p103 = por %p101, %p102
    %p104 = scmp.ne.s32.totalorder %s95, %s96
    %p105 = scmp.eq.s32.totalorder %s22, 0
    %p106 = por %p104, %p105
    %p107 = scmp.ne.s32.totalorder %s95, %s96
    %p108 = scmp.eq.s32.totalorder %s23, 1
    %p109 = por %p107, %p108
    %p111 = scmp.ne.s32.totalorder %s96, %s110
    %p112 = scmp.eq.s32.totalorder %s23, 0
    %p113 = por %p111, %p112
    %s115 = sadd.s32 %s114, 1
    %p118 = scmp.eq.s32.totalorder %s17, 1
    %p119 = scmp.ne.s32.totalorder %s114, %s116
    %p120 = scmp.eq.s32.totalorder %s17, 0
    %p121 = por %p119, %p120
    %p122 = scmp.ne.s32.totalorder %s114, %s116
    %p123 = scmp.eq.s32.totalorder %s22, 1
    %p124 = por %p122, %p123
    %p125 = scmp.ne.s32.totalorder %s116, %s117
    %p126 = scmp.eq.s32.totalorder %s22, 0
    %p127 = por %p125, %p126
    %p128 = scmp.ne.s32.totalorder %s116, %s117
    %p129 = scmp.eq.s32.totalorder %s23, 1
    %p130 = por %p128, %p129
    %p132 = scmp.ne.s32.totalorder %s117, %s131
    %p133 = scmp.eq.s32.totalorder %s23, 0
    %p134 = por %p132, %p133
    %s136 = sadd.s32 %s135, 1
    %p139 = scmp.eq.s32.totalorder %s17, 1
    %p140 = scmp.ne.s32.totalorder %s135, %s137
    %p141 = scmp.eq.s32.totalorder %s17, 0
    %p142 = por %p140, %p141
    %p143 = scmp.ne.s32.totalorder %s135, %s137
    %p144 = scmp.eq.s32.totalorder %s22, 1
    %p145 = por %p143, %p144
    %p146 = scmp.ne.s32.totalorder %s137, %s138
    %p147 = scmp.eq.s32.totalorder %s22, 0
    %p148 = por %p146, %p147
    %p149 = scmp.ne.s32.totalorder %s137, %s138
    %p150 = scmp.eq.s32.totalorder %s23, 1
    %p151 = por %p149, %p150
    %p153 = scmp.ne.s32.totalorder %s138, %s152
    %p154 = scmp.eq.s32.totalorder %s23, 0
    %p155 = por %p153, %p154
    %s157 = sadd.s32 %s156, 1
    %p160 = scmp.eq.s32.totalorder %s17, 1
    %p161 = scmp.ne.s32.totalorder %s156, %s158
    %p162 = scmp.eq.s32.totalorder %s17, 0
    %p163 = por %p161, %p162
    %p164 = scmp.ne.s32.totalorder %s156, %s158
    %p165 = scmp.eq.s32.totalorder %s22, 1
    %p166 = por %p164, %p165
    %p167 = scmp.ne.s32.totalorder %s158, %s159
    %p168 = scmp.eq.s32.totalorder %s22, 0
    %p169 = por %p167, %p168
    %p170 = scmp.ne.s32.totalorder %s158, %s159
    %p171 = scmp.eq.s32.totalorder %s23, 1
    %p172 = por %p170, %p171
    %p174 = scmp.ne.s32.totalorder %s159, %s173
    %p175 = scmp.eq.s32.totalorder %s23, 0
    %p176 = por %p174, %p175
    %s178 = sadd.s32 %s177, 1
    %p181 = scmp.eq.s32.totalorder %s17, 1
    %p182 = scmp.ne.s32.totalorder %s177, %s179
    %p183 = scmp.eq.s32.totalorder %s17, 0
    %p184 = por %p182, %p183
    %p185 = scmp.ne.s32.totalorder %s177, %s179
    %p186 = scmp.eq.s32.totalorder %s22, 1
    %p187 = por %p185, %p186
    %p188 = scmp.ne.s32.totalorder %s179, %s180
    %p189 = scmp.eq.s32.totalorder %s22, 0
    %p190 = por %p188, %p189
    %p191 = scmp.ne.s32.totalorder %s179, %s180
    %p192 = scmp.eq.s32.totalorder %s23, 1
    %p193 = por %p191, %p192
    %p195 = scmp.ne.s32.totalorder %s180, %s194
    %p196 = scmp.eq.s32.totalorder %s23, 0
    %p197 = por %p195, %p196
    %s199 = sadd.s32 %s198, 1
    %p202 = scmp.eq.s32.totalorder %s17, 1
    %p203 = scmp.ne.s32.totalorder %s198, %s200
    %p204 = scmp.eq.s32.totalorder %s17, 0
    %p205 = por %p203, %p204
    %p206 = scmp.ne.s32.totalorder %s198, %s200
    %p207 = scmp.eq.s32.totalorder %s22, 1
    %p208 = por %p206, %p207
    %p209 = scmp.ne.s32.totalorder %s200, %s201
    %p210 = scmp.eq.s32.totalorder %s22, 0
    %p211 = por %p209, %p210
    %p212 = scmp.ne.s32.totalorder %s200, %s201
    %p213 = scmp.eq.s32.totalorder %s23, 1
    %p214 = por %p212, %p213
    %p216 = scmp.ne.s32.totalorder %s201, %s215
    %p217 = scmp.eq.s32.totalorder %s23, 0
    %p218 = por %p216, %p217
    %s220 = sadd.s32 %s219, 1
    %p223 = scmp.eq.s32.totalorder %s17, 1
    %p224 = scmp.ne.s32.totalorder %s219, %s221
    %p225 = scmp.eq.s32.totalorder %s17, 0
    %p226 = por %p224, %p225
    %p227 = scmp.ne.s32.totalorder %s219, %s221
    %p228 = scmp.eq.s32.totalorder %s22, 1
    %p229 = por %p227, %p228
    %p230 = scmp.ne.s32.totalorder %s221, %s222
    %p231 = scmp.eq.s32.totalorder %s22, 0
    %p232 = por %p230, %p231
    %p233 = scmp.ne.s32.totalorder %s221, %s222
    %p234 = scmp.eq.s32.totalorder %s23, 1
    %p235 = por %p233, %p234
    %p237 = scmp.ne.s32.totalorder %s222, %s236
    %p238 = scmp.eq.s32.totalorder %s23, 0
    %p239 = por %p237, %p238
    %s241 = sadd.s32 %s240, 1
    %p244 = scmp.eq.s32.totalorder %s17, 1
    %p245 = scmp.ne.s32.totalorder %s240, %s242
    %p246 = scmp.eq.s32.totalorder %s17, 0
    %p247 = por %p245, %p246
    %p248 = scmp.ne.s32.totalorder %s240, %s242
    %p249 = scmp.eq.s32.totalorder %s22, 1
    %p250 = por %p248, %p249
    %p251 = scmp.ne.s32.totalorder %s242, %s243
    %p252 = scmp.eq.s32.totalorder %s22, 0
    %p253 = por %p251, %p252
    %p254 = scmp.ne.s32.totalorder %s242, %s243
    %p255 = scmp.eq.s32.totalorder %s23, 1
    %p256 = por %p254, %p255
    %p258 = scmp.ne.s32.totalorder %s243, %s257
    %p259 = scmp.eq.s32.totalorder %s23, 0
    %p260 = por %p258, %p259
    %s261 = ssub.s32 %s17, %s24
    %p262 = scmp.eq.s32.totalorder %s261, 0
    %s264 = sadd.s32 %s263, 1
    %s265 = scalar_select %p262, %s263, %s264
    %p268 = pneg %p262
    %p269 = scmp.eq.s32.totalorder %s17, 1
    %p270 = por %p268, %p269
    %p271 = scmp.ne.s32.totalorder %s263, %s266
    %p272 = scmp.eq.s32.totalorder %s17, 0
    %p273 = por %p271, %p272
    %p274 = scmp.ne.s32.totalorder %s263, %s266
    %p275 = scmp.eq.s32.totalorder %s22, 1
    %p276 = por %p274, %p275
    %p277 = scmp.ne.s32.totalorder %s266, %s267
    %p278 = scmp.eq.s32.totalorder %s22, 0
    %p279 = por %p277, %p278
    %p280 = scmp.ne.s32.totalorder %s266, %s267
    %p281 = scmp.eq.s32.totalorder %s23, 1
    %p282 = por %p280, %p281
    %p284 = scmp.ne.s32.totalorder %s267, %s283
    %p285 = scmp.eq.s32.totalorder %s23, 0
    %p286 = por %p284, %p285
    %p287 = scmp.le.s32.totalorder 1, %s17
    %p288 = scmp.lt.s32.totalorder %s17, 3
    %p289 = pnand %p287, %p288
    %p290 = pneg %p289
    // Predicated region
    $region9: #{tpu_custom_call.1} parent=5 // pred_check
      _
    $region10: #{tpu_custom_call.1} parent=5 // pred_check_branch
      %292 = sbr.rel (%p289) target = $region12
    $region11: #{tpu_custom_call.1} parent=5 // pred_region
      %s293 = ssub.s32 %s17, 1
      // Predicated region
      $region13: #{tpu_custom_call.1} parent=11 // pred_check
        %p294 = pneg %p64
      $region14: #{tpu_custom_call.1} parent=11 // pred_check_branch
        %296 = sbr.rel (%p294) target = $region16
      $region15: #{tpu_custom_call.1} parent=11 // pred_region
        _
      $region16: #{tpu_custom_call.1} parent=11 // pred_fallthru
        _
      // Predicated region
      $region17: #{tpu_custom_call.1} parent=11 // pred_check
        %p297 = pneg %p85
      $region18: #{tpu_custom_call.1} parent=11 // pred_check_branch
        %299 = sbr.rel (%p297) target = $region20
      $region19: #{tpu_custom_call.1} parent=11 // pred_region
        _
      $region20: #{tpu_custom_call.1} parent=11 // pred_fallthru
        _
      // Predicated region
      $region21: #{tpu_custom_call.1} parent=11 // pred_check
        %p300 = pneg %p106
      $region22: #{tpu_custom_call.1} parent=11 // pred_check_branch
        %302 = sbr.rel (%p300) target = $region24
      $region23: #{tpu_custom_call.1} parent=11 // pred_region
        _
      $region24: #{tpu_custom_call.1} parent=11 // pred_fallthru
        _
      // Predicated region
      $region25: #{tpu_custom_call.1} parent=11 // pred_check
        %p303 = pneg %p127
      $region26: #{tpu_custom_call.1} parent=11 // pred_check_branch
        %305 = sbr.rel (%p303) target = $region28
      $region27: #{tpu_custom_call.1} parent=11 // pred_region
        _
      $region28: #{tpu_custom_call.1} parent=11 // pred_fallthru
        _
      // Predicated region
      $region29: #{tpu_custom_call.1} parent=11 // pred_check
        %p306 = pneg %p148
      $region30: #{tpu_custom_call.1} parent=11 // pred_check_branch
        %308 = sbr.rel (%p306) target = $region32
      $region31: #{tpu_custom_call.1} parent=11 // pred_region
        _
      $region32: #{tpu_custom_call.1} parent=11 // pred_fallthru
        _
      // Predicated region
      $region33: #{tpu_custom_call.1} parent=11 // pred_check
        %p309 = pneg %p169
      $region34: #{tpu_custom_call.1} parent=11 // pred_check_branch
        %311 = sbr.rel (%p309) target = $region36
      $region35: #{tpu_custom_call.1} parent=11 // pred_region
        _
      $region36: #{tpu_custom_call.1} parent=11 // pred_fallthru
        _
      // Predicated region
      $region37: #{tpu_custom_call.1} parent=11 // pred_check
        %p312 = pneg %p190
      $region38: #{tpu_custom_call.1} parent=11 // pred_check_branch
        %314 = sbr.rel (%p312) target = $region40
      $region39: #{tpu_custom_call.1} parent=11 // pred_region
        _
      $region40: #{tpu_custom_call.1} parent=11 // pred_fallthru
        _
      // Predicated region
      $region41: #{tpu_custom_call.1} parent=11 // pred_check
        %p315 = pneg %p211
      $region42: #{tpu_custom_call.1} parent=11 // pred_check_branch
        %317 = sbr.rel (%p315) target = $region44
      $region43: #{tpu_custom_call.1} parent=11 // pred_region
        _
      $region44: #{tpu_custom_call.1} parent=11 // pred_fallthru
        _
      // Predicated region
      $region45: #{tpu_custom_call.1} parent=11 // pred_check
        %p318 = pneg %p232
      $region46: #{tpu_custom_call.1} parent=11 // pred_check_branch
        %320 = sbr.rel (%p318) target = $region48
      $region47: #{tpu_custom_call.1} parent=11 // pred_region
        _
      $region48: #{tpu_custom_call.1} parent=11 // pred_fallthru
        _
      // Predicated region
      $region49: #{tpu_custom_call.1} parent=11 // pred_check
        %p321 = pneg %p253
      $region50: #{tpu_custom_call.1} parent=11 // pred_check_branch
        %323 = sbr.rel (%p321) target = $region52
      $region51: #{tpu_custom_call.1} parent=11 // pred_region
        _
      $region52: #{tpu_custom_call.1} parent=11 // pred_fallthru
        _
    $region12: #{tpu_custom_call.1} parent=5 // pred_fallthru
      _
    %p324 = scmp.lt.s32.totalorder %s17, 2
    // Predicated region
    $region53: #{tpu_custom_call.1} parent=5 // pred_check
      %p325 = pneg %p324
    $region54: #{tpu_custom_call.1} parent=5 // pred_check_branch
      %327 = sbr.rel (%p325) target = $region56
    $region55: #{tpu_custom_call.1} parent=5 // pred_region
      // Predicated region
      $region57: #{tpu_custom_call.1} parent=55 // pred_check
        %p328 = pneg %p37
      $region58: #{tpu_custom_call.1} parent=55 // pred_check_branch
        %330 = sbr.rel (%p328) target = $region60
      $region59: #{tpu_custom_call.1} parent=55 // pred_region
        %s331 = smul.u32 32, %s17
        %p332 = scmp.lt.s32.totalorder %s331, 63
        %s333 = scalar_select %p332, %s331, 63
        %s334 = smul.addr %s333, 4
        %s335 = scalar_lea.vmem %s0, %s334
        %s336 = smul.u32 32, %s17
      $region60: #{tpu_custom_call.1} parent=55 // pred_fallthru
        _
    $region56: #{tpu_custom_call.1} parent=5 // pred_fallthru
      _
    %p337 = scmp.le.s32.totalorder 1, %s17
    %p338 = scmp.lt.s32.totalorder %s17, 3
    %p339 = pnand %p337, %p338
    %p340 = pneg %p339
    // Predicated region
    $region61: #{tpu_custom_call.1} parent=5 // pred_check
      _
    $region62: #{tpu_custom_call.1} parent=5 // pred_check_branch
      %342 = sbr.rel (%p339) target = $region64
    $region63: #{tpu_custom_call.1} parent=5 // pred_region
      %s343 = ssub.s32 %s17, 1
      %s344 = smul.u32 32, %s22
      %p345 = scmp.lt.s32.totalorder %s344, 63
      %s346 = scalar_select %p345, %s344, 63
      %s347 = smul.addr %s346, 4
      %s348 = scalar_lea.vmem %s0, %s347
      %p349 = pneg %p43
      %p350 = pneg %p40
      %p351 = pneg %p64
      %p352 = pneg %p61
      %p353 = pneg %p85
      %p354 = pneg %p82
      %p355 = pneg %p106
      %p356 = pneg %p103
      %p357 = pneg %p127
      %p358 = pneg %p124
      %p359 = pneg %p148
      %p360 = pneg %p145
      %p361 = pneg %p169
      %p362 = pneg %p166
      %p363 = pneg %p190
      %p364 = pneg %p187
      %p365 = pneg %p211
      %p366 = pneg %p208
      %p367 = pneg %p232
      %p368 = pneg %p229
      %p369 = pneg %p253
      %p370 = pneg %p250
      %p371 = pneg %p279
      %p372 = pneg %p276
      %s373 = smul.u32 32, %s22
      %p374 = scmp.lt.s32.totalorder %s373, 63
      %s375 = scalar_select %p374, %s373, 63
      %s376 = smul.addr %s375, 4
      %s377 = scalar_lea.vmem %s11, %s376
      %s378 = smul.u32 32, %s22
      %p379 = scmp.lt.s32.totalorder %s378, 63
      %s380 = scalar_select %p379, %s378, 63
      %s381 = smul.addr %s380, 4
      %s382 = scalar_lea.vmem %s0, %s381
      %s383 = smul.u32 32, %s22
      %s384 = smul.u32 32, %s22
      %p385 = scmp.lt.s32.totalorder %s384, 63
      %s386 = scalar_select %p385, %s384, 63
      %s387 = smul.addr %s386, 4
      %s388 = scalar_lea.vmem %s11, %s387
      %s389 = smul.u32 32, %s22
      %v391 = vld [vmem:[%s382] sm:$0xf]
      %v392 = vld [vmem:[%s382 + $0x4] sm:$0xf]
      %v393 = vld [vmem:[%s382 + $0x8] sm:$0xf]
      %v394 = vld [vmem:[%s382 + $0xc] sm:$0xf]
      %v395 = vld [vmem:[%s382 + $0x10] sm:$0xf]
      %v396 = vld [vmem:[%s382 + $0x14] sm:$0xf]
      %v397 = vld [vmem:[%s382 + $0x18] sm:$0xf]
      %v398 = vld [vmem:[%s382 + $0x1c] sm:$0xf]
      %v399 = vld [vmem:[%s382 + $0x20] sm:$0xf]
      %v400 = vld [vmem:[%s382 + $0x24] sm:$0xf]
      %v401 = vld [vmem:[%s382 + $0x28] sm:$0xf]
      %v402 = vld [vmem:[%s382 + $0x2c] sm:$0xf]
      %v403 = vld [vmem:[%s382 + $0x30] sm:$0xf]
      %v404 = vld [vmem:[%s382 + $0x34] sm:$0xf]
      %v405 = vld [vmem:[%s382 + $0x38] sm:$0xf]
      %v406 = vld [vmem:[%s382 + $0x3c] sm:$0xf]
      %v407 = vld [vmem:[%s382 + $0x40] sm:$0xf]
      %v408 = vld [vmem:[%s382 + $0x44] sm:$0xf]
      %v409 = vld [vmem:[%s382 + $0x48] sm:$0xf]
      %v410 = vld [vmem:[%s382 + $0x4c] sm:$0xf]
      %v411 = vld [vmem:[%s382 + $0x50] sm:$0xf]
      %v412 = vld [vmem:[%s382 + $0x54] sm:$0xf]
      %v413 = vld [vmem:[%s382 + $0x58] sm:$0xf]
      %v414 = vld [vmem:[%s382 + $0x5c] sm:$0xf]
      %v415 = vld [vmem:[%s382 + $0x60] sm:$0xf]
      %v416 = vld [vmem:[%s382 + $0x64] sm:$0xf]
      %v417 = vld [vmem:[%s382 + $0x68] sm:$0xf]
      %v418 = vld [vmem:[%s382 + $0x6c] sm:$0xf]
      %v419 = vld [vmem:[%s382 + $0x70] sm:$0xf]
      %v420 = vld [vmem:[%s382 + $0x74] sm:$0xf]
      %v421 = vld [vmem:[%s382 + $0x78] sm:$0xf]
      %v422 = vld [vmem:[%s382 + $0x7c] sm:$0xf]
      %v423 = vld [vmem:[%s1] sm:$0x3]
      %v424 = vld [vmem:[%s2] sm:$0x1]
      %v426 = vlaneseq
      %v427 = vshrl.u32 %v426, 7
      %v428 = vsub.s32 0, %v427
      %v429 = vrot.slane %v424, %v428
      %v463 = vunpack.c.l.b16 %v391
      %v464 = vunpack.c.l.b16 %v392
      %v465 = vunpack.c.l.b16 %v393
      %v466 = vunpack.c.l.b16 %v394
      %v467 = vunpack.c.l.b16 %v395
      %v468 = vunpack.c.l.b16 %v396
      %v469 = vunpack.c.l.b16 %v397
      %v470 = vunpack.c.l.b16 %v398
      %v471 = vunpack.c.l.b16 %v399
      %v472 = vunpack.c.l.b16 %v400
      %v473 = vunpack.c.l.b16 %v401
      %v474 = vunpack.c.l.b16 %v402
      %v475 = vunpack.c.l.b16 %v403
      %v476 = vunpack.c.l.b16 %v404
      %v477 = vunpack.c.l.b16 %v405
      %v478 = vunpack.c.l.b16 %v406
      %v479 = vunpack.c.l.b16 %v407
      %v480 = vunpack.c.l.b16 %v408
      %v481 = vunpack.c.l.b16 %v409
      %v482 = vunpack.c.l.b16 %v410
      %v483 = vunpack.c.l.b16 %v411
      %v484 = vunpack.c.l.b16 %v412
      %v485 = vunpack.c.l.b16 %v413
      %v486 = vunpack.c.l.b16 %v414
      %v487 = vunpack.c.l.b16 %v415
      %v488 = vunpack.c.l.b16 %v416
      %v489 = vunpack.c.l.b16 %v417
      %v490 = vunpack.c.l.b16 %v418
      %v491 = vunpack.c.l.b16 %v419
      %v492 = vunpack.c.l.b16 %v420
      %v493 = vunpack.c.l.b16 %v421
      %v494 = vunpack.c.l.b16 %v422
      %v495 = vpack.c.b16 %v464, %v463
      %v496 = vpack.c.b16 %v466, %v465
      %v497 = vpack.c.b16 %v468, %v467
      %v498 = vpack.c.b16 %v470, %v469
      %v499 = vpack.c.b16 %v472, %v471
      %v500 = vpack.c.b16 %v474, %v473
      %v501 = vpack.c.b16 %v476, %v475
      %v502 = vpack.c.b16 %v478, %v477
      %v503 = vpack.c.b16 %v480, %v479
      %v504 = vpack.c.b16 %v482, %v481
      %v505 = vpack.c.b16 %v484, %v483
      %v506 = vpack.c.b16 %v486, %v485
      %v507 = vpack.c.b16 %v488, %v487
      %v508 = vpack.c.b16 %v490, %v489
      %v509 = vpack.c.b16 %v492, %v491
      %v510 = vpack.c.b16 %v494, %v493
      %vm511 = vcmask 31744
      %v513 = vsel %vm511, %v495, 0
      %v516 = vsel %vm511, %v496, 0
      %v519 = vsel %vm511, %v497, 0
      %v522 = vsel %vm511, %v498, 0
      %v525 = vsel %vm511, %v499, 0
      %v528 = vsel %vm511, %v500, 0
      %v531 = vsel %vm511, %v501, 0
      %v534 = vsel %vm511, %v502, 0
      %v537 = vsel %vm511, %v503, 0
      %v540 = vsel %vm511, %v504, 0
      %v543 = vsel %vm511, %v505, 0
      %v546 = vsel %vm511, %v506, 0
      %v549 = vsel %vm511, %v507, 0
      %v552 = vsel %vm511, %v508, 0
      %v555 = vsel %vm511, %v509, 0
      %v558 = vsel %vm511, %v510, 0
      %vm560 = vcmask 1041408
      %v562 = vsel %vm560, %v423, 0
      %564 = vmatprep.subr.bf16.mxu0 0
      %565 = vmatpush1.bf16.msra.mxu0 0
      %566 = vmatprep.subr.bf16.mxu0 0
      %567 = vmatpush1.bf16.msra.mxu0 0
      %568 = vmatprep.subr.bf16.mxu0 0
      %569 = vmatpush1.bf16.msra.mxu0 0
      %570 = vmatprep.subr.bf16.mxu0 0
      %571 = vmatpush1.bf16.msra.mxu0 0
      %572 = vmatprep.subr.bf16.mxu0 0
      %573 = vmatpush1.bf16.msra.mxu0 0
      %574 = vmatprep.subr.bf16.mxu0 0
      %575 = vmatpush1.bf16.msra.mxu0 0
      %576 = vmatprep.subr.bf16.mxu0 0
      %577 = vmatpush1.bf16.msra.mxu0 0
      %578 = vmatprep.subr.bf16.mxu0 0
      %579 = vmatpush1.bf16.msra.mxu0 %v562
      %580 = vmatprep.subr.bf16.mxu0 0
      %581 = vmatpush2.bf16.msra.mxu0 0
      %582 = vmatprep.subr.bf16.mxu0 0
      %583 = vmatpush2.bf16.msra.mxu0 0
      %584 = vmatprep.subr.bf16.mxu0 0
      %585 = vmatpush2.bf16.msra.mxu0 0
      %586 = vmatprep.subr.bf16.mxu0 0
      %587 = vmatpush2.bf16.msra.mxu0 0
      %588 = vmatprep.subr.bf16.mxu0 0
      %589 = vmatpush2.bf16.msra.mxu0 0
      %590 = vmatprep.subr.bf16.mxu0 0
      %591 = vmatpush2.bf16.msra.mxu0 0
      %592 = vmatprep.subr.bf16.mxu0 0
      %593 = vmatpush2.bf16.msra.mxu0 0
      %594 = vmatprep.subr.bf16.mxu0 0
      %595 = vmatpush2.bf16.msra.mxu0 0
      %596 = vmatprep.mubr.bf16.mxu0 0
      %597 = vmatmul.mubr.bf16.gmra.mxu0 %v513
      %v598 = vpop.f32.mrf.mxu0
      %v599 = vadd.f32 %v429, %v598
      %v600 = vpop.f32.mrf.mxu0
      %v601 = vpop.f32.mrf.mxu0
      %v602 = vadd.f32 %v429, %v601
      %v603 = vpop.f32.mrf.mxu0
      %604 = vmatprep.mubr.bf16.mxu0 0
      %605 = vmatmul.mubr.bf16.gmra.mxu0 %v516
      %v606 = vpop.f32.mrf.mxu0
      %v607 = vadd.f32 %v429, %v606
      %v608 = vpop.f32.mrf.mxu0
      %v609 = vpop.f32.mrf.mxu0
      %v610 = vadd.f32 %v429, %v609
      %v611 = vpop.f32.mrf.mxu0
      %612 = vmatprep.mubr.bf16.mxu0 0
      %613 = vmatmul.mubr.bf16.gmra.mxu0 %v519
      %v614 = vpop.f32.mrf.mxu0
      %v615 = vadd.f32 %v429, %v614
      %v616 = vpop.f32.mrf.mxu0
      %v617 = vpop.f32.mrf.mxu0
      %v618 = vadd.f32 %v429, %v617
      %v619 = vpop.f32.mrf.mxu0
      %620 = vmatprep.mubr.bf16.mxu0 0
      %621 = vmatmul.mubr.bf16.gmra.mxu0 %v522
      %v622 = vpop.f32.mrf.mxu0
      %v623 = vadd.f32 %v429, %v622
      %v624 = vpop.f32.mrf.mxu0
      %v625 = vpop.f32.mrf.mxu0
      %v626 = vadd.f32 %v429, %v625
      %v627 = vpop.f32.mrf.mxu0
      %628 = vmatprep.mubr.bf16.mxu0 0
      %629 = vmatmul.mubr.bf16.gmra.mxu0 %v525
      %v630 = vpop.f32.mrf.mxu0
      %v631 = vadd.f32 %v429, %v630
      %v632 = vpop.f32.mrf.mxu0
      %v633 = vpop.f32.mrf.mxu0
      %v634 = vadd.f32 %v429, %v633
      %v635 = vpop.f32.mrf.mxu0
      %636 = vmatprep.mubr.bf16.mxu0 0
      %637 = vmatmul.mubr.bf16.gmra.mxu0 %v528
      %v638 = vpop.f32.mrf.mxu0
      %v639 = vadd.f32 %v429, %v638
      %v640 = vpop.f32.mrf.mxu0
      %v641 = vpop.f32.mrf.mxu0
      %v642 = vadd.f32 %v429, %v641
      %v643 = vpop.f32.mrf.mxu0
      %644 = vmatprep.mubr.bf16.mxu0 0
      %645 = vmatmul.mubr.bf16.gmra.mxu0 %v531
      %v646 = vpop.f32.mrf.mxu0
      %v647 = vadd.f32 %v429, %v646
      %v648 = vpop.f32.mrf.mxu0
      %v649 = vpop.f32.mrf.mxu0
      %v650 = vadd.f32 %v429, %v649
      %v651 = vpop.f32.mrf.mxu0
      %652 = vmatprep.mubr.bf16.mxu0 0
      %653 = vmatmul.mubr.bf16.gmra.mxu0 %v534
      %v654 = vpop.f32.mrf.mxu0
      %v655 = vadd.f32 %v429, %v654
      %v656 = vpop.f32.mrf.mxu0
      %v657 = vpop.f32.mrf.mxu0
      %v658 = vadd.f32 %v429, %v657
      %v659 = vpop.f32.mrf.mxu0
      %660 = vmatprep.mubr.bf16.mxu0 0
      %661 = vmatmul.mubr.bf16.gmra.mxu0 %v537
      %v662 = vpop.f32.mrf.mxu0
      %v663 = vadd.f32 %v429, %v662
      %v664 = vpop.f32.mrf.mxu0
      %v665 = vpop.f32.mrf.mxu0
      %v666 = vadd.f32 %v429, %v665
      %v667 = vpop.f32.mrf.mxu0
      %668 = vmatprep.mubr.bf16.mxu0 0
      %669 = vmatmul.mubr.bf16.gmra.mxu0 %v540
      %v670 = vpop.f32.mrf.mxu0
      %v671 = vadd.f32 %v429, %v670
      %v672 = vpop.f32.mrf.mxu0
      %v673 = vpop.f32.mrf.mxu0
      %v674 = vadd.f32 %v429, %v673
      %v675 = vpop.f32.mrf.mxu0
      %676 = vmatprep.mubr.bf16.mxu0 0
      %677 = vmatmul.mubr.bf16.gmra.mxu0 %v543
      %v678 = vpop.f32.mrf.mxu0
      %v679 = vadd.f32 %v429, %v678
      %v680 = vpop.f32.mrf.mxu0
      %v681 = vpop.f32.mrf.mxu0
      %v682 = vadd.f32 %v429, %v681
      %v683 = vpop.f32.mrf.mxu0
      %684 = vmatprep.mubr.bf16.mxu0 0
      %685 = vmatmul.mubr.bf16.gmra.mxu0 %v546
      %v686 = vpop.f32.mrf.mxu0
      %v687 = vadd.f32 %v429, %v686
      %v688 = vpop.f32.mrf.mxu0
      %v689 = vpop.f32.mrf.mxu0
      %v690 = vadd.f32 %v429, %v689
      %v691 = vpop.f32.mrf.mxu0
      %692 = vmatprep.mubr.bf16.mxu0 0
      %693 = vmatmul.mubr.bf16.gmra.mxu0 %v549
      %v694 = vpop.f32.mrf.mxu0
      %v695 = vadd.f32 %v429, %v694
      %v696 = vpop.f32.mrf.mxu0
      %v697 = vpop.f32.mrf.mxu0
      %v698 = vadd.f32 %v429, %v697
      %v699 = vpop.f32.mrf.mxu0
      %700 = vmatprep.mubr.bf16.mxu0 0
      %701 = vmatmul.mubr.bf16.gmra.mxu0 %v552
      %v702 = vpop.f32.mrf.mxu0
      %v703 = vadd.f32 %v429, %v702
      %v704 = vpop.f32.mrf.mxu0
      %v705 = vpop.f32.mrf.mxu0
      %v706 = vadd.f32 %v429, %v705
      %v707 = vpop.f32.mrf.mxu0
      %708 = vmatprep.mubr.bf16.mxu0 0
      %709 = vmatmul.mubr.bf16.gmra.mxu0 %v555
      %v710 = vpop.f32.mrf.mxu0
      %v711 = vadd.f32 %v429, %v710
      %v712 = vpop.f32.mrf.mxu0
      %v713 = vpop.f32.mrf.mxu0
      %v714 = vadd.f32 %v429, %v713
      %v715 = vpop.f32.mrf.mxu0
      %716 = vmatprep.mubr.bf16.mxu0 0
      %717 = vmatmul.mubr.bf16.gmra.mxu0 %v558
      %v718 = vpop.f32.mrf.mxu0
      %v719 = vadd.f32 %v429, %v718
      %v720 = vpop.f32.mrf.mxu0
      %v721 = vpop.f32.mrf.mxu0
      %v722 = vadd.f32 %v429, %v721
      %v723 = vpop.f32.mrf.mxu0
      %724 = vdwg.mxu0
      %v725 = vmax.f32 %v599, 0.0
      %v726 = vmax.f32 %v602, 0.0
      %v727 = vmax.f32 %v607, 0.0
      %v728 = vmax.f32 %v610, 0.0
      %v729 = vmax.f32 %v615, 0.0
      %v730 = vmax.f32 %v618, 0.0
      %v731 = vmax.f32 %v623, 0.0
      %v732 = vmax.f32 %v626, 0.0
      %v733 = vmax.f32 %v631, 0.0
      %v734 = vmax.f32 %v634, 0.0
      %v735 = vmax.f32 %v639, 0.0
      %v736 = vmax.f32 %v642, 0.0
      %v737 = vmax.f32 %v647, 0.0
      %v738 = vmax.f32 %v650, 0.0
      %v739 = vmax.f32 %v655, 0.0
      %v740 = vmax.f32 %v658, 0.0
      %v741 = vmax.f32 %v663, 0.0
      %v742 = vmax.f32 %v666, 0.0
      %v743 = vmax.f32 %v671, 0.0
      %v744 = vmax.f32 %v674, 0.0
      %v745 = vmax.f32 %v679, 0.0
      %v746 = vmax.f32 %v682, 0.0
      %v747 = vmax.f32 %v687, 0.0
      %v748 = vmax.f32 %v690, 0.0
      %v749 = vmax.f32 %v695, 0.0
      %v750 = vmax.f32 %v698, 0.0
      %v751 = vmax.f32 %v703, 0.0
      %v752 = vmax.f32 %v706, 0.0
      %v753 = vmax.f32 %v711, 0.0
      %v754 = vmax.f32 %v714, 0.0
      %v755 = vmax.f32 %v719, 0.0
      %v756 = vmax.f32 %v722, 0.0
      %757 = vst.msk [vmem:[#allocation2 + $0x20] sm:$0xff] %vm511, %v725
      %758 = vst.msk [vmem:[#allocation2 + $0x28] sm:$0xff] %vm511, %v726
      %759 = vst.msk [vmem:[#allocation2 + $0x30] sm:$0xff] %vm511, %v727
      %760 = vst.msk [vmem:[#allocation2 + $0x38] sm:$0xff] %vm511, %v728
      %761 = vst.msk [vmem:[#allocation2 + $0x40] sm:$0xff] %vm511, %v729
      %762 = vst.msk [vmem:[#allocation2 + $0x48] sm:$0xff] %vm511, %v730
      %763 = vst.msk [vmem:[#allocation2 + $0x50] sm:$0xff] %vm511, %v731
      %764 = vst.msk [vmem:[#allocation2 + $0x58] sm:$0xff] %vm511, %v732
      %765 = vst.msk [vmem:[#allocation2 + $0x60] sm:$0xff] %vm511, %v733
      %766 = vst.msk [vmem:[#allocation2 + $0x68] sm:$0xff] %vm511, %v734
      %767 = vst.msk [vmem:[#allocation2 + $0x70] sm:$0xff] %vm511, %v735
      %768 = vst.msk [vmem:[#allocation2 + $0x78] sm:$0xff] %vm511, %v736
      %769 = vst.msk [vmem:[#allocation2 + $0x80] sm:$0xff] %vm511, %v737
      %770 = vst.msk [vmem:[#allocation2 + $0x88] sm:$0xff] %vm511, %v738
      %771 = vst.msk [vmem:[#allocation2 + $0x90] sm:$0xff] %vm511, %v739
      %772 = vst.msk [vmem:[#allocation2 + $0x98] sm:$0xff] %vm511, %v740
      %773 = vst.msk [vmem:[#allocation2 + $0xa0] sm:$0xff] %vm511, %v741
      %774 = vst.msk [vmem:[#allocation2 + $0xa8] sm:$0xff] %vm511, %v742
      %775 = vst.msk [vmem:[#allocation2 + $0xb0] sm:$0xff] %vm511, %v743
      %776 = vst.msk [vmem:[#allocation2 + $0xb8] sm:$0xff] %vm511, %v744
      %777 = vst.msk [vmem:[#allocation2 + $0xc0] sm:$0xff] %vm511, %v745
      %778 = vst.msk [vmem:[#allocation2 + $0xc8] sm:$0xff] %vm511, %v746
      %779 = vst.msk [vmem:[#allocation2 + $0xd0] sm:$0xff] %vm511, %v747
      %780 = vst.msk [vmem:[#allocation2 + $0xd8] sm:$0xff] %vm511, %v748
      %781 = vst.msk [vmem:[#allocation2 + $0xe0] sm:$0xff] %vm511, %v749
      %782 = vst.msk [vmem:[#allocation2 + $0xe8] sm:$0xff] %vm511, %v750
      %783 = vst.msk [vmem:[#allocation2 + $0xf0] sm:$0xff] %vm511, %v751
      %784 = vst.msk [vmem:[#allocation2 + $0xf8] sm:$0xff] %vm511, %v752
      %785 = vst.msk [vmem:[#allocation2 + $0x100] sm:$0xff] %vm511, %v753
      %786 = vst.msk [vmem:[#allocation2 + $0x108] sm:$0xff] %vm511, %v754
      %787 = vst.msk [vmem:[#allocation2 + $0x110] sm:$0xff] %vm511, %v755
      %788 = vst.msk [vmem:[#allocation2 + $0x118] sm:$0xff] %vm511, %v756
      %789 = vst.msk [vmem:[#allocation2] sm:$0xff] %vm511, 0.0
      %790 = vst.msk [vmem:[#allocation2 + $0x8] sm:$0xff] %vm511, 0.0
      %791 = vst.msk [vmem:[#allocation2 + $0x10] sm:$0xff] %vm511, 0.0
      %792 = vst.msk [vmem:[#allocation2 + $0x18] sm:$0xff] %vm511, 0.0
      %793 = vst.msk [vmem:[#allocation2 + $0x120] sm:$0xff] %vm511, 0.0
      %794 = vst.msk [vmem:[#allocation2 + $0x128] sm:$0xff] %vm511, 0.0
      %795 = vst.msk [vmem:[#allocation2 + $0x130] sm:$0xff] %vm511, 0.0
      %796 = vst.msk [vmem:[#allocation2 + $0x138] sm:$0xff] %vm511, 0.0
      %v797 = vld [vmem:[%s7] sm:$0xf]
      %v798 = vld [vmem:[%s7 + $0x4] sm:$0xf]
      %v799 = vld [vmem:[%s7 + $0x8] sm:$0xf]
      %v800 = vld [vmem:[%s7 + $0xc] sm:$0xf]
      %v801 = vld [vmem:[%s7 + $0x10] sm:$0xf]
      %v802 = vld [vmem:[%s7 + $0x14] sm:$0xf]
      %v803 = vld [vmem:[%s7 + $0x18] sm:$0xf]
      %v804 = vld [vmem:[%s7 + $0x1c] sm:$0xf]
      %v805 = vld [vmem:[%s7 + $0x20] sm:$0xf]
      %v806 = vld [vmem:[%s7 + $0x24] sm:$0xf]
      %v807 = vld [vmem:[%s7 + $0x28] sm:$0xf]
      %v808 = vld [vmem:[%s7 + $0x2c] sm:$0xf]
      %v809 = vld [vmem:[%s7 + $0x30] sm:$0xf]
      %v810 = vld [vmem:[%s7 + $0x34] sm:$0xf]
      %v811 = vld [vmem:[%s7 + $0x38] sm:$0xf]
      %v812 = vld [vmem:[%s7 + $0x3c] sm:$0xf]
      %v813 = vld [vmem:[%s7 + $0x40] sm:$0xf]
      %v814 = vld [vmem:[%s7 + $0x44] sm:$0xf]
      %v815 = vld [vmem:[%s7 + $0x48] sm:$0xf]
      %v816 = vld [vmem:[%s7 + $0x4c] sm:$0xf]
      %v817 = vld [vmem:[%s7 + $0x50] sm:$0xf]
      %v818 = vld [vmem:[%s7 + $0x54] sm:$0xf]
      %v819 = vld [vmem:[%s7 + $0x58] sm:$0xf]
      %v820 = vld [vmem:[%s7 + $0x5c] sm:$0xf]
      %v821 = vld [vmem:[%s7 + $0x60] sm:$0xf]
      %v822 = vld [vmem:[%s7 + $0x64] sm:$0xf]
      %v823 = vld [vmem:[%s7 + $0x68] sm:$0xf]
      %v824 = vld [vmem:[%s7 + $0x6c] sm:$0xf]
      %v825 = vld [vmem:[%s7 + $0x70] sm:$0xf]
      %v826 = vld [vmem:[%s7 + $0x74] sm:$0xf]
      %v827 = vld [vmem:[%s7 + $0x78] sm:$0xf]
      %v828 = vld [vmem:[%s7 + $0x7c] sm:$0xf]
      %v829 = vld [vmem:[%s8] sm:$0xf]
      %v830 = vld [vmem:[%s8 + $0x4] sm:$0xf]
      %v831 = vld [vmem:[%s8 + $0x8] sm:$0xf]
      %v832 = vld [vmem:[%s8 + $0xc] sm:$0xf]
      %v833 = vld [vmem:[%s8 + $0x10] sm:$0xf]
      %v834 = vld [vmem:[%s8 + $0x14] sm:$0xf]
      %v835 = vld [vmem:[%s8 + $0x18] sm:$0xf]
      %v836 = vld [vmem:[%s8 + $0x1c] sm:$0xf]
      %v837 = vld [vmem:[%s8 + $0x20] sm:$0xf]
      %v838 = vld [vmem:[%s8 + $0x24] sm:$0xf]
      %v839 = vld [vmem:[%s8 + $0x28] sm:$0xf]
      %v840 = vld [vmem:[%s8 + $0x2c] sm:$0xf]
      %v841 = vld [vmem:[%s8 + $0x30] sm:$0xf]
      %v842 = vld [vmem:[%s8 + $0x34] sm:$0xf]
      %v843 = vld [vmem:[%s8 + $0x38] sm:$0xf]
      %v844 = vld [vmem:[%s8 + $0x3c] sm:$0xf]
      %v845 = vld [vmem:[%s8 + $0x40] sm:$0xf]
      %v846 = vld [vmem:[%s8 + $0x44] sm:$0xf]
      %v847 = vld [vmem:[%s8 + $0x48] sm:$0xf]
      %v848 = vld [vmem:[%s8 + $0x4c] sm:$0xf]
      %v849 = vld [vmem:[%s8 + $0x50] sm:$0xf]
      %v850 = vld [vmem:[%s8 + $0x54] sm:$0xf]
      %v851 = vld [vmem:[%s8 + $0x58] sm:$0xf]
      %v852 = vld [vmem:[%s8 + $0x5c] sm:$0xf]
      %v853 = vld [vmem:[%s8 + $0x60] sm:$0xf]
      %v854 = vld [vmem:[%s8 + $0x64] sm:$0xf]
      %v855 = vld [vmem:[%s8 + $0x68] sm:$0xf]
      %v856 = vld [vmem:[%s8 + $0x6c] sm:$0xf]
      %v857 = vld [vmem:[%s8 + $0x70] sm:$0xf]
      %v858 = vld [vmem:[%s8 + $0x74] sm:$0xf]
      %v859 = vld [vmem:[%s8 + $0x78] sm:$0xf]
      %v860 = vld [vmem:[%s8 + $0x7c] sm:$0xf]
      %v861 = vld [vmem:[#allocation2 + $0xf] sm:$0xff]
      %v862 = vld [vmem:[#allocation2 + $0x17] sm:$0xff]
      %v863 = vld [vmem:[#allocation2 + $0x1f] sm:$0xff]
      %v864 = vld [vmem:[#allocation2 + $0x27] sm:$0xff]
      %v865 = vld [vmem:[#allocation2 + $0x2f] sm:$0xff]
      %v866 = vld [vmem:[#allocation2 + $0x37] sm:$0xff]
      %v867 = vld [vmem:[#allocation2 + $0x3f] sm:$0xff]
      %v868 = vld [vmem:[#allocation2 + $0x47] sm:$0xff]
      %v869 = vld [vmem:[#allocation2 + $0x4f] sm:$0xff]
      %v870 = vld [vmem:[#allocation2 + $0x57] sm:$0xff]
      %v871 = vld [vmem:[#allocation2 + $0x5f] sm:$0xff]
      %v872 = vld [vmem:[#allocation2 + $0x67] sm:$0xff]
      %v873 = vld [vmem:[#allocation2 + $0x6f] sm:$0xff]
      %v874 = vld [vmem:[#allocation2 + $0x77] sm:$0xff]
      %v875 = vld [vmem:[#allocation2 + $0x7f] sm:$0xff]
      %v876 = vld [vmem:[#allocation2 + $0x87] sm:$0xff]
      %v877 = vld [vmem:[#allocation2 + $0x8f] sm:$0xff]
      %v878 = vld [vmem:[#allocation2 + $0x97] sm:$0xff]
      %v879 = vld [vmem:[#allocation2 + $0x9f] sm:$0xff]
      %v880 = vld [vmem:[#allocation2 + $0xa7] sm:$0xff]
      %v881 = vld [vmem:[#allocation2 + $0xaf] sm:$0xff]
      %v882 = vld [vmem:[#allocation2 + $0xb7] sm:$0xff]
      %v883 = vld [vmem:[#allocation2 + $0xbf] sm:$0xff]
      %v884 = vld [vmem:[#allocation2 + $0xc7] sm:$0xff]
      %v885 = vld [vmem:[#allocation2 + $0xcf] sm:$0xff]
      %v886 = vld [vmem:[#allocation2 + $0xd7] sm:$0xff]
      %v887 = vld [vmem:[#allocation2 + $0xdf] sm:$0xff]
      %v888 = vld [vmem:[#allocation2 + $0xe7] sm:$0xff]
      %v889 = vld [vmem:[#allocation2 + $0xef] sm:$0xff]
      %v890 = vld [vmem:[#allocation2 + $0xf7] sm:$0xff]
      %v891 = vld [vmem:[#allocation2 + $0xff] sm:$0xff]
      %v892 = vld [vmem:[#allocation2 + $0x107] sm:$0xff]
      %v893 = vpack.c.bf16 %v862, %v861
      %v894 = vpack.c.bf16 %v864, %v863
      %v895 = vpack.c.bf16 %v866, %v865
      %v896 = vpack.c.bf16 %v868, %v867
      %v897 = vpack.c.bf16 %v870, %v869
      %v898 = vpack.c.bf16 %v872, %v871
      %v899 = vpack.c.bf16 %v874, %v873
      %v900 = vpack.c.bf16 %v876, %v875
      %v901 = vpack.c.bf16 %v878, %v877
      %v902 = vpack.c.bf16 %v880, %v879
      %v903 = vpack.c.bf16 %v882, %v881
      %v904 = vpack.c.bf16 %v884, %v883
      %v905 = vpack.c.bf16 %v886, %v885
      %v906 = vpack.c.bf16 %v888, %v887
      %v907 = vpack.c.bf16 %v890, %v889
      %v908 = vpack.c.bf16 %v892, %v891
      %910 = vset.pattern.permute.xlu0 0
      %911 = vperm.xlu0 %910, %v797
      %v912 = vpop.permute.xlu0 %911
      %v915 = vunpack.c.l.s4 839922192
      %v916 = vunpack.c.0.s8 %v915
      %v917 = vlaneseq
      %v918 = vshrl.u32 %v917, 7
      %v919 = vsub.s32 %v916, %v918
      %v920 = vrot.slane %v912, %v919
      %922 = vset.pattern.permute.xlu0 0
      %923 = vperm.xlu0 %922, %v798
      %v924 = vpop.permute.xlu0 %923
      %v927 = vunpack.c.l.s4 839922192
      %v928 = vunpack.c.0.s8 %v927
      %v929 = vlaneseq
      %v930 = vshrl.u32 %v929, 7
      %v931 = vsub.s32 %v928, %v930
      %v932 = vrot.slane %v924, %v931
      %934 = vset.pattern.permute.xlu0 0
      %935 = vperm.xlu0 %934, %v799
      %v936 = vpop.permute.xlu0 %935
      %v939 = vunpack.c.l.s4 839922192
      %v940 = vunpack.c.0.s8 %v939
      %v941 = vlaneseq
      %v942 = vshrl.u32 %v941, 7
      %v943 = vsub.s32 %v940, %v942
      %v944 = vrot.slane %v936, %v943
      %946 = vset.pattern.permute.xlu0 0
      %947 = vperm.xlu0 %946, %v800
      %v948 = vpop.permute.xlu0 %947
      %v951 = vunpack.c.l.s4 839922192
      %v952 = vunpack.c.0.s8 %v951
      %v953 = vlaneseq
      %v954 = vshrl.u32 %v953, 7
      %v955 = vsub.s32 %v952, %v954
      %v956 = vrot.slane %v948, %v955
      %958 = vset.pattern.permute.xlu0 0
      %959 = vperm.xlu0 %958, %v801
      %v960 = vpop.permute.xlu0 %959
      %v963 = vunpack.c.l.s4 839922192
      %v964 = vunpack.c.0.s8 %v963
      %v965 = vlaneseq
      %v966 = vshrl.u32 %v965, 7
      %v967 = vsub.s32 %v964, %v966
      %v968 = vrot.slane %v960, %v967
      %970 = vset.pattern.permute.xlu0 0
      %971 = vperm.xlu0 %970, %v802
      %v972 = vpop.permute.xlu0 %971
      %v975 = vunpack.c.l.s4 839922192
      %v976 = vunpack.c.0.s8 %v975
      %v977 = vlaneseq
      %v978 = vshrl.u32 %v977, 7
      %v979 = vsub.s32 %v976, %v978
      %v980 = vrot.slane %v972, %v979
      %982 = vset.pattern.permute.xlu0 0
      %983 = vperm.xlu0 %982, %v803
      %v984 = vpop.permute.xlu0 %983
      %v987 = vunpack.c.l.s4 839922192
      %v988 = vunpack.c.0.s8 %v987
      %v989 = vlaneseq
      %v990 = vshrl.u32 %v989, 7
      %v991 = vsub.s32 %v988, %v990
      %v992 = vrot.slane %v984, %v991
      %994 = vset.pattern.permute.xlu0 0
      %995 = vperm.xlu0 %994, %v804
      %v996 = vpop.permute.xlu0 %995
      %v999 = vunpack.c.l.s4 839922192
      %v1000 = vunpack.c.0.s8 %v999
      %v1001 = vlaneseq
      %v1002 = vshrl.u32 %v1001, 7
      %v1003 = vsub.s32 %v1000, %v1002
      %v1004 = vrot.slane %v996, %v1003
      %1006 = vset.pattern.permute.xlu0 0
      %1007 = vperm.xlu0 %1006, %v805
      %v1008 = vpop.permute.xlu0 %1007
      %v1011 = vunpack.c.l.s4 839922192
      %v1012 = vunpack.c.0.s8 %v1011
      %v1013 = vlaneseq
      %v1014 = vshrl.u32 %v1013, 7
      %v1015 = vsub.s32 %v1012, %v1014
      %v1016 = vrot.slane %v1008, %v1015
      %1018 = vset.pattern.permute.xlu0 0
      %1019 = vperm.xlu0 %1018, %v806
      %v1020 = vpop.permute.xlu0 %1019
      %v1023 = vunpack.c.l.s4 839922192
      %v1024 = vunpack.c.0.s8 %v1023
      %v1025 = vlaneseq
      %v1026 = vshrl.u32 %v1025, 7
      %v1027 = vsub.s32 %v1024, %v1026
      %v1028 = vrot.slane %v1020, %v1027
      %1030 = vset.pattern.permute.xlu0 0
      %1031 = vperm.xlu0 %1030, %v807
      %v1032 = vpop.permute.xlu0 %1031
      %v1035 = vunpack.c.l.s4 839922192
      %v1036 = vunpack.c.0.s8 %v1035
      %v1037 = vlaneseq
      %v1038 = vshrl.u32 %v1037, 7
      %v1039 = vsub.s32 %v1036, %v1038
      %v1040 = vrot.slane %v1032, %v1039
      %1042 = vset.pattern.permute.xlu0 0
      %1043 = vperm.xlu0 %1042, %v808
      %v1044 = vpop.permute.xlu0 %1043
      %v1047 = vunpack.c.l.s4 839922192
      %v1048 = vunpack.c.0.s8 %v1047
      %v1049 = vlaneseq
      %v1050 = vshrl.u32 %v1049, 7
      %v1051 = vsub.s32 %v1048, %v1050
      %v1052 = vrot.slane %v1044, %v1051
      %1054 = vset.pattern.permute.xlu0 0
      %1055 = vperm.xlu0 %1054, %v809
      %v1056 = vpop.permute.xlu0 %1055
      %v1059 = vunpack.c.l.s4 839922192
      %v1060 = vunpack.c.0.s8 %v1059
      %v1061 = vlaneseq
      %v1062 = vshrl.u32 %v1061, 7
      %v1063 = vsub.s32 %v1060, %v1062
      %v1064 = vrot.slane %v1056, %v1063
      %1066 = vset.pattern.permute.xlu0 0
      %1067 = vperm.xlu0 %1066, %v810
      %v1068 = vpop.permute.xlu0 %1067
      %v1071 = vunpack.c.l.s4 839922192
      %v1072 = vunpack.c.0.s8 %v1071
      %v1073 = vlaneseq
      %v1074 = vshrl.u32 %v1073, 7
      %v1075 = vsub.s32 %v1072, %v1074
      %v1076 = vrot.slane %v1068, %v1075
      %1078 = vset.pattern.permute.xlu0 0
      %1079 = vperm.xlu0 %1078, %v811
      %v1080 = vpop.permute.xlu0 %1079
      %v1083 = vunpack.c.l.s4 839922192
      %v1084 = vunpack.c.0.s8 %v1083
      %v1085 = vlaneseq
      %v1086 = vshrl.u32 %v1085, 7
      %v1087 = vsub.s32 %v1084, %v1086
      %v1088 = vrot.slane %v1080, %v1087
      %1090 = vset.pattern.permute.xlu0 0
      %1091 = vperm.xlu0 %1090, %v812
      %v1092 = vpop.permute.xlu0 %1091
      %v1095 = vunpack.c.l.s4 839922192
      %v1096 = vunpack.c.0.s8 %v1095
      %v1097 = vlaneseq
      %v1098 = vshrl.u32 %v1097, 7
      %v1099 = vsub.s32 %v1096, %v1098
      %v1100 = vrot.slane %v1092, %v1099
      %1102 = vset.pattern.permute.xlu0 0
      %1103 = vperm.xlu0 %1102, %v813
      %v1104 = vpop.permute.xlu0 %1103
      %v1107 = vunpack.c.l.s4 839922192
      %v1108 = vunpack.c.0.s8 %v1107
      %v1109 = vlaneseq
      %v1110 = vshrl.u32 %v1109, 7
      %v1111 = vsub.s32 %v1108, %v1110
      %v1112 = vrot.slane %v1104, %v1111
      %1114 = vset.pattern.permute.xlu0 0
      %1115 = vperm.xlu0 %1114, %v814
      %v1116 = vpop.permute.xlu0 %1115
      %v1119 = vunpack.c.l.s4 839922192
      %v1120 = vunpack.c.0.s8 %v1119
      %v1121 = vlaneseq
      %v1122 = vshrl.u32 %v1121, 7
      %v1123 = vsub.s32 %v1120, %v1122
      %v1124 = vrot.slane %v1116, %v1123
      %1126 = vset.pattern.permute.xlu0 0
      %1127 = vperm.xlu0 %1126, %v815
      %v1128 = vpop.permute.xlu0 %1127
      %v1131 = vunpack.c.l.s4 839922192
      %v1132 = vunpack.c.0.s8 %v1131
      %v1133 = vlaneseq
      %v1134 = vshrl.u32 %v1133, 7
      %v1135 = vsub.s32 %v1132, %v1134
      %v1136 = vrot.slane %v1128, %v1135
      %1138 = vset.pattern.permute.xlu0 0
      %1139 = vperm.xlu0 %1138, %v816
      %v1140 = vpop.permute.xlu0 %1139
      %v1143 = vunpack.c.l.s4 839922192
      %v1144 = vunpack.c.0.s8 %v1143
      %v1145 = vlaneseq
      %v1146 = vshrl.u32 %v1145, 7
      %v1147 = vsub.s32 %v1144, %v1146
      %v1148 = vrot.slane %v1140, %v1147
      %1150 = vset.pattern.permute.xlu0 0
      %1151 = vperm.xlu0 %1150, %v817
      %v1152 = vpop.permute.xlu0 %1151
      %v1155 = vunpack.c.l.s4 839922192
      %v1156 = vunpack.c.0.s8 %v1155
      %v1157 = vlaneseq
      %v1158 = vshrl.u32 %v1157, 7
      %v1159 = vsub.s32 %v1156, %v1158
      %v1160 = vrot.slane %v1152, %v1159
      %1162 = vset.pattern.permute.xlu0 0
      %1163 = vperm.xlu0 %1162, %v818
      %v1164 = vpop.permute.xlu0 %1163
      %v1167 = vunpack.c.l.s4 839922192
      %v1168 = vunpack.c.0.s8 %v1167
      %v1169 = vlaneseq
      %v1170 = vshrl.u32 %v1169, 7
      %v1171 = vsub.s32 %v1168, %v1170
      %v1172 = vrot.slane %v1164, %v1171
      %1174 = vset.pattern.permute.xlu0 0
      %1175 = vperm.xlu0 %1174, %v819
      %v1176 = vpop.permute.xlu0 %1175
      %v1179 = vunpack.c.l.s4 839922192
      %v1180 = vunpack.c.0.s8 %v1179
      %v1181 = vlaneseq
      %v1182 = vshrl.u32 %v1181, 7
      %v1183 = vsub.s32 %v1180, %v1182
      %v1184 = vrot.slane %v1176, %v1183
      %1186 = vset.pattern.permute.xlu0 0
      %1187 = vperm.xlu0 %1186, %v820
      %v1188 = vpop.permute.xlu0 %1187
      %v1191 = vunpack.c.l.s4 839922192
      %v1192 = vunpack.c.0.s8 %v1191
      %v1193 = vlaneseq
      %v1194 = vshrl.u32 %v1193, 7
      %v1195 = vsub.s32 %v1192, %v1194
      %v1196 = vrot.slane %v1188, %v1195
      %1198 = vset.pattern.permute.xlu0 0
      %1199 = vperm.xlu0 %1198, %v821
      %v1200 = vpop.permute.xlu0 %1199
      %v1203 = vunpack.c.l.s4 839922192
      %v1204 = vunpack.c.0.s8 %v1203
      %v1205 = vlaneseq
      %v1206 = vshrl.u32 %v1205, 7
      %v1207 = vsub.s32 %v1204, %v1206
      %v1208 = vrot.slane %v1200, %v1207
      %1210 = vset.pattern.permute.xlu0 0
      %1211 = vperm.xlu0 %1210, %v822
      %v1212 = vpop.permute.xlu0 %1211
      %v1215 = vunpack.c.l.s4 839922192
      %v1216 = vunpack.c.0.s8 %v1215
      %v1217 = vlaneseq
      %v1218 = vshrl.u32 %v1217, 7
      %v1219 = vsub.s32 %v1216, %v1218
      %v1220 = vrot.slane %v1212, %v1219
      %1222 = vset.pattern.permute.xlu0 0
      %1223 = vperm.xlu0 %1222, %v823
      %v1224 = vpop.permute.xlu0 %1223
      %v1227 = vunpack.c.l.s4 839922192
      %v1228 = vunpack.c.0.s8 %v1227
      %v1229 = vlaneseq
      %v1230 = vshrl.u32 %v1229, 7
      %v1231 = vsub.s32 %v1228, %v1230
      %v1232 = vrot.slane %v1224, %v1231
      %1234 = vset.pattern.permute.xlu0 0
      %1235 = vperm.xlu0 %1234, %v824
      %v1236 = vpop.permute.xlu0 %1235
      %v1239 = vunpack.c.l.s4 839922192
      %v1240 = vunpack.c.0.s8 %v1239
      %v1241 = vlaneseq
      %v1242 = vshrl.u32 %v1241, 7
      %v1243 = vsub.s32 %v1240, %v1242
      %v1244 = vrot.slane %v1236, %v1243
      %1246 = vset.pattern.permute.xlu0 0
      %1247 = vperm.xlu0 %1246, %v825
      %v1248 = vpop.permute.xlu0 %1247
      %v1251 = vunpack.c.l.s4 839922192
      %v1252 = vunpack.c.0.s8 %v1251
      %v1253 = vlaneseq
      %v1254 = vshrl.u32 %v1253, 7
      %v1255 = vsub.s32 %v1252, %v1254
      %v1256 = vrot.slane %v1248, %v1255
      %1258 = vset.pattern.permute.xlu0 0
      %1259 = vperm.xlu0 %1258, %v826
      %v1260 = vpop.permute.xlu0 %1259
      %v1263 = vunpack.c.l.s4 839922192
      %v1264 = vunpack.c.0.s8 %v1263
      %v1265 = vlaneseq
      %v1266 = vshrl.u32 %v1265, 7
      %v1267 = vsub.s32 %v1264, %v1266
      %v1268 = vrot.slane %v1260, %v1267
      %1270 = vset.pattern.permute.xlu0 0
      %1271 = vperm.xlu0 %1270, %v827
      %v1272 = vpop.permute.xlu0 %1271
      %v1275 = vunpack.c.l.s4 839922192
      %v1276 = vunpack.c.0.s8 %v1275
      %v1277 = vlaneseq
      %v1278 = vshrl.u32 %v1277, 7
      %v1279 = vsub.s32 %v1276, %v1278
      %v1280 = vrot.slane %v1272, %v1279
      %1282 = vset.pattern.permute.xlu0 0
      %1283 = vperm.xlu0 %1282, %v828
      %v1284 = vpop.permute.xlu0 %1283
      %v1287 = vunpack.c.l.s4 839922192
      %v1288 = vunpack.c.0.s8 %v1287
      %v1289 = vlaneseq
      %v1290 = vshrl.u32 %v1289, 7
      %v1291 = vsub.s32 %v1288, %v1290
      %v1292 = vrot.slane %v1284, %v1291
      %v1325 = vunpack.c.l.b16 %v920
      %v1326 = vunpack.c.l.b16 %v932
      %v1327 = vunpack.c.l.b16 %v944
      %v1328 = vunpack.c.l.b16 %v956
      %v1329 = vunpack.c.l.b16 %v968
      %v1330 = vunpack.c.l.b16 %v980
      %v1331 = vunpack.c.l.b16 %v992
      %v1332 = vunpack.c.l.b16 %v1004
      %v1333 = vunpack.c.l.b16 %v1016
      %v1334 = vunpack.c.l.b16 %v1028
      %v1335 = vunpack.c.l.b16 %v1040
      %v1336 = vunpack.c.l.b16 %v1052
      %v1337 = vunpack.c.l.b16 %v1064
      %v1338 = vunpack.c.l.b16 %v1076
      %v1339 = vunpack.c.l.b16 %v1088
      %v1340 = vunpack.c.l.b16 %v1100
      %v1341 = vunpack.c.l.b16 %v1112
      %v1342 = vunpack.c.l.b16 %v1124
      %v1343 = vunpack.c.l.b16 %v1136
      %v1344 = vunpack.c.l.b16 %v1148
      %v1345 = vunpack.c.l.b16 %v1160
      %v1346 = vunpack.c.l.b16 %v1172
      %v1347 = vunpack.c.l.b16 %v1184
      %v1348 = vunpack.c.l.b16 %v1196
      %v1349 = vunpack.c.l.b16 %v1208
      %v1350 = vunpack.c.l.b16 %v1220
      %v1351 = vunpack.c.l.b16 %v1232
      %v1352 = vunpack.c.l.b16 %v1244
      %v1353 = vunpack.c.l.b16 %v1256
      %v1354 = vunpack.c.l.b16 %v1268
      %v1355 = vunpack.c.l.b16 %v1280
      %v1356 = vunpack.c.l.b16 %v1292
      %v1357 = vpack.c.b16 %v1326, %v1325
      %v1358 = vpack.c.b16 %v1328, %v1327
      %v1359 = vpack.c.b16 %v1330, %v1329
      %v1360 = vpack.c.b16 %v1332, %v1331
      %v1361 = vpack.c.b16 %v1334, %v1333
      %v1362 = vpack.c.b16 %v1336, %v1335
      %v1363 = vpack.c.b16 %v1338, %v1337
      %v1364 = vpack.c.b16 %v1340, %v1339
      %v1365 = vpack.c.b16 %v1342, %v1341
      %v1366 = vpack.c.b16 %v1344, %v1343
      %v1367 = vpack.c.b16 %v1346, %v1345
      %v1368 = vpack.c.b16 %v1348, %v1347
      %v1369 = vpack.c.b16 %v1350, %v1349
      %v1370 = vpack.c.b16 %v1352, %v1351
      %v1371 = vpack.c.b16 %v1354, %v1353
      %v1372 = vpack.c.b16 %v1356, %v1355
      %v1389 = vmul.bf16 %v893, %v1357
      %v1390 = vmul.bf16 %v894, %v1358
      %v1391 = vmul.bf16 %v895, %v1359
      %v1392 = vmul.bf16 %v896, %v1360
      %v1393 = vmul.bf16 %v897, %v1361
      %v1394 = vmul.bf16 %v898, %v1362
      %v1395 = vmul.bf16 %v899, %v1363
      %v1396 = vmul.bf16 %v900, %v1364
      %v1397 = vmul.bf16 %v901, %v1365
      %v1398 = vmul.bf16 %v902, %v1366
      %v1399 = vmul.bf16 %v903, %v1367
      %v1400 = vmul.bf16 %v904, %v1368
      %v1401 = vmul.bf16 %v905, %v1369
      %v1402 = vmul.bf16 %v906, %v1370
      %v1403 = vmul.bf16 %v907, %v1371
      %v1404 = vmul.bf16 %v908, %v1372
      %v1405 = vld [vmem:[%s3] sm:$0x3]
      %v1406 = vld [vmem:[#allocation2 + $0x10] sm:$0xff]
      %v1407 = vld [vmem:[#allocation2 + $0x18] sm:$0xff]
      %v1408 = vld [vmem:[#allocation2 + $0x20] sm:$0xff]
      %v1409 = vld [vmem:[#allocation2 + $0x28] sm:$0xff]
      %v1410 = vld [vmem:[#allocation2 + $0x30] sm:$0xff]
      %v1411 = vld [vmem:[#allocation2 + $0x38] sm:$0xff]
      %v1412 = vld [vmem:[#allocation2 + $0x40] sm:$0xff]
      %v1413 = vld [vmem:[#allocation2 + $0x48] sm:$0xff]
      %v1414 = vld [vmem:[#allocation2 + $0x50] sm:$0xff]
      %v1415 = vld [vmem:[#allocation2 + $0x58] sm:$0xff]
      %v1416 = vld [vmem:[#allocation2 + $0x60] sm:$0xff]
      %v1417 = vld [vmem:[#allocation2 + $0x68] sm:$0xff]
      %v1418 = vld [vmem:[#allocation2 + $0x70] sm:$0xff]
      %v1419 = vld [vmem:[#allocation2 + $0x78] sm:$0xff]
      %v1420 = vld [vmem:[#allocation2 + $0x80] sm:$0xff]
      %v1421 = vld [vmem:[#allocation2 + $0x88] sm:$0xff]
      %v1422 = vld [vmem:[#allocation2 + $0x90] sm:$0xff]
      %v1423 = vld [vmem:[#allocation2 + $0x98] sm:$0xff]
      %v1424 = vld [vmem:[#allocation2 + $0xa0] sm:$0xff]
      %v1425 = vld [vmem:[#allocation2 + $0xa8] sm:$0xff]
      %v1426 = vld [vmem:[#allocation2 + $0xb0] sm:$0xff]
      %v1427 = vld [vmem:[#allocation2 + $0xb8] sm:$0xff]
      %v1428 = vld [vmem:[#allocation2 + $0xc0] sm:$0xff]
      %v1429 = vld [vmem:[#allocation2 + $0xc8] sm:$0xff]
      %v1430 = vld [vmem:[#allocation2 + $0xd0] sm:$0xff]
      %v1431 = vld [vmem:[#allocation2 + $0xd8] sm:$0xff]
      %v1432 = vld [vmem:[#allocation2 + $0xe0] sm:$0xff]
      %v1433 = vld [vmem:[#allocation2 + $0xe8] sm:$0xff]
      %v1434 = vld [vmem:[#allocation2 + $0xf0] sm:$0xff]
      %v1435 = vld [vmem:[#allocation2 + $0xf8] sm:$0xff]
      %v1436 = vld [vmem:[#allocation2 + $0x100] sm:$0xff]
      %v1437 = vld [vmem:[#allocation2 + $0x108] sm:$0xff]
      %v1438 = vpack.c.bf16 %v1407, %v1406
      %v1439 = vpack.c.bf16 %v1409, %v1408
      %v1440 = vpack.c.bf16 %v1411, %v1410
      %v1441 = vpack.c.bf16 %v1413, %v1412
      %v1442 = vpack.c.bf16 %v1415, %v1414
      %v1443 = vpack.c.bf16 %v1417, %v1416
      %v1444 = vpack.c.bf16 %v1419, %v1418
      %v1445 = vpack.c.bf16 %v1421, %v1420
      %v1446 = vpack.c.bf16 %v1423, %v1422
      %v1447 = vpack.c.bf16 %v1425, %v1424
      %v1448 = vpack.c.bf16 %v1427, %v1426
      %v1449 = vpack.c.bf16 %v1429, %v1428
      %v1450 = vpack.c.bf16 %v1431, %v1430
      %v1451 = vpack.c.bf16 %v1433, %v1432
      %v1452 = vpack.c.bf16 %v1435, %v1434
      %v1453 = vpack.c.bf16 %v1437, %v1436
      %s1454 = scalar_lea.vmem %s3, 2
      %v1455 = vld [vmem:[%s1454] sm:$0x3]
      %v1457 = vsel %vm511, %v1438, 0
      %v1460 = vsel %vm511, %v1439, 0
      %v1463 = vsel %vm511, %v1440, 0
      %v1466 = vsel %vm511, %v1441, 0
      %v1469 = vsel %vm511, %v1442, 0
      %v1472 = vsel %vm511, %v1443, 0
      %v1475 = vsel %vm511, %v1444, 0
      %v1478 = vsel %vm511, %v1445, 0
      %v1481 = vsel %vm511, %v1446, 0
      %v1484 = vsel %vm511, %v1447, 0
      %v1487 = vsel %vm511, %v1448, 0
      %v1490 = vsel %vm511, %v1449, 0
      %v1493 = vsel %vm511, %v1450, 0
      %v1496 = vsel %vm511, %v1451, 0
      %v1499 = vsel %vm511, %v1452, 0
      %v1502 = vsel %vm511, %v1453, 0
      %v1505 = vsel %vm560, %v1455, 0
      %1507 = vmatprep.subr.bf16.mxu0 0
      %1508 = vmatpush1.bf16.msra.mxu0 0
      %1509 = vmatprep.subr.bf16.mxu0 0
      %1510 = vmatpush1.bf16.msra.mxu0 0
      %1511 = vmatprep.subr.bf16.mxu0 0
      %1512 = vmatpush1.bf16.msra.mxu0 0
      %1513 = vmatprep.subr.bf16.mxu0 0
      %1514 = vmatpush1.bf16.msra.mxu0 0
      %1515 = vmatprep.subr.bf16.mxu0 0
      %1516 = vmatpush1.bf16.msra.mxu0 0
      %1517 = vmatprep.subr.bf16.mxu0 0
      %1518 = vmatpush1.bf16.msra.mxu0 0
      %1519 = vmatprep.subr.bf16.mxu0 0
      %1520 = vmatpush1.bf16.msra.mxu0 0
      %1521 = vmatprep.subr.bf16.mxu0 0
      %1522 = vmatpush1.bf16.msra.mxu0 %v1505
      %1523 = vmatprep.subr.bf16.mxu0 0
      %1524 = vmatpush2.bf16.msra.mxu0 0
      %1525 = vmatprep.subr.bf16.mxu0 0
      %1526 = vmatpush2.bf16.msra.mxu0 0
      %1527 = vmatprep.subr.bf16.mxu0 0
      %1528 = vmatpush2.bf16.msra.mxu0 0
      %1529 = vmatprep.subr.bf16.mxu0 0
      %1530 = vmatpush2.bf16.msra.mxu0 0
      %1531 = vmatprep.subr.bf16.mxu0 0
      %1532 = vmatpush2.bf16.msra.mxu0 0
      %1533 = vmatprep.subr.bf16.mxu0 0
      %1534 = vmatpush2.bf16.msra.mxu0 0
      %1535 = vmatprep.subr.bf16.mxu0 0
      %1536 = vmatpush2.bf16.msra.mxu0 0
      %1537 = vmatprep.subr.bf16.mxu0 0
      %1538 = vmatpush2.bf16.msra.mxu0 0
      %1539 = vmatprep.mubr.bf16.mxu0 0
      %1540 = vmatmul.mubr.bf16.gmra.mxu0 %v1457
      %v1541 = vpop.f32.mrf.mxu0
      %v1542 = vadd.f32 0.0, %v1541
      %v1543 = vpop.f32.mrf.mxu0
      %v1544 = vpop.f32.mrf.mxu0
      %v1545 = vadd.f32 0.0, %v1544
      %v1546 = vpop.f32.mrf.mxu0
      %1547 = vmatprep.mubr.bf16.mxu0 0
      %1548 = vmatmul.mubr.bf16.gmra.mxu0 %v1460
      %v1549 = vpop.f32.mrf.mxu0
      %v1550 = vadd.f32 0.0, %v1549
      %v1551 = vpop.f32.mrf.mxu0
      %v1552 = vpop.f32.mrf.mxu0
      %v1553 = vadd.f32 0.0, %v1552
      %v1554 = vpop.f32.mrf.mxu0
      %1555 = vmatprep.mubr.bf16.mxu0 0
      %1556 = vmatmul.mubr.bf16.gmra.mxu0 %v1463
      %v1557 = vpop.f32.mrf.mxu0
      %v1558 = vadd.f32 0.0, %v1557
      %v1559 = vpop.f32.mrf.mxu0
      %v1560 = vpop.f32.mrf.mxu0
      %v1561 = vadd.f32 0.0, %v1560
      %v1562 = vpop.f32.mrf.mxu0
      %1563 = vmatprep.mubr.bf16.mxu0 0
      %1564 = vmatmul.mubr.bf16.gmra.mxu0 %v1466
      %v1565 = vpop.f32.mrf.mxu0
      %v1566 = vadd.f32 0.0, %v1565
      %v1567 = vpop.f32.mrf.mxu0
      %v1568 = vpop.f32.mrf.mxu0
      %v1569 = vadd.f32 0.0, %v1568
      %v1570 = vpop.f32.mrf.mxu0
      %1571 = vmatprep.mubr.bf16.mxu0 0
      %1572 = vmatmul.mubr.bf16.gmra.mxu0 %v1469
      %v1573 = vpop.f32.mrf.mxu0
      %v1574 = vadd.f32 0.0, %v1573
      %v1575 = vpop.f32.mrf.mxu0
      %v1576 = vpop.f32.mrf.mxu0
      %v1577 = vadd.f32 0.0, %v1576
      %v1578 = vpop.f32.mrf.mxu0
      %1579 = vmatprep.mubr.bf16.mxu0 0
      %1580 = vmatmul.mubr.bf16.gmra.mxu0 %v1472
      %v1581 = vpop.f32.mrf.mxu0
      %v1582 = vadd.f32 0.0, %v1581
      %v1583 = vpop.f32.mrf.mxu0
      %v1584 = vpop.f32.mrf.mxu0
      %v1585 = vadd.f32 0.0, %v1584
      %v1586 = vpop.f32.mrf.mxu0
      %1587 = vmatprep.mubr.bf16.mxu0 0
      %1588 = vmatmul.mubr.bf16.gmra.mxu0 %v1475
      %v1589 = vpop.f32.mrf.mxu0
      %v1590 = vadd.f32 0.0, %v1589
      %v1591 = vpop.f32.mrf.mxu0
      %v1592 = vpop.f32.mrf.mxu0
      %v1593 = vadd.f32 0.0, %v1592
      %v1594 = vpop.f32.mrf.mxu0
      %1595 = vmatprep.mubr.bf16.mxu0 0
      %1596 = vmatmul.mubr.bf16.gmra.mxu0 %v1478
      %v1597 = vpop.f32.mrf.mxu0
      %v1598 = vadd.f32 0.0, %v1597
      %v1599 = vpop.f32.mrf.mxu0
      %v1600 = vpop.f32.mrf.mxu0
      %v1601 = vadd.f32 0.0, %v1600
      %v1602 = vpop.f32.mrf.mxu0
      %1603 = vmatprep.mubr.bf16.mxu0 0
      %1604 = vmatmul.mubr.bf16.gmra.mxu0 %v1481
      %v1605 = vpop.f32.mrf.mxu0
      %v1606 = vadd.f32 0.0, %v1605
      %v1607 = vpop.f32.mrf.mxu0
      %v1608 = vpop.f32.mrf.mxu0
      %v1609 = vadd.f32 0.0, %v1608
      %v1610 = vpop.f32.mrf.mxu0
      %1611 = vmatprep.mubr.bf16.mxu0 0
      %1612 = vmatmul.mubr.bf16.gmra.mxu0 %v1484
      %v1613 = vpop.f32.mrf.mxu0
      %v1614 = vadd.f32 0.0, %v1613
      %v1615 = vpop.f32.mrf.mxu0
      %v1616 = vpop.f32.mrf.mxu0
      %v1617 = vadd.f32 0.0, %v1616
      %v1618 = vpop.f32.mrf.mxu0
      %1619 = vmatprep.mubr.bf16.mxu0 0
      %1620 = vmatmul.mubr.bf16.gmra.mxu0 %v1487
      %v1621 = vpop.f32.mrf.mxu0
      %v1622 = vadd.f32 0.0, %v1621
      %v1623 = vpop.f32.mrf.mxu0
      %v1624 = vpop.f32.mrf.mxu0
      %v1625 = vadd.f32 0.0, %v1624
      %v1626 = vpop.f32.mrf.mxu0
      %1627 = vmatprep.mubr.bf16.mxu0 0
      %1628 = vmatmul.mubr.bf16.gmra.mxu0 %v1490
      %v1629 = vpop.f32.mrf.mxu0
      %v1630 = vadd.f32 0.0, %v1629
      %v1631 = vpop.f32.mrf.mxu0
      %v1632 = vpop.f32.mrf.mxu0
      %v1633 = vadd.f32 0.0, %v1632
      %v1634 = vpop.f32.mrf.mxu0
      %1635 = vmatprep.mubr.bf16.mxu0 0
      %1636 = vmatmul.mubr.bf16.gmra.mxu0 %v1493
      %v1637 = vpop.f32.mrf.mxu0
      %v1638 = vadd.f32 0.0, %v1637
      %v1639 = vpop.f32.mrf.mxu0
      %v1640 = vpop.f32.mrf.mxu0
      %v1641 = vadd.f32 0.0, %v1640
      %v1642 = vpop.f32.mrf.mxu0
      %1643 = vmatprep.mubr.bf16.mxu0 0
      %1644 = vmatmul.mubr.bf16.gmra.mxu0 %v1496
      %v1645 = vpop.f32.mrf.mxu0
      %v1646 = vadd.f32 0.0, %v1645
      %v1647 = vpop.f32.mrf.mxu0
      %v1648 = vpop.f32.mrf.mxu0
      %v1649 = vadd.f32 0.0, %v1648
      %v1650 = vpop.f32.mrf.mxu0
      %1651 = vmatprep.mubr.bf16.mxu0 0
      %1652 = vmatmul.mubr.bf16.gmra.mxu0 %v1499
      %v1653 = vpop.f32.mrf.mxu0
      %v1654 = vadd.f32 0.0, %v1653
      %v1655 = vpop.f32.mrf.mxu0
      %v1656 = vpop.f32.mrf.mxu0
      %v1657 = vadd.f32 0.0, %v1656
      %v1658 = vpop.f32.mrf.mxu0
      %1659 = vmatprep.mubr.bf16.mxu0 0
      %1660 = vmatmul.mubr.bf16.gmra.mxu0 %v1502
      %v1661 = vpop.f32.mrf.mxu0
      %v1662 = vadd.f32 0.0, %v1661
      %v1663 = vpop.f32.mrf.mxu0
      %v1664 = vpop.f32.mrf.mxu0
      %v1665 = vadd.f32 0.0, %v1664
      %v1666 = vpop.f32.mrf.mxu0
      %1667 = vdwg.mxu0
      %v1669 = vsel %vm511, %v1389, 0
      %v1672 = vsel %vm511, %v1390, 0
      %v1675 = vsel %vm511, %v1391, 0
      %v1678 = vsel %vm511, %v1392, 0
      %v1681 = vsel %vm511, %v1393, 0
      %v1684 = vsel %vm511, %v1394, 0
      %v1687 = vsel %vm511, %v1395, 0
      %v1690 = vsel %vm511, %v1396, 0
      %v1693 = vsel %vm511, %v1397, 0
      %v1696 = vsel %vm511, %v1398, 0
      %v1699 = vsel %vm511, %v1399, 0
      %v1702 = vsel %vm511, %v1400, 0
      %v1705 = vsel %vm511, %v1401, 0
      %v1708 = vsel %vm511, %v1402, 0
      %v1711 = vsel %vm511, %v1403, 0
      %v1714 = vsel %vm511, %v1404, 0
      %v1717 = vsel %vm560, %v1405, 0
      %1719 = vmatprep.subr.bf16.mxu0 0
      %1720 = vmatpush1.bf16.msra.mxu0 0
      %1721 = vmatprep.subr.bf16.mxu0 0
      %1722 = vmatpush1.bf16.msra.mxu0 0
      %1723 = vmatprep.subr.bf16.mxu0 0
      %1724 = vmatpush1.bf16.msra.mxu0 0
      %1725 = vmatprep.subr.bf16.mxu0 0
      %1726 = vmatpush1.bf16.msra.mxu0 0
      %1727 = vmatprep.subr.bf16.mxu0 0
      %1728 = vmatpush1.bf16.msra.mxu0 0
      %1729 = vmatprep.subr.bf16.mxu0 0
      %1730 = vmatpush1.bf16.msra.mxu0 0
      %1731 = vmatprep.subr.bf16.mxu0 0
      %1732 = vmatpush1.bf16.msra.mxu0 0
      %1733 = vmatprep.subr.bf16.mxu0 0
      %1734 = vmatpush1.bf16.msra.mxu0 %v1717
      %1735 = vmatprep.subr.bf16.mxu0 0
      %1736 = vmatpush2.bf16.msra.mxu0 0
      %1737 = vmatprep.subr.bf16.mxu0 0
      %1738 = vmatpush2.bf16.msra.mxu0 0
      %1739 = vmatprep.subr.bf16.mxu0 0
      %1740 = vmatpush2.bf16.msra.mxu0 0
      %1741 = vmatprep.subr.bf16.mxu0 0
      %1742 = vmatpush2.bf16.msra.mxu0 0
      %1743 = vmatprep.subr.bf16.mxu0 0
      %1744 = vmatpush2.bf16.msra.mxu0 0
      %1745 = vmatprep.subr.bf16.mxu0 0
      %1746 = vmatpush2.bf16.msra.mxu0 0
      %1747 = vmatprep.subr.bf16.mxu0 0
      %1748 = vmatpush2.bf16.msra.mxu0 0
      %1749 = vmatprep.subr.bf16.mxu0 0
      %1750 = vmatpush2.bf16.msra.mxu0 0
      %1751 = vmatprep.mubr.bf16.mxu0 0
      %1752 = vmatmul.mubr.bf16.gmra.mxu0 %v1669
      %v1753 = vpop.f32.mrf.mxu0
      %v1754 = vadd.f32 %v1542, %v1753
      %v1755 = vpop.f32.mrf.mxu0
      %v1756 = vpop.f32.mrf.mxu0
      %v1757 = vadd.f32 %v1545, %v1756
      %v1758 = vpop.f32.mrf.mxu0
      %1759 = vmatprep.mubr.bf16.mxu0 0
      %1760 = vmatmul.mubr.bf16.gmra.mxu0 %v1672
      %v1761 = vpop.f32.mrf.mxu0
      %v1762 = vadd.f32 %v1550, %v1761
      %v1763 = vpop.f32.mrf.mxu0
      %v1764 = vpop.f32.mrf.mxu0
      %v1765 = vadd.f32 %v1553, %v1764
      %v1766 = vpop.f32.mrf.mxu0
      %1767 = vmatprep.mubr.bf16.mxu0 0
      %1768 = vmatmul.mubr.bf16.gmra.mxu0 %v1675
      %v1769 = vpop.f32.mrf.mxu0
      %v1770 = vadd.f32 %v1558, %v1769
      %v1771 = vpop.f32.mrf.mxu0
      %v1772 = vpop.f32.mrf.mxu0
      %v1773 = vadd.f32 %v1561, %v1772
      %v1774 = vpop.f32.mrf.mxu0
      %1775 = vmatprep.mubr.bf16.mxu0 0
      %1776 = vmatmul.mubr.bf16.gmra.mxu0 %v1678
      %v1777 = vpop.f32.mrf.mxu0
      %v1778 = vadd.f32 %v1566, %v1777
      %v1779 = vpop.f32.mrf.mxu0
      %v1780 = vpop.f32.mrf.mxu0
      %v1781 = vadd.f32 %v1569, %v1780
      %v1782 = vpop.f32.mrf.mxu0
      %1783 = vmatprep.mubr.bf16.mxu0 0
      %1784 = vmatmul.mubr.bf16.gmra.mxu0 %v1681
      %v1785 = vpop.f32.mrf.mxu0
      %v1786 = vadd.f32 %v1574, %v1785
      %v1787 = vpop.f32.mrf.mxu0
      %v1788 = vpop.f32.mrf.mxu0
      %v1789 = vadd.f32 %v1577, %v1788
      %v1790 = vpop.f32.mrf.mxu0
      %1791 = vmatprep.mubr.bf16.mxu0 0
      %1792 = vmatmul.mubr.bf16.gmra.mxu0 %v1684
      %v1793 = vpop.f32.mrf.mxu0
      %v1794 = vadd.f32 %v1582, %v1793
      %v1795 = vpop.f32.mrf.mxu0
      %v1796 = vpop.f32.mrf.mxu0
      %v1797 = vadd.f32 %v1585, %v1796
      %v1798 = vpop.f32.mrf.mxu0
      %1799 = vmatprep.mubr.bf16.mxu0 0
      %1800 = vmatmul.mubr.bf16.gmra.mxu0 %v1687
      %v1801 = vpop.f32.mrf.mxu0
      %v1802 = vadd.f32 %v1590, %v1801
      %v1803 = vpop.f32.mrf.mxu0
      %v1804 = vpop.f32.mrf.mxu0
      %v1805 = vadd.f32 %v1593, %v1804
      %v1806 = vpop.f32.mrf.mxu0
      %1807 = vmatprep.mubr.bf16.mxu0 0
      %1808 = vmatmul.mubr.bf16.gmra.mxu0 %v1690
      %v1809 = vpop.f32.mrf.mxu0
      %v1810 = vadd.f32 %v1598, %v1809
      %v1811 = vpop.f32.mrf.mxu0
      %v1812 = vpop.f32.mrf.mxu0
      %v1813 = vadd.f32 %v1601, %v1812
      %v1814 = vpop.f32.mrf.mxu0
      %1815 = vmatprep.mubr.bf16.mxu0 0
      %1816 = vmatmul.mubr.bf16.gmra.mxu0 %v1693
      %v1817 = vpop.f32.mrf.mxu0
      %v1818 = vadd.f32 %v1606, %v1817
      %v1819 = vpop.f32.mrf.mxu0
      %v1820 = vpop.f32.mrf.mxu0
      %v1821 = vadd.f32 %v1609, %v1820
      %v1822 = vpop.f32.mrf.mxu0
      %1823 = vmatprep.mubr.bf16.mxu0 0
      %1824 = vmatmul.mubr.bf16.gmra.mxu0 %v1696
      %v1825 = vpop.f32.mrf.mxu0
      %v1826 = vadd.f32 %v1614, %v1825
      %v1827 = vpop.f32.mrf.mxu0
      %v1828 = vpop.f32.mrf.mxu0
      %v1829 = vadd.f32 %v1617, %v1828
      %v1830 = vpop.f32.mrf.mxu0
      %1831 = vmatprep.mubr.bf16.mxu0 0
      %1832 = vmatmul.mubr.bf16.gmra.mxu0 %v1699
      %v1833 = vpop.f32.mrf.mxu0
      %v1834 = vadd.f32 %v1622, %v1833
      %v1835 = vpop.f32.mrf.mxu0
      %v1836 = vpop.f32.mrf.mxu0
      %v1837 = vadd.f32 %v1625, %v1836
      %v1838 = vpop.f32.mrf.mxu0
      %1839 = vmatprep.mubr.bf16.mxu0 0
      %1840 = vmatmul.mubr.bf16.gmra.mxu0 %v1702
      %v1841 = vpop.f32.mrf.mxu0
      %v1842 = vadd.f32 %v1630, %v1841
      %v1843 = vpop.f32.mrf.mxu0
      %v1844 = vpop.f32.mrf.mxu0
      %v1845 = vadd.f32 %v1633, %v1844
      %v1846 = vpop.f32.mrf.mxu0
      %1847 = vmatprep.mubr.bf16.mxu0 0
      %1848 = vmatmul.mubr.bf16.gmra.mxu0 %v1705
      %v1849 = vpop.f32.mrf.mxu0
      %v1850 = vadd.f32 %v1638, %v1849
      %v1851 = vpop.f32.mrf.mxu0
      %v1852 = vpop.f32.mrf.mxu0
      %v1853 = vadd.f32 %v1641, %v1852
      %v1854 = vpop.f32.mrf.mxu0
      %1855 = vmatprep.mubr.bf16.mxu0 0
      %1856 = vmatmul.mubr.bf16.gmra.mxu0 %v1708
      %v1857 = vpop.f32.mrf.mxu0
      %v1858 = vadd.f32 %v1646, %v1857
      %v1859 = vpop.f32.mrf.mxu0
      %v1860 = vpop.f32.mrf.mxu0
      %v1861 = vadd.f32 %v1649, %v1860
      %v1862 = vpop.f32.mrf.mxu0
      %1863 = vmatprep.mubr.bf16.mxu0 0
      %1864 = vmatmul.mubr.bf16.gmra.mxu0 %v1711
      %v1865 = vpop.f32.mrf.mxu0
      %v1866 = vadd.f32 %v1654, %v1865
      %v1867 = vpop.f32.mrf.mxu0
      %v1868 = vpop.f32.mrf.mxu0
      %v1869 = vadd.f32 %v1657, %v1868
      %v1870 = vpop.f32.mrf.mxu0
      %1871 = vmatprep.mubr.bf16.mxu0 0
      %1872 = vmatmul.mubr.bf16.gmra.mxu0 %v1714
      %v1873 = vpop.f32.mrf.mxu0
      %v1874 = vadd.f32 %v1662, %v1873
      %v1875 = vpop.f32.mrf.mxu0
      %v1876 = vpop.f32.mrf.mxu0
      %v1877 = vadd.f32 %v1665, %v1876
      %v1878 = vpop.f32.mrf.mxu0
      %1879 = vdwg.mxu0
      %v1880 = vld [vmem:[#allocation2 + $0x11] sm:$0xff]
      %v1881 = vld [vmem:[#allocation2 + $0x19] sm:$0xff]
      %v1882 = vld [vmem:[#allocation2 + $0x21] sm:$0xff]
      %v1883 = vld [vmem:[#allocation2 + $0x29] sm:$0xff]
      %v1884 = vld [vmem:[#allocation2 + $0x31] sm:$0xff]
      %v1885 = vld [vmem:[#allocation2 + $0x39] sm:$0xff]
      %v1886 = vld [vmem:[#allocation2 + $0x41] sm:$0xff]
      %v1887 = vld [vmem:[#allocation2 + $0x49] sm:$0xff]
      %v1888 = vld [vmem:[#allocation2 + $0x51] sm:$0xff]
      %v1889 = vld [vmem:[#allocation2 + $0x59] sm:$0xff]
      %v1890 = vld [vmem:[#allocation2 + $0x61] sm:$0xff]
      %v1891 = vld [vmem:[#allocation2 + $0x69] sm:$0xff]
      %v1892 = vld [vmem:[#allocation2 + $0x71] sm:$0xff]
      %v1893 = vld [vmem:[#allocation2 + $0x79] sm:$0xff]
      %v1894 = vld [vmem:[#allocation2 + $0x81] sm:$0xff]
      %v1895 = vld [vmem:[#allocation2 + $0x89] sm:$0xff]
      %v1896 = vld [vmem:[#allocation2 + $0x91] sm:$0xff]
      %v1897 = vld [vmem:[#allocation2 + $0x99] sm:$0xff]
      %v1898 = vld [vmem:[#allocation2 + $0xa1] sm:$0xff]
      %v1899 = vld [vmem:[#allocation2 + $0xa9] sm:$0xff]
      %v1900 = vld [vmem:[#allocation2 + $0xb1] sm:$0xff]
      %v1901 = vld [vmem:[#allocation2 + $0xb9] sm:$0xff]
      %v1902 = vld [vmem:[#allocation2 + $0xc1] sm:$0xff]
      %v1903 = vld [vmem:[#allocation2 + $0xc9] sm:$0xff]
      %v1904 = vld [vmem:[#allocation2 + $0xd1] sm:$0xff]
      %v1905 = vld [vmem:[#allocation2 + $0xd9] sm:$0xff]
      %v1906 = vld [vmem:[#allocation2 + $0xe1] sm:$0xff]
      %v1907 = vld [vmem:[#allocation2 + $0xe9] sm:$0xff]
      %v1908 = vld [vmem:[#allocation2 + $0xf1] sm:$0xff]
      %v1909 = vld [vmem:[#allocation2 + $0xf9] sm:$0xff]
      %v1910 = vld [vmem:[#allocation2 + $0x101] sm:$0xff]
      %v1911 = vld [vmem:[#allocation2 + $0x109] sm:$0xff]
      %v1912 = vpack.c.bf16 %v1881, %v1880
      %v1913 = vpack.c.bf16 %v1883, %v1882
      %v1914 = vpack.c.bf16 %v1885, %v1884
      %v1915 = vpack.c.bf16 %v1887, %v1886
      %v1916 = vpack.c.bf16 %v1889, %v1888
      %v1917 = vpack.c.bf16 %v1891, %v1890
      %v1918 = vpack.c.bf16 %v1893, %v1892
      %v1919 = vpack.c.bf16 %v1895, %v1894
      %v1920 = vpack.c.bf16 %v1897, %v1896
      %v1921 = vpack.c.bf16 %v1899, %v1898
      %v1922 = vpack.c.bf16 %v1901, %v1900
      %v1923 = vpack.c.bf16 %v1903, %v1902
      %v1924 = vpack.c.bf16 %v1905, %v1904
      %v1925 = vpack.c.bf16 %v1907, %v1906
      %v1926 = vpack.c.bf16 %v1909, %v1908
      %v1927 = vpack.c.bf16 %v1911, %v1910
      %1929 = vset.pattern.permute.xlu0 0
      %1930 = vperm.xlu0 %1929, %v829
      %v1931 = vpop.permute.xlu0 %1930
      %v1934 = vunpack.c.l.s4 839922192
      %v1935 = vunpack.c.0.s8 %v1934
      %v1936 = vlaneseq
      %v1937 = vshrl.u32 %v1936, 7
      %v1938 = vsub.s32 %v1935, %v1937
      %v1939 = vrot.slane %v1931, %v1938
      %1941 = vset.pattern.permute.xlu0 0
      %1942 = vperm.xlu0 %1941, %v830
      %v1943 = vpop.permute.xlu0 %1942
      %v1946 = vunpack.c.l.s4 839922192
      %v1947 = vunpack.c.0.s8 %v1946
      %v1948 = vlaneseq
      %v1949 = vshrl.u32 %v1948, 7
      %v1950 = vsub.s32 %v1947, %v1949
      %v1951 = vrot.slane %v1943, %v1950
      %1953 = vset.pattern.permute.xlu0 0
      %1954 = vperm.xlu0 %1953, %v831
      %v1955 = vpop.permute.xlu0 %1954
      %v1958 = vunpack.c.l.s4 839922192
      %v1959 = vunpack.c.0.s8 %v1958
      %v1960 = vlaneseq
      %v1961 = vshrl.u32 %v1960, 7
      %v1962 = vsub.s32 %v1959, %v1961
      %v1963 = vrot.slane %v1955, %v1962
      %1965 = vset.pattern.permute.xlu0 0
      %1966 = vperm.xlu0 %1965, %v832
      %v1967 = vpop.permute.xlu0 %1966
      %v1970 = vunpack.c.l.s4 839922192
      %v1971 = vunpack.c.0.s8 %v1970
      %v1972 = vlaneseq
      %v1973 = vshrl.u32 %v1972, 7
      %v1974 = vsub.s32 %v1971, %v1973
      %v1975 = vrot.slane %v1967, %v1974
      %1977 = vset.pattern.permute.xlu0 0
      %1978 = vperm.xlu0 %1977, %v833
      %v1979 = vpop.permute.xlu0 %1978
      %v1982 = vunpack.c.l.s4 839922192
      %v1983 = vunpack.c.0.s8 %v1982
      %v1984 = vlaneseq
      %v1985 = vshrl.u32 %v1984, 7
      %v1986 = vsub.s32 %v1983, %v1985
      %v1987 = vrot.slane %v1979, %v1986
      %1989 = vset.pattern.permute.xlu0 0
      %1990 = vperm.xlu0 %1989, %v834
      %v1991 = vpop.permute.xlu0 %1990
      %v1994 = vunpack.c.l.s4 839922192
      %v1995 = vunpack.c.0.s8 %v1994
      %v1996 = vlaneseq
      %v1997 = vshrl.u32 %v1996, 7
      %v1998 = vsub.s32 %v1995, %v1997
      %v1999 = vrot.slane %v1991, %v1998
      %2001 = vset.pattern.permute.xlu0 0
      %2002 = vperm.xlu0 %2001, %v835
      %v2003 = vpop.permute.xlu0 %2002
      %v2006 = vunpack.c.l.s4 839922192
      %v2007 = vunpack.c.0.s8 %v2006
      %v2008 = vlaneseq
      %v2009 = vshrl.u32 %v2008, 7
      %v2010 = vsub.s32 %v2007, %v2009
      %v2011 = vrot.slane %v2003, %v2010
      %2013 = vset.pattern.permute.xlu0 0
      %2014 = vperm.xlu0 %2013, %v836
      %v2015 = vpop.permute.xlu0 %2014
      %v2018 = vunpack.c.l.s4 839922192
      %v2019 = vunpack.c.0.s8 %v2018
      %v2020 = vlaneseq
      %v2021 = vshrl.u32 %v2020, 7
      %v2022 = vsub.s32 %v2019, %v2021
      %v2023 = vrot.slane %v2015, %v2022
      %2025 = vset.pattern.permute.xlu0 0
      %2026 = vperm.xlu0 %2025, %v837
      %v2027 = vpop.permute.xlu0 %2026
      %v2030 = vunpack.c.l.s4 839922192
      %v2031 = vunpack.c.0.s8 %v2030
      %v2032 = vlaneseq
      %v2033 = vshrl.u32 %v2032, 7
      %v2034 = vsub.s32 %v2031, %v2033
      %v2035 = vrot.slane %v2027, %v2034
      %2037 = vset.pattern.permute.xlu0 0
      %2038 = vperm.xlu0 %2037, %v838
      %v2039 = vpop.permute.xlu0 %2038
      %v2042 = vunpack.c.l.s4 839922192
      %v2043 = vunpack.c.0.s8 %v2042
      %v2044 = vlaneseq
      %v2045 = vshrl.u32 %v2044, 7
      %v2046 = vsub.s32 %v2043, %v2045
      %v2047 = vrot.slane %v2039, %v2046
      %2049 = vset.pattern.permute.xlu0 0
      %2050 = vperm.xlu0 %2049, %v839
      %v2051 = vpop.permute.xlu0 %2050
      %v2054 = vunpack.c.l.s4 839922192
      %v2055 = vunpack.c.0.s8 %v2054
      %v2056 = vlaneseq
      %v2057 = vshrl.u32 %v2056, 7
      %v2058 = vsub.s32 %v2055, %v2057
      %v2059 = vrot.slane %v2051, %v2058
      %2061 = vset.pattern.permute.xlu0 0
      %2062 = vperm.xlu0 %2061, %v840
      %v2063 = vpop.permute.xlu0 %2062
      %v2066 = vunpack.c.l.s4 839922192
      %v2067 = vunpack.c.0.s8 %v2066
      %v2068 = vlaneseq
      %v2069 = vshrl.u32 %v2068, 7
      %v2070 = vsub.s32 %v2067, %v2069
      %v2071 = vrot.slane %v2063, %v2070
      %2073 = vset.pattern.permute.xlu0 0
      %2074 = vperm.xlu0 %2073, %v841
      %v2075 = vpop.permute.xlu0 %2074
      %v2078 = vunpack.c.l.s4 839922192
      %v2079 = vunpack.c.0.s8 %v2078
      %v2080 = vlaneseq
      %v2081 = vshrl.u32 %v2080, 7
      %v2082 = vsub.s32 %v2079, %v2081
      %v2083 = vrot.slane %v2075, %v2082
      %2085 = vset.pattern.permute.xlu0 0
      %2086 = vperm.xlu0 %2085, %v842
      %v2087 = vpop.permute.xlu0 %2086
      %v2090 = vunpack.c.l.s4 839922192
      %v2091 = vunpack.c.0.s8 %v2090
      %v2092 = vlaneseq
      %v2093 = vshrl.u32 %v2092, 7
      %v2094 = vsub.s32 %v2091, %v2093
      %v2095 = vrot.slane %v2087, %v2094
      %2097 = vset.pattern.permute.xlu0 0
      %2098 = vperm.xlu0 %2097, %v843
      %v2099 = vpop.permute.xlu0 %2098
      %v2102 = vunpack.c.l.s4 839922192
      %v2103 = vunpack.c.0.s8 %v2102
      %v2104 = vlaneseq
      %v2105 = vshrl.u32 %v2104, 7
      %v2106 = vsub.s32 %v2103, %v2105
      %v2107 = vrot.slane %v2099, %v2106
      %2109 = vset.pattern.permute.xlu0 0
      %2110 = vperm.xlu0 %2109, %v844
      %v2111 = vpop.permute.xlu0 %2110
      %v2114 = vunpack.c.l.s4 839922192
      %v2115 = vunpack.c.0.s8 %v2114
      %v2116 = vlaneseq
      %v2117 = vshrl.u32 %v2116, 7
      %v2118 = vsub.s32 %v2115, %v2117
      %v2119 = vrot.slane %v2111, %v2118
      %2121 = vset.pattern.permute.xlu0 0
      %2122 = vperm.xlu0 %2121, %v845
      %v2123 = vpop.permute.xlu0 %2122
      %v2126 = vunpack.c.l.s4 839922192
      %v2127 = vunpack.c.0.s8 %v2126
      %v2128 = vlaneseq
      %v2129 = vshrl.u32 %v2128, 7
      %v2130 = vsub.s32 %v2127, %v2129
      %v2131 = vrot.slane %v2123, %v2130
      %2133 = vset.pattern.permute.xlu0 0
      %2134 = vperm.xlu0 %2133, %v846
      %v2135 = vpop.permute.xlu0 %2134
      %v2138 = vunpack.c.l.s4 839922192
      %v2139 = vunpack.c.0.s8 %v2138
      %v2140 = vlaneseq
      %v2141 = vshrl.u32 %v2140, 7
      %v2142 = vsub.s32 %v2139, %v2141
      %v2143 = vrot.slane %v2135, %v2142
      %2145 = vset.pattern.permute.xlu0 0
      %2146 = vperm.xlu0 %2145, %v847
      %v2147 = vpop.permute.xlu0 %2146
      %v2150 = vunpack.c.l.s4 839922192
      %v2151 = vunpack.c.0.s8 %v2150
      %v2152 = vlaneseq
      %v2153 = vshrl.u32 %v2152, 7
      %v2154 = vsub.s32 %v2151, %v2153
      %v2155 = vrot.slane %v2147, %v2154
      %2157 = vset.pattern.permute.xlu0 0
      %2158 = vperm.xlu0 %2157, %v848
      %v2159 = vpop.permute.xlu0 %2158
      %v2162 = vunpack.c.l.s4 839922192
      %v2163 = vunpack.c.0.s8 %v2162
      %v2164 = vlaneseq
      %v2165 = vshrl.u32 %v2164, 7
      %v2166 = vsub.s32 %v2163, %v2165
      %v2167 = vrot.slane %v2159, %v2166
      %2169 = vset.pattern.permute.xlu0 0
      %2170 = vperm.xlu0 %2169, %v849
      %v2171 = vpop.permute.xlu0 %2170
      %v2174 = vunpack.c.l.s4 839922192
      %v2175 = vunpack.c.0.s8 %v2174
      %v2176 = vlaneseq
      %v2177 = vshrl.u32 %v2176, 7
      %v2178 = vsub.s32 %v2175, %v2177
      %v2179 = vrot.slane %v2171, %v2178
      %2181 = vset.pattern.permute.xlu0 0
      %2182 = vperm.xlu0 %2181, %v850
      %v2183 = vpop.permute.xlu0 %2182
      %v2186 = vunpack.c.l.s4 839922192
      %v2187 = vunpack.c.0.s8 %v2186
      %v2188 = vlaneseq
      %v2189 = vshrl.u32 %v2188, 7
      %v2190 = vsub.s32 %v2187, %v2189
      %v2191 = vrot.slane %v2183, %v2190
      %2193 = vset.pattern.permute.xlu0 0
      %2194 = vperm.xlu0 %2193, %v851
      %v2195 = vpop.permute.xlu0 %2194
      %v2198 = vunpack.c.l.s4 839922192
      %v2199 = vunpack.c.0.s8 %v2198
      %v2200 = vlaneseq
      %v2201 = vshrl.u32 %v2200, 7
      %v2202 = vsub.s32 %v2199, %v2201
      %v2203 = vrot.slane %v2195, %v2202
      %2205 = vset.pattern.permute.xlu0 0
      %2206 = vperm.xlu0 %2205, %v852
      %v2207 = vpop.permute.xlu0 %2206
      %v2210 = vunpack.c.l.s4 839922192
      %v2211 = vunpack.c.0.s8 %v2210
      %v2212 = vlaneseq
      %v2213 = vshrl.u32 %v2212, 7
      %v2214 = vsub.s32 %v2211, %v2213
      %v2215 = vrot.slane %v2207, %v2214
      %2217 = vset.pattern.permute.xlu0 0
      %2218 = vperm.xlu0 %2217, %v853
      %v2219 = vpop.permute.xlu0 %2218
      %v2222 = vunpack.c.l.s4 839922192
      %v2223 = vunpack.c.0.s8 %v2222
      %v2224 = vlaneseq
      %v2225 = vshrl.u32 %v2224, 7
      %v2226 = vsub.s32 %v2223, %v2225
      %v2227 = vrot.slane %v2219, %v2226
      %2229 = vset.pattern.permute.xlu0 0
      %2230 = vperm.xlu0 %2229, %v854
      %v2231 = vpop.permute.xlu0 %2230
      %v2234 = vunpack.c.l.s4 839922192
      %v2235 = vunpack.c.0.s8 %v2234
      %v2236 = vlaneseq
      %v2237 = vshrl.u32 %v2236, 7
      %v2238 = vsub.s32 %v2235, %v2237
      %v2239 = vrot.slane %v2231, %v2238
      %2241 = vset.pattern.permute.xlu0 0
      %2242 = vperm.xlu0 %2241, %v855
      %v2243 = vpop.permute.xlu0 %2242
      %v2246 = vunpack.c.l.s4 839922192
      %v2247 = vunpack.c.0.s8 %v2246
      %v2248 = vlaneseq
      %v2249 = vshrl.u32 %v2248, 7
      %v2250 = vsub.s32 %v2247, %v2249
      %v2251 = vrot.slane %v2243, %v2250
      %2253 = vset.pattern.permute.xlu0 0
      %2254 = vperm.xlu0 %2253, %v856
      %v2255 = vpop.permute.xlu0 %2254
      %v2258 = vunpack.c.l.s4 839922192
      %v2259 = vunpack.c.0.s8 %v2258
      %v2260 = vlaneseq
      %v2261 = vshrl.u32 %v2260, 7
      %v2262 = vsub.s32 %v2259, %v2261
      %v2263 = vrot.slane %v2255, %v2262
      %2265 = vset.pattern.permute.xlu0 0
      %2266 = vperm.xlu0 %2265, %v857
      %v2267 = vpop.permute.xlu0 %2266
      %v2270 = vunpack.c.l.s4 839922192
      %v2271 = vunpack.c.0.s8 %v2270
      %v2272 = vlaneseq
      %v2273 = vshrl.u32 %v2272, 7
      %v2274 = vsub.s32 %v2271, %v2273
      %v2275 = vrot.slane %v2267, %v2274
      %2277 = vset.pattern.permute.xlu0 0
      %2278 = vperm.xlu0 %2277, %v858
      %v2279 = vpop.permute.xlu0 %2278
      %v2282 = vunpack.c.l.s4 839922192
      %v2283 = vunpack.c.0.s8 %v2282
      %v2284 = vlaneseq
      %v2285 = vshrl.u32 %v2284, 7
      %v2286 = vsub.s32 %v2283, %v2285
      %v2287 = vrot.slane %v2279, %v2286
      %2289 = vset.pattern.permute.xlu0 0
      %2290 = vperm.xlu0 %2289, %v859
      %v2291 = vpop.permute.xlu0 %2290
      %v2294 = vunpack.c.l.s4 839922192
      %v2295 = vunpack.c.0.s8 %v2294
      %v2296 = vlaneseq
      %v2297 = vshrl.u32 %v2296, 7
      %v2298 = vsub.s32 %v2295, %v2297
      %v2299 = vrot.slane %v2291, %v2298
      %2301 = vset.pattern.permute.xlu0 0
      %2302 = vperm.xlu0 %2301, %v860
      %v2303 = vpop.permute.xlu0 %2302
      %v2306 = vunpack.c.l.s4 839922192
      %v2307 = vunpack.c.0.s8 %v2306
      %v2308 = vlaneseq
      %v2309 = vshrl.u32 %v2308, 7
      %v2310 = vsub.s32 %v2307, %v2309
      %v2311 = vrot.slane %v2303, %v2310
      %v2344 = vunpack.c.l.b16 %v1939
      %v2345 = vunpack.c.l.b16 %v1951
      %v2346 = vunpack.c.l.b16 %v1963
      %v2347 = vunpack.c.l.b16 %v1975
      %v2348 = vunpack.c.l.b16 %v1987
      %v2349 = vunpack.c.l.b16 %v1999
      %v2350 = vunpack.c.l.b16 %v2011
      %v2351 = vunpack.c.l.b16 %v2023
      %v2352 = vunpack.c.l.b16 %v2035
      %v2353 = vunpack.c.l.b16 %v2047
      %v2354 = vunpack.c.l.b16 %v2059
      %v2355 = vunpack.c.l.b16 %v2071
      %v2356 = vunpack.c.l.b16 %v2083
      %v2357 = vunpack.c.l.b16 %v2095
      %v2358 = vunpack.c.l.b16 %v2107
      %v2359 = vunpack.c.l.b16 %v2119
      %v2360 = vunpack.c.l.b16 %v2131
      %v2361 = vunpack.c.l.b16 %v2143
      %v2362 = vunpack.c.l.b16 %v2155
      %v2363 = vunpack.c.l.b16 %v2167
      %v2364 = vunpack.c.l.b16 %v2179
      %v2365 = vunpack.c.l.b16 %v2191
      %v2366 = vunpack.c.l.b16 %v2203
      %v2367 = vunpack.c.l.b16 %v2215
      %v2368 = vunpack.c.l.b16 %v2227
      %v2369 = vunpack.c.l.b16 %v2239
      %v2370 = vunpack.c.l.b16 %v2251
      %v2371 = vunpack.c.l.b16 %v2263
      %v2372 = vunpack.c.l.b16 %v2275
      %v2373 = vunpack.c.l.b16 %v2287
      %v2374 = vunpack.c.l.b16 %v2299
      %v2375 = vunpack.c.l.b16 %v2311
      %v2376 = vpack.c.b16 %v2345, %v2344
      %v2377 = vpack.c.b16 %v2347, %v2346
      %v2378 = vpack.c.b16 %v2349, %v2348
      %v2379 = vpack.c.b16 %v2351, %v2350
      %v2380 = vpack.c.b16 %v2353, %v2352
      %v2381 = vpack.c.b16 %v2355, %v2354
      %v2382 = vpack.c.b16 %v2357, %v2356
      %v2383 = vpack.c.b16 %v2359, %v2358
      %v2384 = vpack.c.b16 %v2361, %v2360
      %v2385 = vpack.c.b16 %v2363, %v2362
      %v2386 = vpack.c.b16 %v2365, %v2364
      %v2387 = vpack.c.b16 %v2367, %v2366
      %v2388 = vpack.c.b16 %v2369, %v2368
      %v2389 = vpack.c.b16 %v2371, %v2370
      %v2390 = vpack.c.b16 %v2373, %v2372
      %v2391 = vpack.c.b16 %v2375, %v2374
      %v2408 = vmul.bf16 %v1912, %v2376
      %v2409 = vmul.bf16 %v1913, %v2377
      %v2410 = vmul.bf16 %v1914, %v2378
      %v2411 = vmul.bf16 %v1915, %v2379
      %v2412 = vmul.bf16 %v1916, %v2380
      %v2413 = vmul.bf16 %v1917, %v2381
      %v2414 = vmul.bf16 %v1918, %v2382
      %v2415 = vmul.bf16 %v1919, %v2383
      %v2416 = vmul.bf16 %v1920, %v2384
      %v2417 = vmul.bf16 %v1921, %v2385
      %v2418 = vmul.bf16 %v1922, %v2386
      %v2419 = vmul.bf16 %v1923, %v2387
      %v2420 = vmul.bf16 %v1924, %v2388
      %v2421 = vmul.bf16 %v1925, %v2389
      %v2422 = vmul.bf16 %v1926, %v2390
      %v2423 = vmul.bf16 %v1927, %v2391
      %s2424 = scalar_lea.vmem %s3, 4
      %v2425 = vld [vmem:[%s2424] sm:$0x3]
      %v2427 = vsel %vm511, %v2408, 0
      %v2430 = vsel %vm511, %v2409, 0
      %v2433 = vsel %vm511, %v2410, 0
      %v2436 = vsel %vm511, %v2411, 0
      %v2439 = vsel %vm511, %v2412, 0
      %v2442 = vsel %vm511, %v2413, 0
      %v2445 = vsel %vm511, %v2414, 0
      %v2448 = vsel %vm511, %v2415, 0
      %v2451 = vsel %vm511, %v2416, 0
      %v2454 = vsel %vm511, %v2417, 0
      %v2457 = vsel %vm511, %v2418, 0
      %v2460 = vsel %vm511, %v2419, 0
      %v2463 = vsel %vm511, %v2420, 0
      %v2466 = vsel %vm511, %v2421, 0
      %v2469 = vsel %vm511, %v2422, 0
      %v2472 = vsel %vm511, %v2423, 0
      %v2475 = vsel %vm560, %v2425, 0
      %2477 = vmatprep.subr.bf16.mxu0 0
      %2478 = vmatpush1.bf16.msra.mxu0 0
      %2479 = vmatprep.subr.bf16.mxu0 0
      %2480 = vmatpush1.bf16.msra.mxu0 0
      %2481 = vmatprep.subr.bf16.mxu0 0
      %2482 = vmatpush1.bf16.msra.mxu0 0
      %2483 = vmatprep.subr.bf16.mxu0 0
      %2484 = vmatpush1.bf16.msra.mxu0 0
      %2485 = vmatprep.subr.bf16.mxu0 0
      %2486 = vmatpush1.bf16.msra.mxu0 0
      %2487 = vmatprep.subr.bf16.mxu0 0
      %2488 = vmatpush1.bf16.msra.mxu0 0
      %2489 = vmatprep.subr.bf16.mxu0 0
      %2490 = vmatpush1.bf16.msra.mxu0 0
      %2491 = vmatprep.subr.bf16.mxu0 0
      %2492 = vmatpush1.bf16.msra.mxu0 %v2475
      %2493 = vmatprep.subr.bf16.mxu0 0
      %2494 = vmatpush2.bf16.msra.mxu0 0
      %2495 = vmatprep.subr.bf16.mxu0 0
      %2496 = vmatpush2.bf16.msra.mxu0 0
      %2497 = vmatprep.subr.bf16.mxu0 0
      %2498 = vmatpush2.bf16.msra.mxu0 0
      %2499 = vmatprep.subr.bf16.mxu0 0
      %2500 = vmatpush2.bf16.msra.mxu0 0
      %2501 = vmatprep.subr.bf16.mxu0 0
      %2502 = vmatpush2.bf16.msra.mxu0 0
      %2503 = vmatprep.subr.bf16.mxu0 0
      %2504 = vmatpush2.bf16.msra.mxu0 0
      %2505 = vmatprep.subr.bf16.mxu0 0
      %2506 = vmatpush2.bf16.msra.mxu0 0
      %2507 = vmatprep.subr.bf16.mxu0 0
      %2508 = vmatpush2.bf16.msra.mxu0 0
      %2509 = vmatprep.mubr.bf16.mxu0 0
      %2510 = vmatmul.mubr.bf16.gmra.mxu0 %v2427
      %v2511 = vpop.f32.mrf.mxu0
      %v2512 = vadd.f32 0.0, %v2511
      %v2513 = vpop.f32.mrf.mxu0
      %v2514 = vpop.f32.mrf.mxu0
      %v2515 = vadd.f32 0.0, %v2514
      %v2516 = vpop.f32.mrf.mxu0
      %2517 = vmatprep.mubr.bf16.mxu0 0
      %2518 = vmatmul.mubr.bf16.gmra.mxu0 %v2430
      %v2519 = vpop.f32.mrf.mxu0
      %v2520 = vadd.f32 0.0, %v2519
      %v2521 = vpop.f32.mrf.mxu0
      %v2522 = vpop.f32.mrf.mxu0
      %v2523 = vadd.f32 0.0, %v2522
      %v2524 = vpop.f32.mrf.mxu0
      %2525 = vmatprep.mubr.bf16.mxu0 0
      %2526 = vmatmul.mubr.bf16.gmra.mxu0 %v2433
      %v2527 = vpop.f32.mrf.mxu0
      %v2528 = vadd.f32 0.0, %v2527
      %v2529 = vpop.f32.mrf.mxu0
      %v2530 = vpop.f32.mrf.mxu0
      %v2531 = vadd.f32 0.0, %v2530
      %v2532 = vpop.f32.mrf.mxu0
      %2533 = vmatprep.mubr.bf16.mxu0 0
      %2534 = vmatmul.mubr.bf16.gmra.mxu0 %v2436
      %v2535 = vpop.f32.mrf.mxu0
      %v2536 = vadd.f32 0.0, %v2535
      %v2537 = vpop.f32.mrf.mxu0
      %v2538 = vpop.f32.mrf.mxu0
      %v2539 = vadd.f32 0.0, %v2538
      %v2540 = vpop.f32.mrf.mxu0
      %2541 = vmatprep.mubr.bf16.mxu0 0
      %2542 = vmatmul.mubr.bf16.gmra.mxu0 %v2439
      %v2543 = vpop.f32.mrf.mxu0
      %v2544 = vadd.f32 0.0, %v2543
      %v2545 = vpop.f32.mrf.mxu0
      %v2546 = vpop.f32.mrf.mxu0
      %v2547 = vadd.f32 0.0, %v2546
      %v2548 = vpop.f32.mrf.mxu0
      %2549 = vmatprep.mubr.bf16.mxu0 0
      %2550 = vmatmul.mubr.bf16.gmra.mxu0 %v2442
      %v2551 = vpop.f32.mrf.mxu0
      %v2552 = vadd.f32 0.0, %v2551
      %v2553 = vpop.f32.mrf.mxu0
      %v2554 = vpop.f32.mrf.mxu0
      %v2555 = vadd.f32 0.0, %v2554
      %v2556 = vpop.f32.mrf.mxu0
      %2557 = vmatprep.mubr.bf16.mxu0 0
      %2558 = vmatmul.mubr.bf16.gmra.mxu0 %v2445
      %v2559 = vpop.f32.mrf.mxu0
      %v2560 = vadd.f32 0.0, %v2559
      %v2561 = vpop.f32.mrf.mxu0
      %v2562 = vpop.f32.mrf.mxu0
      %v2563 = vadd.f32 0.0, %v2562
      %v2564 = vpop.f32.mrf.mxu0
      %2565 = vmatprep.mubr.bf16.mxu0 0
      %2566 = vmatmul.mubr.bf16.gmra.mxu0 %v2448
      %v2567 = vpop.f32.mrf.mxu0
      %v2568 = vadd.f32 0.0, %v2567
      %v2569 = vpop.f32.mrf.mxu0
      %v2570 = vpop.f32.mrf.mxu0
      %v2571 = vadd.f32 0.0, %v2570
      %v2572 = vpop.f32.mrf.mxu0
      %2573 = vmatprep.mubr.bf16.mxu0 0
      %2574 = vmatmul.mubr.bf16.gmra.mxu0 %v2451
      %v2575 = vpop.f32.mrf.mxu0
      %v2576 = vadd.f32 0.0, %v2575
      %v2577 = vpop.f32.mrf.mxu0
      %v2578 = vpop.f32.mrf.mxu0
      %v2579 = vadd.f32 0.0, %v2578
      %v2580 = vpop.f32.mrf.mxu0
      %2581 = vmatprep.mubr.bf16.mxu0 0
      %2582 = vmatmul.mubr.bf16.gmra.mxu0 %v2454
      %v2583 = vpop.f32.mrf.mxu0
      %v2584 = vadd.f32 0.0, %v2583
      %v2585 = vpop.f32.mrf.mxu0
      %v2586 = vpop.f32.mrf.mxu0
      %v2587 = vadd.f32 0.0, %v2586
      %v2588 = vpop.f32.mrf.mxu0
      %2589 = vmatprep.mubr.bf16.mxu0 0
      %2590 = vmatmul.mubr.bf16.gmra.mxu0 %v2457
      %v2591 = vpop.f32.mrf.mxu0
      %v2592 = vadd.f32 0.0, %v2591
      %v2593 = vpop.f32.mrf.mxu0
      %v2594 = vpop.f32.mrf.mxu0
      %v2595 = vadd.f32 0.0, %v2594
      %v2596 = vpop.f32.mrf.mxu0
      %2597 = vmatprep.mubr.bf16.mxu0 0
      %2598 = vmatmul.mubr.bf16.gmra.mxu0 %v2460
      %v2599 = vpop.f32.mrf.mxu0
      %v2600 = vadd.f32 0.0, %v2599
      %v2601 = vpop.f32.mrf.mxu0
      %v2602 = vpop.f32.mrf.mxu0
      %v2603 = vadd.f32 0.0, %v2602
      %v2604 = vpop.f32.mrf.mxu0
      %2605 = vmatprep.mubr.bf16.mxu0 0
      %2606 = vmatmul.mubr.bf16.gmra.mxu0 %v2463
      %v2607 = vpop.f32.mrf.mxu0
      %v2608 = vadd.f32 0.0, %v2607
      %v2609 = vpop.f32.mrf.mxu0
      %v2610 = vpop.f32.mrf.mxu0
      %v2611 = vadd.f32 0.0, %v2610
      %v2612 = vpop.f32.mrf.mxu0
      %2613 = vmatprep.mubr.bf16.mxu0 0
      %2614 = vmatmul.mubr.bf16.gmra.mxu0 %v2466
      %v2615 = vpop.f32.mrf.mxu0
      %v2616 = vadd.f32 0.0, %v2615
      %v2617 = vpop.f32.mrf.mxu0
      %v2618 = vpop.f32.mrf.mxu0
      %v2619 = vadd.f32 0.0, %v2618
      %v2620 = vpop.f32.mrf.mxu0
      %2621 = vmatprep.mubr.bf16.mxu0 0
      %2622 = vmatmul.mubr.bf16.gmra.mxu0 %v2469
      %v2623 = vpop.f32.mrf.mxu0
      %v2624 = vadd.f32 0.0, %v2623
      %v2625 = vpop.f32.mrf.mxu0
      %v2626 = vpop.f32.mrf.mxu0
      %v2627 = vadd.f32 0.0, %v2626
      %v2628 = vpop.f32.mrf.mxu0
      %2629 = vmatprep.mubr.bf16.mxu0 0
      %2630 = vmatmul.mubr.bf16.gmra.mxu0 %v2472
      %v2631 = vpop.f32.mrf.mxu0
      %v2632 = vadd.f32 0.0, %v2631
      %v2633 = vpop.f32.mrf.mxu0
      %v2634 = vpop.f32.mrf.mxu0
      %v2635 = vadd.f32 0.0, %v2634
      %v2636 = vpop.f32.mrf.mxu0
      %2637 = vdwg.mxu0
      %v2638 = vadd.f32 %v1754, %v2512
      %v2639 = vadd.f32 %v1757, %v2515
      %v2640 = vadd.f32 %v1762, %v2520
      %v2641 = vadd.f32 %v1765, %v2523
      %v2642 = vadd.f32 %v1770, %v2528
      %v2643 = vadd.f32 %v1773, %v2531
      %v2644 = vadd.f32 %v1778, %v2536
      %v2645 = vadd.f32 %v1781, %v2539
      %v2646 = vadd.f32 %v1786, %v2544
      %v2647 = vadd.f32 %v1789, %v2547
      %v2648 = vadd.f32 %v1794, %v2552
      %v2649 = vadd.f32 %v1797, %v2555
      %v2650 = vadd.f32 %v1802, %v2560
      %v2651 = vadd.f32 %v1805, %v2563
      %v2652 = vadd.f32 %v1810, %v2568
      %v2653 = vadd.f32 %v1813, %v2571
      %v2654 = vadd.f32 %v1818, %v2576
      %v2655 = vadd.f32 %v1821, %v2579
      %v2656 = vadd.f32 %v1826, %v2584
      %v2657 = vadd.f32 %v1829, %v2587
      %v2658 = vadd.f32 %v1834, %v2592
      %v2659 = vadd.f32 %v1837, %v2595
      %v2660 = vadd.f32 %v1842, %v2600
      %v2661 = vadd.f32 %v1845, %v2603
      %v2662 = vadd.f32 %v1850, %v2608
      %v2663 = vadd.f32 %v1853, %v2611
      %v2664 = vadd.f32 %v1858, %v2616
      %v2665 = vadd.f32 %v1861, %v2619
      %v2666 = vadd.f32 %v1866, %v2624
      %v2667 = vadd.f32 %v1869, %v2627
      %v2668 = vadd.f32 %v1874, %v2632
      %v2669 = vadd.f32 %v1877, %v2635
      %v2670 = vld [vmem:[#allocation2 + $0x1f] sm:$0xff]
      %v2671 = vld [vmem:[#allocation2 + $0x27] sm:$0xff]
      %v2672 = vld [vmem:[#allocation2 + $0x2f] sm:$0xff]
      %v2673 = vld [vmem:[#allocation2 + $0x37] sm:$0xff]
      %v2674 = vld [vmem:[#allocation2 + $0x3f] sm:$0xff]
      %v2675 = vld [vmem:[#allocation2 + $0x47] sm:$0xff]
      %v2676 = vld [vmem:[#allocation2 + $0x4f] sm:$0xff]
      %v2677 = vld [vmem:[#allocation2 + $0x57] sm:$0xff]
      %v2678 = vld [vmem:[#allocation2 + $0x5f] sm:$0xff]
      %v2679 = vld [vmem:[#allocation2 + $0x67] sm:$0xff]
      %v2680 = vld [vmem:[#allocation2 + $0x6f] sm:$0xff]
      %v2681 = vld [vmem:[#allocation2 + $0x77] sm:$0xff]
      %v2682 = vld [vmem:[#allocation2 + $0x7f] sm:$0xff]
      %v2683 = vld [vmem:[#allocation2 + $0x87] sm:$0xff]
      %v2684 = vld [vmem:[#allocation2 + $0x8f] sm:$0xff]
      %v2685 = vld [vmem:[#allocation2 + $0x97] sm:$0xff]
      %v2686 = vld [vmem:[#allocation2 + $0x9f] sm:$0xff]
      %v2687 = vld [vmem:[#allocation2 + $0xa7] sm:$0xff]
      %v2688 = vld [vmem:[#allocation2 + $0xaf] sm:$0xff]
      %v2689 = vld [vmem:[#allocation2 + $0xb7] sm:$0xff]
      %v2690 = vld [vmem:[#allocation2 + $0xbf] sm:$0xff]
      %v2691 = vld [vmem:[#allocation2 + $0xc7] sm:$0xff]
      %v2692 = vld [vmem:[#allocation2 + $0xcf] sm:$0xff]
      %v2693 = vld [vmem:[#allocation2 + $0xd7] sm:$0xff]
      %v2694 = vld [vmem:[#allocation2 + $0xdf] sm:$0xff]
      %v2695 = vld [vmem:[#allocation2 + $0xe7] sm:$0xff]
      %v2696 = vld [vmem:[#allocation2 + $0xef] sm:$0xff]
      %v2697 = vld [vmem:[#allocation2 + $0xf7] sm:$0xff]
      %v2698 = vld [vmem:[#allocation2 + $0xff] sm:$0xff]
      %v2699 = vld [vmem:[#allocation2 + $0x107] sm:$0xff]
      %v2700 = vld [vmem:[#allocation2 + $0x10f] sm:$0xff]
      %v2701 = vld [vmem:[#allocation2 + $0x117] sm:$0xff]
      %v2702 = vpack.c.bf16 %v2671, %v2670
      %v2703 = vpack.c.bf16 %v2673, %v2672
      %v2704 = vpack.c.bf16 %v2675, %v2674
      %v2705 = vpack.c.bf16 %v2677, %v2676
      %v2706 = vpack.c.bf16 %v2679, %v2678
      %v2707 = vpack.c.bf16 %v2681, %v2680
      %v2708 = vpack.c.bf16 %v2683, %v2682
      %v2709 = vpack.c.bf16 %v2685, %v2684
      %v2710 = vpack.c.bf16 %v2687, %v2686
      %v2711 = vpack.c.bf16 %v2689, %v2688
      %v2712 = vpack.c.bf16 %v2691, %v2690
      %v2713 = vpack.c.bf16 %v2693, %v2692
      %v2714 = vpack.c.bf16 %v2695, %v2694
      %v2715 = vpack.c.bf16 %v2697, %v2696
      %v2716 = vpack.c.bf16 %v2699, %v2698
      %v2717 = vpack.c.bf16 %v2701, %v2700
      %v2718 = vmul.bf16 %v2702, %v1357
      %v2719 = vmul.bf16 %v2703, %v1358
      %v2720 = vmul.bf16 %v2704, %v1359
      %v2721 = vmul.bf16 %v2705, %v1360
      %v2722 = vmul.bf16 %v2706, %v1361
      %v2723 = vmul.bf16 %v2707, %v1362
      %v2724 = vmul.bf16 %v2708, %v1363
      %v2725 = vmul.bf16 %v2709, %v1364
      %v2726 = vmul.bf16 %v2710, %v1365
      %v2727 = vmul.bf16 %v2711, %v1366
      %v2728 = vmul.bf16 %v2712, %v1367
      %v2729 = vmul.bf16 %v2713, %v1368
      %v2730 = vmul.bf16 %v2714, %v1369
      %v2731 = vmul.bf16 %v2715, %v1370
      %v2732 = vmul.bf16 %v2716, %v1371
      %v2733 = vmul.bf16 %v2717, %v1372
      %s2734 = scalar_lea.vmem %s3, 6
      %v2735 = vld [vmem:[%s2734] sm:$0x3]
      %v2737 = vsel %vm511, %v2718, 0
      %v2740 = vsel %vm511, %v2719, 0
      %v2743 = vsel %vm511, %v2720, 0
      %v2746 = vsel %vm511, %v2721, 0
      %v2749 = vsel %vm511, %v2722, 0
      %v2752 = vsel %vm511, %v2723, 0
      %v2755 = vsel %vm511, %v2724, 0
      %v2758 = vsel %vm511, %v2725, 0
      %v2761 = vsel %vm511, %v2726, 0
      %v2764 = vsel %vm511, %v2727, 0
      %v2767 = vsel %vm511, %v2728, 0
      %v2770 = vsel %vm511, %v2729, 0
      %v2773 = vsel %vm511, %v2730, 0
      %v2776 = vsel %vm511, %v2731, 0
      %v2779 = vsel %vm511, %v2732, 0
      %v2782 = vsel %vm511, %v2733, 0
      %v2785 = vsel %vm560, %v2735, 0
      %2787 = vmatprep.subr.bf16.mxu0 0
      %2788 = vmatpush1.bf16.msra.mxu0 0
      %2789 = vmatprep.subr.bf16.mxu0 0
      %2790 = vmatpush1.bf16.msra.mxu0 0
      %2791 = vmatprep.subr.bf16.mxu0 0
      %2792 = vmatpush1.bf16.msra.mxu0 0
      %2793 = vmatprep.subr.bf16.mxu0 0
      %2794 = vmatpush1.bf16.msra.mxu0 0
      %2795 = vmatprep.subr.bf16.mxu0 0
      %2796 = vmatpush1.bf16.msra.mxu0 0
      %2797 = vmatprep.subr.bf16.mxu0 0
      %2798 = vmatpush1.bf16.msra.mxu0 0
      %2799 = vmatprep.subr.bf16.mxu0 0
      %2800 = vmatpush1.bf16.msra.mxu0 0
      %2801 = vmatprep.subr.bf16.mxu0 0
      %2802 = vmatpush1.bf16.msra.mxu0 %v2785
      %2803 = vmatprep.subr.bf16.mxu0 0
      %2804 = vmatpush2.bf16.msra.mxu0 0
      %2805 = vmatprep.subr.bf16.mxu0 0
      %2806 = vmatpush2.bf16.msra.mxu0 0
      %2807 = vmatprep.subr.bf16.mxu0 0
      %2808 = vmatpush2.bf16.msra.mxu0 0
      %2809 = vmatprep.subr.bf16.mxu0 0
      %2810 = vmatpush2.bf16.msra.mxu0 0
      %2811 = vmatprep.subr.bf16.mxu0 0
      %2812 = vmatpush2.bf16.msra.mxu0 0
      %2813 = vmatprep.subr.bf16.mxu0 0
      %2814 = vmatpush2.bf16.msra.mxu0 0
      %2815 = vmatprep.subr.bf16.mxu0 0
      %2816 = vmatpush2.bf16.msra.mxu0 0
      %2817 = vmatprep.subr.bf16.mxu0 0
      %2818 = vmatpush2.bf16.msra.mxu0 0
      %2819 = vmatprep.mubr.bf16.mxu0 0
      %2820 = vmatmul.mubr.bf16.gmra.mxu0 %v2737
      %v2821 = vpop.f32.mrf.mxu0
      %v2822 = vadd.f32 0.0, %v2821
      %v2823 = vpop.f32.mrf.mxu0
      %v2824 = vpop.f32.mrf.mxu0
      %v2825 = vadd.f32 0.0, %v2824
      %v2826 = vpop.f32.mrf.mxu0
      %2827 = vmatprep.mubr.bf16.mxu0 0
      %2828 = vmatmul.mubr.bf16.gmra.mxu0 %v2740
      %v2829 = vpop.f32.mrf.mxu0
      %v2830 = vadd.f32 0.0, %v2829
      %v2831 = vpop.f32.mrf.mxu0
      %v2832 = vpop.f32.mrf.mxu0
      %v2833 = vadd.f32 0.0, %v2832
      %v2834 = vpop.f32.mrf.mxu0
      %2835 = vmatprep.mubr.bf16.mxu0 0
      %2836 = vmatmul.mubr.bf16.gmra.mxu0 %v2743
      %v2837 = vpop.f32.mrf.mxu0
      %v2838 = vadd.f32 0.0, %v2837
      %v2839 = vpop.f32.mrf.mxu0
      %v2840 = vpop.f32.mrf.mxu0
      %v2841 = vadd.f32 0.0, %v2840
      %v2842 = vpop.f32.mrf.mxu0
      %2843 = vmatprep.mubr.bf16.mxu0 0
      %2844 = vmatmul.mubr.bf16.gmra.mxu0 %v2746
      %v2845 = vpop.f32.mrf.mxu0
      %v2846 = vadd.f32 0.0, %v2845
      %v2847 = vpop.f32.mrf.mxu0
      %v2848 = vpop.f32.mrf.mxu0
      %v2849 = vadd.f32 0.0, %v2848
      %v2850 = vpop.f32.mrf.mxu0
      %2851 = vmatprep.mubr.bf16.mxu0 0
      %2852 = vmatmul.mubr.bf16.gmra.mxu0 %v2749
      %v2853 = vpop.f32.mrf.mxu0
      %v2854 = vadd.f32 0.0, %v2853
      %v2855 = vpop.f32.mrf.mxu0
      %v2856 = vpop.f32.mrf.mxu0
      %v2857 = vadd.f32 0.0, %v2856
      %v2858 = vpop.f32.mrf.mxu0
      %2859 = vmatprep.mubr.bf16.mxu0 0
      %2860 = vmatmul.mubr.bf16.gmra.mxu0 %v2752
      %v2861 = vpop.f32.mrf.mxu0
      %v2862 = vadd.f32 0.0, %v2861
      %v2863 = vpop.f32.mrf.mxu0
      %v2864 = vpop.f32.mrf.mxu0
      %v2865 = vadd.f32 0.0, %v2864
      %v2866 = vpop.f32.mrf.mxu0
      %2867 = vmatprep.mubr.bf16.mxu0 0
      %2868 = vmatmul.mubr.bf16.gmra.mxu0 %v2755
      %v2869 = vpop.f32.mrf.mxu0
      %v2870 = vadd.f32 0.0, %v2869
      %v2871 = vpop.f32.mrf.mxu0
      %v2872 = vpop.f32.mrf.mxu0
      %v2873 = vadd.f32 0.0, %v2872
      %v2874 = vpop.f32.mrf.mxu0
      %2875 = vmatprep.mubr.bf16.mxu0 0
      %2876 = vmatmul.mubr.bf16.gmra.mxu0 %v2758
      %v2877 = vpop.f32.mrf.mxu0
      %v2878 = vadd.f32 0.0, %v2877
      %v2879 = vpop.f32.mrf.mxu0
      %v2880 = vpop.f32.mrf.mxu0
      %v2881 = vadd.f32 0.0, %v2880
      %v2882 = vpop.f32.mrf.mxu0
      %2883 = vmatprep.mubr.bf16.mxu0 0
      %2884 = vmatmul.mubr.bf16.gmra.mxu0 %v2761
      %v2885 = vpop.f32.mrf.mxu0
      %v2886 = vadd.f32 0.0, %v2885
      %v2887 = vpop.f32.mrf.mxu0
      %v2888 = vpop.f32.mrf.mxu0
      %v2889 = vadd.f32 0.0, %v2888
      %v2890 = vpop.f32.mrf.mxu0
      %2891 = vmatprep.mubr.bf16.mxu0 0
      %2892 = vmatmul.mubr.bf16.gmra.mxu0 %v2764
      %v2893 = vpop.f32.mrf.mxu0
      %v2894 = vadd.f32 0.0, %v2893
      %v2895 = vpop.f32.mrf.mxu0
      %v2896 = vpop.f32.mrf.mxu0
      %v2897 = vadd.f32 0.0, %v2896
      %v2898 = vpop.f32.mrf.mxu0
      %2899 = vmatprep.mubr.bf16.mxu0 0
      %2900 = vmatmul.mubr.bf16.gmra.mxu0 %v2767
      %v2901 = vpop.f32.mrf.mxu0
      %v2902 = vadd.f32 0.0, %v2901
      %v2903 = vpop.f32.mrf.mxu0
      %v2904 = vpop.f32.mrf.mxu0
      %v2905 = vadd.f32 0.0, %v2904
      %v2906 = vpop.f32.mrf.mxu0
      %2907 = vmatprep.mubr.bf16.mxu0 0
      %2908 = vmatmul.mubr.bf16.gmra.mxu0 %v2770
      %v2909 = vpop.f32.mrf.mxu0
      %v2910 = vadd.f32 0.0, %v2909
      %v2911 = vpop.f32.mrf.mxu0
      %v2912 = vpop.f32.mrf.mxu0
      %v2913 = vadd.f32 0.0, %v2912
      %v2914 = vpop.f32.mrf.mxu0
      %2915 = vmatprep.mubr.bf16.mxu0 0
      %2916 = vmatmul.mubr.bf16.gmra.mxu0 %v2773
      %v2917 = vpop.f32.mrf.mxu0
      %v2918 = vadd.f32 0.0, %v2917
      %v2919 = vpop.f32.mrf.mxu0
      %v2920 = vpop.f32.mrf.mxu0
      %v2921 = vadd.f32 0.0, %v2920
      %v2922 = vpop.f32.mrf.mxu0
      %2923 = vmatprep.mubr.bf16.mxu0 0
      %2924 = vmatmul.mubr.bf16.gmra.mxu0 %v2776
      %v2925 = vpop.f32.mrf.mxu0
      %v2926 = vadd.f32 0.0, %v2925
      %v2927 = vpop.f32.mrf.mxu0
      %v2928 = vpop.f32.mrf.mxu0
      %v2929 = vadd.f32 0.0, %v2928
      %v2930 = vpop.f32.mrf.mxu0
      %2931 = vmatprep.mubr.bf16.mxu0 0
      %2932 = vmatmul.mubr.bf16.gmra.mxu0 %v2779
      %v2933 = vpop.f32.mrf.mxu0
      %v2934 = vadd.f32 0.0, %v2933
      %v2935 = vpop.f32.mrf.mxu0
      %v2936 = vpop.f32.mrf.mxu0
      %v2937 = vadd.f32 0.0, %v2936
      %v2938 = vpop.f32.mrf.mxu0
      %2939 = vmatprep.mubr.bf16.mxu0 0
      %2940 = vmatmul.mubr.bf16.gmra.mxu0 %v2782
      %v2941 = vpop.f32.mrf.mxu0
      %v2942 = vadd.f32 0.0, %v2941
      %v2943 = vpop.f32.mrf.mxu0
      %v2944 = vpop.f32.mrf.mxu0
      %v2945 = vadd.f32 0.0, %v2944
      %v2946 = vpop.f32.mrf.mxu0
      %2947 = vdwg.mxu0
      %v2948 = vadd.f32 %v2638, %v2822
      %v2949 = vadd.f32 %v2639, %v2825
      %v2950 = vadd.f32 %v2640, %v2830
      %v2951 = vadd.f32 %v2641, %v2833
      %v2952 = vadd.f32 %v2642, %v2838
      %v2953 = vadd.f32 %v2643, %v2841
      %v2954 = vadd.f32 %v2644, %v2846
      %v2955 = vadd.f32 %v2645, %v2849
      %v2956 = vadd.f32 %v2646, %v2854
      %v2957 = vadd.f32 %v2647, %v2857
      %v2958 = vadd.f32 %v2648, %v2862
      %v2959 = vadd.f32 %v2649, %v2865
      %v2960 = vadd.f32 %v2650, %v2870
      %v2961 = vadd.f32 %v2651, %v2873
      %v2962 = vadd.f32 %v2652, %v2878
      %v2963 = vadd.f32 %v2653, %v2881
      %v2964 = vadd.f32 %v2654, %v2886
      %v2965 = vadd.f32 %v2655, %v2889
      %v2966 = vadd.f32 %v2656, %v2894
      %v2967 = vadd.f32 %v2657, %v2897
      %v2968 = vadd.f32 %v2658, %v2902
      %v2969 = vadd.f32 %v2659, %v2905
      %v2970 = vadd.f32 %v2660, %v2910
      %v2971 = vadd.f32 %v2661, %v2913
      %v2972 = vadd.f32 %v2662, %v2918
      %v2973 = vadd.f32 %v2663, %v2921
      %v2974 = vadd.f32 %v2664, %v2926
      %v2975 = vadd.f32 %v2665, %v2929
      %v2976 = vadd.f32 %v2666, %v2934
      %v2977 = vadd.f32 %v2667, %v2937
      %v2978 = vadd.f32 %v2668, %v2942
      %v2979 = vadd.f32 %v2669, %v2945
      %v2980 = vld [vmem:[#allocation2 + $0x20] sm:$0xff]
      %v2981 = vld [vmem:[#allocation2 + $0x28] sm:$0xff]
      %v2982 = vld [vmem:[#allocation2 + $0x30] sm:$0xff]
      %v2983 = vld [vmem:[#allocation2 + $0x38] sm:$0xff]
      %v2984 = vld [vmem:[#allocation2 + $0x40] sm:$0xff]
      %v2985 = vld [vmem:[#allocation2 + $0x48] sm:$0xff]
      %v2986 = vld [vmem:[#allocation2 + $0x50] sm:$0xff]
      %v2987 = vld [vmem:[#allocation2 + $0x58] sm:$0xff]
      %v2988 = vld [vmem:[#allocation2 + $0x60] sm:$0xff]
      %v2989 = vld [vmem:[#allocation2 + $0x68] sm:$0xff]
      %v2990 = vld [vmem:[#allocation2 + $0x70] sm:$0xff]
      %v2991 = vld [vmem:[#allocation2 + $0x78] sm:$0xff]
      %v2992 = vld [vmem:[#allocation2 + $0x80] sm:$0xff]
      %v2993 = vld [vmem:[#allocation2 + $0x88] sm:$0xff]
      %v2994 = vld [vmem:[#allocation2 + $0x90] sm:$0xff]
      %v2995 = vld [vmem:[#allocation2 + $0x98] sm:$0xff]
      %v2996 = vld [vmem:[#allocation2 + $0xa0] sm:$0xff]
      %v2997 = vld [vmem:[#allocation2 + $0xa8] sm:$0xff]
      %v2998 = vld [vmem:[#allocation2 + $0xb0] sm:$0xff]
      %v2999 = vld [vmem:[#allocation2 + $0xb8] sm:$0xff]
      %v3000 = vld [vmem:[#allocation2 + $0xc0] sm:$0xff]
      %v3001 = vld [vmem:[#allocation2 + $0xc8] sm:$0xff]
      %v3002 = vld [vmem:[#allocation2 + $0xd0] sm:$0xff]
      %v3003 = vld [vmem:[#allocation2 + $0xd8] sm:$0xff]
      %v3004 = vld [vmem:[#allocation2 + $0xe0] sm:$0xff]
      %v3005 = vld [vmem:[#allocation2 + $0xe8] sm:$0xff]
      %v3006 = vld [vmem:[#allocation2 + $0xf0] sm:$0xff]
      %v3007 = vld [vmem:[#allocation2 + $0xf8] sm:$0xff]
      %v3008 = vld [vmem:[#allocation2 + $0x100] sm:$0xff]
      %v3009 = vld [vmem:[#allocation2 + $0x108] sm:$0xff]
      %v3010 = vld [vmem:[#allocation2 + $0x110] sm:$0xff]
      %v3011 = vld [vmem:[#allocation2 + $0x118] sm:$0xff]
      %v3012 = vpack.c.bf16 %v2981, %v2980
      %v3013 = vpack.c.bf16 %v2983, %v2982
      %v3014 = vpack.c.bf16 %v2985, %v2984
      %v3015 = vpack.c.bf16 %v2987, %v2986
      %v3016 = vpack.c.bf16 %v2989, %v2988
      %v3017 = vpack.c.bf16 %v2991, %v2990
      %v3018 = vpack.c.bf16 %v2993, %v2992
      %v3019 = vpack.c.bf16 %v2995, %v2994
      %v3020 = vpack.c.bf16 %v2997, %v2996
      %v3021 = vpack.c.bf16 %v2999, %v2998
      %v3022 = vpack.c.bf16 %v3001, %v3000
      %v3023 = vpack.c.bf16 %v3003, %v3002
      %v3024 = vpack.c.bf16 %v3005, %v3004
      %v3025 = vpack.c.bf16 %v3007, %v3006
      %v3026 = vpack.c.bf16 %v3009, %v3008
      %v3027 = vpack.c.bf16 %v3011, %v3010
      %s3028 = scalar_lea.vmem %s3, 8
      %v3029 = vld [vmem:[%s3028] sm:$0x3]
      %v3031 = vsel %vm511, %v3012, 0
      %v3034 = vsel %vm511, %v3013, 0
      %v3037 = vsel %vm511, %v3014, 0
      %v3040 = vsel %vm511, %v3015, 0
      %v3043 = vsel %vm511, %v3016, 0
      %v3046 = vsel %vm511, %v3017, 0
      %v3049 = vsel %vm511, %v3018, 0
      %v3052 = vsel %vm511, %v3019, 0
      %v3055 = vsel %vm511, %v3020, 0
      %v3058 = vsel %vm511, %v3021, 0
      %v3061 = vsel %vm511, %v3022, 0
      %v3064 = vsel %vm511, %v3023, 0
      %v3067 = vsel %vm511, %v3024, 0
      %v3070 = vsel %vm511, %v3025, 0
      %v3073 = vsel %vm511, %v3026, 0
      %v3076 = vsel %vm511, %v3027, 0
      %v3079 = vsel %vm560, %v3029, 0
      %3081 = vmatprep.subr.bf16.mxu0 0
      %3082 = vmatpush1.bf16.msra.mxu0 0
      %3083 = vmatprep.subr.bf16.mxu0 0
      %3084 = vmatpush1.bf16.msra.mxu0 0
      %3085 = vmatprep.subr.bf16.mxu0 0
      %3086 = vmatpush1.bf16.msra.mxu0 0
      %3087 = vmatprep.subr.bf16.mxu0 0
      %3088 = vmatpush1.bf16.msra.mxu0 0
      %3089 = vmatprep.subr.bf16.mxu0 0
      %3090 = vmatpush1.bf16.msra.mxu0 0
      %3091 = vmatprep.subr.bf16.mxu0 0
      %3092 = vmatpush1.bf16.msra.mxu0 0
      %3093 = vmatprep.subr.bf16.mxu0 0
      %3094 = vmatpush1.bf16.msra.mxu0 0
      %3095 = vmatprep.subr.bf16.mxu0 0
      %3096 = vmatpush1.bf16.msra.mxu0 %v3079
      %3097 = vmatprep.subr.bf16.mxu0 0
      %3098 = vmatpush2.bf16.msra.mxu0 0
      %3099 = vmatprep.subr.bf16.mxu0 0
      %3100 = vmatpush2.bf16.msra.mxu0 0
      %3101 = vmatprep.subr.bf16.mxu0 0
      %3102 = vmatpush2.bf16.msra.mxu0 0
      %3103 = vmatprep.subr.bf16.mxu0 0
      %3104 = vmatpush2.bf16.msra.mxu0 0
      %3105 = vmatprep.subr.bf16.mxu0 0
      %3106 = vmatpush2.bf16.msra.mxu0 0
      %3107 = vmatprep.subr.bf16.mxu0 0
      %3108 = vmatpush2.bf16.msra.mxu0 0
      %3109 = vmatprep.subr.bf16.mxu0 0
      %3110 = vmatpush2.bf16.msra.mxu0 0
      %3111 = vmatprep.subr.bf16.mxu0 0
      %3112 = vmatpush2.bf16.msra.mxu0 0
      %3113 = vmatprep.mubr.bf16.mxu0 0
      %3114 = vmatmul.mubr.bf16.gmra.mxu0 %v3031
      %v3115 = vpop.f32.mrf.mxu0
      %v3116 = vadd.f32 0.0, %v3115
      %v3117 = vpop.f32.mrf.mxu0
      %v3118 = vpop.f32.mrf.mxu0
      %v3119 = vadd.f32 0.0, %v3118
      %v3120 = vpop.f32.mrf.mxu0
      %3121 = vmatprep.mubr.bf16.mxu0 0
      %3122 = vmatmul.mubr.bf16.gmra.mxu0 %v3034
      %v3123 = vpop.f32.mrf.mxu0
      %v3124 = vadd.f32 0.0, %v3123
      %v3125 = vpop.f32.mrf.mxu0
      %v3126 = vpop.f32.mrf.mxu0
      %v3127 = vadd.f32 0.0, %v3126
      %v3128 = vpop.f32.mrf.mxu0
      %3129 = vmatprep.mubr.bf16.mxu0 0
      %3130 = vmatmul.mubr.bf16.gmra.mxu0 %v3037
      %v3131 = vpop.f32.mrf.mxu0
      %v3132 = vadd.f32 0.0, %v3131
      %v3133 = vpop.f32.mrf.mxu0
      %v3134 = vpop.f32.mrf.mxu0
      %v3135 = vadd.f32 0.0, %v3134
      %v3136 = vpop.f32.mrf.mxu0
      %3137 = vmatprep.mubr.bf16.mxu0 0
      %3138 = vmatmul.mubr.bf16.gmra.mxu0 %v3040
      %v3139 = vpop.f32.mrf.mxu0
      %v3140 = vadd.f32 0.0, %v3139
      %v3141 = vpop.f32.mrf.mxu0
      %v3142 = vpop.f32.mrf.mxu0
      %v3143 = vadd.f32 0.0, %v3142
      %v3144 = vpop.f32.mrf.mxu0
      %3145 = vmatprep.mubr.bf16.mxu0 0
      %3146 = vmatmul.mubr.bf16.gmra.mxu0 %v3043
      %v3147 = vpop.f32.mrf.mxu0
      %v3148 = vadd.f32 0.0, %v3147
      %v3149 = vpop.f32.mrf.mxu0
      %v3150 = vpop.f32.mrf.mxu0
      %v3151 = vadd.f32 0.0, %v3150
      %v3152 = vpop.f32.mrf.mxu0
      %3153 = vmatprep.mubr.bf16.mxu0 0
      %3154 = vmatmul.mubr.bf16.gmra.mxu0 %v3046
      %v3155 = vpop.f32.mrf.mxu0
      %v3156 = vadd.f32 0.0, %v3155
      %v3157 = vpop.f32.mrf.mxu0
      %v3158 = vpop.f32.mrf.mxu0
      %v3159 = vadd.f32 0.0, %v3158
      %v3160 = vpop.f32.mrf.mxu0
      %3161 = vmatprep.mubr.bf16.mxu0 0
      %3162 = vmatmul.mubr.bf16.gmra.mxu0 %v3049
      %v3163 = vpop.f32.mrf.mxu0
      %v3164 = vadd.f32 0.0, %v3163
      %v3165 = vpop.f32.mrf.mxu0
      %v3166 = vpop.f32.mrf.mxu0
      %v3167 = vadd.f32 0.0, %v3166
      %v3168 = vpop.f32.mrf.mxu0
      %3169 = vmatprep.mubr.bf16.mxu0 0
      %3170 = vmatmul.mubr.bf16.gmra.mxu0 %v3052
      %v3171 = vpop.f32.mrf.mxu0
      %v3172 = vadd.f32 0.0, %v3171
      %v3173 = vpop.f32.mrf.mxu0
      %v3174 = vpop.f32.mrf.mxu0
      %v3175 = vadd.f32 0.0, %v3174
      %v3176 = vpop.f32.mrf.mxu0
      %3177 = vmatprep.mubr.bf16.mxu0 0
      %3178 = vmatmul.mubr.bf16.gmra.mxu0 %v3055
      %v3179 = vpop.f32.mrf.mxu0
      %v3180 = vadd.f32 0.0, %v3179
      %v3181 = vpop.f32.mrf.mxu0
      %v3182 = vpop.f32.mrf.mxu0
      %v3183 = vadd.f32 0.0, %v3182
      %v3184 = vpop.f32.mrf.mxu0
      %3185 = vmatprep.mubr.bf16.mxu0 0
      %3186 = vmatmul.mubr.bf16.gmra.mxu0 %v3058
      %v3187 = vpop.f32.mrf.mxu0
      %v3188 = vadd.f32 0.0, %v3187
      %v3189 = vpop.f32.mrf.mxu0
      %v3190 = vpop.f32.mrf.mxu0
      %v3191 = vadd.f32 0.0, %v3190
      %v3192 = vpop.f32.mrf.mxu0
      %3193 = vmatprep.mubr.bf16.mxu0 0
      %3194 = vmatmul.mubr.bf16.gmra.mxu0 %v3061
      %v3195 = vpop.f32.mrf.mxu0
      %v3196 = vadd.f32 0.0, %v3195
      %v3197 = vpop.f32.mrf.mxu0
      %v3198 = vpop.f32.mrf.mxu0
      %v3199 = vadd.f32 0.0, %v3198
      %v3200 = vpop.f32.mrf.mxu0
      %3201 = vmatprep.mubr.bf16.mxu0 0
      %3202 = vmatmul.mubr.bf16.gmra.mxu0 %v3064
      %v3203 = vpop.f32.mrf.mxu0
      %v3204 = vadd.f32 0.0, %v3203
      %v3205 = vpop.f32.mrf.mxu0
      %v3206 = vpop.f32.mrf.mxu0
      %v3207 = vadd.f32 0.0, %v3206
      %v3208 = vpop.f32.mrf.mxu0
      %3209 = vmatprep.mubr.bf16.mxu0 0
      %3210 = vmatmul.mubr.bf16.gmra.mxu0 %v3067
      %v3211 = vpop.f32.mrf.mxu0
      %v3212 = vadd.f32 0.0, %v3211
      %v3213 = vpop.f32.mrf.mxu0
      %v3214 = vpop.f32.mrf.mxu0
      %v3215 = vadd.f32 0.0, %v3214
      %v3216 = vpop.f32.mrf.mxu0
      %3217 = vmatprep.mubr.bf16.mxu0 0
      %3218 = vmatmul.mubr.bf16.gmra.mxu0 %v3070
      %v3219 = vpop.f32.mrf.mxu0
      %v3220 = vadd.f32 0.0, %v3219
      %v3221 = vpop.f32.mrf.mxu0
      %v3222 = vpop.f32.mrf.mxu0
      %v3223 = vadd.f32 0.0, %v3222
      %v3224 = vpop.f32.mrf.mxu0
      %3225 = vmatprep.mubr.bf16.mxu0 0
      %3226 = vmatmul.mubr.bf16.gmra.mxu0 %v3073
      %v3227 = vpop.f32.mrf.mxu0
      %v3228 = vadd.f32 0.0, %v3227
      %v3229 = vpop.f32.mrf.mxu0
      %v3230 = vpop.f32.mrf.mxu0
      %v3231 = vadd.f32 0.0, %v3230
      %v3232 = vpop.f32.mrf.mxu0
      %3233 = vmatprep.mubr.bf16.mxu0 0
      %3234 = vmatmul.mubr.bf16.gmra.mxu0 %v3076
      %v3235 = vpop.f32.mrf.mxu0
      %v3236 = vadd.f32 0.0, %v3235
      %v3237 = vpop.f32.mrf.mxu0
      %v3238 = vpop.f32.mrf.mxu0
      %v3239 = vadd.f32 0.0, %v3238
      %v3240 = vpop.f32.mrf.mxu0
      %3241 = vdwg.mxu0
      %v3242 = vadd.f32 %v2948, %v3116
      %v3243 = vadd.f32 %v2949, %v3119
      %v3244 = vadd.f32 %v2950, %v3124
      %v3245 = vadd.f32 %v2951, %v3127
      %v3246 = vadd.f32 %v2952, %v3132
      %v3247 = vadd.f32 %v2953, %v3135
      %v3248 = vadd.f32 %v2954, %v3140
      %v3249 = vadd.f32 %v2955, %v3143
      %v3250 = vadd.f32 %v2956, %v3148
      %v3251 = vadd.f32 %v2957, %v3151
      %v3252 = vadd.f32 %v2958, %v3156
      %v3253 = vadd.f32 %v2959, %v3159
      %v3254 = vadd.f32 %v2960, %v3164
      %v3255 = vadd.f32 %v2961, %v3167
      %v3256 = vadd.f32 %v2962, %v3172
      %v3257 = vadd.f32 %v2963, %v3175
      %v3258 = vadd.f32 %v2964, %v3180
      %v3259 = vadd.f32 %v2965, %v3183
      %v3260 = vadd.f32 %v2966, %v3188
      %v3261 = vadd.f32 %v2967, %v3191
      %v3262 = vadd.f32 %v2968, %v3196
      %v3263 = vadd.f32 %v2969, %v3199
      %v3264 = vadd.f32 %v2970, %v3204
      %v3265 = vadd.f32 %v2971, %v3207
      %v3266 = vadd.f32 %v2972, %v3212
      %v3267 = vadd.f32 %v2973, %v3215
      %v3268 = vadd.f32 %v2974, %v3220
      %v3269 = vadd.f32 %v2975, %v3223
      %v3270 = vadd.f32 %v2976, %v3228
      %v3271 = vadd.f32 %v2977, %v3231
      %v3272 = vadd.f32 %v2978, %v3236
      %v3273 = vadd.f32 %v2979, %v3239
      %v3274 = vld [vmem:[#allocation2 + $0x21] sm:$0xff]
      %v3275 = vld [vmem:[#allocation2 + $0x29] sm:$0xff]
      %v3276 = vld [vmem:[#allocation2 + $0x31] sm:$0xff]
      %v3277 = vld [vmem:[#allocation2 + $0x39] sm:$0xff]
      %v3278 = vld [vmem:[#allocation2 + $0x41] sm:$0xff]
      %v3279 = vld [vmem:[#allocation2 + $0x49] sm:$0xff]
      %v3280 = vld [vmem:[#allocation2 + $0x51] sm:$0xff]
      %v3281 = vld [vmem:[#allocation2 + $0x59] sm:$0xff]
      %v3282 = vld [vmem:[#allocation2 + $0x61] sm:$0xff]
      %v3283 = vld [vmem:[#allocation2 + $0x69] sm:$0xff]
      %v3284 = vld [vmem:[#allocation2 + $0x71] sm:$0xff]
      %v3285 = vld [vmem:[#allocation2 + $0x79] sm:$0xff]
      %v3286 = vld [vmem:[#allocation2 + $0x81] sm:$0xff]
      %v3287 = vld [vmem:[#allocation2 + $0x89] sm:$0xff]
      %v3288 = vld [vmem:[#allocation2 + $0x91] sm:$0xff]
      %v3289 = vld [vmem:[#allocation2 + $0x99] sm:$0xff]
      %v3290 = vld [vmem:[#allocation2 + $0xa1] sm:$0xff]
      %v3291 = vld [vmem:[#allocation2 + $0xa9] sm:$0xff]
      %v3292 = vld [vmem:[#allocation2 + $0xb1] sm:$0xff]
      %v3293 = vld [vmem:[#allocation2 + $0xb9] sm:$0xff]
      %v3294 = vld [vmem:[#allocation2 + $0xc1] sm:$0xff]
      %v3295 = vld [vmem:[#allocation2 + $0xc9] sm:$0xff]
      %v3296 = vld [vmem:[#allocation2 + $0xd1] sm:$0xff]
      %v3297 = vld [vmem:[#allocation2 + $0xd9] sm:$0xff]
      %v3298 = vld [vmem:[#allocation2 + $0xe1] sm:$0xff]
      %v3299 = vld [vmem:[#allocation2 + $0xe9] sm:$0xff]
      %v3300 = vld [vmem:[#allocation2 + $0xf1] sm:$0xff]
      %v3301 = vld [vmem:[#allocation2 + $0xf9] sm:$0xff]
      %v3302 = vld [vmem:[#allocation2 + $0x101] sm:$0xff]
      %v3303 = vld [vmem:[#allocation2 + $0x109] sm:$0xff]
      %v3304 = vld [vmem:[#allocation2 + $0x111] sm:$0xff]
      %v3305 = vld [vmem:[#allocation2 + $0x119] sm:$0xff]
      %v3306 = vpack.c.bf16 %v3275, %v3274
      %v3307 = vpack.c.bf16 %v3277, %v3276
      %v3308 = vpack.c.bf16 %v3279, %v3278
      %v3309 = vpack.c.bf16 %v3281, %v3280
      %v3310 = vpack.c.bf16 %v3283, %v3282
      %v3311 = vpack.c.bf16 %v3285, %v3284
      %v3312 = vpack.c.bf16 %v3287, %v3286
      %v3313 = vpack.c.bf16 %v3289, %v3288
      %v3314 = vpack.c.bf16 %v3291, %v3290
      %v3315 = vpack.c.bf16 %v3293, %v3292
      %v3316 = vpack.c.bf16 %v3295, %v3294
      %v3317 = vpack.c.bf16 %v3297, %v3296
      %v3318 = vpack.c.bf16 %v3299, %v3298
      %v3319 = vpack.c.bf16 %v3301, %v3300
      %v3320 = vpack.c.bf16 %v3303, %v3302
      %v3321 = vpack.c.bf16 %v3305, %v3304
      %v3322 = vmul.bf16 %v3306, %v2376
      %v3323 = vmul.bf16 %v3307, %v2377
      %v3324 = vmul.bf16 %v3308, %v2378
      %v3325 = vmul.bf16 %v3309, %v2379
      %v3326 = vmul.bf16 %v3310, %v2380
      %v3327 = vmul.bf16 %v3311, %v2381
      %v3328 = vmul.bf16 %v3312, %v2382
      %v3329 = vmul.bf16 %v3313, %v2383
      %v3330 = vmul.bf16 %v3314, %v2384
      %v3331 = vmul.bf16 %v3315, %v2385
      %v3332 = vmul.bf16 %v3316, %v2386
      %v3333 = vmul.bf16 %v3317, %v2387
      %v3334 = vmul.bf16 %v3318, %v2388
      %v3335 = vmul.bf16 %v3319, %v2389
      %v3336 = vmul.bf16 %v3320, %v2390
      %v3337 = vmul.bf16 %v3321, %v2391
      %s3338 = scalar_lea.vmem %s3, 10
      %v3339 = vld [vmem:[%s3338] sm:$0x3]
      %v3341 = vsel %vm511, %v3322, 0
      %v3344 = vsel %vm511, %v3323, 0
      %v3347 = vsel %vm511, %v3324, 0
      %v3350 = vsel %vm511, %v3325, 0
      %v3353 = vsel %vm511, %v3326, 0
      %v3356 = vsel %vm511, %v3327, 0
      %v3359 = vsel %vm511, %v3328, 0
      %v3362 = vsel %vm511, %v3329, 0
      %v3365 = vsel %vm511, %v3330, 0
      %v3368 = vsel %vm511, %v3331, 0
      %v3371 = vsel %vm511, %v3332, 0
      %v3374 = vsel %vm511, %v3333, 0
      %v3377 = vsel %vm511, %v3334, 0
      %v3380 = vsel %vm511, %v3335, 0
      %v3383 = vsel %vm511, %v3336, 0
      %v3386 = vsel %vm511, %v3337, 0
      %v3389 = vsel %vm560, %v3339, 0
      %3391 = vmatprep.subr.bf16.mxu0 0
      %3392 = vmatpush1.bf16.msra.mxu0 0
      %3393 = vmatprep.subr.bf16.mxu0 0
      %3394 = vmatpush1.bf16.msra.mxu0 0
      %3395 = vmatprep.subr.bf16.mxu0 0
      %3396 = vmatpush1.bf16.msra.mxu0 0
      %3397 = vmatprep.subr.bf16.mxu0 0
      %3398 = vmatpush1.bf16.msra.mxu0 0
      %3399 = vmatprep.subr.bf16.mxu0 0
      %3400 = vmatpush1.bf16.msra.mxu0 0
      %3401 = vmatprep.subr.bf16.mxu0 0
      %3402 = vmatpush1.bf16.msra.mxu0 0
      %3403 = vmatprep.subr.bf16.mxu0 0
      %3404 = vmatpush1.bf16.msra.mxu0 0
      %3405 = vmatprep.subr.bf16.mxu0 0
      %3406 = vmatpush1.bf16.msra.mxu0 %v3389
      %3407 = vmatprep.subr.bf16.mxu0 0
      %3408 = vmatpush2.bf16.msra.mxu0 0
      %3409 = vmatprep.subr.bf16.mxu0 0
      %3410 = vmatpush2.bf16.msra.mxu0 0
      %3411 = vmatprep.subr.bf16.mxu0 0
      %3412 = vmatpush2.bf16.msra.mxu0 0
      %3413 = vmatprep.subr.bf16.mxu0 0
      %3414 = vmatpush2.bf16.msra.mxu0 0
      %3415 = vmatprep.subr.bf16.mxu0 0
      %3416 = vmatpush2.bf16.msra.mxu0 0
      %3417 = vmatprep.subr.bf16.mxu0 0
      %3418 = vmatpush2.bf16.msra.mxu0 0
      %3419 = vmatprep.subr.bf16.mxu0 0
      %3420 = vmatpush2.bf16.msra.mxu0 0
      %3421 = vmatprep.subr.bf16.mxu0 0
      %3422 = vmatpush2.bf16.msra.mxu0 0
      %3423 = vmatprep.mubr.bf16.mxu0 0
      %3424 = vmatmul.mubr.bf16.gmra.mxu0 %v3341
      %v3425 = vpop.f32.mrf.mxu0
      %v3426 = vadd.f32 0.0, %v3425
      %v3427 = vpop.f32.mrf.mxu0
      %v3428 = vpop.f32.mrf.mxu0
      %v3429 = vadd.f32 0.0, %v3428
      %v3430 = vpop.f32.mrf.mxu0
      %3431 = vmatprep.mubr.bf16.mxu0 0
      %3432 = vmatmul.mubr.bf16.gmra.mxu0 %v3344
      %v3433 = vpop.f32.mrf.mxu0
      %v3434 = vadd.f32 0.0, %v3433
      %v3435 = vpop.f32.mrf.mxu0
      %v3436 = vpop.f32.mrf.mxu0
      %v3437 = vadd.f32 0.0, %v3436
      %v3438 = vpop.f32.mrf.mxu0
      %3439 = vmatprep.mubr.bf16.mxu0 0
      %3440 = vmatmul.mubr.bf16.gmra.mxu0 %v3347
      %v3441 = vpop.f32.mrf.mxu0
      %v3442 = vadd.f32 0.0, %v3441
      %v3443 = vpop.f32.mrf.mxu0
      %v3444 = vpop.f32.mrf.mxu0
      %v3445 = vadd.f32 0.0, %v3444
      %v3446 = vpop.f32.mrf.mxu0
      %3447 = vmatprep.mubr.bf16.mxu0 0
      %3448 = vmatmul.mubr.bf16.gmra.mxu0 %v3350
      %v3449 = vpop.f32.mrf.mxu0
      %v3450 = vadd.f32 0.0, %v3449
      %v3451 = vpop.f32.mrf.mxu0
      %v3452 = vpop.f32.mrf.mxu0
      %v3453 = vadd.f32 0.0, %v3452
      %v3454 = vpop.f32.mrf.mxu0
      %3455 = vmatprep.mubr.bf16.mxu0 0
      %3456 = vmatmul.mubr.bf16.gmra.mxu0 %v3353
      %v3457 = vpop.f32.mrf.mxu0
      %v3458 = vadd.f32 0.0, %v3457
      %v3459 = vpop.f32.mrf.mxu0
      %v3460 = vpop.f32.mrf.mxu0
      %v3461 = vadd.f32 0.0, %v3460
      %v3462 = vpop.f32.mrf.mxu0
      %3463 = vmatprep.mubr.bf16.mxu0 0
      %3464 = vmatmul.mubr.bf16.gmra.mxu0 %v3356
      %v3465 = vpop.f32.mrf.mxu0
      %v3466 = vadd.f32 0.0, %v3465
      %v3467 = vpop.f32.mrf.mxu0
      %v3468 = vpop.f32.mrf.mxu0
      %v3469 = vadd.f32 0.0, %v3468
      %v3470 = vpop.f32.mrf.mxu0
      %3471 = vmatprep.mubr.bf16.mxu0 0
      %3472 = vmatmul.mubr.bf16.gmra.mxu0 %v3359
      %v3473 = vpop.f32.mrf.mxu0
      %v3474 = vadd.f32 0.0, %v3473
      %v3475 = vpop.f32.mrf.mxu0
      %v3476 = vpop.f32.mrf.mxu0
      %v3477 = vadd.f32 0.0, %v3476
      %v3478 = vpop.f32.mrf.mxu0
      %3479 = vmatprep.mubr.bf16.mxu0 0
      %3480 = vmatmul.mubr.bf16.gmra.mxu0 %v3362
      %v3481 = vpop.f32.mrf.mxu0
      %v3482 = vadd.f32 0.0, %v3481
      %v3483 = vpop.f32.mrf.mxu0
      %v3484 = vpop.f32.mrf.mxu0
      %v3485 = vadd.f32 0.0, %v3484
      %v3486 = vpop.f32.mrf.mxu0
      %3487 = vmatprep.mubr.bf16.mxu0 0
      %3488 = vmatmul.mubr.bf16.gmra.mxu0 %v3365
      %v3489 = vpop.f32.mrf.mxu0
      %v3490 = vadd.f32 0.0, %v3489
      %v3491 = vpop.f32.mrf.mxu0
      %v3492 = vpop.f32.mrf.mxu0
      %v3493 = vadd.f32 0.0, %v3492
      %v3494 = vpop.f32.mrf.mxu0
      %3495 = vmatprep.mubr.bf16.mxu0 0
      %3496 = vmatmul.mubr.bf16.gmra.mxu0 %v3368
      %v3497 = vpop.f32.mrf.mxu0
      %v3498 = vadd.f32 0.0, %v3497
      %v3499 = vpop.f32.mrf.mxu0
      %v3500 = vpop.f32.mrf.mxu0
      %v3501 = vadd.f32 0.0, %v3500
      %v3502 = vpop.f32.mrf.mxu0
      %3503 = vmatprep.mubr.bf16.mxu0 0
      %3504 = vmatmul.mubr.bf16.gmra.mxu0 %v3371
      %v3505 = vpop.f32.mrf.mxu0
      %v3506 = vadd.f32 0.0, %v3505
      %v3507 = vpop.f32.mrf.mxu0
      %v3508 = vpop.f32.mrf.mxu0
      %v3509 = vadd.f32 0.0, %v3508
      %v3510 = vpop.f32.mrf.mxu0
      %3511 = vmatprep.mubr.bf16.mxu0 0
      %3512 = vmatmul.mubr.bf16.gmra.mxu0 %v3374
      %v3513 = vpop.f32.mrf.mxu0
      %v3514 = vadd.f32 0.0, %v3513
      %v3515 = vpop.f32.mrf.mxu0
      %v3516 = vpop.f32.mrf.mxu0
      %v3517 = vadd.f32 0.0, %v3516
      %v3518 = vpop.f32.mrf.mxu0
      %3519 = vmatprep.mubr.bf16.mxu0 0
      %3520 = vmatmul.mubr.bf16.gmra.mxu0 %v3377
      %v3521 = vpop.f32.mrf.mxu0
      %v3522 = vadd.f32 0.0, %v3521
      %v3523 = vpop.f32.mrf.mxu0
      %v3524 = vpop.f32.mrf.mxu0
      %v3525 = vadd.f32 0.0, %v3524
      %v3526 = vpop.f32.mrf.mxu0
      %3527 = vmatprep.mubr.bf16.mxu0 0
      %3528 = vmatmul.mubr.bf16.gmra.mxu0 %v3380
      %v3529 = vpop.f32.mrf.mxu0
      %v3530 = vadd.f32 0.0, %v3529
      %v3531 = vpop.f32.mrf.mxu0
      %v3532 = vpop.f32.mrf.mxu0
      %v3533 = vadd.f32 0.0, %v3532
      %v3534 = vpop.f32.mrf.mxu0
      %3535 = vmatprep.mubr.bf16.mxu0 0
      %3536 = vmatmul.mubr.bf16.gmra.mxu0 %v3383
      %v3537 = vpop.f32.mrf.mxu0
      %v3538 = vadd.f32 0.0, %v3537
      %v3539 = vpop.f32.mrf.mxu0
      %v3540 = vpop.f32.mrf.mxu0
      %v3541 = vadd.f32 0.0, %v3540
      %v3542 = vpop.f32.mrf.mxu0
      %3543 = vmatprep.mubr.bf16.mxu0 0
      %3544 = vmatmul.mubr.bf16.gmra.mxu0 %v3386
      %v3545 = vpop.f32.mrf.mxu0
      %v3546 = vadd.f32 0.0, %v3545
      %v3547 = vpop.f32.mrf.mxu0
      %v3548 = vpop.f32.mrf.mxu0
      %v3549 = vadd.f32 0.0, %v3548
      %v3550 = vpop.f32.mrf.mxu0
      %3551 = vdwg.mxu0
      %v3552 = vadd.f32 %v3242, %v3426
      %v3553 = vadd.f32 %v3243, %v3429
      %v3554 = vadd.f32 %v3244, %v3434
      %v3555 = vadd.f32 %v3245, %v3437
      %v3556 = vadd.f32 %v3246, %v3442
      %v3557 = vadd.f32 %v3247, %v3445
      %v3558 = vadd.f32 %v3248, %v3450
      %v3559 = vadd.f32 %v3249, %v3453
      %v3560 = vadd.f32 %v3250, %v3458
      %v3561 = vadd.f32 %v3251, %v3461
      %v3562 = vadd.f32 %v3252, %v3466
      %v3563 = vadd.f32 %v3253, %v3469
      %v3564 = vadd.f32 %v3254, %v3474
      %v3565 = vadd.f32 %v3255, %v3477
      %v3566 = vadd.f32 %v3256, %v3482
      %v3567 = vadd.f32 %v3257, %v3485
      %v3568 = vadd.f32 %v3258, %v3490
      %v3569 = vadd.f32 %v3259, %v3493
      %v3570 = vadd.f32 %v3260, %v3498
      %v3571 = vadd.f32 %v3261, %v3501
      %v3572 = vadd.f32 %v3262, %v3506
      %v3573 = vadd.f32 %v3263, %v3509
      %v3574 = vadd.f32 %v3264, %v3514
      %v3575 = vadd.f32 %v3265, %v3517
      %v3576 = vadd.f32 %v3266, %v3522
      %v3577 = vadd.f32 %v3267, %v3525
      %v3578 = vadd.f32 %v3268, %v3530
      %v3579 = vadd.f32 %v3269, %v3533
      %v3580 = vadd.f32 %v3270, %v3538
      %v3581 = vadd.f32 %v3271, %v3541
      %v3582 = vadd.f32 %v3272, %v3546
      %v3583 = vadd.f32 %v3273, %v3549
      %v3584 = vld [vmem:[#allocation2 + $0x2f] sm:$0xff]
      %v3585 = vld [vmem:[#allocation2 + $0x37] sm:$0xff]
      %v3586 = vld [vmem:[#allocation2 + $0x3f] sm:$0xff]
      %v3587 = vld [vmem:[#allocation2 + $0x47] sm:$0xff]
      %v3588 = vld [vmem:[#allocation2 + $0x4f] sm:$0xff]
      %v3589 = vld [vmem:[#allocation2 + $0x57] sm:$0xff]
      %v3590 = vld [vmem:[#allocation2 + $0x5f] sm:$0xff]
      %v3591 = vld [vmem:[#allocation2 + $0x67] sm:$0xff]
      %v3592 = vld [vmem:[#allocation2 + $0x6f] sm:$0xff]
      %v3593 = vld [vmem:[#allocation2 + $0x77] sm:$0xff]
      %v3594 = vld [vmem:[#allocation2 + $0x7f] sm:$0xff]
      %v3595 = vld [vmem:[#allocation2 + $0x87] sm:$0xff]
      %v3596 = vld [vmem:[#allocation2 + $0x8f] sm:$0xff]
      %v3597 = vld [vmem:[#allocation2 + $0x97] sm:$0xff]
      %v3598 = vld [vmem:[#allocation2 + $0x9f] sm:$0xff]
      %v3599 = vld [vmem:[#allocation2 + $0xa7] sm:$0xff]
      %v3600 = vld [vmem:[#allocation2 + $0xaf] sm:$0xff]
      %v3601 = vld [vmem:[#allocation2 + $0xb7] sm:$0xff]
      %v3602 = vld [vmem:[#allocation2 + $0xbf] sm:$0xff]
      %v3603 = vld [vmem:[#allocation2 + $0xc7] sm:$0xff]
      %v3604 = vld [vmem:[#allocation2 + $0xcf] sm:$0xff]
      %v3605 = vld [vmem:[#allocation2 + $0xd7] sm:$0xff]
      %v3606 = vld [vmem:[#allocation2 + $0xdf] sm:$0xff]
      %v3607 = vld [vmem:[#allocation2 + $0xe7] sm:$0xff]
      %v3608 = vld [vmem:[#allocation2 + $0xef] sm:$0xff]
      %v3609 = vld [vmem:[#allocation2 + $0xf7] sm:$0xff]
      %v3610 = vld [vmem:[#allocation2 + $0xff] sm:$0xff]
      %v3611 = vld [vmem:[#allocation2 + $0x107] sm:$0xff]
      %v3612 = vld [vmem:[#allocation2 + $0x10f] sm:$0xff]
      %v3613 = vld [vmem:[#allocation2 + $0x117] sm:$0xff]
      %v3614 = vld [vmem:[#allocation2 + $0x11f] sm:$0xff]
      %v3615 = vld [vmem:[#allocation2 + $0x127] sm:$0xff]
      %v3616 = vpack.c.bf16 %v3585, %v3584
      %v3617 = vpack.c.bf16 %v3587, %v3586
      %v3618 = vpack.c.bf16 %v3589, %v3588
      %v3619 = vpack.c.bf16 %v3591, %v3590
      %v3620 = vpack.c.bf16 %v3593, %v3592
      %v3621 = vpack.c.bf16 %v3595, %v3594
      %v3622 = vpack.c.bf16 %v3597, %v3596
      %v3623 = vpack.c.bf16 %v3599, %v3598
      %v3624 = vpack.c.bf16 %v3601, %v3600
      %v3625 = vpack.c.bf16 %v3603, %v3602
      %v3626 = vpack.c.bf16 %v3605, %v3604
      %v3627 = vpack.c.bf16 %v3607, %v3606
      %v3628 = vpack.c.bf16 %v3609, %v3608
      %v3629 = vpack.c.bf16 %v3611, %v3610
      %v3630 = vpack.c.bf16 %v3613, %v3612
      %v3631 = vpack.c.bf16 %v3615, %v3614
      %v3632 = vmul.bf16 %v3616, %v1357
      %v3633 = vmul.bf16 %v3617, %v1358
      %v3634 = vmul.bf16 %v3618, %v1359
      %v3635 = vmul.bf16 %v3619, %v1360
      %v3636 = vmul.bf16 %v3620, %v1361
      %v3637 = vmul.bf16 %v3621, %v1362
      %v3638 = vmul.bf16 %v3622, %v1363
      %v3639 = vmul.bf16 %v3623, %v1364
      %v3640 = vmul.bf16 %v3624, %v1365
      %v3641 = vmul.bf16 %v3625, %v1366
      %v3642 = vmul.bf16 %v3626, %v1367
      %v3643 = vmul.bf16 %v3627, %v1368
      %v3644 = vmul.bf16 %v3628, %v1369
      %v3645 = vmul.bf16 %v3629, %v1370
      %v3646 = vmul.bf16 %v3630, %v1371
      %v3647 = vmul.bf16 %v3631, %v1372
      %s3648 = scalar_lea.vmem %s3, 12
      %v3649 = vld [vmem:[%s3648] sm:$0x3]
      %v3651 = vsel %vm511, %v3632, 0
      %v3654 = vsel %vm511, %v3633, 0
      %v3657 = vsel %vm511, %v3634, 0
      %v3660 = vsel %vm511, %v3635, 0
      %v3663 = vsel %vm511, %v3636, 0
      %v3666 = vsel %vm511, %v3637, 0
      %v3669 = vsel %vm511, %v3638, 0
      %v3672 = vsel %vm511, %v3639, 0
      %v3675 = vsel %vm511, %v3640, 0
      %v3678 = vsel %vm511, %v3641, 0
      %v3681 = vsel %vm511, %v3642, 0
      %v3684 = vsel %vm511, %v3643, 0
      %v3687 = vsel %vm511, %v3644, 0
      %v3690 = vsel %vm511, %v3645, 0
      %v3693 = vsel %vm511, %v3646, 0
      %v3696 = vsel %vm511, %v3647, 0
      %v3699 = vsel %vm560, %v3649, 0
      %3701 = vmatprep.subr.bf16.mxu0 0
      %3702 = vmatpush1.bf16.msra.mxu0 0
      %3703 = vmatprep.subr.bf16.mxu0 0
      %3704 = vmatpush1.bf16.msra.mxu0 0
      %3705 = vmatprep.subr.bf16.mxu0 0
      %3706 = vmatpush1.bf16.msra.mxu0 0
      %3707 = vmatprep.subr.bf16.mxu0 0
      %3708 = vmatpush1.bf16.msra.mxu0 0
      %3709 = vmatprep.subr.bf16.mxu0 0
      %3710 = vmatpush1.bf16.msra.mxu0 0
      %3711 = vmatprep.subr.bf16.mxu0 0
      %3712 = vmatpush1.bf16.msra.mxu0 0
      %3713 = vmatprep.subr.bf16.mxu0 0
      %3714 = vmatpush1.bf16.msra.mxu0 0
      %3715 = vmatprep.subr.bf16.mxu0 0
      %3716 = vmatpush1.bf16.msra.mxu0 %v3699
      %3717 = vmatprep.subr.bf16.mxu0 0
      %3718 = vmatpush2.bf16.msra.mxu0 0
      %3719 = vmatprep.subr.bf16.mxu0 0
      %3720 = vmatpush2.bf16.msra.mxu0 0
      %3721 = vmatprep.subr.bf16.mxu0 0
      %3722 = vmatpush2.bf16.msra.mxu0 0
      %3723 = vmatprep.subr.bf16.mxu0 0
      %3724 = vmatpush2.bf16.msra.mxu0 0
      %3725 = vmatprep.subr.bf16.mxu0 0
      %3726 = vmatpush2.bf16.msra.mxu0 0
      %3727 = vmatprep.subr.bf16.mxu0 0
      %3728 = vmatpush2.bf16.msra.mxu0 0
      %3729 = vmatprep.subr.bf16.mxu0 0
      %3730 = vmatpush2.bf16.msra.mxu0 0
      %3731 = vmatprep.subr.bf16.mxu0 0
      %3732 = vmatpush2.bf16.msra.mxu0 0
      %3733 = vmatprep.mubr.bf16.mxu0 0
      %3734 = vmatmul.mubr.bf16.gmra.mxu0 %v3651
      %v3735 = vpop.f32.mrf.mxu0
      %v3736 = vadd.f32 0.0, %v3735
      %v3737 = vpop.f32.mrf.mxu0
      %v3738 = vpop.f32.mrf.mxu0
      %v3739 = vadd.f32 0.0, %v3738
      %v3740 = vpop.f32.mrf.mxu0
      %3741 = vmatprep.mubr.bf16.mxu0 0
      %3742 = vmatmul.mubr.bf16.gmra.mxu0 %v3654
      %v3743 = vpop.f32.mrf.mxu0
      %v3744 = vadd.f32 0.0, %v3743
      %v3745 = vpop.f32.mrf.mxu0
      %v3746 = vpop.f32.mrf.mxu0
      %v3747 = vadd.f32 0.0, %v3746
      %v3748 = vpop.f32.mrf.mxu0
      %3749 = vmatprep.mubr.bf16.mxu0 0
      %3750 = vmatmul.mubr.bf16.gmra.mxu0 %v3657
      %v3751 = vpop.f32.mrf.mxu0
      %v3752 = vadd.f32 0.0, %v3751
      %v3753 = vpop.f32.mrf.mxu0
      %v3754 = vpop.f32.mrf.mxu0
      %v3755 = vadd.f32 0.0, %v3754
      %v3756 = vpop.f32.mrf.mxu0
      %3757 = vmatprep.mubr.bf16.mxu0 0
      %3758 = vmatmul.mubr.bf16.gmra.mxu0 %v3660
      %v3759 = vpop.f32.mrf.mxu0
      %v3760 = vadd.f32 0.0, %v3759
      %v3761 = vpop.f32.mrf.mxu0
      %v3762 = vpop.f32.mrf.mxu0
      %v3763 = vadd.f32 0.0, %v3762
      %v3764 = vpop.f32.mrf.mxu0
      %3765 = vmatprep.mubr.bf16.mxu0 0
      %3766 = vmatmul.mubr.bf16.gmra.mxu0 %v3663
      %v3767 = vpop.f32.mrf.mxu0
      %v3768 = vadd.f32 0.0, %v3767
      %v3769 = vpop.f32.mrf.mxu0
      %v3770 = vpop.f32.mrf.mxu0
      %v3771 = vadd.f32 0.0, %v3770
      %v3772 = vpop.f32.mrf.mxu0
      %3773 = vmatprep.mubr.bf16.mxu0 0
      %3774 = vmatmul.mubr.bf16.gmra.mxu0 %v3666
      %v3775 = vpop.f32.mrf.mxu0
      %v3776 = vadd.f32 0.0, %v3775
      %v3777 = vpop.f32.mrf.mxu0
      %v3778 = vpop.f32.mrf.mxu0
      %v3779 = vadd.f32 0.0, %v3778
      %v3780 = vpop.f32.mrf.mxu0
      %3781 = vmatprep.mubr.bf16.mxu0 0
      %3782 = vmatmul.mubr.bf16.gmra.mxu0 %v3669
      %v3783 = vpop.f32.mrf.mxu0
      %v3784 = vadd.f32 0.0, %v3783
      %v3785 = vpop.f32.mrf.mxu0
      %v3786 = vpop.f32.mrf.mxu0
      %v3787 = vadd.f32 0.0, %v3786
      %v3788 = vpop.f32.mrf.mxu0
      %3789 = vmatprep.mubr.bf16.mxu0 0
      %3790 = vmatmul.mubr.bf16.gmra.mxu0 %v3672
      %v3791 = vpop.f32.mrf.mxu0
      %v3792 = vadd.f32 0.0, %v3791
      %v3793 = vpop.f32.mrf.mxu0
      %v3794 = vpop.f32.mrf.mxu0
      %v3795 = vadd.f32 0.0, %v3794
      %v3796 = vpop.f32.mrf.mxu0
      %3797 = vmatprep.mubr.bf16.mxu0 0
      %3798 = vmatmul.mubr.bf16.gmra.mxu0 %v3675
      %v3799 = vpop.f32.mrf.mxu0
      %v3800 = vadd.f32 0.0, %v3799
      %v3801 = vpop.f32.mrf.mxu0
      %v3802 = vpop.f32.mrf.mxu0
      %v3803 = vadd.f32 0.0, %v3802
      %v3804 = vpop.f32.mrf.mxu0
      %3805 = vmatprep.mubr.bf16.mxu0 0
      %3806 = vmatmul.mubr.bf16.gmra.mxu0 %v3678
      %v3807 = vpop.f32.mrf.mxu0
      %v3808 = vadd.f32 0.0, %v3807
      %v3809 = vpop.f32.mrf.mxu0
      %v3810 = vpop.f32.mrf.mxu0
      %v3811 = vadd.f32 0.0, %v3810
      %v3812 = vpop.f32.mrf.mxu0
      %3813 = vmatprep.mubr.bf16.mxu0 0
      %3814 = vmatmul.mubr.bf16.gmra.mxu0 %v3681
      %v3815 = vpop.f32.mrf.mxu0
      %v3816 = vadd.f32 0.0, %v3815
      %v3817 = vpop.f32.mrf.mxu0
      %v3818 = vpop.f32.mrf.mxu0
      %v3819 = vadd.f32 0.0, %v3818
      %v3820 = vpop.f32.mrf.mxu0
      %3821 = vmatprep.mubr.bf16.mxu0 0
      %3822 = vmatmul.mubr.bf16.gmra.mxu0 %v3684
      %v3823 = vpop.f32.mrf.mxu0
      %v3824 = vadd.f32 0.0, %v3823
      %v3825 = vpop.f32.mrf.mxu0
      %v3826 = vpop.f32.mrf.mxu0
      %v3827 = vadd.f32 0.0, %v3826
      %v3828 = vpop.f32.mrf.mxu0
      %3829 = vmatprep.mubr.bf16.mxu0 0
      %3830 = vmatmul.mubr.bf16.gmra.mxu0 %v3687
      %v3831 = vpop.f32.mrf.mxu0
      %v3832 = vadd.f32 0.0, %v3831
      %v3833 = vpop.f32.mrf.mxu0
      %v3834 = vpop.f32.mrf.mxu0
      %v3835 = vadd.f32 0.0, %v3834
      %v3836 = vpop.f32.mrf.mxu0
      %3837 = vmatprep.mubr.bf16.mxu0 0
      %3838 = vmatmul.mubr.bf16.gmra.mxu0 %v3690
      %v3839 = vpop.f32.mrf.mxu0
      %v3840 = vadd.f32 0.0, %v3839
      %v3841 = vpop.f32.mrf.mxu0
      %v3842 = vpop.f32.mrf.mxu0
      %v3843 = vadd.f32 0.0, %v3842
      %v3844 = vpop.f32.mrf.mxu0
      %3845 = vmatprep.mubr.bf16.mxu0 0
      %3846 = vmatmul.mubr.bf16.gmra.mxu0 %v3693
      %v3847 = vpop.f32.mrf.mxu0
      %v3848 = vadd.f32 0.0, %v3847
      %v3849 = vpop.f32.mrf.mxu0
      %v3850 = vpop.f32.mrf.mxu0
      %v3851 = vadd.f32 0.0, %v3850
      %v3852 = vpop.f32.mrf.mxu0
      %3853 = vmatprep.mubr.bf16.mxu0 0
      %3854 = vmatmul.mubr.bf16.gmra.mxu0 %v3696
      %v3855 = vpop.f32.mrf.mxu0
      %v3856 = vadd.f32 0.0, %v3855
      %v3857 = vpop.f32.mrf.mxu0
      %v3858 = vpop.f32.mrf.mxu0
      %v3859 = vadd.f32 0.0, %v3858
      %v3860 = vpop.f32.mrf.mxu0
      %3861 = vdwg.mxu0
      %v3862 = vadd.f32 %v3552, %v3736
      %v3863 = vadd.f32 %v3553, %v3739
      %v3864 = vadd.f32 %v3554, %v3744
      %v3865 = vadd.f32 %v3555, %v3747
      %v3866 = vadd.f32 %v3556, %v3752
      %v3867 = vadd.f32 %v3557, %v3755
      %v3868 = vadd.f32 %v3558, %v3760
      %v3869 = vadd.f32 %v3559, %v3763
      %v3870 = vadd.f32 %v3560, %v3768
      %v3871 = vadd.f32 %v3561, %v3771
      %v3872 = vadd.f32 %v3562, %v3776
      %v3873 = vadd.f32 %v3563, %v3779
      %v3874 = vadd.f32 %v3564, %v3784
      %v3875 = vadd.f32 %v3565, %v3787
      %v3876 = vadd.f32 %v3566, %v3792
      %v3877 = vadd.f32 %v3567, %v3795
      %v3878 = vadd.f32 %v3568, %v3800
      %v3879 = vadd.f32 %v3569, %v3803
      %v3880 = vadd.f32 %v3570, %v3808
      %v3881 = vadd.f32 %v3571, %v3811
      %v3882 = vadd.f32 %v3572, %v3816
      %v3883 = vadd.f32 %v3573, %v3819
      %v3884 = vadd.f32 %v3574, %v3824
      %v3885 = vadd.f32 %v3575, %v3827
      %v3886 = vadd.f32 %v3576, %v3832
      %v3887 = vadd.f32 %v3577, %v3835
      %v3888 = vadd.f32 %v3578, %v3840
      %v3889 = vadd.f32 %v3579, %v3843
      %v3890 = vadd.f32 %v3580, %v3848
      %v3891 = vadd.f32 %v3581, %v3851
      %v3892 = vadd.f32 %v3582, %v3856
      %v3893 = vadd.f32 %v3583, %v3859
      %v3894 = vld [vmem:[#allocation2 + $0x30] sm:$0xff]
      %v3895 = vld [vmem:[#allocation2 + $0x38] sm:$0xff]
      %v3896 = vld [vmem:[#allocation2 + $0x40] sm:$0xff]
      %v3897 = vld [vmem:[#allocation2 + $0x48] sm:$0xff]
      %v3898 = vld [vmem:[#allocation2 + $0x50] sm:$0xff]
      %v3899 = vld [vmem:[#allocation2 + $0x58] sm:$0xff]
      %v3900 = vld [vmem:[#allocation2 + $0x60] sm:$0xff]
      %v3901 = vld [vmem:[#allocation2 + $0x68] sm:$0xff]
      %v3902 = vld [vmem:[#allocation2 + $0x70] sm:$0xff]
      %v3903 = vld [vmem:[#allocation2 + $0x78] sm:$0xff]
      %v3904 = vld [vmem:[#allocation2 + $0x80] sm:$0xff]
      %v3905 = vld [vmem:[#allocation2 + $0x88] sm:$0xff]
      %v3906 = vld [vmem:[#allocation2 + $0x90] sm:$0xff]
      %v3907 = vld [vmem:[#allocation2 + $0x98] sm:$0xff]
      %v3908 = vld [vmem:[#allocation2 + $0xa0] sm:$0xff]
      %v3909 = vld [vmem:[#allocation2 + $0xa8] sm:$0xff]
      %v3910 = vld [vmem:[#allocation2 + $0xb0] sm:$0xff]
      %v3911 = vld [vmem:[#allocation2 + $0xb8] sm:$0xff]
      %v3912 = vld [vmem:[#allocation2 + $0xc0] sm:$0xff]
      %v3913 = vld [vmem:[#allocation2 + $0xc8] sm:$0xff]
      %v3914 = vld [vmem:[#allocation2 + $0xd0] sm:$0xff]
      %v3915 = vld [vmem:[#allocation2 + $0xd8] sm:$0xff]
      %v3916 = vld [vmem:[#allocation2 + $0xe0] sm:$0xff]
      %v3917 = vld [vmem:[#allocation2 + $0xe8] sm:$0xff]
      %v3918 = vld [vmem:[#allocation2 + $0xf0] sm:$0xff]
      %v3919 = vld [vmem:[#allocation2 + $0xf8] sm:$0xff]
      %v3920 = vld [vmem:[#allocation2 + $0x100] sm:$0xff]
      %v3921 = vld [vmem:[#allocation2 + $0x108] sm:$0xff]
      %v3922 = vld [vmem:[#allocation2 + $0x110] sm:$0xff]
      %v3923 = vld [vmem:[#allocation2 + $0x118] sm:$0xff]
      %v3924 = vld [vmem:[#allocation2 + $0x120] sm:$0xff]
      %v3925 = vld [vmem:[#allocation2 + $0x128] sm:$0xff]
      %v3926 = vpack.c.bf16 %v3895, %v3894
      %v3927 = vpack.c.bf16 %v3897, %v3896
      %v3928 = vpack.c.bf16 %v3899, %v3898
      %v3929 = vpack.c.bf16 %v3901, %v3900
      %v3930 = vpack.c.bf16 %v3903, %v3902
      %v3931 = vpack.c.bf16 %v3905, %v3904
      %v3932 = vpack.c.bf16 %v3907, %v3906
      %v3933 = vpack.c.bf16 %v3909, %v3908
      %v3934 = vpack.c.bf16 %v3911, %v3910
      %v3935 = vpack.c.bf16 %v3913, %v3912
      %v3936 = vpack.c.bf16 %v3915, %v3914
      %v3937 = vpack.c.bf16 %v3917, %v3916
      %v3938 = vpack.c.bf16 %v3919, %v3918
      %v3939 = vpack.c.bf16 %v3921, %v3920
      %v3940 = vpack.c.bf16 %v3923, %v3922
      %v3941 = vpack.c.bf16 %v3925, %v3924
      %s3942 = scalar_lea.vmem %s3, 14
      %v3943 = vld [vmem:[%s3942] sm:$0x3]
      %v3945 = vsel %vm511, %v3926, 0
      %v3948 = vsel %vm511, %v3927, 0
      %v3951 = vsel %vm511, %v3928, 0
      %v3954 = vsel %vm511, %v3929, 0
      %v3957 = vsel %vm511, %v3930, 0
      %v3960 = vsel %vm511, %v3931, 0
      %v3963 = vsel %vm511, %v3932, 0
      %v3966 = vsel %vm511, %v3933, 0
      %v3969 = vsel %vm511, %v3934, 0
      %v3972 = vsel %vm511, %v3935, 0
      %v3975 = vsel %vm511, %v3936, 0
      %v3978 = vsel %vm511, %v3937, 0
      %v3981 = vsel %vm511, %v3938, 0
      %v3984 = vsel %vm511, %v3939, 0
      %v3987 = vsel %vm511, %v3940, 0
      %v3990 = vsel %vm511, %v3941, 0
      %v3993 = vsel %vm560, %v3943, 0
      %3995 = vmatprep.subr.bf16.mxu0 0
      %3996 = vmatpush1.bf16.msra.mxu0 0
      %3997 = vmatprep.subr.bf16.mxu0 0
      %3998 = vmatpush1.bf16.msra.mxu0 0
      %3999 = vmatprep.subr.bf16.mxu0 0
      %4000 = vmatpush1.bf16.msra.mxu0 0
      %4001 = vmatprep.subr.bf16.mxu0 0
      %4002 = vmatpush1.bf16.msra.mxu0 0
      %4003 = vmatprep.subr.bf16.mxu0 0
      %4004 = vmatpush1.bf16.msra.mxu0 0
      %4005 = vmatprep.subr.bf16.mxu0 0
      %4006 = vmatpush1.bf16.msra.mxu0 0
      %4007 = vmatprep.subr.bf16.mxu0 0
      %4008 = vmatpush1.bf16.msra.mxu0 0
      %4009 = vmatprep.subr.bf16.mxu0 0
      %4010 = vmatpush1.bf16.msra.mxu0 %v3993
      %4011 = vmatprep.subr.bf16.mxu0 0
      %4012 = vmatpush2.bf16.msra.mxu0 0
      %4013 = vmatprep.subr.bf16.mxu0 0
      %4014 = vmatpush2.bf16.msra.mxu0 0
      %4015 = vmatprep.subr.bf16.mxu0 0
      %4016 = vmatpush2.bf16.msra.mxu0 0
      %4017 = vmatprep.subr.bf16.mxu0 0
      %4018 = vmatpush2.bf16.msra.mxu0 0
      %4019 = vmatprep.subr.bf16.mxu0 0
      %4020 = vmatpush2.bf16.msra.mxu0 0
      %4021 = vmatprep.subr.bf16.mxu0 0
      %4022 = vmatpush2.bf16.msra.mxu0 0
      %4023 = vmatprep.subr.bf16.mxu0 0
      %4024 = vmatpush2.bf16.msra.mxu0 0
      %4025 = vmatprep.subr.bf16.mxu0 0
      %4026 = vmatpush2.bf16.msra.mxu0 0
      %4027 = vmatprep.mubr.bf16.mxu0 0
      %4028 = vmatmul.mubr.bf16.gmra.mxu0 %v3945
      %v4029 = vpop.f32.mrf.mxu0
      %v4030 = vadd.f32 0.0, %v4029
      %v4031 = vpop.f32.mrf.mxu0
      %v4032 = vpop.f32.mrf.mxu0
      %v4033 = vadd.f32 0.0, %v4032
      %v4034 = vpop.f32.mrf.mxu0
      %4035 = vmatprep.mubr.bf16.mxu0 0
      %4036 = vmatmul.mubr.bf16.gmra.mxu0 %v3948
      %v4037 = vpop.f32.mrf.mxu0
      %v4038 = vadd.f32 0.0, %v4037
      %v4039 = vpop.f32.mrf.mxu0
      %v4040 = vpop.f32.mrf.mxu0
      %v4041 = vadd.f32 0.0, %v4040
      %v4042 = vpop.f32.mrf.mxu0
      %4043 = vmatprep.mubr.bf16.mxu0 0
      %4044 = vmatmul.mubr.bf16.gmra.mxu0 %v3951
      %v4045 = vpop.f32.mrf.mxu0
      %v4046 = vadd.f32 0.0, %v4045
      %v4047 = vpop.f32.mrf.mxu0
      %v4048 = vpop.f32.mrf.mxu0
      %v4049 = vadd.f32 0.0, %v4048
      %v4050 = vpop.f32.mrf.mxu0
      %4051 = vmatprep.mubr.bf16.mxu0 0
      %4052 = vmatmul.mubr.bf16.gmra.mxu0 %v3954
      %v4053 = vpop.f32.mrf.mxu0
      %v4054 = vadd.f32 0.0, %v4053
      %v4055 = vpop.f32.mrf.mxu0
      %v4056 = vpop.f32.mrf.mxu0
      %v4057 = vadd.f32 0.0, %v4056
      %v4058 = vpop.f32.mrf.mxu0
      %4059 = vmatprep.mubr.bf16.mxu0 0
      %4060 = vmatmul.mubr.bf16.gmra.mxu0 %v3957
      %v4061 = vpop.f32.mrf.mxu0
      %v4062 = vadd.f32 0.0, %v4061
      %v4063 = vpop.f32.mrf.mxu0
      %v4064 = vpop.f32.mrf.mxu0
      %v4065 = vadd.f32 0.0, %v4064
      %v4066 = vpop.f32.mrf.mxu0
      %4067 = vmatprep.mubr.bf16.mxu0 0
      %4068 = vmatmul.mubr.bf16.gmra.mxu0 %v3960
      %v4069 = vpop.f32.mrf.mxu0
      %v4070 = vadd.f32 0.0, %v4069
      %v4071 = vpop.f32.mrf.mxu0
      %v4072 = vpop.f32.mrf.mxu0
      %v4073 = vadd.f32 0.0, %v4072
      %v4074 = vpop.f32.mrf.mxu0
      %4075 = vmatprep.mubr.bf16.mxu0 0
      %4076 = vmatmul.mubr.bf16.gmra.mxu0 %v3963
      %v4077 = vpop.f32.mrf.mxu0
      %v4078 = vadd.f32 0.0, %v4077
      %v4079 = vpop.f32.mrf.mxu0
      %v4080 = vpop.f32.mrf.mxu0
      %v4081 = vadd.f32 0.0, %v4080
      %v4082 = vpop.f32.mrf.mxu0
      %4083 = vmatprep.mubr.bf16.mxu0 0
      %4084 = vmatmul.mubr.bf16.gmra.mxu0 %v3966
      %v4085 = vpop.f32.mrf.mxu0
      %v4086 = vadd.f32 0.0, %v4085
      %v4087 = vpop.f32.mrf.mxu0
      %v4088 = vpop.f32.mrf.mxu0
      %v4089 = vadd.f32 0.0, %v4088
      %v4090 = vpop.f32.mrf.mxu0
      %4091 = vmatprep.mubr.bf16.mxu0 0
      %4092 = vmatmul.mubr.bf16.gmra.mxu0 %v3969
      %v4093 = vpop.f32.mrf.mxu0
      %v4094 = vadd.f32 0.0, %v4093
      %v4095 = vpop.f32.mrf.mxu0
      %v4096 = vpop.f32.mrf.mxu0
      %v4097 = vadd.f32 0.0, %v4096
      %v4098 = vpop.f32.mrf.mxu0
      %4099 = vmatprep.mubr.bf16.mxu0 0
      %4100 = vmatmul.mubr.bf16.gmra.mxu0 %v3972
      %v4101 = vpop.f32.mrf.mxu0
      %v4102 = vadd.f32 0.0, %v4101
      %v4103 = vpop.f32.mrf.mxu0
      %v4104 = vpop.f32.mrf.mxu0
      %v4105 = vadd.f32 0.0, %v4104
      %v4106 = vpop.f32.mrf.mxu0
      %4107 = vmatprep.mubr.bf16.mxu0 0
      %4108 = vmatmul.mubr.bf16.gmra.mxu0 %v3975
      %v4109 = vpop.f32.mrf.mxu0
      %v4110 = vadd.f32 0.0, %v4109
      %v4111 = vpop.f32.mrf.mxu0
      %v4112 = vpop.f32.mrf.mxu0
      %v4113 = vadd.f32 0.0, %v4112
      %v4114 = vpop.f32.mrf.mxu0
      %4115 = vmatprep.mubr.bf16.mxu0 0
      %4116 = vmatmul.mubr.bf16.gmra.mxu0 %v3978
      %v4117 = vpop.f32.mrf.mxu0
      %v4118 = vadd.f32 0.0, %v4117
      %v4119 = vpop.f32.mrf.mxu0
      %v4120 = vpop.f32.mrf.mxu0
      %v4121 = vadd.f32 0.0, %v4120
      %v4122 = vpop.f32.mrf.mxu0
      %4123 = vmatprep.mubr.bf16.mxu0 0
      %4124 = vmatmul.mubr.bf16.gmra.mxu0 %v3981
      %v4125 = vpop.f32.mrf.mxu0
      %v4126 = vadd.f32 0.0, %v4125
      %v4127 = vpop.f32.mrf.mxu0
      %v4128 = vpop.f32.mrf.mxu0
      %v4129 = vadd.f32 0.0, %v4128
      %v4130 = vpop.f32.mrf.mxu0
      %4131 = vmatprep.mubr.bf16.mxu0 0
      %4132 = vmatmul.mubr.bf16.gmra.mxu0 %v3984
      %v4133 = vpop.f32.mrf.mxu0
      %v4134 = vadd.f32 0.0, %v4133
      %v4135 = vpop.f32.mrf.mxu0
      %v4136 = vpop.f32.mrf.mxu0
      %v4137 = vadd.f32 0.0, %v4136
      %v4138 = vpop.f32.mrf.mxu0
      %4139 = vmatprep.mubr.bf16.mxu0 0
      %4140 = vmatmul.mubr.bf16.gmra.mxu0 %v3987
      %v4141 = vpop.f32.mrf.mxu0
      %v4142 = vadd.f32 0.0, %v4141
      %v4143 = vpop.f32.mrf.mxu0
      %v4144 = vpop.f32.mrf.mxu0
      %v4145 = vadd.f32 0.0, %v4144
      %v4146 = vpop.f32.mrf.mxu0
      %4147 = vmatprep.mubr.bf16.mxu0 0
      %4148 = vmatmul.mubr.bf16.gmra.mxu0 %v3990
      %v4149 = vpop.f32.mrf.mxu0
      %v4150 = vadd.f32 0.0, %v4149
      %v4151 = vpop.f32.mrf.mxu0
      %v4152 = vpop.f32.mrf.mxu0
      %v4153 = vadd.f32 0.0, %v4152
      %v4154 = vpop.f32.mrf.mxu0
      %4155 = vdwg.mxu0
      %v4156 = vadd.f32 %v3862, %v4030
      %v4157 = vadd.f32 %v3863, %v4033
      %v4158 = vadd.f32 %v3864, %v4038
      %v4159 = vadd.f32 %v3865, %v4041
      %v4160 = vadd.f32 %v3866, %v4046
      %v4161 = vadd.f32 %v3867, %v4049
      %v4162 = vadd.f32 %v3868, %v4054
      %v4163 = vadd.f32 %v3869, %v4057
      %v4164 = vadd.f32 %v3870, %v4062
      %v4165 = vadd.f32 %v3871, %v4065
      %v4166 = vadd.f32 %v3872, %v4070
      %v4167 = vadd.f32 %v3873, %v4073
      %v4168 = vadd.f32 %v3874, %v4078
      %v4169 = vadd.f32 %v3875, %v4081
      %v4170 = vadd.f32 %v3876, %v4086
      %v4171 = vadd.f32 %v3877, %v4089
      %v4172 = vadd.f32 %v3878, %v4094
      %v4173 = vadd.f32 %v3879, %v4097
      %v4174 = vadd.f32 %v3880, %v4102
      %v4175 = vadd.f32 %v3881, %v4105
      %v4176 = vadd.f32 %v3882, %v4110
      %v4177 = vadd.f32 %v3883, %v4113
      %v4178 = vadd.f32 %v3884, %v4118
      %v4179 = vadd.f32 %v3885, %v4121
      %v4180 = vadd.f32 %v3886, %v4126
      %v4181 = vadd.f32 %v3887, %v4129
      %v4182 = vadd.f32 %v3888, %v4134
      %v4183 = vadd.f32 %v3889, %v4137
      %v4184 = vadd.f32 %v3890, %v4142
      %v4185 = vadd.f32 %v3891, %v4145
      %v4186 = vadd.f32 %v3892, %v4150
      %v4187 = vadd.f32 %v3893, %v4153
      %v4188 = vld [vmem:[#allocation2 + $0x31] sm:$0xff]
      %v4189 = vld [vmem:[#allocation2 + $0x39] sm:$0xff]
      %v4190 = vld [vmem:[#allocation2 + $0x41] sm:$0xff]
      %v4191 = vld [vmem:[#allocation2 + $0x49] sm:$0xff]
      %v4192 = vld [vmem:[#allocation2 + $0x51] sm:$0xff]
      %v4193 = vld [vmem:[#allocation2 + $0x59] sm:$0xff]
      %v4194 = vld [vmem:[#allocation2 + $0x61] sm:$0xff]
      %v4195 = vld [vmem:[#allocation2 + $0x69] sm:$0xff]
      %v4196 = vld [vmem:[#allocation2 + $0x71] sm:$0xff]
      %v4197 = vld [vmem:[#allocation2 + $0x79] sm:$0xff]
      %v4198 = vld [vmem:[#allocation2 + $0x81] sm:$0xff]
      %v4199 = vld [vmem:[#allocation2 + $0x89] sm:$0xff]
      %v4200 = vld [vmem:[#allocation2 + $0x91] sm:$0xff]
      %v4201 = vld [vmem:[#allocation2 + $0x99] sm:$0xff]
      %v4202 = vld [vmem:[#allocation2 + $0xa1] sm:$0xff]
      %v4203 = vld [vmem:[#allocation2 + $0xa9] sm:$0xff]
      %v4204 = vld [vmem:[#allocation2 + $0xb1] sm:$0xff]
      %v4205 = vld [vmem:[#allocation2 + $0xb9] sm:$0xff]
      %v4206 = vld [vmem:[#allocation2 + $0xc1] sm:$0xff]
      %v4207 = vld [vmem:[#allocation2 + $0xc9] sm:$0xff]
      %v4208 = vld [vmem:[#allocation2 + $0xd1] sm:$0xff]
      %v4209 = vld [vmem:[#allocation2 + $0xd9] sm:$0xff]
      %v4210 = vld [vmem:[#allocation2 + $0xe1] sm:$0xff]
      %v4211 = vld [vmem:[#allocation2 + $0xe9] sm:$0xff]
      %v4212 = vld [vmem:[#allocation2 + $0xf1] sm:$0xff]
      %v4213 = vld [vmem:[#allocation2 + $0xf9] sm:$0xff]
      %v4214 = vld [vmem:[#allocation2 + $0x101] sm:$0xff]
      %v4215 = vld [vmem:[#allocation2 + $0x109] sm:$0xff]
      %v4216 = vld [vmem:[#allocation2 + $0x111] sm:$0xff]
      %v4217 = vld [vmem:[#allocation2 + $0x119] sm:$0xff]
      %v4218 = vld [vmem:[#allocation2 + $0x121] sm:$0xff]
      %v4219 = vld [vmem:[#allocation2 + $0x129] sm:$0xff]
      %v4220 = vpack.c.bf16 %v4189, %v4188
      %v4221 = vpack.c.bf16 %v4191, %v4190
      %v4222 = vpack.c.bf16 %v4193, %v4192
      %v4223 = vpack.c.bf16 %v4195, %v4194
      %v4224 = vpack.c.bf16 %v4197, %v4196
      %v4225 = vpack.c.bf16 %v4199, %v4198
      %v4226 = vpack.c.bf16 %v4201, %v4200
      %v4227 = vpack.c.bf16 %v4203, %v4202
      %v4228 = vpack.c.bf16 %v4205, %v4204
      %v4229 = vpack.c.bf16 %v4207, %v4206
      %v4230 = vpack.c.bf16 %v4209, %v4208
      %v4231 = vpack.c.bf16 %v4211, %v4210
      %v4232 = vpack.c.bf16 %v4213, %v4212
      %v4233 = vpack.c.bf16 %v4215, %v4214
      %v4234 = vpack.c.bf16 %v4217, %v4216
      %v4235 = vpack.c.bf16 %v4219, %v4218
      %v4236 = vmul.bf16 %v4220, %v2376
      %v4237 = vmul.bf16 %v4221, %v2377
      %v4238 = vmul.bf16 %v4222, %v2378
      %v4239 = vmul.bf16 %v4223, %v2379
      %v4240 = vmul.bf16 %v4224, %v2380
      %v4241 = vmul.bf16 %v4225, %v2381
      %v4242 = vmul.bf16 %v4226, %v2382
      %v4243 = vmul.bf16 %v4227, %v2383
      %v4244 = vmul.bf16 %v4228, %v2384
      %v4245 = vmul.bf16 %v4229, %v2385
      %v4246 = vmul.bf16 %v4230, %v2386
      %v4247 = vmul.bf16 %v4231, %v2387
      %v4248 = vmul.bf16 %v4232, %v2388
      %v4249 = vmul.bf16 %v4233, %v2389
      %v4250 = vmul.bf16 %v4234, %v2390
      %v4251 = vmul.bf16 %v4235, %v2391
      %s4252 = scalar_lea.vmem %s3, 16
      %v4253 = vld [vmem:[%s4252] sm:$0x3]
      %v4255 = vsel %vm511, %v4236, 0
      %v4258 = vsel %vm511, %v4237, 0
      %v4261 = vsel %vm511, %v4238, 0
      %v4264 = vsel %vm511, %v4239, 0
      %v4267 = vsel %vm511, %v4240, 0
      %v4270 = vsel %vm511, %v4241, 0
      %v4273 = vsel %vm511, %v4242, 0
      %v4276 = vsel %vm511, %v4243, 0
      %v4279 = vsel %vm511, %v4244, 0
      %v4282 = vsel %vm511, %v4245, 0
      %v4285 = vsel %vm511, %v4246, 0
      %v4288 = vsel %vm511, %v4247, 0
      %v4291 = vsel %vm511, %v4248, 0
      %v4294 = vsel %vm511, %v4249, 0
      %v4297 = vsel %vm511, %v4250, 0
      %v4300 = vsel %vm511, %v4251, 0
      %v4303 = vsel %vm560, %v4253, 0
      %4305 = vmatprep.subr.bf16.mxu0 0
      %4306 = vmatpush1.bf16.msra.mxu0 0
      %4307 = vmatprep.subr.bf16.mxu0 0
      %4308 = vmatpush1.bf16.msra.mxu0 0
      %4309 = vmatprep.subr.bf16.mxu0 0
      %4310 = vmatpush1.bf16.msra.mxu0 0
      %4311 = vmatprep.subr.bf16.mxu0 0
      %4312 = vmatpush1.bf16.msra.mxu0 0
      %4313 = vmatprep.subr.bf16.mxu0 0
      %4314 = vmatpush1.bf16.msra.mxu0 0
      %4315 = vmatprep.subr.bf16.mxu0 0
      %4316 = vmatpush1.bf16.msra.mxu0 0
      %4317 = vmatprep.subr.bf16.mxu0 0
      %4318 = vmatpush1.bf16.msra.mxu0 0
      %4319 = vmatprep.subr.bf16.mxu0 0
      %4320 = vmatpush1.bf16.msra.mxu0 %v4303
      %4321 = vmatprep.subr.bf16.mxu0 0
      %4322 = vmatpush2.bf16.msra.mxu0 0
      %4323 = vmatprep.subr.bf16.mxu0 0
      %4324 = vmatpush2.bf16.msra.mxu0 0
      %4325 = vmatprep.subr.bf16.mxu0 0
      %4326 = vmatpush2.bf16.msra.mxu0 0
      %4327 = vmatprep.subr.bf16.mxu0 0
      %4328 = vmatpush2.bf16.msra.mxu0 0
      %4329 = vmatprep.subr.bf16.mxu0 0
      %4330 = vmatpush2.bf16.msra.mxu0 0
      %4331 = vmatprep.subr.bf16.mxu0 0
      %4332 = vmatpush2.bf16.msra.mxu0 0
      %4333 = vmatprep.subr.bf16.mxu0 0
      %4334 = vmatpush2.bf16.msra.mxu0 0
      %4335 = vmatprep.subr.bf16.mxu0 0
      %4336 = vmatpush2.bf16.msra.mxu0 0
      %4337 = vmatprep.mubr.bf16.mxu0 0
      %4338 = vmatmul.mubr.bf16.gmra.mxu0 %v4255
      %v4339 = vpop.f32.mrf.mxu0
      %v4340 = vadd.f32 0.0, %v4339
      %v4341 = vpop.f32.mrf.mxu0
      %v4342 = vpop.f32.mrf.mxu0
      %v4343 = vadd.f32 0.0, %v4342
      %v4344 = vpop.f32.mrf.mxu0
      %4345 = vmatprep.mubr.bf16.mxu0 0
      %4346 = vmatmul.mubr.bf16.gmra.mxu0 %v4258
      %v4347 = vpop.f32.mrf.mxu0
      %v4348 = vadd.f32 0.0, %v4347
      %v4349 = vpop.f32.mrf.mxu0
      %v4350 = vpop.f32.mrf.mxu0
      %v4351 = vadd.f32 0.0, %v4350
      %v4352 = vpop.f32.mrf.mxu0
      %4353 = vmatprep.mubr.bf16.mxu0 0
      %4354 = vmatmul.mubr.bf16.gmra.mxu0 %v4261
      %v4355 = vpop.f32.mrf.mxu0
      %v4356 = vadd.f32 0.0, %v4355
      %v4357 = vpop.f32.mrf.mxu0
      %v4358 = vpop.f32.mrf.mxu0
      %v4359 = vadd.f32 0.0, %v4358
      %v4360 = vpop.f32.mrf.mxu0
      %4361 = vmatprep.mubr.bf16.mxu0 0
      %4362 = vmatmul.mubr.bf16.gmra.mxu0 %v4264
      %v4363 = vpop.f32.mrf.mxu0
      %v4364 = vadd.f32 0.0, %v4363
      %v4365 = vpop.f32.mrf.mxu0
      %v4366 = vpop.f32.mrf.mxu0
      %v4367 = vadd.f32 0.0, %v4366
      %v4368 = vpop.f32.mrf.mxu0
      %4369 = vmatprep.mubr.bf16.mxu0 0
      %4370 = vmatmul.mubr.bf16.gmra.mxu0 %v4267
      %v4371 = vpop.f32.mrf.mxu0
      %v4372 = vadd.f32 0.0, %v4371
      %v4373 = vpop.f32.mrf.mxu0
      %v4374 = vpop.f32.mrf.mxu0
      %v4375 = vadd.f32 0.0, %v4374
      %v4376 = vpop.f32.mrf.mxu0
      %4377 = vmatprep.mubr.bf16.mxu0 0
      %4378 = vmatmul.mubr.bf16.gmra.mxu0 %v4270
      %v4379 = vpop.f32.mrf.mxu0
      %v4380 = vadd.f32 0.0, %v4379
      %v4381 = vpop.f32.mrf.mxu0
      %v4382 = vpop.f32.mrf.mxu0
      %v4383 = vadd.f32 0.0, %v4382
      %v4384 = vpop.f32.mrf.mxu0
      %4385 = vmatprep.mubr.bf16.mxu0 0
      %4386 = vmatmul.mubr.bf16.gmra.mxu0 %v4273
      %v4387 = vpop.f32.mrf.mxu0
      %v4388 = vadd.f32 0.0, %v4387
      %v4389 = vpop.f32.mrf.mxu0
      %v4390 = vpop.f32.mrf.mxu0
      %v4391 = vadd.f32 0.0, %v4390
      %v4392 = vpop.f32.mrf.mxu0
      %4393 = vmatprep.mubr.bf16.mxu0 0
      %4394 = vmatmul.mubr.bf16.gmra.mxu0 %v4276
      %v4395 = vpop.f32.mrf.mxu0
      %v4396 = vadd.f32 0.0, %v4395
      %v4397 = vpop.f32.mrf.mxu0
      %v4398 = vpop.f32.mrf.mxu0
      %v4399 = vadd.f32 0.0, %v4398
      %v4400 = vpop.f32.mrf.mxu0
      %4401 = vmatprep.mubr.bf16.mxu0 0
      %4402 = vmatmul.mubr.bf16.gmra.mxu0 %v4279
      %v4403 = vpop.f32.mrf.mxu0
      %v4404 = vadd.f32 0.0, %v4403
      %v4405 = vpop.f32.mrf.mxu0
      %v4406 = vpop.f32.mrf.mxu0
      %v4407 = vadd.f32 0.0, %v4406
      %v4408 = vpop.f32.mrf.mxu0
      %4409 = vmatprep.mubr.bf16.mxu0 0
      %4410 = vmatmul.mubr.bf16.gmra.mxu0 %v4282
      %v4411 = vpop.f32.mrf.mxu0
      %v4412 = vadd.f32 0.0, %v4411
      %v4413 = vpop.f32.mrf.mxu0
      %v4414 = vpop.f32.mrf.mxu0
      %v4415 = vadd.f32 0.0, %v4414
      %v4416 = vpop.f32.mrf.mxu0
      %4417 = vmatprep.mubr.bf16.mxu0 0
      %4418 = vmatmul.mubr.bf16.gmra.mxu0 %v4285
      %v4419 = vpop.f32.mrf.mxu0
      %v4420 = vadd.f32 0.0, %v4419
      %v4421 = vpop.f32.mrf.mxu0
      %v4422 = vpop.f32.mrf.mxu0
      %v4423 = vadd.f32 0.0, %v4422
      %v4424 = vpop.f32.mrf.mxu0
      %4425 = vmatprep.mubr.bf16.mxu0 0
      %4426 = vmatmul.mubr.bf16.gmra.mxu0 %v4288
      %v4427 = vpop.f32.mrf.mxu0
      %v4428 = vadd.f32 0.0, %v4427
      %v4429 = vpop.f32.mrf.mxu0
      %v4430 = vpop.f32.mrf.mxu0
      %v4431 = vadd.f32 0.0, %v4430
      %v4432 = vpop.f32.mrf.mxu0
      %4433 = vmatprep.mubr.bf16.mxu0 0
      %4434 = vmatmul.mubr.bf16.gmra.mxu0 %v4291
      %v4435 = vpop.f32.mrf.mxu0
      %v4436 = vadd.f32 0.0, %v4435
      %v4437 = vpop.f32.mrf.mxu0
      %v4438 = vpop.f32.mrf.mxu0
      %v4439 = vadd.f32 0.0, %v4438
      %v4440 = vpop.f32.mrf.mxu0
      %4441 = vmatprep.mubr.bf16.mxu0 0
      %4442 = vmatmul.mubr.bf16.gmra.mxu0 %v4294
      %v4443 = vpop.f32.mrf.mxu0
      %v4444 = vadd.f32 0.0, %v4443
      %v4445 = vpop.f32.mrf.mxu0
      %v4446 = vpop.f32.mrf.mxu0
      %v4447 = vadd.f32 0.0, %v4446
      %v4448 = vpop.f32.mrf.mxu0
      %4449 = vmatprep.mubr.bf16.mxu0 0
      %4450 = vmatmul.mubr.bf16.gmra.mxu0 %v4297
      %v4451 = vpop.f32.mrf.mxu0
      %v4452 = vadd.f32 0.0, %v4451
      %v4453 = vpop.f32.mrf.mxu0
      %v4454 = vpop.f32.mrf.mxu0
      %v4455 = vadd.f32 0.0, %v4454
      %v4456 = vpop.f32.mrf.mxu0
      %4457 = vmatprep.mubr.bf16.mxu0 0
      %4458 = vmatmul.mubr.bf16.gmra.mxu0 %v4300
      %v4459 = vpop.f32.mrf.mxu0
      %v4460 = vadd.f32 0.0, %v4459
      %v4461 = vpop.f32.mrf.mxu0
      %v4462 = vpop.f32.mrf.mxu0
      %v4463 = vadd.f32 0.0, %v4462
      %v4464 = vpop.f32.mrf.mxu0
      %4465 = vdwg.mxu0
      %v4466 = vadd.f32 %v4156, %v4340
      %v4467 = vadd.f32 %v4157, %v4343
      %v4468 = vadd.f32 %v4158, %v4348
      %v4469 = vadd.f32 %v4159, %v4351
      %v4470 = vadd.f32 %v4160, %v4356
      %v4471 = vadd.f32 %v4161, %v4359
      %v4472 = vadd.f32 %v4162, %v4364
      %v4473 = vadd.f32 %v4163, %v4367
      %v4474 = vadd.f32 %v4164, %v4372
      %v4475 = vadd.f32 %v4165, %v4375
      %v4476 = vadd.f32 %v4166, %v4380
      %v4477 = vadd.f32 %v4167, %v4383
      %v4478 = vadd.f32 %v4168, %v4388
      %v4479 = vadd.f32 %v4169, %v4391
      %v4480 = vadd.f32 %v4170, %v4396
      %v4481 = vadd.f32 %v4171, %v4399
      %v4482 = vadd.f32 %v4172, %v4404
      %v4483 = vadd.f32 %v4173, %v4407
      %v4484 = vadd.f32 %v4174, %v4412
      %v4485 = vadd.f32 %v4175, %v4415
      %v4486 = vadd.f32 %v4176, %v4420
      %v4487 = vadd.f32 %v4177, %v4423
      %v4488 = vadd.f32 %v4178, %v4428
      %v4489 = vadd.f32 %v4179, %v4431
      %v4490 = vadd.f32 %v4180, %v4436
      %v4491 = vadd.f32 %v4181, %v4439
      %v4492 = vadd.f32 %v4182, %v4444
      %v4493 = vadd.f32 %v4183, %v4447
      %v4494 = vadd.f32 %v4184, %v4452
      %v4495 = vadd.f32 %v4185, %v4455
      %v4496 = vadd.f32 %v4186, %v4460
      %v4497 = vadd.f32 %v4187, %v4463
      %v4498 = vld [vmem:[%s4] sm:$0x1]
      %v4500 = vlaneseq
      %v4501 = vshrl.u32 %v4500, 7
      %v4502 = vsub.s32 0, %v4501
      %v4503 = vrot.slane %v4498, %v4502
      %v4505 = vadd.f32 %v4466, %v4503
      %v4506 = vadd.f32 %v4467, %v4503
      %v4507 = vadd.f32 %v4468, %v4503
      %v4508 = vadd.f32 %v4469, %v4503
      %v4509 = vadd.f32 %v4470, %v4503
      %v4510 = vadd.f32 %v4471, %v4503
      %v4511 = vadd.f32 %v4472, %v4503
      %v4512 = vadd.f32 %v4473, %v4503
      %v4513 = vadd.f32 %v4474, %v4503
      %v4514 = vadd.f32 %v4475, %v4503
      %v4515 = vadd.f32 %v4476, %v4503
      %v4516 = vadd.f32 %v4477, %v4503
      %v4517 = vadd.f32 %v4478, %v4503
      %v4518 = vadd.f32 %v4479, %v4503
      %v4519 = vadd.f32 %v4480, %v4503
      %v4520 = vadd.f32 %v4481, %v4503
      %v4521 = vadd.f32 %v4482, %v4503
      %v4522 = vadd.f32 %v4483, %v4503
      %v4523 = vadd.f32 %v4484, %v4503
      %v4524 = vadd.f32 %v4485, %v4503
      %v4525 = vadd.f32 %v4486, %v4503
      %v4526 = vadd.f32 %v4487, %v4503
      %v4527 = vadd.f32 %v4488, %v4503
      %v4528 = vadd.f32 %v4489, %v4503
      %v4529 = vadd.f32 %v4490, %v4503
      %v4530 = vadd.f32 %v4491, %v4503
      %v4531 = vadd.f32 %v4492, %v4503
      %v4532 = vadd.f32 %v4493, %v4503
      %v4533 = vadd.f32 %v4494, %v4503
      %v4534 = vadd.f32 %v4495, %v4503
      %v4535 = vadd.f32 %v4496, %v4503
      %v4536 = vadd.f32 %v4497, %v4503
      %v4537 = vmax.f32 %v4505, 0.0
      %v4538 = vmax.f32 %v4506, 0.0
      %v4539 = vmax.f32 %v4507, 0.0
      %v4540 = vmax.f32 %v4508, 0.0
      %v4541 = vmax.f32 %v4509, 0.0
      %v4542 = vmax.f32 %v4510, 0.0
      %v4543 = vmax.f32 %v4511, 0.0
      %v4544 = vmax.f32 %v4512, 0.0
      %v4545 = vmax.f32 %v4513, 0.0
      %v4546 = vmax.f32 %v4514, 0.0
      %v4547 = vmax.f32 %v4515, 0.0
      %v4548 = vmax.f32 %v4516, 0.0
      %v4549 = vmax.f32 %v4517, 0.0
      %v4550 = vmax.f32 %v4518, 0.0
      %v4551 = vmax.f32 %v4519, 0.0
      %v4552 = vmax.f32 %v4520, 0.0
      %v4553 = vmax.f32 %v4521, 0.0
      %v4554 = vmax.f32 %v4522, 0.0
      %v4555 = vmax.f32 %v4523, 0.0
      %v4556 = vmax.f32 %v4524, 0.0
      %v4557 = vmax.f32 %v4525, 0.0
      %v4558 = vmax.f32 %v4526, 0.0
      %v4559 = vmax.f32 %v4527, 0.0
      %v4560 = vmax.f32 %v4528, 0.0
      %v4561 = vmax.f32 %v4529, 0.0
      %v4562 = vmax.f32 %v4530, 0.0
      %v4563 = vmax.f32 %v4531, 0.0
      %v4564 = vmax.f32 %v4532, 0.0
      %v4565 = vmax.f32 %v4533, 0.0
      %v4566 = vmax.f32 %v4534, 0.0
      %v4567 = vmax.f32 %v4535, 0.0
      %v4568 = vmax.f32 %v4536, 0.0
      %v4569 = vpack.c.bf16 %v4538, %v4537
      %v4570 = vpack.c.bf16 %v4540, %v4539
      %v4571 = vpack.c.bf16 %v4542, %v4541
      %v4572 = vpack.c.bf16 %v4544, %v4543
      %v4573 = vpack.c.bf16 %v4546, %v4545
      %v4574 = vpack.c.bf16 %v4548, %v4547
      %v4575 = vpack.c.bf16 %v4550, %v4549
      %v4576 = vpack.c.bf16 %v4552, %v4551
      %v4577 = vpack.c.bf16 %v4554, %v4553
      %v4578 = vpack.c.bf16 %v4556, %v4555
      %v4579 = vpack.c.bf16 %v4558, %v4557
      %v4580 = vpack.c.bf16 %v4560, %v4559
      %v4581 = vpack.c.bf16 %v4562, %v4561
      %v4582 = vpack.c.bf16 %v4564, %v4563
      %v4583 = vpack.c.bf16 %v4566, %v4565
      %v4584 = vpack.c.bf16 %v4568, %v4567
      %v4585 = vld [vmem:[%s5] sm:$0x3]
      %v4586 = vld [vmem:[%s6] sm:$0x1]
      %v4588 = vlaneseq
      %v4589 = vshrl.u32 %v4588, 7
      %v4590 = vsub.s32 0, %v4589
      %v4591 = vrot.slane %v4586, %v4590
      %v4594 = vsel %vm511, %v4569, 0
      %v4597 = vsel %vm511, %v4570, 0
      %v4600 = vsel %vm511, %v4571, 0
      %v4603 = vsel %vm511, %v4572, 0
      %v4606 = vsel %vm511, %v4573, 0
      %v4609 = vsel %vm511, %v4574, 0
      %v4612 = vsel %vm511, %v4575, 0
      %v4615 = vsel %vm511, %v4576, 0
      %v4618 = vsel %vm511, %v4577, 0
      %v4621 = vsel %vm511, %v4578, 0
      %v4624 = vsel %vm511, %v4579, 0
      %v4627 = vsel %vm511, %v4580, 0
      %v4630 = vsel %vm511, %v4581, 0
      %v4633 = vsel %vm511, %v4582, 0
      %v4636 = vsel %vm511, %v4583, 0
      %v4639 = vsel %vm511, %v4584, 0
      %v4642 = vsel %vm560, %v4585, 0
      %4644 = vmatprep.subr.bf16.mxu0 0
      %4645 = vmatpush1.bf16.msra.mxu0 0
      %4646 = vmatprep.subr.bf16.mxu0 0
      %4647 = vmatpush1.bf16.msra.mxu0 0
      %4648 = vmatprep.subr.bf16.mxu0 0
      %4649 = vmatpush1.bf16.msra.mxu0 0
      %4650 = vmatprep.subr.bf16.mxu0 0
      %4651 = vmatpush1.bf16.msra.mxu0 0
      %4652 = vmatprep.subr.bf16.mxu0 0
      %4653 = vmatpush1.bf16.msra.mxu0 0
      %4654 = vmatprep.subr.bf16.mxu0 0
      %4655 = vmatpush1.bf16.msra.mxu0 0
      %4656 = vmatprep.subr.bf16.mxu0 0
      %4657 = vmatpush1.bf16.msra.mxu0 0
      %4658 = vmatprep.subr.bf16.mxu0 0
      %4659 = vmatpush1.bf16.msra.mxu0 %v4642
      %4660 = vmatprep.subr.bf16.mxu0 0
      %4661 = vmatpush2.bf16.msra.mxu0 0
      %4662 = vmatprep.subr.bf16.mxu0 0
      %4663 = vmatpush2.bf16.msra.mxu0 0
      %4664 = vmatprep.subr.bf16.mxu0 0
      %4665 = vmatpush2.bf16.msra.mxu0 0
      %4666 = vmatprep.subr.bf16.mxu0 0
      %4667 = vmatpush2.bf16.msra.mxu0 0
      %4668 = vmatprep.subr.bf16.mxu0 0
      %4669 = vmatpush2.bf16.msra.mxu0 0
      %4670 = vmatprep.subr.bf16.mxu0 0
      %4671 = vmatpush2.bf16.msra.mxu0 0
      %4672 = vmatprep.subr.bf16.mxu0 0
      %4673 = vmatpush2.bf16.msra.mxu0 0
      %4674 = vmatprep.subr.bf16.mxu0 0
      %4675 = vmatpush2.bf16.msra.mxu0 0
      %4676 = vmatprep.mubr.bf16.mxu0 0
      %4677 = vmatmul.mubr.bf16.gmra.mxu0 %v4594
      %v4678 = vpop.f32.mrf.mxu0
      %v4679 = vadd.f32 %v4591, %v4678
      %v4680 = vpop.f32.mrf.mxu0
      %v4681 = vpop.f32.mrf.mxu0
      %v4682 = vadd.f32 %v4591, %v4681
      %v4683 = vpop.f32.mrf.mxu0
      %4684 = vmatprep.mubr.bf16.mxu0 0
      %4685 = vmatmul.mubr.bf16.gmra.mxu0 %v4597
      %v4686 = vpop.f32.mrf.mxu0
      %v4687 = vadd.f32 %v4591, %v4686
      %v4688 = vpop.f32.mrf.mxu0
      %v4689 = vpop.f32.mrf.mxu0
      %v4690 = vadd.f32 %v4591, %v4689
      %v4691 = vpop.f32.mrf.mxu0
      %4692 = vmatprep.mubr.bf16.mxu0 0
      %4693 = vmatmul.mubr.bf16.gmra.mxu0 %v4600
      %v4694 = vpop.f32.mrf.mxu0
      %v4695 = vadd.f32 %v4591, %v4694
      %v4696 = vpop.f32.mrf.mxu0
      %v4697 = vpop.f32.mrf.mxu0
      %v4698 = vadd.f32 %v4591, %v4697
      %v4699 = vpop.f32.mrf.mxu0
      %4700 = vmatprep.mubr.bf16.mxu0 0
      %4701 = vmatmul.mubr.bf16.gmra.mxu0 %v4603
      %v4702 = vpop.f32.mrf.mxu0
      %v4703 = vadd.f32 %v4591, %v4702
      %v4704 = vpop.f32.mrf.mxu0
      %v4705 = vpop.f32.mrf.mxu0
      %v4706 = vadd.f32 %v4591, %v4705
      %v4707 = vpop.f32.mrf.mxu0
      %4708 = vmatprep.mubr.bf16.mxu0 0
      %4709 = vmatmul.mubr.bf16.gmra.mxu0 %v4606
      %v4710 = vpop.f32.mrf.mxu0
      %v4711 = vadd.f32 %v4591, %v4710
      %v4712 = vpop.f32.mrf.mxu0
      %v4713 = vpop.f32.mrf.mxu0
      %v4714 = vadd.f32 %v4591, %v4713
      %v4715 = vpop.f32.mrf.mxu0
      %4716 = vmatprep.mubr.bf16.mxu0 0
      %4717 = vmatmul.mubr.bf16.gmra.mxu0 %v4609
      %v4718 = vpop.f32.mrf.mxu0
      %v4719 = vadd.f32 %v4591, %v4718
      %v4720 = vpop.f32.mrf.mxu0
      %v4721 = vpop.f32.mrf.mxu0
      %v4722 = vadd.f32 %v4591, %v4721
      %v4723 = vpop.f32.mrf.mxu0
      %4724 = vmatprep.mubr.bf16.mxu0 0
      %4725 = vmatmul.mubr.bf16.gmra.mxu0 %v4612
      %v4726 = vpop.f32.mrf.mxu0
      %v4727 = vadd.f32 %v4591, %v4726
      %v4728 = vpop.f32.mrf.mxu0
      %v4729 = vpop.f32.mrf.mxu0
      %v4730 = vadd.f32 %v4591, %v4729
      %v4731 = vpop.f32.mrf.mxu0
      %4732 = vmatprep.mubr.bf16.mxu0 0
      %4733 = vmatmul.mubr.bf16.gmra.mxu0 %v4615
      %v4734 = vpop.f32.mrf.mxu0
      %v4735 = vadd.f32 %v4591, %v4734
      %v4736 = vpop.f32.mrf.mxu0
      %v4737 = vpop.f32.mrf.mxu0
      %v4738 = vadd.f32 %v4591, %v4737
      %v4739 = vpop.f32.mrf.mxu0
      %4740 = vmatprep.mubr.bf16.mxu0 0
      %4741 = vmatmul.mubr.bf16.gmra.mxu0 %v4618
      %v4742 = vpop.f32.mrf.mxu0
      %v4743 = vadd.f32 %v4591, %v4742
      %v4744 = vpop.f32.mrf.mxu0
      %v4745 = vpop.f32.mrf.mxu0
      %v4746 = vadd.f32 %v4591, %v4745
      %v4747 = vpop.f32.mrf.mxu0
      %4748 = vmatprep.mubr.bf16.mxu0 0
      %4749 = vmatmul.mubr.bf16.gmra.mxu0 %v4621
      %v4750 = vpop.f32.mrf.mxu0
      %v4751 = vadd.f32 %v4591, %v4750
      %v4752 = vpop.f32.mrf.mxu0
      %v4753 = vpop.f32.mrf.mxu0
      %v4754 = vadd.f32 %v4591, %v4753
      %v4755 = vpop.f32.mrf.mxu0
      %4756 = vmatprep.mubr.bf16.mxu0 0
      %4757 = vmatmul.mubr.bf16.gmra.mxu0 %v4624
      %v4758 = vpop.f32.mrf.mxu0
      %v4759 = vadd.f32 %v4591, %v4758
      %v4760 = vpop.f32.mrf.mxu0
      %v4761 = vpop.f32.mrf.mxu0
      %v4762 = vadd.f32 %v4591, %v4761
      %v4763 = vpop.f32.mrf.mxu0
      %4764 = vmatprep.mubr.bf16.mxu0 0
      %4765 = vmatmul.mubr.bf16.gmra.mxu0 %v4627
      %v4766 = vpop.f32.mrf.mxu0
      %v4767 = vadd.f32 %v4591, %v4766
      %v4768 = vpop.f32.mrf.mxu0
      %v4769 = vpop.f32.mrf.mxu0
      %v4770 = vadd.f32 %v4591, %v4769
      %v4771 = vpop.f32.mrf.mxu0
      %4772 = vmatprep.mubr.bf16.mxu0 0
      %4773 = vmatmul.mubr.bf16.gmra.mxu0 %v4630
      %v4774 = vpop.f32.mrf.mxu0
      %v4775 = vadd.f32 %v4591, %v4774
      %v4776 = vpop.f32.mrf.mxu0
      %v4777 = vpop.f32.mrf.mxu0
      %v4778 = vadd.f32 %v4591, %v4777
      %v4779 = vpop.f32.mrf.mxu0
      %4780 = vmatprep.mubr.bf16.mxu0 0
      %4781 = vmatmul.mubr.bf16.gmra.mxu0 %v4633
      %v4782 = vpop.f32.mrf.mxu0
      %v4783 = vadd.f32 %v4591, %v4782
      %v4784 = vpop.f32.mrf.mxu0
      %v4785 = vpop.f32.mrf.mxu0
      %v4786 = vadd.f32 %v4591, %v4785
      %v4787 = vpop.f32.mrf.mxu0
      %4788 = vmatprep.mubr.bf16.mxu0 0
      %4789 = vmatmul.mubr.bf16.gmra.mxu0 %v4636
      %v4790 = vpop.f32.mrf.mxu0
      %v4791 = vadd.f32 %v4591, %v4790
      %v4792 = vpop.f32.mrf.mxu0
      %v4793 = vpop.f32.mrf.mxu0
      %v4794 = vadd.f32 %v4591, %v4793
      %v4795 = vpop.f32.mrf.mxu0
      %4796 = vmatprep.mubr.bf16.mxu0 0
      %4797 = vmatmul.mubr.bf16.gmra.mxu0 %v4639
      %v4798 = vpop.f32.mrf.mxu0
      %v4799 = vadd.f32 %v4591, %v4798
      %v4800 = vpop.f32.mrf.mxu0
      %v4801 = vpop.f32.mrf.mxu0
      %v4802 = vadd.f32 %v4591, %v4801
      %v4803 = vpop.f32.mrf.mxu0
      %4804 = vdwg.mxu0
      %v4805 = vld [vmem:[%s382] sm:$0xf]
      %v4806 = vld [vmem:[%s382 + $0x4] sm:$0xf]
      %v4807 = vld [vmem:[%s382 + $0x8] sm:$0xf]
      %v4808 = vld [vmem:[%s382 + $0xc] sm:$0xf]
      %v4809 = vld [vmem:[%s382 + $0x10] sm:$0xf]
      %v4810 = vld [vmem:[%s382 + $0x14] sm:$0xf]
      %v4811 = vld [vmem:[%s382 + $0x18] sm:$0xf]
      %v4812 = vld [vmem:[%s382 + $0x1c] sm:$0xf]
      %v4813 = vld [vmem:[%s382 + $0x20] sm:$0xf]
      %v4814 = vld [vmem:[%s382 + $0x24] sm:$0xf]
      %v4815 = vld [vmem:[%s382 + $0x28] sm:$0xf]
      %v4816 = vld [vmem:[%s382 + $0x2c] sm:$0xf]
      %v4817 = vld [vmem:[%s382 + $0x30] sm:$0xf]
      %v4818 = vld [vmem:[%s382 + $0x34] sm:$0xf]
      %v4819 = vld [vmem:[%s382 + $0x38] sm:$0xf]
      %v4820 = vld [vmem:[%s382 + $0x3c] sm:$0xf]
      %v4821 = vld [vmem:[%s382 + $0x40] sm:$0xf]
      %v4822 = vld [vmem:[%s382 + $0x44] sm:$0xf]
      %v4823 = vld [vmem:[%s382 + $0x48] sm:$0xf]
      %v4824 = vld [vmem:[%s382 + $0x4c] sm:$0xf]
      %v4825 = vld [vmem:[%s382 + $0x50] sm:$0xf]
      %v4826 = vld [vmem:[%s382 + $0x54] sm:$0xf]
      %v4827 = vld [vmem:[%s382 + $0x58] sm:$0xf]
      %v4828 = vld [vmem:[%s382 + $0x5c] sm:$0xf]
      %v4829 = vld [vmem:[%s382 + $0x60] sm:$0xf]
      %v4830 = vld [vmem:[%s382 + $0x64] sm:$0xf]
      %v4831 = vld [vmem:[%s382 + $0x68] sm:$0xf]
      %v4832 = vld [vmem:[%s382 + $0x6c] sm:$0xf]
      %v4833 = vld [vmem:[%s382 + $0x70] sm:$0xf]
      %v4834 = vld [vmem:[%s382 + $0x74] sm:$0xf]
      %v4835 = vld [vmem:[%s382 + $0x78] sm:$0xf]
      %v4836 = vld [vmem:[%s382 + $0x7c] sm:$0xf]
      %v4837 = vld [vmem:[%s9] sm:$0x3]
      %v4838 = vld [vmem:[%s10] sm:$0x1]
      %v4840 = vlaneseq
      %v4841 = vshrl.u32 %v4840, 7
      %v4842 = vsub.s32 0, %v4841
      %v4843 = vrot.slane %v4838, %v4842
      %v4877 = vunpack.c.l.b16 %v4805
      %v4878 = vunpack.c.l.b16 %v4806
      %v4879 = vunpack.c.l.b16 %v4807
      %v4880 = vunpack.c.l.b16 %v4808
      %v4881 = vunpack.c.l.b16 %v4809
      %v4882 = vunpack.c.l.b16 %v4810
      %v4883 = vunpack.c.l.b16 %v4811
      %v4884 = vunpack.c.l.b16 %v4812
      %v4885 = vunpack.c.l.b16 %v4813
      %v4886 = vunpack.c.l.b16 %v4814
      %v4887 = vunpack.c.l.b16 %v4815
      %v4888 = vunpack.c.l.b16 %v4816
      %v4889 = vunpack.c.l.b16 %v4817
      %v4890 = vunpack.c.l.b16 %v4818
      %v4891 = vunpack.c.l.b16 %v4819
      %v4892 = vunpack.c.l.b16 %v4820
      %v4893 = vunpack.c.l.b16 %v4821
      %v4894 = vunpack.c.l.b16 %v4822
      %v4895 = vunpack.c.l.b16 %v4823
      %v4896 = vunpack.c.l.b16 %v4824
      %v4897 = vunpack.c.l.b16 %v4825
      %v4898 = vunpack.c.l.b16 %v4826
      %v4899 = vunpack.c.l.b16 %v4827
      %v4900 = vunpack.c.l.b16 %v4828
      %v4901 = vunpack.c.l.b16 %v4829
      %v4902 = vunpack.c.l.b16 %v4830
      %v4903 = vunpack.c.l.b16 %v4831
      %v4904 = vunpack.c.l.b16 %v4832
      %v4905 = vunpack.c.l.b16 %v4833
      %v4906 = vunpack.c.l.b16 %v4834
      %v4907 = vunpack.c.l.b16 %v4835
      %v4908 = vunpack.c.l.b16 %v4836
      %v4909 = vpack.c.b16 %v4878, %v4877
      %v4910 = vpack.c.b16 %v4880, %v4879
      %v4911 = vpack.c.b16 %v4882, %v4881
      %v4912 = vpack.c.b16 %v4884, %v4883
      %v4913 = vpack.c.b16 %v4886, %v4885
      %v4914 = vpack.c.b16 %v4888, %v4887
      %v4915 = vpack.c.b16 %v4890, %v4889
      %v4916 = vpack.c.b16 %v4892, %v4891
      %v4917 = vpack.c.b16 %v4894, %v4893
      %v4918 = vpack.c.b16 %v4896, %v4895
      %v4919 = vpack.c.b16 %v4898, %v4897
      %v4920 = vpack.c.b16 %v4900, %v4899
      %v4921 = vpack.c.b16 %v4902, %v4901
      %v4922 = vpack.c.b16 %v4904, %v4903
      %v4923 = vpack.c.b16 %v4906, %v4905
      %v4924 = vpack.c.b16 %v4908, %v4907
      %v4926 = vsel %vm511, %v4909, 0
      %v4929 = vsel %vm511, %v4910, 0
      %v4932 = vsel %vm511, %v4911, 0
      %v4935 = vsel %vm511, %v4912, 0
      %v4938 = vsel %vm511, %v4913, 0
      %v4941 = vsel %vm511, %v4914, 0
      %v4944 = vsel %vm511, %v4915, 0
      %v4947 = vsel %vm511, %v4916, 0
      %v4950 = vsel %vm511, %v4917, 0
      %v4953 = vsel %vm511, %v4918, 0
      %v4956 = vsel %vm511, %v4919, 0
      %v4959 = vsel %vm511, %v4920, 0
      %v4962 = vsel %vm511, %v4921, 0
      %v4965 = vsel %vm511, %v4922, 0
      %v4968 = vsel %vm511, %v4923, 0
      %v4971 = vsel %vm511, %v4924, 0
      %v4974 = vsel %vm560, %v4837, 0
      %4976 = vmatprep.subr.bf16.mxu0 0
      %4977 = vmatpush1.bf16.msra.mxu0 0
      %4978 = vmatprep.subr.bf16.mxu0 0
      %4979 = vmatpush1.bf16.msra.mxu0 0
      %4980 = vmatprep.subr.bf16.mxu0 0
      %4981 = vmatpush1.bf16.msra.mxu0 0
      %4982 = vmatprep.subr.bf16.mxu0 0
      %4983 = vmatpush1.bf16.msra.mxu0 0
      %4984 = vmatprep.subr.bf16.mxu0 0
      %4985 = vmatpush1.bf16.msra.mxu0 0
      %4986 = vmatprep.subr.bf16.mxu0 0
      %4987 = vmatpush1.bf16.msra.mxu0 0
      %4988 = vmatprep.subr.bf16.mxu0 0
      %4989 = vmatpush1.bf16.msra.mxu0 0
      %4990 = vmatprep.subr.bf16.mxu0 0
      %4991 = vmatpush1.bf16.msra.mxu0 %v4974
      %4992 = vmatprep.subr.bf16.mxu0 0
      %4993 = vmatpush2.bf16.msra.mxu0 0
      %4994 = vmatprep.subr.bf16.mxu0 0
      %4995 = vmatpush2.bf16.msra.mxu0 0
      %4996 = vmatprep.subr.bf16.mxu0 0
      %4997 = vmatpush2.bf16.msra.mxu0 0
      %4998 = vmatprep.subr.bf16.mxu0 0
      %4999 = vmatpush2.bf16.msra.mxu0 0
      %5000 = vmatprep.subr.bf16.mxu0 0
      %5001 = vmatpush2.bf16.msra.mxu0 0
      %5002 = vmatprep.subr.bf16.mxu0 0
      %5003 = vmatpush2.bf16.msra.mxu0 0
      %5004 = vmatprep.subr.bf16.mxu0 0
      %5005 = vmatpush2.bf16.msra.mxu0 0
      %5006 = vmatprep.subr.bf16.mxu0 0
      %5007 = vmatpush2.bf16.msra.mxu0 0
      %5008 = vmatprep.mubr.bf16.mxu0 0
      %5009 = vmatmul.mubr.bf16.gmra.mxu0 %v4926
      %v5010 = vpop.f32.mrf.mxu0
      %v5011 = vadd.f32 %v4843, %v5010
      %v5012 = vpop.f32.mrf.mxu0
      %v5013 = vpop.f32.mrf.mxu0
      %v5014 = vadd.f32 %v4843, %v5013
      %v5015 = vpop.f32.mrf.mxu0
      %5016 = vmatprep.mubr.bf16.mxu0 0
      %5017 = vmatmul.mubr.bf16.gmra.mxu0 %v4929
      %v5018 = vpop.f32.mrf.mxu0
      %v5019 = vadd.f32 %v4843, %v5018
      %v5020 = vpop.f32.mrf.mxu0
      %v5021 = vpop.f32.mrf.mxu0
      %v5022 = vadd.f32 %v4843, %v5021
      %v5023 = vpop.f32.mrf.mxu0
      %5024 = vmatprep.mubr.bf16.mxu0 0
      %5025 = vmatmul.mubr.bf16.gmra.mxu0 %v4932
      %v5026 = vpop.f32.mrf.mxu0
      %v5027 = vadd.f32 %v4843, %v5026
      %v5028 = vpop.f32.mrf.mxu0
      %v5029 = vpop.f32.mrf.mxu0
      %v5030 = vadd.f32 %v4843, %v5029
      %v5031 = vpop.f32.mrf.mxu0
      %5032 = vmatprep.mubr.bf16.mxu0 0
      %5033 = vmatmul.mubr.bf16.gmra.mxu0 %v4935
      %v5034 = vpop.f32.mrf.mxu0
      %v5035 = vadd.f32 %v4843, %v5034
      %v5036 = vpop.f32.mrf.mxu0
      %v5037 = vpop.f32.mrf.mxu0
      %v5038 = vadd.f32 %v4843, %v5037
      %v5039 = vpop.f32.mrf.mxu0
      %5040 = vmatprep.mubr.bf16.mxu0 0
      %5041 = vmatmul.mubr.bf16.gmra.mxu0 %v4938
      %v5042 = vpop.f32.mrf.mxu0
      %v5043 = vadd.f32 %v4843, %v5042
      %v5044 = vpop.f32.mrf.mxu0
      %v5045 = vpop.f32.mrf.mxu0
      %v5046 = vadd.f32 %v4843, %v5045
      %v5047 = vpop.f32.mrf.mxu0
      %5048 = vmatprep.mubr.bf16.mxu0 0
      %5049 = vmatmul.mubr.bf16.gmra.mxu0 %v4941
      %v5050 = vpop.f32.mrf.mxu0
      %v5051 = vadd.f32 %v4843, %v5050
      %v5052 = vpop.f32.mrf.mxu0
      %v5053 = vpop.f32.mrf.mxu0
      %v5054 = vadd.f32 %v4843, %v5053
      %v5055 = vpop.f32.mrf.mxu0
      %5056 = vmatprep.mubr.bf16.mxu0 0
      %5057 = vmatmul.mubr.bf16.gmra.mxu0 %v4944
      %v5058 = vpop.f32.mrf.mxu0
      %v5059 = vadd.f32 %v4843, %v5058
      %v5060 = vpop.f32.mrf.mxu0
      %v5061 = vpop.f32.mrf.mxu0
      %v5062 = vadd.f32 %v4843, %v5061
      %v5063 = vpop.f32.mrf.mxu0
      %5064 = vmatprep.mubr.bf16.mxu0 0
      %5065 = vmatmul.mubr.bf16.gmra.mxu0 %v4947
      %v5066 = vpop.f32.mrf.mxu0
      %v5067 = vadd.f32 %v4843, %v5066
      %v5068 = vpop.f32.mrf.mxu0
      %v5069 = vpop.f32.mrf.mxu0
      %v5070 = vadd.f32 %v4843, %v5069
      %v5071 = vpop.f32.mrf.mxu0
      %5072 = vmatprep.mubr.bf16.mxu0 0
      %5073 = vmatmul.mubr.bf16.gmra.mxu0 %v4950
      %v5074 = vpop.f32.mrf.mxu0
      %v5075 = vadd.f32 %v4843, %v5074
      %v5076 = vpop.f32.mrf.mxu0
      %v5077 = vpop.f32.mrf.mxu0
      %v5078 = vadd.f32 %v4843, %v5077
      %v5079 = vpop.f32.mrf.mxu0
      %5080 = vmatprep.mubr.bf16.mxu0 0
      %5081 = vmatmul.mubr.bf16.gmra.mxu0 %v4953
      %v5082 = vpop.f32.mrf.mxu0
      %v5083 = vadd.f32 %v4843, %v5082
      %v5084 = vpop.f32.mrf.mxu0
      %v5085 = vpop.f32.mrf.mxu0
      %v5086 = vadd.f32 %v4843, %v5085
      %v5087 = vpop.f32.mrf.mxu0
      %5088 = vmatprep.mubr.bf16.mxu0 0
      %5089 = vmatmul.mubr.bf16.gmra.mxu0 %v4956
      %v5090 = vpop.f32.mrf.mxu0
      %v5091 = vadd.f32 %v4843, %v5090
      %v5092 = vpop.f32.mrf.mxu0
      %v5093 = vpop.f32.mrf.mxu0
      %v5094 = vadd.f32 %v4843, %v5093
      %v5095 = vpop.f32.mrf.mxu0
      %5096 = vmatprep.mubr.bf16.mxu0 0
      %5097 = vmatmul.mubr.bf16.gmra.mxu0 %v4959
      %v5098 = vpop.f32.mrf.mxu0
      %v5099 = vadd.f32 %v4843, %v5098
      %v5100 = vpop.f32.mrf.mxu0
      %v5101 = vpop.f32.mrf.mxu0
      %v5102 = vadd.f32 %v4843, %v5101
      %v5103 = vpop.f32.mrf.mxu0
      %5104 = vmatprep.mubr.bf16.mxu0 0
      %5105 = vmatmul.mubr.bf16.gmra.mxu0 %v4962
      %v5106 = vpop.f32.mrf.mxu0
      %v5107 = vadd.f32 %v4843, %v5106
      %v5108 = vpop.f32.mrf.mxu0
      %v5109 = vpop.f32.mrf.mxu0
      %v5110 = vadd.f32 %v4843, %v5109
      %v5111 = vpop.f32.mrf.mxu0
      %5112 = vmatprep.mubr.bf16.mxu0 0
      %5113 = vmatmul.mubr.bf16.gmra.mxu0 %v4965
      %v5114 = vpop.f32.mrf.mxu0
      %v5115 = vadd.f32 %v4843, %v5114
      %v5116 = vpop.f32.mrf.mxu0
      %v5117 = vpop.f32.mrf.mxu0
      %v5118 = vadd.f32 %v4843, %v5117
      %v5119 = vpop.f32.mrf.mxu0
      %5120 = vmatprep.mubr.bf16.mxu0 0
      %5121 = vmatmul.mubr.bf16.gmra.mxu0 %v4968
      %v5122 = vpop.f32.mrf.mxu0
      %v5123 = vadd.f32 %v4843, %v5122
      %v5124 = vpop.f32.mrf.mxu0
      %v5125 = vpop.f32.mrf.mxu0
      %v5126 = vadd.f32 %v4843, %v5125
      %v5127 = vpop.f32.mrf.mxu0
      %5128 = vmatprep.mubr.bf16.mxu0 0
      %5129 = vmatmul.mubr.bf16.gmra.mxu0 %v4971
      %v5130 = vpop.f32.mrf.mxu0
      %v5131 = vadd.f32 %v4843, %v5130
      %v5132 = vpop.f32.mrf.mxu0
      %v5133 = vpop.f32.mrf.mxu0
      %v5134 = vadd.f32 %v4843, %v5133
      %v5135 = vpop.f32.mrf.mxu0
      %5136 = vdwg.mxu0
      %v5137 = vadd.f32 %v4679, %v5011
      %v5138 = vadd.f32 %v4682, %v5014
      %v5139 = vadd.f32 %v4687, %v5019
      %v5140 = vadd.f32 %v4690, %v5022
      %v5141 = vadd.f32 %v4695, %v5027
      %v5142 = vadd.f32 %v4698, %v5030
      %v5143 = vadd.f32 %v4703, %v5035
      %v5144 = vadd.f32 %v4706, %v5038
      %v5145 = vadd.f32 %v4711, %v5043
      %v5146 = vadd.f32 %v4714, %v5046
      %v5147 = vadd.f32 %v4719, %v5051
      %v5148 = vadd.f32 %v4722, %v5054
      %v5149 = vadd.f32 %v4727, %v5059
      %v5150 = vadd.f32 %v4730, %v5062
      %v5151 = vadd.f32 %v4735, %v5067
      %v5152 = vadd.f32 %v4738, %v5070
      %v5153 = vadd.f32 %v4743, %v5075
      %v5154 = vadd.f32 %v4746, %v5078
      %v5155 = vadd.f32 %v4751, %v5083
      %v5156 = vadd.f32 %v4754, %v5086
      %v5157 = vadd.f32 %v4759, %v5091
      %v5158 = vadd.f32 %v4762, %v5094
      %v5159 = vadd.f32 %v4767, %v5099
      %v5160 = vadd.f32 %v4770, %v5102
      %v5161 = vadd.f32 %v4775, %v5107
      %v5162 = vadd.f32 %v4778, %v5110
      %v5163 = vadd.f32 %v4783, %v5115
      %v5164 = vadd.f32 %v4786, %v5118
      %v5165 = vadd.f32 %v4791, %v5123
      %v5166 = vadd.f32 %v4794, %v5126
      %v5167 = vadd.f32 %v4799, %v5131
      %v5168 = vadd.f32 %v4802, %v5134
      %v5169 = vmax.f32 %v5137, 0.0
      %v5170 = vmax.f32 %v5138, 0.0
      %v5171 = vmax.f32 %v5139, 0.0
      %v5172 = vmax.f32 %v5140, 0.0
      %v5173 = vmax.f32 %v5141, 0.0
      %v5174 = vmax.f32 %v5142, 0.0
      %v5175 = vmax.f32 %v5143, 0.0
      %v5176 = vmax.f32 %v5144, 0.0
      %v5177 = vmax.f32 %v5145, 0.0
      %v5178 = vmax.f32 %v5146, 0.0
      %v5179 = vmax.f32 %v5147, 0.0
      %v5180 = vmax.f32 %v5148, 0.0
      %v5181 = vmax.f32 %v5149, 0.0
      %v5182 = vmax.f32 %v5150, 0.0
      %v5183 = vmax.f32 %v5151, 0.0
      %v5184 = vmax.f32 %v5152, 0.0
      %v5185 = vmax.f32 %v5153, 0.0
      %v5186 = vmax.f32 %v5154, 0.0
      %v5187 = vmax.f32 %v5155, 0.0
      %v5188 = vmax.f32 %v5156, 0.0
      %v5189 = vmax.f32 %v5157, 0.0
      %v5190 = vmax.f32 %v5158, 0.0
      %v5191 = vmax.f32 %v5159, 0.0
      %v5192 = vmax.f32 %v5160, 0.0
      %v5193 = vmax.f32 %v5161, 0.0
      %v5194 = vmax.f32 %v5162, 0.0
      %v5195 = vmax.f32 %v5163, 0.0
      %v5196 = vmax.f32 %v5164, 0.0
      %v5197 = vmax.f32 %v5165, 0.0
      %v5198 = vmax.f32 %v5166, 0.0
      %v5199 = vmax.f32 %v5167, 0.0
      %v5200 = vmax.f32 %v5168, 0.0
      %v5201 = vpack.c.bf16 %v5170, %v5169
      %v5202 = vpack.c.bf16 %v5172, %v5171
      %v5203 = vpack.c.bf16 %v5174, %v5173
      %v5204 = vpack.c.bf16 %v5176, %v5175
      %v5205 = vpack.c.bf16 %v5178, %v5177
      %v5206 = vpack.c.bf16 %v5180, %v5179
      %v5207 = vpack.c.bf16 %v5182, %v5181
      %v5208 = vpack.c.bf16 %v5184, %v5183
      %v5209 = vpack.c.bf16 %v5186, %v5185
      %v5210 = vpack.c.bf16 %v5188, %v5187
      %v5211 = vpack.c.bf16 %v5190, %v5189
      %v5212 = vpack.c.bf16 %v5192, %v5191
      %v5213 = vpack.c.bf16 %v5194, %v5193
      %v5214 = vpack.c.bf16 %v5196, %v5195
      %v5215 = vpack.c.bf16 %v5198, %v5197
      %v5216 = vpack.c.bf16 %v5200, %v5199
      %v5233 = vunpack.c.l.b16 %v5201
      %v5234 = vunpack.c.h.b16 %v5201
      %v5235 = vunpack.c.l.b16 %v5202
      %v5236 = vunpack.c.h.b16 %v5202
      %v5237 = vunpack.c.l.b16 %v5203
      %v5238 = vunpack.c.h.b16 %v5203
      %v5239 = vunpack.c.l.b16 %v5204
      %v5240 = vunpack.c.h.b16 %v5204
      %v5241 = vunpack.c.l.b16 %v5205
      %v5242 = vunpack.c.h.b16 %v5205
      %v5243 = vunpack.c.l.b16 %v5206
      %v5244 = vunpack.c.h.b16 %v5206
      %v5245 = vunpack.c.l.b16 %v5207
      %v5246 = vunpack.c.h.b16 %v5207
      %v5247 = vunpack.c.l.b16 %v5208
      %v5248 = vunpack.c.h.b16 %v5208
      %v5249 = vunpack.c.l.b16 %v5209
      %v5250 = vunpack.c.h.b16 %v5209
      %v5251 = vunpack.c.l.b16 %v5210
      %v5252 = vunpack.c.h.b16 %v5210
      %v5253 = vunpack.c.l.b16 %v5211
      %v5254 = vunpack.c.h.b16 %v5211
      %v5255 = vunpack.c.l.b16 %v5212
      %v5256 = vunpack.c.h.b16 %v5212
      %v5257 = vunpack.c.l.b16 %v5213
      %v5258 = vunpack.c.h.b16 %v5213
      %v5259 = vunpack.c.l.b16 %v5214
      %v5260 = vunpack.c.h.b16 %v5214
      %v5261 = vunpack.c.l.b16 %v5215
      %v5262 = vunpack.c.h.b16 %v5215
      %v5263 = vunpack.c.l.b16 %v5216
      %v5264 = vunpack.c.h.b16 %v5216
      %v5265 = vpack.c.b16 %v5233, %v5233
      %v5266 = vpack.c.b16 %v5234, %v5234
      %v5267 = vpack.c.b16 %v5235, %v5235
      %v5268 = vpack.c.b16 %v5236, %v5236
      %v5269 = vpack.c.b16 %v5237, %v5237
      %v5270 = vpack.c.b16 %v5238, %v5238
      %v5271 = vpack.c.b16 %v5239, %v5239
      %v5272 = vpack.c.b16 %v5240, %v5240
      %v5273 = vpack.c.b16 %v5241, %v5241
      %v5274 = vpack.c.b16 %v5242, %v5242
      %v5275 = vpack.c.b16 %v5243, %v5243
      %v5276 = vpack.c.b16 %v5244, %v5244
      %v5277 = vpack.c.b16 %v5245, %v5245
      %v5278 = vpack.c.b16 %v5246, %v5246
      %v5279 = vpack.c.b16 %v5247, %v5247
      %v5280 = vpack.c.b16 %v5248, %v5248
      %v5281 = vpack.c.b16 %v5249, %v5249
      %v5282 = vpack.c.b16 %v5250, %v5250
      %v5283 = vpack.c.b16 %v5251, %v5251
      %v5284 = vpack.c.b16 %v5252, %v5252
      %v5285 = vpack.c.b16 %v5253, %v5253
      %v5286 = vpack.c.b16 %v5254, %v5254
      %v5287 = vpack.c.b16 %v5255, %v5255
      %v5288 = vpack.c.b16 %v5256, %v5256
      %v5289 = vpack.c.b16 %v5257, %v5257
      %v5290 = vpack.c.b16 %v5258, %v5258
      %v5291 = vpack.c.b16 %v5259, %v5259
      %v5292 = vpack.c.b16 %v5260, %v5260
      %v5293 = vpack.c.b16 %v5261, %v5261
      %v5294 = vpack.c.b16 %v5262, %v5262
      %v5295 = vpack.c.b16 %v5263, %v5263
      %v5296 = vpack.c.b16 %v5264, %v5264
      %vm5329 = vcmask 125952
      %5330 = vst.msk [vmem:[%s388] sm:$0xf] %vm5329, %v5265
      %5331 = vst.msk [vmem:[%s388 + $0x4] sm:$0xf] %vm5329, %v5266
      %5332 = vst.msk [vmem:[%s388 + $0x8] sm:$0xf] %vm5329, %v5267
      %5333 = vst.msk [vmem:[%s388 + $0xc] sm:$0xf] %vm5329, %v5268
      %5334 = vst.msk [vmem:[%s388 + $0x10] sm:$0xf] %vm5329, %v5269
      %5335 = vst.msk [vmem:[%s388 + $0x14] sm:$0xf] %vm5329, %v5270
      %5336 = vst.msk [vmem:[%s388 + $0x18] sm:$0xf] %vm5329, %v5271
      %5337 = vst.msk [vmem:[%s388 + $0x1c] sm:$0xf] %vm5329, %v5272
      %5338 = vst.msk [vmem:[%s388 + $0x20] sm:$0xf] %vm5329, %v5273
      %5339 = vst.msk [vmem:[%s388 + $0x24] sm:$0xf] %vm5329, %v5274
      %5340 = vst.msk [vmem:[%s388 + $0x28] sm:$0xf] %vm5329, %v5275
      %5341 = vst.msk [vmem:[%s388 + $0x2c] sm:$0xf] %vm5329, %v5276
      %5342 = vst.msk [vmem:[%s388 + $0x30] sm:$0xf] %vm5329, %v5277
      %5343 = vst.msk [vmem:[%s388 + $0x34] sm:$0xf] %vm5329, %v5278
      %5344 = vst.msk [vmem:[%s388 + $0x38] sm:$0xf] %vm5329, %v5279
      %5345 = vst.msk [vmem:[%s388 + $0x3c] sm:$0xf] %vm5329, %v5280
      %5346 = vst.msk [vmem:[%s388 + $0x40] sm:$0xf] %vm5329, %v5281
      %5347 = vst.msk [vmem:[%s388 + $0x44] sm:$0xf] %vm5329, %v5282
      %5348 = vst.msk [vmem:[%s388 + $0x48] sm:$0xf] %vm5329, %v5283
      %5349 = vst.msk [vmem:[%s388 + $0x4c] sm:$0xf] %vm5329, %v5284
      %5350 = vst.msk [vmem:[%s388 + $0x50] sm:$0xf] %vm5329, %v5285
      %5351 = vst.msk [vmem:[%s388 + $0x54] sm:$0xf] %vm5329, %v5286
      %5352 = vst.msk [vmem:[%s388 + $0x58] sm:$0xf] %vm5329, %v5287
      %5353 = vst.msk [vmem:[%s388 + $0x5c] sm:$0xf] %vm5329, %v5288
      %5354 = vst.msk [vmem:[%s388 + $0x60] sm:$0xf] %vm5329, %v5289
      %5355 = vst.msk [vmem:[%s388 + $0x64] sm:$0xf] %vm5329, %v5290
      %5356 = vst.msk [vmem:[%s388 + $0x68] sm:$0xf] %vm5329, %v5291
      %5357 = vst.msk [vmem:[%s388 + $0x6c] sm:$0xf] %vm5329, %v5292
      %5358 = vst.msk [vmem:[%s388 + $0x70] sm:$0xf] %vm5329, %v5293
      %5359 = vst.msk [vmem:[%s388 + $0x74] sm:$0xf] %vm5329, %v5294
      %5360 = vst.msk [vmem:[%s388 + $0x78] sm:$0xf] %vm5329, %v5295
      %5361 = vst.msk [vmem:[%s388 + $0x7c] sm:$0xf] %vm5329, %v5296
      %s5362 = smul.u32 32, %s22
      %p5363 = scmp.lt.s32.totalorder %s5362, 63
      %s5364 = scalar_select %p5363, %s5362, 63
      %s5365 = smul.addr %s5364, 4
      %s5366 = scalar_lea.vmem %s11, %s5365
      // Predicated region
      $region65: #{tpu_custom_call.1} parent=63 // pred_check
        %p5367 = pneg %p276
      $region66: #{tpu_custom_call.1} parent=63 // pred_check_branch
        %5369 = sbr.rel (%p5367) target = $region68
      $region67: #{tpu_custom_call.1} parent=63 // pred_region
        %s5370 = smul.u32 32, %s22
      $region68: #{tpu_custom_call.1} parent=63 // pred_fallthru
        _
    $region64: #{tpu_custom_call.1} parent=5 // pred_fallthru
      _
    %p5371 = scmp.le.s32.totalorder 2, %s17
    // Predicated region
    $region69: #{tpu_custom_call.1} parent=5 // pred_check
      %p5372 = pneg %p5371
    $region70: #{tpu_custom_call.1} parent=5 // pred_check_branch
      %5374 = sbr.rel (%p5372) target = $region72
    $region71: #{tpu_custom_call.1} parent=5 // pred_region
      %s5375 = ssub.s32 %s17, 2
      // Predicated region
      $region73: #{tpu_custom_call.1} parent=71 // pred_check
        %p5376 = pneg %p282
      $region74: #{tpu_custom_call.1} parent=71 // pred_check_branch
        %5378 = sbr.rel (%p5376) target = $region76
      $region75: #{tpu_custom_call.1} parent=71 // pred_region
        %s5379 = smul.u32 32, %s23
        %p5380 = scmp.lt.s32.totalorder %s5379, 63
        %s5381 = scalar_select %p5380, %s5379, 63
        %s5382 = smul.addr %s5381, 4
        %s5383 = scalar_lea.vmem %s11, %s5382
      $region76: #{tpu_custom_call.1} parent=71 // pred_fallthru
        _
    $region72: #{tpu_custom_call.1} parent=5 // pred_fallthru
      _
  $region6: #{tpu_custom_call.1} parent=0 // loop_footer
    %s21 = sadd.s32 1, %s17
  $region7: #{tpu_custom_call.1} parent=0 // loop_footer_branch
    %16 = sbr.rel target = $region3
  $region8: #{tpu_custom_call.1} parent=0 // loop_exit
    _

</llo_original>
